<compile_context>
chip_gen: v5e
topology: v5e:2x2
jax: 0.10.0
libtpu: 0.0.40
codegen_flags: <defaults>
</compile_context>

<pallas_src>
import functools
import numpy as np

import jax
import jax.numpy as jnp
from jax.experimental import pallas as pl
from jax.experimental.pallas import tpu as pltpu

EPS = 1e-5
F32 = jnp.float32
NEG_INF = -1e9


# ----------------------- host-side constant builders (init time) -----------------------

def relative_position_index(ws):
    coords = np.stack(np.meshgrid(np.arange(ws), np.arange(ws), indexing="ij"))
    cf = coords.reshape(2, -1)
    rel = (cf[:, :, None] - cf[:, None, :]).transpose(1, 2, 0).astype(np.int64)
    rel[:, :, 0] += ws - 1
    rel[:, :, 1] += ws - 1
    rel[:, :, 0] *= 2 * ws - 1
    return rel.sum(-1)                                                  # (N, N)


def build_shift_mask(H, W, ws, shift):
    img = np.zeros((H, W), np.float32)
    cnt = 0
    for hs in (slice(0, -ws), slice(-ws, -shift), slice(-shift, None)):
        for wsl in (slice(0, -ws), slice(-ws, -shift), slice(-shift, None)):
            img[hs, wsl] = cnt
            cnt += 1
    m = img.reshape(H // ws, ws, W // ws, ws).transpose(0, 2, 1, 3).reshape(-1, ws * ws)
    attn = m[:, None, :] - m[:, :, None]
    return np.where(attn != 0, -100.0, 0.0).astype(np.float32)          # (nW, N, N)


def build_dense_attn_bias(table, ws, H, W, shift, num_heads):
    """(nH, L, L) additive attention bias in ORIGINAL token order.

    Folds: relative-position bias, the cyclic shift, the window partition (cross-window pairs
    get NEG_INF so a dense softmax zeroes them) and the shifted-window mask (-100)."""
    N = ws * ws
    L = H * W
    rel_idx = relative_position_index(ws).reshape(-1)
    rpb = table[rel_idx].reshape(N, N, num_heads).transpose(2, 0, 1)    # (nH, N, N)

    hh, ww = np.meshgrid(np.arange(H), np.arange(W), indexing="ij")
    # rolled position (h, w) holds original token ((h+shift)%H, (w+shift)%W)
    t_orig = (((hh + shift) % H) * W + ((ww + shift) % W)).reshape(-1)
    win = ((hh // ws) * (W // ws) + (ww // ws)).reshape(-1)
    n_in = ((hh % ws) * ws + (ww % ws)).reshape(-1)

    win_of = np.empty(L, np.int64)
    n_of = np.empty(L, np.int64)
    win_of[t_orig] = win
    n_of[t_orig] = n_in

    bias = rpb[:, n_of[:, None], n_of[None, :]].astype(np.float32)      # (nH, L, L)
    if shift > 0:
        sm = build_shift_mask(H, W, ws, shift)                          # (nW, N, N)
        bias = bias + sm[win_of[:, None], n_of[:, None], n_of[None, :]][None]
    same = win_of[:, None] == win_of[None, :]
    return np.where(same[None], bias, NEG_INF).astype(np.float32)


# ----------------------------- Pallas kernels -----------------------------

def _swin_block_kernel(x_ref, n1g_ref, n1b_ref, qkvw_ref, qkvb_ref, bias_ref,
                       pw_ref, pb_ref, n2g_ref, n2b_ref,
                       w1_ref, b1_ref, w2_ref, b2_ref, o_ref, *, num_heads):
    """One full Swin block for one sample (grid step).

    x_ref   : (1, L, C)     sample tokens
    n1g/n1b : (1, C)        AdaIN gamma/beta (norm1)
    qkvw/b  : (C, 3C),(1,3C)  q scale pre-folded into the q columns
    bias    : (nH, L, L)    precomputed dense attention bias (shift/window/rel-pos folded)
    pw/pb   : (C, C),(1, C) output projection
    n2g/n2b : (1, C)        AdaIN gamma/beta (norm2)
    w1/b1   : (C, Hd),(1,Hd)  MLP fc1
    w2/b2   : (Hd, C),(1, C)  MLP fc2
    o_ref   : (1, L, C)
    """
    L = x_ref.shape[1]
    C = x_ref.shape[2]
    hd = C // num_heads

    x = x_ref[0].astype(F32)                                            # (L, C)

    # ---- AdaIN (norm1): per-sample, per-channel stats over tokens; gamma folded into scale ----
    mu1 = jnp.mean(x, axis=0, keepdims=True)
    var1 = jnp.mean(jnp.square(x - mu1), axis=0, keepdims=True)         # two-pass (parity)
    s1 = n1g_ref[...].astype(F32) * jax.lax.rsqrt(var1 + EPS)
    xn = (x - mu1) * s1 + n1b_ref[...].astype(F32)

    # ---- fused qkv projection ----
    qkv = jnp.dot(xn, qkvw_ref[...].astype(F32), preferred_element_type=F32)
    qkv = qkv + qkvb_ref[...].astype(F32)                               # (L, 3C)
    v_full = qkv[:, 2 * C:]                                             # (L, C)

    # ---- whole-sample attention; windowing/shift/rel-pos are folded into bias_ref ----
    col = jax.lax.broadcasted_iota(jnp.int32, (1, C), 1)
    ctx = jnp.zeros((L, C), F32)                                        # head-concat context
    for h in range(num_heads):                                          # static unroll, nH <= 4
        q = qkv[:, h * hd:(h + 1) * hd]                                 # (L, hd), already scaled
        k = qkv[:, C + h * hd:C + (h + 1) * hd]
        s = jnp.einsum('nd,md->nm', q, k, preferred_element_type=F32)   # (L, L)
        s = s + bias_ref[h].astype(F32)
        s = s - jnp.max(s, axis=-1, keepdims=True)
        p = jnp.exp(s)
        p = p * pl.reciprocal(jnp.sum(p, axis=-1, keepdims=True), approx=True)
        # place head h's context directly in its output columns (zeros elsewhere)
        v_h = jnp.where((col >= h * hd) & (col < (h + 1) * hd), v_full, 0.0)
        ctx = ctx + jnp.dot(p, v_h, preferred_element_type=F32)

    # ---- single lane-wide output projection (contraction K = C, not per-head hd) ----
    attn = jnp.dot(ctx, pw_ref[...].astype(F32), preferred_element_type=F32)
    attn = attn + pb_ref[...].astype(F32)

    # ---- residual 1 + AdaIN (norm2) + MLP + residual 2 ----
    y = x + attn
    mu2 = jnp.mean(y, axis=0, keepdims=True)
    var2 = jnp.mean(jnp.square(y - mu2), axis=0, keepdims=True)
    s2 = n2g_ref[...].astype(F32) * jax.lax.rsqrt(var2 + EPS)
    yn = (y - mu2) * s2 + n2b_ref[...].astype(F32)
    hid = jnp.dot(yn, w1_ref[...].astype(F32), preferred_element_type=F32)
    hid = hid + b1_ref[...].astype(F32)
    # TODO(synk): torch nn.GELU() is exact (erf) GELU; tanh approximation used for TPU lowering safety.
    hid = jax.nn.gelu(hid, approximate=True)
    z = jnp.dot(hid, w2_ref[...].astype(F32), preferred_element_type=F32)
    z = z + b2_ref[...].astype(F32)
    o_ref[0] = (y + z).astype(o_ref.dtype)


def swin_block_pallas(x, p, num_heads):
    """One fused pallas_call for a full Swin block; grid=(B,) so v7x's two TCs both get work."""
    B, L, C = x.shape
    Hd = p["fc1"]["w"].shape[1]
    nH = num_heads
    return pl.pallas_call(
        functools.partial(_swin_block_kernel, num_heads=nH),
        out_shape=jax.ShapeDtypeStruct((B, L, C), x.dtype),
        grid=(B,),
        in_specs=[
            pl.BlockSpec((1, L, C), lambda b: (b, 0, 0)),      # x (per-sample)
            pl.BlockSpec((1, C), lambda b: (0, 0)),            # norm1 gamma
            pl.BlockSpec((1, C), lambda b: (0, 0)),            # norm1 beta
            pl.BlockSpec((C, 3 * C), lambda b: (0, 0)),        # qkv weight (q-scale folded)
            pl.BlockSpec((1, 3 * C), lambda b: (0, 0)),        # qkv bias
            pl.BlockSpec((nH, L, L), lambda b: (0, 0, 0)),     # dense attention bias
            pl.BlockSpec((C, C), lambda b: (0, 0)),            # proj weight
            pl.BlockSpec((1, C), lambda b: (0, 0)),            # proj bias
            pl.BlockSpec((1, C), lambda b: (0, 0)),            # norm2 gamma
            pl.BlockSpec((1, C), lambda b: (0, 0)),            # norm2 beta
            pl.BlockSpec((C, Hd), lambda b: (0, 0)),           # fc1 weight
            pl.BlockSpec((1, Hd), lambda b: (0, 0)),           # fc1 bias
            pl.BlockSpec((Hd, C), lambda b: (0, 0)),           # fc2 weight
            pl.BlockSpec((1, C), lambda b: (0, 0)),            # fc2 bias
        ],
        out_specs=pl.BlockSpec((1, L, C), lambda b: (b, 0, 0)),
        compiler_params=pltpu.CompilerParams(dimension_semantics=("parallel",)),
    )(x, p["norm1_g"], p["norm1_b"], p["qkv_w"], p["qkv_b"], p["attn_bias"],
      p["proj"]["w"], p["proj"]["b"], p["norm2_g"], p["norm2_b"],
      p["fc1"]["w"], p["fc1"]["b"], p["fc2"]["w"], p["fc2"]["b"])


def _adain_linear_kernel(x_ref, g_ref, b_ref, w_ref, wb_ref, o_ref):
    """Per-sample AdaIN (instance norm over tokens) fused with a linear projection."""
    x = x_ref[0].astype(F32)                                            # (L, Cin)
    mu = jnp.mean(x, axis=0, keepdims=True)
    var = jnp.mean(jnp.square(x - mu), axis=0, keepdims=True)
    s = g_ref[...].astype(F32) * jax.lax.rsqrt(var + EPS)
    xn = (x - mu) * s + b_ref[...].astype(F32)
    y = jnp.dot(xn, w_ref[...].astype(F32), preferred_element_type=F32)
    y = y + wb_ref[...].astype(F32)
    o_ref[0] = y.astype(o_ref.dtype)


def adain_linear_pallas(x, gamma, beta, w, wb):
    B, L, Cin = x.shape
    Cout = w.shape[1]
    return pl.pallas_call(
        _adain_linear_kernel,
        out_shape=jax.ShapeDtypeStruct((B, L, Cout), x.dtype),
        grid=(B,),
        in_specs=[pl.BlockSpec((1, L, Cin), lambda b: (b, 0, 0)),
                  pl.BlockSpec((1, Cin), lambda b: (0, 0)),
                  pl.BlockSpec((1, Cin), lambda b: (0, 0)),
                  pl.BlockSpec((Cin, Cout), lambda b: (0, 0)),
                  pl.BlockSpec((1, Cout), lambda b: (0, 0))],
        out_specs=pl.BlockSpec((1, L, Cout), lambda b: (b, 0, 0)),
        compiler_params=pltpu.CompilerParams(dimension_semantics=("parallel",)),
    )(x, gamma, beta, w, wb)


# ----------------------------- parameters -----------------------------

def init_linear(key, fan_in, fan_out):
    w = 0.02 * jax.random.normal(key, (fan_in, fan_out), F32)
    b = jnp.zeros((1, fan_out), F32)
    return {"w": w, "b": b}


def init_block(key, dim, num_heads, mlp_ratio, ws, H, W, shift):
    ks = jax.random.split(key, 5)
    hidden = int(dim * mlp_ratio)
    hd = dim // num_heads
    scale = hd ** -0.5
    qkv = init_linear(ks[0], dim, 3 * dim)
    # fold the per-head query scale into the q part of the qkv projection (free at init)
    qkv_w = qkv["w"].at[:, :dim].multiply(scale)
    qkv_b = qkv["b"].at[:, :dim].multiply(scale)
    # relative-position bias table gathered ONCE at init and fused with shift/window structure
    table = 0.02 * jax.random.normal(ks[4], ((2 * ws - 1) ** 2, num_heads), F32)
    attn_bias = jnp.asarray(
        build_dense_attn_bias(np.asarray(table), ws, H, W, shift, num_heads))
    return {
        # TODO(synk): AdaIN gamma/beta are assigned externally in the PyTorch module; defaults 1/0 used here.
        "norm1_g": jnp.ones((1, dim), F32),
        "norm1_b": jnp.zeros((1, dim), F32),
        "qkv_w": qkv_w, "qkv_b": qkv_b,
        "proj": init_linear(ks[1], dim, dim),
        "norm2_g": jnp.ones((1, dim), F32),
        "norm2_b": jnp.zeros((1, dim), F32),
        "fc1": init_linear(ks[2], dim, hidden),
        "fc2": init_linear(ks[3], hidden, dim),
        "attn_bias": attn_bias,
    }


def init_model(key, cfg, dim, input_resolution):
    layers = []
    res = list(input_resolution)
    num_layers = len(cfg["depths"])
    for i in range(num_layers):
        d = dim * (2 ** i)
        H, W = res
        ws_eff = min(cfg["window_size"], min(res))
        can_shift = min(res) > ws_eff
        lkeys = jax.random.split(jax.random.fold_in(key, i), cfg["depths"][i] + 1)
        blocks = []
        for j in range(cfg["depths"][i]):
            shift = (ws_eff // 2) if (j % 2 == 1 and can_shift) else 0
            blocks.append(init_block(lkeys[j], d, cfg["num_heads"][i],
                                     cfg["mlp_ratio"], ws_eff, H, W, shift))
        downsample = None
        if cfg["downsample"][i] and i < num_layers - 1:
            downsample = {"norm_g": jnp.ones((1, 4 * d), F32),
                          "norm_b": jnp.zeros((1, 4 * d), F32),
                          "red": init_linear(lkeys[-1], 4 * d, 2 * d)}   # bias=False -> zero bias
        layers.append({"blocks": blocks, "downsample": downsample,
                       "resolution": (H, W), "dim": d,
                       "num_heads": cfg["num_heads"][i]})
        if cfg["downsample"][i]:
            res = [res[0] // 2, res[1] // 2]
    return layers


# ----------------------------- forward -----------------------------

def patch_merging(x, p, H, W):
    B, L, C = x.shape
    x = x.reshape(B, H, W, C)
    x0 = x[:, 0::2, 0::2, :]
    x1 = x[:, 1::2, 0::2, :]
    x2 = x[:, 0::2, 1::2, :]
    x3 = x[:, 1::2, 1::2, :]
    x = jnp.concatenate([x0, x1, x2, x3], axis=-1).reshape(B, (H // 2) * (W // 2), 4 * C)
    # fused AdaIN + reduction linear (bias=False)
    return adain_linear_pallas(x, p["norm_g"], p["norm_b"], p["red"]["w"], p["red"]["b"])


def model_forward(x, layers):
    for layer in layers:
        H, W = layer["resolution"]
        for bp in layer["blocks"]:
            x = swin_block_pallas(x, bp, layer["num_heads"])     # one pallas_call per block
        if layer["downsample"] is not None:
            x = patch_merging(x, layer["downsample"], H, W)
    return x, []


# ----------------------------- main -----------------------------

if __name__ == "__main__":
    cfg = dict(depths=(2, 2), num_heads=(2, 4), window_size=4, mlp_ratio=2.0,
               qkv_bias=True, drop_path_rate=0.0, attn_drop_rate=0.0,
               downsample=(True, False))
    input_size = (32, 32)
    patch_size = (4, 4)
    dim = 32
    res = (input_size[0] // patch_size[0], input_size[1] // patch_size[1])   # (8, 8)
    B = 2
    L = res[0] * res[1]                                                      # 64

    key = jax.random.PRNGKey(0)
    kx, kp = jax.random.split(key)
    x = jax.random.normal(kx, (B, L, dim), jnp.float32)                      # tokens [B, L, C]

    layers = init_model(kp, cfg, dim, res)

    fwd = jax.jit(lambda inp: model_forward(inp, layers))
    out, vis = fwd(x)
    jax.block_until_ready(out)
    assert out.shape == (B, L // 4, 2 * dim), out.shape
    print("KERNEL_OK")
</pallas_src>

<mosaic_0001>
module attributes {stable_mosaic.version = 11 : i64} {
  func.func @_swin_block_kernel(%arg0: i32, %arg1: memref<1x64x32xf32, #tpu.memory_space<vmem>>, %arg2: memref<1x32xf32, #tpu.memory_space<vmem>>, %arg3: memref<1x32xf32, #tpu.memory_space<vmem>>, %arg4: memref<32x96xf32, #tpu.memory_space<vmem>>, %arg5: memref<1x96xf32, #tpu.memory_space<vmem>>, %arg6: memref<2x64x64xf32, #tpu.memory_space<vmem>>, %arg7: memref<32x32xf32, #tpu.memory_space<vmem>>, %arg8: memref<1x32xf32, #tpu.memory_space<vmem>>, %arg9: memref<1x32xf32, #tpu.memory_space<vmem>>, %arg10: memref<1x32xf32, #tpu.memory_space<vmem>>, %arg11: memref<32x64xf32, #tpu.memory_space<vmem>>, %arg12: memref<1x64xf32, #tpu.memory_space<vmem>>, %arg13: memref<64x32xf32, #tpu.memory_space<vmem>>, %arg14: memref<1x32xf32, #tpu.memory_space<vmem>>, %arg15: memref<1x64x32xf32, #tpu.memory_space<vmem>>) attributes {dimension_semantics = [#tpu.dimension_semantics<parallel>], iteration_bounds = array<i64: 2>, scalar_prefetch = 0 : i64, scratch_operands = 0 : i64, tpu.core_type = #tpu.core_type<tc>, window_params = [{transform_indices = @transform_0, window_bounds = array<i64: 1, 64, 32>}, {pipeline_mode = #tpu.pipeline_mode<synchronous>, transform_indices = @transform_1, window_bounds = array<i64: 1, 32>}, {pipeline_mode = #tpu.pipeline_mode<synchronous>, transform_indices = @transform_2, window_bounds = array<i64: 1, 32>}, {pipeline_mode = #tpu.pipeline_mode<synchronous>, transform_indices = @transform_3, window_bounds = array<i64: 32, 96>}, {pipeline_mode = #tpu.pipeline_mode<synchronous>, transform_indices = @transform_4, window_bounds = array<i64: 1, 96>}, {pipeline_mode = #tpu.pipeline_mode<synchronous>, transform_indices = @transform_5, window_bounds = array<i64: 2, 64, 64>}, {pipeline_mode = #tpu.pipeline_mode<synchronous>, transform_indices = @transform_6, window_bounds = array<i64: 32, 32>}, {pipeline_mode = #tpu.pipeline_mode<synchronous>, transform_indices = @transform_7, window_bounds = array<i64: 1, 32>}, {pipeline_mode = #tpu.pipeline_mode<synchronous>, transform_indices = @transform_8, window_bounds = array<i64: 1, 32>}, {pipeline_mode = #tpu.pipeline_mode<synchronous>, transform_indices = @transform_9, window_bounds = array<i64: 1, 32>}, {pipeline_mode = #tpu.pipeline_mode<synchronous>, transform_indices = @transform_10, window_bounds = array<i64: 32, 64>}, {pipeline_mode = #tpu.pipeline_mode<synchronous>, transform_indices = @transform_11, window_bounds = array<i64: 1, 64>}, {pipeline_mode = #tpu.pipeline_mode<synchronous>, transform_indices = @transform_12, window_bounds = array<i64: 64, 32>}, {pipeline_mode = #tpu.pipeline_mode<synchronous>, transform_indices = @transform_13, window_bounds = array<i64: 1, 32>}, {transform_indices = @transform_14, window_bounds = array<i64: 1, 64, 32>}]} {
    %c0 = arith.constant 0 : index
    %c0_0 = arith.constant 0 : index
    %c0_1 = arith.constant 0 : index
    %0 = vector.load %arg1[%c0, %c0_0, %c0_1] : memref<1x64x32xf32, #tpu.memory_space<vmem>>, vector<1x64x32xf32>
    %1 = vector.shape_cast %0 : vector<1x64x32xf32> to vector<64x32xf32>
    %cst = arith.constant dense<0.000000e+00> : vector<32xf32>
    %2 = vector.multi_reduction <add>, %1, %cst [0] : vector<64x32xf32> to vector<32xf32>
    %3 = vector.shape_cast %2 : vector<32xf32> to vector<1x32xf32>
    %cst_2 = arith.constant 6.400000e+01 : f32
    %4 = vector.broadcast %cst_2 : f32 to vector<1x32xf32>
    %5 = arith.divf %3, %4 : vector<1x32xf32>
    %6 = vector.broadcast %5 : vector<1x32xf32> to vector<64x32xf32>
    %7 = arith.subf %1, %6 : vector<64x32xf32>
    %8 = arith.mulf %7, %7 : vector<64x32xf32>
    %cst_3 = arith.constant dense<0.000000e+00> : vector<32xf32>
    %9 = vector.multi_reduction <add>, %8, %cst_3 [0] : vector<64x32xf32> to vector<32xf32>
    %10 = vector.shape_cast %9 : vector<32xf32> to vector<1x32xf32>
    %cst_4 = arith.constant 6.400000e+01 : f32
    %11 = vector.broadcast %cst_4 : f32 to vector<1x32xf32>
    %12 = arith.divf %10, %11 : vector<1x32xf32>
    %c0_5 = arith.constant 0 : index
    %c0_6 = arith.constant 0 : index
    %13 = vector.load %arg2[%c0_5, %c0_6] : memref<1x32xf32, #tpu.memory_space<vmem>>, vector<1x32xf32>
    %cst_7 = arith.constant 9.99999974E-6 : f32
    %14 = vector.broadcast %cst_7 : f32 to vector<1x32xf32>
    %15 = arith.addf %12, %14 : vector<1x32xf32>
    %16 = math.rsqrt %15 : vector<1x32xf32>
    %17 = arith.mulf %13, %16 : vector<1x32xf32>
    %18 = vector.broadcast %5 : vector<1x32xf32> to vector<64x32xf32>
    %19 = arith.subf %1, %18 : vector<64x32xf32>
    %20 = vector.broadcast %17 : vector<1x32xf32> to vector<64x32xf32>
    %21 = arith.mulf %19, %20 : vector<64x32xf32>
    %c0_8 = arith.constant 0 : index
    %c0_9 = arith.constant 0 : index
    %22 = vector.load %arg3[%c0_8, %c0_9] : memref<1x32xf32, #tpu.memory_space<vmem>>, vector<1x32xf32>
    %23 = vector.broadcast %22 : vector<1x32xf32> to vector<64x32xf32>
    %24 = arith.addf %21, %23 : vector<64x32xf32>
    %c0_10 = arith.constant 0 : index
    %c0_11 = arith.constant 0 : index
    %25 = vector.load %arg4[%c0_10, %c0_11] : memref<32x96xf32, #tpu.memory_space<vmem>>, vector<32x96xf32>
    %cst_12 = arith.constant dense<0.000000e+00> : vector<64x96xf32>
    %26 = tpu.matmul %24, %25, %cst_12 {dimension_numbers = #tpu.dot_dimension_numbers<[1], [0], [0], [1], [0, 0, 1, 1], [], []>} : vector<64x32xf32>, vector<32x96xf32>, vector<64x96xf32> -> vector<64x96xf32>
    %c0_13 = arith.constant 0 : index
    %c0_14 = arith.constant 0 : index
    %27 = vector.load %arg5[%c0_13, %c0_14] : memref<1x96xf32, #tpu.memory_space<vmem>>, vector<1x96xf32>
    %28 = vector.broadcast %27 : vector<1x96xf32> to vector<64x96xf32>
    %29 = arith.addf %26, %28 : vector<64x96xf32>
    %30 = vector.extract_strided_slice %29 {offsets = [0, 64], sizes = [64, 32], strides = [1, 1]} : vector<64x96xf32> to vector<64x32xf32>
    %31 = tpu.iota {dimensions = array<i32: 1>} : vector<1x32xi32>
    %cst_15 = arith.constant 0.000000e+00 : f32
    %32 = vector.broadcast %cst_15 : f32 to vector<64x32xf32>
    %33 = vector.extract_strided_slice %29 {offsets = [0, 0], sizes = [64, 16], strides = [1, 1]} : vector<64x96xf32> to vector<64x16xf32>
    %34 = vector.extract_strided_slice %29 {offsets = [0, 32], sizes = [64, 16], strides = [1, 1]} : vector<64x96xf32> to vector<64x16xf32>
    "tpu.trace_start"() <{level = 10 : i32, message = "nd,md->nm"}> : () -> ()
    %cst_16 = arith.constant dense<0.000000e+00> : vector<64x64xf32>
    %35 = tpu.matmul %33, %34, %cst_16 {dimension_numbers = #tpu.dot_dimension_numbers<[1], [1], [0], [0], [0, 0, 1, 0], [], []>} : vector<64x16xf32>, vector<64x16xf32>, vector<64x64xf32> -> vector<64x64xf32>
    "tpu.trace_stop"() : () -> ()
    %c0_17 = arith.constant 0 : index
    %c0_18 = arith.constant 0 : index
    %c0_19 = arith.constant 0 : index
    %36 = vector.load %arg6[%c0_17, %c0_18, %c0_19] : memref<2x64x64xf32, #tpu.memory_space<vmem>>, vector<1x64x64xf32>
    %37 = vector.shape_cast %36 : vector<1x64x64xf32> to vector<64x64xf32>
    %38 = arith.addf %35, %37 : vector<64x64xf32>
    %cst_20 = arith.constant dense<0xFF800000> : vector<64xf32>
    %39 = vector.multi_reduction <maximumf>, %38, %cst_20 [1] : vector<64x64xf32> to vector<64xf32>
    %40 = vector.shape_cast %39 : vector<64xf32> to vector<64x1xf32>
    %41 = vector.broadcast %40 : vector<64x1xf32> to vector<64x64xf32>
    %42 = arith.subf %38, %41 : vector<64x64xf32>
    %43 = math.exp %42 : vector<64x64xf32>
    %cst_21 = arith.constant dense<0.000000e+00> : vector<64xf32>
    %44 = vector.multi_reduction <add>, %43, %cst_21 [1] : vector<64x64xf32> to vector<64xf32>
    %45 = vector.shape_cast %44 : vector<64xf32> to vector<64x1xf32>
    %46 = tpu.reciprocal %45 {approx = true} : vector<64x1xf32> -> vector<64x1xf32>
    %47 = vector.broadcast %46 : vector<64x1xf32> to vector<64x64xf32>
    %48 = arith.mulf %43, %47 : vector<64x64xf32>
    %c0_i32 = arith.constant 0 : i32
    %49 = vector.broadcast %c0_i32 : i32 to vector<1x32xi32>
    %50 = arith.cmpi sge, %31, %49 : vector<1x32xi32>
    %c16_i32 = arith.constant 16 : i32
    %51 = vector.broadcast %c16_i32 : i32 to vector<1x32xi32>
    %52 = arith.cmpi slt, %31, %51 : vector<1x32xi32>
    %53 = arith.andi %50, %52 : vector<1x32xi1>
    %cst_22 = arith.constant 0.000000e+00 : f32
    %54 = vector.shape_cast %53 : vector<1x32xi1> to vector<1x32xi1>
    %55 = vector.broadcast %54 : vector<1x32xi1> to vector<64x32xi1>
    %56 = vector.broadcast %cst_22 : f32 to vector<64x32xf32>
    %57 = arith.select %55, %30, %56 : vector<64x32xi1>, vector<64x32xf32>
    %cst_23 = arith.constant dense<0.000000e+00> : vector<64x32xf32>
    %58 = tpu.matmul %48, %57, %cst_23 {dimension_numbers = #tpu.dot_dimension_numbers<[1], [0], [0], [1], [0, 0, 1, 1], [], []>} : vector<64x64xf32>, vector<64x32xf32>, vector<64x32xf32> -> vector<64x32xf32>
    %59 = arith.addf %32, %58 : vector<64x32xf32>
    %60 = vector.extract_strided_slice %29 {offsets = [0, 16], sizes = [64, 16], strides = [1, 1]} : vector<64x96xf32> to vector<64x16xf32>
    %61 = vector.extract_strided_slice %29 {offsets = [0, 48], sizes = [64, 16], strides = [1, 1]} : vector<64x96xf32> to vector<64x16xf32>
    "tpu.trace_start"() <{level = 10 : i32, message = "nd,md->nm"}> : () -> ()
    %cst_24 = arith.constant dense<0.000000e+00> : vector<64x64xf32>
    %62 = tpu.matmul %60, %61, %cst_24 {dimension_numbers = #tpu.dot_dimension_numbers<[1], [1], [0], [0], [0, 0, 1, 0], [], []>} : vector<64x16xf32>, vector<64x16xf32>, vector<64x64xf32> -> vector<64x64xf32>
    "tpu.trace_stop"() : () -> ()
    %c1 = arith.constant 1 : index
    %c0_25 = arith.constant 0 : index
    %c0_26 = arith.constant 0 : index
    %63 = vector.load %arg6[%c1, %c0_25, %c0_26] : memref<2x64x64xf32, #tpu.memory_space<vmem>>, vector<1x64x64xf32>
    %64 = vector.shape_cast %63 : vector<1x64x64xf32> to vector<64x64xf32>
    %65 = arith.addf %62, %64 : vector<64x64xf32>
    %cst_27 = arith.constant dense<0xFF800000> : vector<64xf32>
    %66 = vector.multi_reduction <maximumf>, %65, %cst_27 [1] : vector<64x64xf32> to vector<64xf32>
    %67 = vector.shape_cast %66 : vector<64xf32> to vector<64x1xf32>
    %68 = vector.broadcast %67 : vector<64x1xf32> to vector<64x64xf32>
    %69 = arith.subf %65, %68 : vector<64x64xf32>
    %70 = math.exp %69 : vector<64x64xf32>
    %cst_28 = arith.constant dense<0.000000e+00> : vector<64xf32>
    %71 = vector.multi_reduction <add>, %70, %cst_28 [1] : vector<64x64xf32> to vector<64xf32>
    %72 = vector.shape_cast %71 : vector<64xf32> to vector<64x1xf32>
    %73 = tpu.reciprocal %72 {approx = true} : vector<64x1xf32> -> vector<64x1xf32>
    %74 = vector.broadcast %73 : vector<64x1xf32> to vector<64x64xf32>
    %75 = arith.mulf %70, %74 : vector<64x64xf32>
    %c16_i32_29 = arith.constant 16 : i32
    %76 = vector.broadcast %c16_i32_29 : i32 to vector<1x32xi32>
    %77 = arith.cmpi sge, %31, %76 : vector<1x32xi32>
    %c32_i32 = arith.constant 32 : i32
    %78 = vector.broadcast %c32_i32 : i32 to vector<1x32xi32>
    %79 = arith.cmpi slt, %31, %78 : vector<1x32xi32>
    %80 = arith.andi %77, %79 : vector<1x32xi1>
    %cst_30 = arith.constant 0.000000e+00 : f32
    %81 = vector.shape_cast %80 : vector<1x32xi1> to vector<1x32xi1>
    %82 = vector.broadcast %81 : vector<1x32xi1> to vector<64x32xi1>
    %83 = vector.broadcast %cst_30 : f32 to vector<64x32xf32>
    %84 = arith.select %82, %30, %83 : vector<64x32xi1>, vector<64x32xf32>
    %cst_31 = arith.constant dense<0.000000e+00> : vector<64x32xf32>
    %85 = tpu.matmul %75, %84, %cst_31 {dimension_numbers = #tpu.dot_dimension_numbers<[1], [0], [0], [1], [0, 0, 1, 1], [], []>} : vector<64x64xf32>, vector<64x32xf32>, vector<64x32xf32> -> vector<64x32xf32>
    %86 = arith.addf %59, %85 : vector<64x32xf32>
    %c0_32 = arith.constant 0 : index
    %c0_33 = arith.constant 0 : index
    %87 = vector.load %arg7[%c0_32, %c0_33] : memref<32x32xf32, #tpu.memory_space<vmem>>, vector<32x32xf32>
    %cst_34 = arith.constant dense<0.000000e+00> : vector<64x32xf32>
    %88 = tpu.matmul %86, %87, %cst_34 {dimension_numbers = #tpu.dot_dimension_numbers<[1], [0], [0], [1], [0, 0, 1, 1], [], []>} : vector<64x32xf32>, vector<32x32xf32>, vector<64x32xf32> -> vector<64x32xf32>
    %c0_35 = arith.constant 0 : index
    %c0_36 = arith.constant 0 : index
    %89 = vector.load %arg8[%c0_35, %c0_36] : memref<1x32xf32, #tpu.memory_space<vmem>>, vector<1x32xf32>
    %90 = vector.broadcast %89 : vector<1x32xf32> to vector<64x32xf32>
    %91 = arith.addf %88, %90 : vector<64x32xf32>
    %92 = arith.addf %1, %91 : vector<64x32xf32>
    %cst_37 = arith.constant dense<0.000000e+00> : vector<32xf32>
    %93 = vector.multi_reduction <add>, %92, %cst_37 [0] : vector<64x32xf32> to vector<32xf32>
    %94 = vector.shape_cast %93 : vector<32xf32> to vector<1x32xf32>
    %cst_38 = arith.constant 6.400000e+01 : f32
    %95 = vector.broadcast %cst_38 : f32 to vector<1x32xf32>
    %96 = arith.divf %94, %95 : vector<1x32xf32>
    %97 = vector.broadcast %96 : vector<1x32xf32> to vector<64x32xf32>
    %98 = arith.subf %92, %97 : vector<64x32xf32>
    %99 = arith.mulf %98, %98 : vector<64x32xf32>
    %cst_39 = arith.constant dense<0.000000e+00> : vector<32xf32>
    %100 = vector.multi_reduction <add>, %99, %cst_39 [0] : vector<64x32xf32> to vector<32xf32>
    %101 = vector.shape_cast %100 : vector<32xf32> to vector<1x32xf32>
    %cst_40 = arith.constant 6.400000e+01 : f32
    %102 = vector.broadcast %cst_40 : f32 to vector<1x32xf32>
    %103 = arith.divf %101, %102 : vector<1x32xf32>
    %c0_41 = arith.constant 0 : index
    %c0_42 = arith.constant 0 : index
    %104 = vector.load %arg9[%c0_41, %c0_42] : memref<1x32xf32, #tpu.memory_space<vmem>>, vector<1x32xf32>
    %cst_43 = arith.constant 9.99999974E-6 : f32
    %105 = vector.broadcast %cst_43 : f32 to vector<1x32xf32>
    %106 = arith.addf %103, %105 : vector<1x32xf32>
    %107 = math.rsqrt %106 : vector<1x32xf32>
    %108 = arith.mulf %104, %107 : vector<1x32xf32>
    %109 = vector.broadcast %96 : vector<1x32xf32> to vector<64x32xf32>
    %110 = arith.subf %92, %109 : vector<64x32xf32>
    %111 = vector.broadcast %108 : vector<1x32xf32> to vector<64x32xf32>
    %112 = arith.mulf %110, %111 : vector<64x32xf32>
    %c0_44 = arith.constant 0 : index
    %c0_45 = arith.constant 0 : index
    %113 = vector.load %arg10[%c0_44, %c0_45] : memref<1x32xf32, #tpu.memory_space<vmem>>, vector<1x32xf32>
    %114 = vector.broadcast %113 : vector<1x32xf32> to vector<64x32xf32>
    %115 = arith.addf %112, %114 : vector<64x32xf32>
    %c0_46 = arith.constant 0 : index
    %c0_47 = arith.constant 0 : index
    %116 = vector.load %arg11[%c0_46, %c0_47] : memref<32x64xf32, #tpu.memory_space<vmem>>, vector<32x64xf32>
    %cst_48 = arith.constant dense<0.000000e+00> : vector<64x64xf32>
    %117 = tpu.matmul %115, %116, %cst_48 {dimension_numbers = #tpu.dot_dimension_numbers<[1], [0], [0], [1], [0, 0, 1, 1], [], []>} : vector<64x32xf32>, vector<32x64xf32>, vector<64x64xf32> -> vector<64x64xf32>
    %c0_49 = arith.constant 0 : index
    %c0_50 = arith.constant 0 : index
    %118 = vector.load %arg12[%c0_49, %c0_50] : memref<1x64xf32, #tpu.memory_space<vmem>>, vector<1x64xf32>
    %119 = vector.broadcast %118 : vector<1x64xf32> to vector<64x64xf32>
    %120 = arith.addf %117, %119 : vector<64x64xf32>
    %121 = arith.mulf %120, %120 : vector<64x64xf32>
    %122 = arith.mulf %120, %121 : vector<64x64xf32>
    %cst_51 = arith.constant 4.471500e-02 : f32
    %123 = vector.broadcast %cst_51 : f32 to vector<64x64xf32>
    %124 = arith.mulf %123, %122 : vector<64x64xf32>
    %125 = arith.addf %120, %124 : vector<64x64xf32>
    %cst_52 = arith.constant 0.797884583 : f32
    %126 = vector.broadcast %cst_52 : f32 to vector<64x64xf32>
    %127 = arith.mulf %126, %125 : vector<64x64xf32>
    %128 = math.tanh %127 : vector<64x64xf32>
    %cst_53 = arith.constant 1.000000e+00 : f32
    %129 = vector.broadcast %cst_53 : f32 to vector<64x64xf32>
    %130 = arith.addf %129, %128 : vector<64x64xf32>
    %cst_54 = arith.constant 5.000000e-01 : f32
    %131 = vector.broadcast %cst_54 : f32 to vector<64x64xf32>
    %132 = arith.mulf %131, %130 : vector<64x64xf32>
    %133 = arith.mulf %120, %132 : vector<64x64xf32>
    %c0_55 = arith.constant 0 : index
    %c0_56 = arith.constant 0 : index
    %134 = vector.load %arg13[%c0_55, %c0_56] : memref<64x32xf32, #tpu.memory_space<vmem>>, vector<64x32xf32>
    %cst_57 = arith.constant dense<0.000000e+00> : vector<64x32xf32>
    %135 = tpu.matmul %133, %134, %cst_57 {dimension_numbers = #tpu.dot_dimension_numbers<[1], [0], [0], [1], [0, 0, 1, 1], [], []>} : vector<64x64xf32>, vector<64x32xf32>, vector<64x32xf32> -> vector<64x32xf32>
    %c0_58 = arith.constant 0 : index
    %c0_59 = arith.constant 0 : index
    %136 = vector.load %arg14[%c0_58, %c0_59] : memref<1x32xf32, #tpu.memory_space<vmem>>, vector<1x32xf32>
    %137 = vector.broadcast %136 : vector<1x32xf32> to vector<64x32xf32>
    %138 = arith.addf %135, %137 : vector<64x32xf32>
    %139 = arith.addf %92, %138 : vector<64x32xf32>
    %c0_60 = arith.constant 0 : index
    %c0_61 = arith.constant 0 : index
    %c0_62 = arith.constant 0 : index
    %140 = vector.load %arg15[%c0_60, %c0_61, %c0_62] : memref<1x64x32xf32, #tpu.memory_space<vmem>>, vector<1x64x32xf32>
    %141 = vector.shape_cast %140 : vector<1x64x32xf32> to vector<64x32xf32>
    %142 = vector.shape_cast %139 : vector<64x32xf32> to vector<1x64x32xf32>
    tpu.vector_store %arg15[%c0_60, %c0_61, %c0_62], %142 {strides = array<i32>} : memref<1x64x32xf32, #tpu.memory_space<vmem>>, vector<1x64x32xf32>,
    return
  }
  func.func @transform_0(%arg0: i32) -> (i32, i32, i32) {
    %c0_i32 = arith.constant 0 : i32
    %c0_i32_0 = arith.constant 0 : i32
    %c0_i32_1 = arith.constant 0 : i32
    return %arg0, %c0_i32, %c0_i32_0 : i32, i32, i32
  }
  func.func @transform_1(%arg0: i32) -> (i32, i32) {
    %c0_i32 = arith.constant 0 : i32
    %c0_i32_0 = arith.constant 0 : i32
    %c0_i32_1 = arith.constant 0 : i32
    return %c0_i32, %c0_i32_0 : i32, i32
  }
  func.func @transform_2(%arg0: i32) -> (i32, i32) {
    %c0_i32 = arith.constant 0 : i32
    %c0_i32_0 = arith.constant 0 : i32
    %c0_i32_1 = arith.constant 0 : i32
    return %c0_i32, %c0_i32_0 : i32, i32
  }
  func.func @transform_3(%arg0: i32) -> (i32, i32) {
    %c0_i32 = arith.constant 0 : i32
    %c0_i32_0 = arith.constant 0 : i32
    %c0_i32_1 = arith.constant 0 : i32
    return %c0_i32, %c0_i32_0 : i32, i32
  }
  func.func @transform_4(%arg0: i32) -> (i32, i32) {
    %c0_i32 = arith.constant 0 : i32
    %c0_i32_0 = arith.constant 0 : i32
    %c0_i32_1 = arith.constant 0 : i32
    return %c0_i32, %c0_i32_0 : i32, i32
  }
  func.func @transform_5(%arg0: i32) -> (i32, i32, i32) {
    %c0_i32 = arith.constant 0 : i32
    %c0_i32_0 = arith.constant 0 : i32
    %c0_i32_1 = arith.constant 0 : i32
    %c0_i32_2 = arith.constant 0 : i32
    return %c0_i32, %c0_i32_0, %c0_i32_1 : i32, i32, i32
  }
  func.func @transform_6(%arg0: i32) -> (i32, i32) {
    %c0_i32 = arith.constant 0 : i32
    %c0_i32_0 = arith.constant 0 : i32
    %c0_i32_1 = arith.constant 0 : i32
    return %c0_i32, %c0_i32_0 : i32, i32
  }
  func.func @transform_7(%arg0: i32) -> (i32, i32) {
    %c0_i32 = arith.constant 0 : i32
    %c0_i32_0 = arith.constant 0 : i32
    %c0_i32_1 = arith.constant 0 : i32
    return %c0_i32, %c0_i32_0 : i32, i32
  }
  func.func @transform_8(%arg0: i32) -> (i32, i32) {
    %c0_i32 = arith.constant 0 : i32
    %c0_i32_0 = arith.constant 0 : i32
    %c0_i32_1 = arith.constant 0 : i32
    return %c0_i32, %c0_i32_0 : i32, i32
  }
  func.func @transform_9(%arg0: i32) -> (i32, i32) {
    %c0_i32 = arith.constant 0 : i32
    %c0_i32_0 = arith.constant 0 : i32
    %c0_i32_1 = arith.constant 0 : i32
    return %c0_i32, %c0_i32_0 : i32, i32
  }
  func.func @transform_10(%arg0: i32) -> (i32, i32) {
    %c0_i32 = arith.constant 0 : i32
    %c0_i32_0 = arith.constant 0 : i32
    %c0_i32_1 = arith.constant 0 : i32
    return %c0_i32, %c0_i32_0 : i32, i32
  }
  func.func @transform_11(%arg0: i32) -> (i32, i32) {
    %c0_i32 = arith.constant 0 : i32
    %c0_i32_0 = arith.constant 0 : i32
    %c0_i32_1 = arith.constant 0 : i32
    return %c0_i32, %c0_i32_0 : i32, i32
  }
  func.func @transform_12(%arg0: i32) -> (i32, i32) {
    %c0_i32 = arith.constant 0 : i32
    %c0_i32_0 = arith.constant 0 : i32
    %c0_i32_1 = arith.constant 0 : i32
    return %c0_i32, %c0_i32_0 : i32, i32
  }
  func.func @transform_13(%arg0: i32) -> (i32, i32) {
    %c0_i32 = arith.constant 0 : i32
    %c0_i32_0 = arith.constant 0 : i32
    %c0_i32_1 = arith.constant 0 : i32
    return %c0_i32, %c0_i32_0 : i32, i32
  }
  func.func @transform_14(%arg0: i32) -> (i32, i32, i32) {
    %c0_i32 = arith.constant 0 : i32
    %c0_i32_0 = arith.constant 0 : i32
    %c0_i32_1 = arith.constant 0 : i32
    return %arg0, %c0_i32, %c0_i32_0 : i32, i32, i32
  }
}

module attributes {stable_mosaic.version = 11 : i64} {
  func.func @_swin_block_kernel(%arg0: i32, %arg1: memref<1x64x32xf32, #tpu.memory_space<vmem>>, %arg2: memref<1x32xf32, #tpu.memory_space<vmem>>, %arg3: memref<1x32xf32, #tpu.memory_space<vmem>>, %arg4: memref<32x96xf32, #tpu.memory_space<vmem>>, %arg5: memref<1x96xf32, #tpu.memory_space<vmem>>, %arg6: memref<2x64x64xf32, #tpu.memory_space<vmem>>, %arg7: memref<32x32xf32, #tpu.memory_space<vmem>>, %arg8: memref<1x32xf32, #tpu.memory_space<vmem>>, %arg9: memref<1x32xf32, #tpu.memory_space<vmem>>, %arg10: memref<1x32xf32, #tpu.memory_space<vmem>>, %arg11: memref<32x64xf32, #tpu.memory_space<vmem>>, %arg12: memref<1x64xf32, #tpu.memory_space<vmem>>, %arg13: memref<64x32xf32, #tpu.memory_space<vmem>>, %arg14: memref<1x32xf32, #tpu.memory_space<vmem>>, %arg15: memref<1x64x32xf32, #tpu.memory_space<vmem>>) attributes {dimension_semantics = [#tpu.dimension_semantics<parallel>], iteration_bounds = array<i64: 2>, scalar_prefetch = 0 : i64, scratch_operands = 0 : i64, tpu.core_type = #tpu.core_type<tc>, window_params = [{transform_indices = @transform_0, window_bounds = array<i64: 1, 64, 32>}, {pipeline_mode = #tpu.pipeline_mode<synchronous>, transform_indices = @transform_1, window_bounds = array<i64: 1, 32>}, {pipeline_mode = #tpu.pipeline_mode<synchronous>, transform_indices = @transform_2, window_bounds = array<i64: 1, 32>}, {pipeline_mode = #tpu.pipeline_mode<synchronous>, transform_indices = @transform_3, window_bounds = array<i64: 32, 96>}, {pipeline_mode = #tpu.pipeline_mode<synchronous>, transform_indices = @transform_4, window_bounds = array<i64: 1, 96>}, {pipeline_mode = #tpu.pipeline_mode<synchronous>, transform_indices = @transform_5, window_bounds = array<i64: 2, 64, 64>}, {pipeline_mode = #tpu.pipeline_mode<synchronous>, transform_indices = @transform_6, window_bounds = array<i64: 32, 32>}, {pipeline_mode = #tpu.pipeline_mode<synchronous>, transform_indices = @transform_7, window_bounds = array<i64: 1, 32>}, {pipeline_mode = #tpu.pipeline_mode<synchronous>, transform_indices = @transform_8, window_bounds = array<i64: 1, 32>}, {pipeline_mode = #tpu.pipeline_mode<synchronous>, transform_indices = @transform_9, window_bounds = array<i64: 1, 32>}, {pipeline_mode = #tpu.pipeline_mode<synchronous>, transform_indices = @transform_10, window_bounds = array<i64: 32, 64>}, {pipeline_mode = #tpu.pipeline_mode<synchronous>, transform_indices = @transform_11, window_bounds = array<i64: 1, 64>}, {pipeline_mode = #tpu.pipeline_mode<synchronous>, transform_indices = @transform_12, window_bounds = array<i64: 64, 32>}, {pipeline_mode = #tpu.pipeline_mode<synchronous>, transform_indices = @transform_13, window_bounds = array<i64: 1, 32>}, {transform_indices = @transform_14, window_bounds = array<i64: 1, 64, 32>}]} {
    %c0 = arith.constant 0 : index
    %c0_0 = arith.constant 0 : index
    %c0_1 = arith.constant 0 : index
    %0 = vector.load %arg1[%c0, %c0_0, %c0_1] : memref<1x64x32xf32, #tpu.memory_space<vmem>>, vector<1x64x32xf32>
    %1 = vector.shape_cast %0 : vector<1x64x32xf32> to vector<64x32xf32>
    %cst = arith.constant dense<0.000000e+00> : vector<32xf32>
    %2 = vector.multi_reduction <add>, %1, %cst [0] : vector<64x32xf32> to vector<32xf32>
    %3 = vector.shape_cast %2 : vector<32xf32> to vector<1x32xf32>
    %cst_2 = arith.constant 6.400000e+01 : f32
    %4 = vector.broadcast %cst_2 : f32 to vector<1x32xf32>
    %5 = arith.divf %3, %4 : vector<1x32xf32>
    %6 = vector.broadcast %5 : vector<1x32xf32> to vector<64x32xf32>
    %7 = arith.subf %1, %6 : vector<64x32xf32>
    %8 = arith.mulf %7, %7 : vector<64x32xf32>
    %cst_3 = arith.constant dense<0.000000e+00> : vector<32xf32>
    %9 = vector.multi_reduction <add>, %8, %cst_3 [0] : vector<64x32xf32> to vector<32xf32>
    %10 = vector.shape_cast %9 : vector<32xf32> to vector<1x32xf32>
    %cst_4 = arith.constant 6.400000e+01 : f32
    %11 = vector.broadcast %cst_4 : f32 to vector<1x32xf32>
    %12 = arith.divf %10, %11 : vector<1x32xf32>
    %c0_5 = arith.constant 0 : index
    %c0_6 = arith.constant 0 : index
    %13 = vector.load %arg2[%c0_5, %c0_6] : memref<1x32xf32, #tpu.memory_space<vmem>>, vector<1x32xf32>
    %cst_7 = arith.constant 9.99999974E-6 : f32
    %14 = vector.broadcast %cst_7 : f32 to vector<1x32xf32>
    %15 = arith.addf %12, %14 : vector<1x32xf32>
    %16 = math.rsqrt %15 : vector<1x32xf32>
    %17 = arith.mulf %13, %16 : vector<1x32xf32>
    %18 = vector.broadcast %5 : vector<1x32xf32> to vector<64x32xf32>
    %19 = arith.subf %1, %18 : vector<64x32xf32>
    %20 = vector.broadcast %17 : vector<1x32xf32> to vector<64x32xf32>
    %21 = arith.mulf %19, %20 : vector<64x32xf32>
    %c0_8 = arith.constant 0 : index
    %c0_9 = arith.constant 0 : index
    %22 = vector.load %arg3[%c0_8, %c0_9] : memref<1x32xf32, #tpu.memory_space<vmem>>, vector<1x32xf32>
    %23 = vector.broadcast %22 : vector<1x32xf32> to vector<64x32xf32>
    %24 = arith.addf %21, %23 : vector<64x32xf32>
    %c0_10 = arith.constant 0 : index
    %c0_11 = arith.constant 0 : index
    %25 = vector.load %arg4[%c0_10, %c0_11] : memref<32x96xf32, #tpu.memory_space<vmem>>, vector<32x96xf32>
    %cst_12 = arith.constant dense<0.000000e+00> : vector<64x96xf32>
    %26 = tpu.matmul %24, %25, %cst_12 {dimension_numbers = #tpu.dot_dimension_numbers<[1], [0], [0], [1], [0, 0, 1, 1], [], []>} : vector<64x32xf32>, vector<32x96xf32>, vector<64x96xf32> -> vector<64x96xf32>
    %c0_13 = arith.constant 0 : index
    %c0_14 = arith.constant 0 : index
    %27 = vector.load %arg5[%c0_13, %c0_14] : memref<1x96xf32, #tpu.memory_space<vmem>>, vector<1x96xf32>
    %28 = vector.broadcast %27 : vector<1x96xf32> to vector<64x96xf32>
    %29 = arith.addf %26, %28 : vector<64x96xf32>
    %30 = vector.extract_strided_slice %29 {offsets = [0, 64], sizes = [64, 32], strides = [1, 1]} : vector<64x96xf32> to vector<64x32xf32>
    %31 = tpu.iota {dimensions = array<i32: 1>} : vector<1x32xi32>
    %cst_15 = arith.constant 0.000000e+00 : f32
    %32 = vector.broadcast %cst_15 : f32 to vector<64x32xf32>
    %33 = vector.extract_strided_slice %29 {offsets = [0, 0], sizes = [64, 16], strides = [1, 1]} : vector<64x96xf32> to vector<64x16xf32>
    %34 = vector.extract_strided_slice %29 {offsets = [0, 32], sizes = [64, 16], strides = [1, 1]} : vector<64x96xf32> to vector<64x16xf32>
    "tpu.trace_start"() <{level = 10 : i32, message = "nd,md->nm"}> : () -> ()
    %cst_16 = arith.constant dense<0.000000e+00> : vector<64x64xf32>
    %35 = tpu.matmul %33, %34, %cst_16 {dimension_numbers = #tpu.dot_dimension_numbers<[1], [1], [0], [0], [0, 0, 1, 0], [], []>} : vector<64x16xf32>, vector<64x16xf32>, vector<64x64xf32> -> vector<64x64xf32>
    "tpu.trace_stop"() : () -> ()
    %c0_17 = arith.constant 0 : index
    %c0_18 = arith.constant 0 : index
    %c0_19 = arith.constant 0 : index
    %36 = vector.load %arg6[%c0_17, %c0_18, %c0_19] : memref<2x64x64xf32, #tpu.memory_space<vmem>>, vector<1x64x64xf32>
    %37 = vector.shape_cast %36 : vector<1x64x64xf32> to vector<64x64xf32>
    %38 = arith.addf %35, %37 : vector<64x64xf32>
    %cst_20 = arith.constant dense<0xFF800000> : vector<64xf32>
    %39 = vector.multi_reduction <maximumf>, %38, %cst_20 [1] : vector<64x64xf32> to vector<64xf32>
    %40 = vector.shape_cast %39 : vector<64xf32> to vector<64x1xf32>
    %41 = vector.broadcast %40 : vector<64x1xf32> to vector<64x64xf32>
    %42 = arith.subf %38, %41 : vector<64x64xf32>
    %43 = math.exp %42 : vector<64x64xf32>
    %cst_21 = arith.constant dense<0.000000e+00> : vector<64xf32>
    %44 = vector.multi_reduction <add>, %43, %cst_21 [1] : vector<64x64xf32> to vector<64xf32>
    %45 = vector.shape_cast %44 : vector<64xf32> to vector<64x1xf32>
    %46 = tpu.reciprocal %45 {approx = true} : vector<64x1xf32> -> vector<64x1xf32>
    %47 = vector.broadcast %46 : vector<64x1xf32> to vector<64x64xf32>
    %48 = arith.mulf %43, %47 : vector<64x64xf32>
    %c0_i32 = arith.constant 0 : i32
    %49 = vector.broadcast %c0_i32 : i32 to vector<1x32xi32>
    %50 = arith.cmpi sge, %31, %49 : vector<1x32xi32>
    %c16_i32 = arith.constant 16 : i32
    %51 = vector.broadcast %c16_i32 : i32 to vector<1x32xi32>
    %52 = arith.cmpi slt, %31, %51 : vector<1x32xi32>
    %53 = arith.andi %50, %52 : vector<1x32xi1>
    %cst_22 = arith.constant 0.000000e+00 : f32
    %54 = vector.shape_cast %53 : vector<1x32xi1> to vector<1x32xi1>
    %55 = vector.broadcast %54 : vector<1x32xi1> to vector<64x32xi1>
    %56 = vector.broadcast %cst_22 : f32 to vector<64x32xf32>
    %57 = arith.select %55, %30, %56 : vector<64x32xi1>, vector<64x32xf32>
    %cst_23 = arith.constant dense<0.000000e+00> : vector<64x32xf32>
    %58 = tpu.matmul %48, %57, %cst_23 {dimension_numbers = #tpu.dot_dimension_numbers<[1], [0], [0], [1], [0, 0, 1, 1], [], []>} : vector<64x64xf32>, vector<64x32xf32>, vector<64x32xf32> -> vector<64x32xf32>
    %59 = arith.addf %32, %58 : vector<64x32xf32>
    %60 = vector.extract_strided_slice %29 {offsets = [0, 16], sizes = [64, 16], strides = [1, 1]} : vector<64x96xf32> to vector<64x16xf32>
    %61 = vector.extract_strided_slice %29 {offsets = [0, 48], sizes = [64, 16], strides = [1, 1]} : vector<64x96xf32> to vector<64x16xf32>
    "tpu.trace_start"() <{level = 10 : i32, message = "nd,md->nm"}> : () -> ()
    %cst_24 = arith.constant dense<0.000000e+00> : vector<64x64xf32>
    %62 = tpu.matmul %60, %61, %cst_24 {dimension_numbers = #tpu.dot_dimension_numbers<[1], [1], [0], [0], [0, 0, 1, 0], [], []>} : vector<64x16xf32>, vector<64x16xf32>, vector<64x64xf32> -> vector<64x64xf32>
    "tpu.trace_stop"() : () -> ()
    %c1 = arith.constant 1 : index
    %c0_25 = arith.constant 0 : index
    %c0_26 = arith.constant 0 : index
    %63 = vector.load %arg6[%c1, %c0_25, %c0_26] : memref<2x64x64xf32, #tpu.memory_space<vmem>>, vector<1x64x64xf32>
    %64 = vector.shape_cast %63 : vector<1x64x64xf32> to vector<64x64xf32>
    %65 = arith.addf %62, %64 : vector<64x64xf32>
    %cst_27 = arith.constant dense<0xFF800000> : vector<64xf32>
    %66 = vector.multi_reduction <maximumf>, %65, %cst_27 [1] : vector<64x64xf32> to vector<64xf32>
    %67 = vector.shape_cast %66 : vector<64xf32> to vector<64x1xf32>
    %68 = vector.broadcast %67 : vector<64x1xf32> to vector<64x64xf32>
    %69 = arith.subf %65, %68 : vector<64x64xf32>
    %70 = math.exp %69 : vector<64x64xf32>
    %cst_28 = arith.constant dense<0.000000e+00> : vector<64xf32>
    %71 = vector.multi_reduction <add>, %70, %cst_28 [1] : vector<64x64xf32> to vector<64xf32>
    %72 = vector.shape_cast %71 : vector<64xf32> to vector<64x1xf32>
    %73 = tpu.reciprocal %72 {approx = true} : vector<64x1xf32> -> vector<64x1xf32>
    %74 = vector.broadcast %73 : vector<64x1xf32> to vector<64x64xf32>
    %75 = arith.mulf %70, %74 : vector<64x64xf32>
    %c16_i32_29 = arith.constant 16 : i32
    %76 = vector.broadcast %c16_i32_29 : i32 to vector<1x32xi32>
    %77 = arith.cmpi sge, %31, %76 : vector<1x32xi32>
    %c32_i32 = arith.constant 32 : i32
    %78 = vector.broadcast %c32_i32 : i32 to vector<1x32xi32>
    %79 = arith.cmpi slt, %31, %78 : vector<1x32xi32>
    %80 = arith.andi %77, %79 : vector<1x32xi1>
    %cst_30 = arith.constant 0.000000e+00 : f32
    %81 = vector.shape_cast %80 : vector<1x32xi1> to vector<1x32xi1>
    %82 = vector.broadcast %81 : vector<1x32xi1> to vector<64x32xi1>
    %83 = vector.broadcast %cst_30 : f32 to vector<64x32xf32>
    %84 = arith.select %82, %30, %83 : vector<64x32xi1>, vector<64x32xf32>
    %cst_31 = arith.constant dense<0.000000e+00> : vector<64x32xf32>
    %85 = tpu.matmul %75, %84, %cst_31 {dimension_numbers = #tpu.dot_dimension_numbers<[1], [0], [0], [1], [0, 0, 1, 1], [], []>} : vector<64x64xf32>, vector<64x32xf32>, vector<64x32xf32> -> vector<64x32xf32>
    %86 = arith.addf %59, %85 : vector<64x32xf32>
    %c0_32 = arith.constant 0 : index
    %c0_33 = arith.constant 0 : index
    %87 = vector.load %arg7[%c0_32, %c0_33] : memref<32x32xf32, #tpu.memory_space<vmem>>, vector<32x32xf32>
    %cst_34 = arith.constant dense<0.000000e+00> : vector<64x32xf32>
    %88 = tpu.matmul %86, %87, %cst_34 {dimension_numbers = #tpu.dot_dimension_numbers<[1], [0], [0], [1], [0, 0, 1, 1], [], []>} : vector<64x32xf32>, vector<32x32xf32>, vector<64x32xf32> -> vector<64x32xf32>
    %c0_35 = arith.constant 0 : index
    %c0_36 = arith.constant 0 : index
    %89 = vector.load %arg8[%c0_35, %c0_36] : memref<1x32xf32, #tpu.memory_space<vmem>>, vector<1x32xf32>
    %90 = vector.broadcast %89 : vector<1x32xf32> to vector<64x32xf32>
    %91 = arith.addf %88, %90 : vector<64x32xf32>
    %92 = arith.addf %1, %91 : vector<64x32xf32>
    %cst_37 = arith.constant dense<0.000000e+00> : vector<32xf32>
    %93 = vector.multi_reduction <add>, %92, %cst_37 [0] : vector<64x32xf32> to vector<32xf32>
    %94 = vector.shape_cast %93 : vector<32xf32> to vector<1x32xf32>
    %cst_38 = arith.constant 6.400000e+01 : f32
    %95 = vector.broadcast %cst_38 : f32 to vector<1x32xf32>
    %96 = arith.divf %94, %95 : vector<1x32xf32>
    %97 = vector.broadcast %96 : vector<1x32xf32> to vector<64x32xf32>
    %98 = arith.subf %92, %97 : vector<64x32xf32>
    %99 = arith.mulf %98, %98 : vector<64x32xf32>
    %cst_39 = arith.constant dense<0.000000e+00> : vector<32xf32>
    %100 = vector.multi_reduction <add>, %99, %cst_39 [0] : vector<64x32xf32> to vector<32xf32>
    %101 = vector.shape_cast %100 : vector<32xf32> to vector<1x32xf32>
    %cst_40 = arith.constant 6.400000e+01 : f32
    %102 = vector.broadcast %cst_40 : f32 to vector<1x32xf32>
    %103 = arith.divf %101, %102 : vector<1x32xf32>
    %c0_41 = arith.constant 0 : index
    %c0_42 = arith.constant 0 : index
    %104 = vector.load %arg9[%c0_41, %c0_42] : memref<1x32xf32, #tpu.memory_space<vmem>>, vector<1x32xf32>
    %cst_43 = arith.constant 9.99999974E-6 : f32
    %105 = vector.broadcast %cst_43 : f32 to vector<1x32xf32>
    %106 = arith.addf %103, %105 : vector<1x32xf32>
    %107 = math.rsqrt %106 : vector<1x32xf32>
    %108 = arith.mulf %104, %107 : vector<1x32xf32>
    %109 = vector.broadcast %96 : vector<1x32xf32> to vector<64x32xf32>
    %110 = arith.subf %92, %109 : vector<64x32xf32>
    %111 = vector.broadcast %108 : vector<1x32xf32> to vector<64x32xf32>
    %112 = arith.mulf %110, %111 : vector<64x32xf32>
    %c0_44 = arith.constant 0 : index
    %c0_45 = arith.constant 0 : index
    %113 = vector.load %arg10[%c0_44, %c0_45] : memref<1x32xf32, #tpu.memory_space<vmem>>, vector<1x32xf32>
    %114 = vector.broadcast %113 : vector<1x32xf32> to vector<64x32xf32>
    %115 = arith.addf %112, %114 : vector<64x32xf32>
    %c0_46 = arith.constant 0 : index
    %c0_47 = arith.constant 0 : index
    %116 = vector.load %arg11[%c0_46, %c0_47] : memref<32x64xf32, #tpu.memory_space<vmem>>, vector<32x64xf32>
    %cst_48 = arith.constant dense<0.000000e+00> : vector<64x64xf32>
    %117 = tpu.matmul %115, %116, %cst_48 {dimension_numbers = #tpu.dot_dimension_numbers<[1], [0], [0], [1], [0, 0, 1, 1], [], []>} : vector<64x32xf32>, vector<32x64xf32>, vector<64x64xf32> -> vector<64x64xf32>
    %c0_49 = arith.constant 0 : index
    %c0_50 = arith.constant 0 : index
    %118 = vector.load %arg12[%c0_49, %c0_50] : memref<1x64xf32, #tpu.memory_space<vmem>>, vector<1x64xf32>
    %119 = vector.broadcast %118 : vector<1x64xf32> to vector<64x64xf32>
    %120 = arith.addf %117, %119 : vector<64x64xf32>
    %121 = arith.mulf %120, %120 : vector<64x64xf32>
    %122 = arith.mulf %120, %121 : vector<64x64xf32>
    %cst_51 = arith.constant 4.471500e-02 : f32
    %123 = vector.broadcast %cst_51 : f32 to vector<64x64xf32>
    %124 = arith.mulf %123, %122 : vector<64x64xf32>
    %125 = arith.addf %120, %124 : vector<64x64xf32>
    %cst_52 = arith.constant 0.797884583 : f32
    %126 = vector.broadcast %cst_52 : f32 to vector<64x64xf32>
    %127 = arith.mulf %126, %125 : vector<64x64xf32>
    %128 = math.tanh %127 : vector<64x64xf32>
    %cst_53 = arith.constant 1.000000e+00 : f32
    %129 = vector.broadcast %cst_53 : f32 to vector<64x64xf32>
    %130 = arith.addf %129, %128 : vector<64x64xf32>
    %cst_54 = arith.constant 5.000000e-01 : f32
    %131 = vector.broadcast %cst_54 : f32 to vector<64x64xf32>
    %132 = arith.mulf %131, %130 : vector<64x64xf32>
    %133 = arith.mulf %120, %132 : vector<64x64xf32>
    %c0_55 = arith.constant 0 : index
    %c0_56 = arith.constant 0 : index
    %134 = vector.load %arg13[%c0_55, %c0_56] : memref<64x32xf32, #tpu.memory_space<vmem>>, vector<64x32xf32>
    %cst_57 = arith.constant dense<0.000000e+00> : vector<64x32xf32>
    %135 = tpu.matmul %133, %134, %cst_57 {dimension_numbers = #tpu.dot_dimension_numbers<[1], [0], [0], [1], [0, 0, 1, 1], [], []>} : vector<64x64xf32>, vector<64x32xf32>, vector<64x32xf32> -> vector<64x32xf32>
    %c0_58 = arith.constant 0 : index
    %c0_59 = arith.constant 0 : index
    %136 = vector.load %arg14[%c0_58, %c0_59] : memref<1x32xf32, #tpu.memory_space<vmem>>, vector<1x32xf32>
    %137 = vector.broadcast %136 : vector<1x32xf32> to vector<64x32xf32>
    %138 = arith.addf %135, %137 : vector<64x32xf32>
    %139 = arith.addf %92, %138 : vector<64x32xf32>
    %c0_60 = arith.constant 0 : index
    %c0_61 = arith.constant 0 : index
    %c0_62 = arith.constant 0 : index
    %140 = vector.load %arg15[%c0_60, %c0_61, %c0_62] : memref<1x64x32xf32, #tpu.memory_space<vmem>>, vector<1x64x32xf32>
    %141 = vector.shape_cast %140 : vector<1x64x32xf32> to vector<64x32xf32>
    %142 = vector.shape_cast %139 : vector<64x32xf32> to vector<1x64x32xf32>
    tpu.vector_store %arg15[%c0_60, %c0_61, %c0_62], %142 {strides = array<i32>} : memref<1x64x32xf32, #tpu.memory_space<vmem>>, vector<1x64x32xf32>,
    return
  }
  func.func @transform_0(%arg0: i32) -> (i32, i32, i32) {
    %c0_i32 = arith.constant 0 : i32
    %c0_i32_0 = arith.constant 0 : i32
    %c0_i32_1 = arith.constant 0 : i32
    return %arg0, %c0_i32, %c0_i32_0 : i32, i32, i32
  }
  func.func @transform_1(%arg0: i32) -> (i32, i32) {
    %c0_i32 = arith.constant 0 : i32
    %c0_i32_0 = arith.constant 0 : i32
    %c0_i32_1 = arith.constant 0 : i32
    return %c0_i32, %c0_i32_0 : i32, i32
  }
  func.func @transform_2(%arg0: i32) -> (i32, i32) {
    %c0_i32 = arith.constant 0 : i32
    %c0_i32_0 = arith.constant 0 : i32
    %c0_i32_1 = arith.constant 0 : i32
    return %c0_i32, %c0_i32_0 : i32, i32
  }
  func.func @transform_3(%arg0: i32) -> (i32, i32) {
    %c0_i32 = arith.constant 0 : i32
    %c0_i32_0 = arith.constant 0 : i32
    %c0_i32_1 = arith.constant 0 : i32
    return %c0_i32, %c0_i32_0 : i32, i32
  }
  func.func @transform_4(%arg0: i32) -> (i32, i32) {
    %c0_i32 = arith.constant 0 : i32
    %c0_i32_0 = arith.constant 0 : i32
    %c0_i32_1 = arith.constant 0 : i32
    return %c0_i32, %c0_i32_0 : i32, i32
  }
  func.func @transform_5(%arg0: i32) -> (i32, i32, i32) {
    %c0_i32 = arith.constant 0 : i32
    %c0_i32_0 = arith.constant 0 : i32
    %c0_i32_1 = arith.constant 0 : i32
    %c0_i32_2 = arith.constant 0 : i32
    return %c0_i32, %c0_i32_0, %c0_i32_1 : i32, i32, i32
  }
  func.func @transform_6(%arg0: i32) -> (i32, i32) {
    %c0_i32 = arith.constant 0 : i32
    %c0_i32_0 = arith.constant 0 : i32
    %c0_i32_1 = arith.constant 0 : i32
    return %c0_i32, %c0_i32_0 : i32, i32
  }
  func.func @transform_7(%arg0: i32) -> (i32, i32) {
    %c0_i32 = arith.constant 0 : i32
    %c0_i32_0 = arith.constant 0 : i32
    %c0_i32_1 = arith.constant 0 : i32
    return %c0_i32, %c0_i32_0 : i32, i32
  }
  func.func @transform_8(%arg0: i32) -> (i32, i32) {
    %c0_i32 = arith.constant 0 : i32
    %c0_i32_0 = arith.constant 0 : i32
    %c0_i32_1 = arith.constant 0 : i32
    return %c0_i32, %c0_i32_0 : i32, i32
  }
  func.func @transform_9(%arg0: i32) -> (i32, i32) {
    %c0_i32 = arith.constant 0 : i32
    %c0_i32_0 = arith.constant 0 : i32
    %c0_i32_1 = arith.constant 0 : i32
    return %c0_i32, %c0_i32_0 : i32, i32
  }
  func.func @transform_10(%arg0: i32) -> (i32, i32) {
    %c0_i32 = arith.constant 0 : i32
    %c0_i32_0 = arith.constant 0 : i32
    %c0_i32_1 = arith.constant 0 : i32
    return %c0_i32, %c0_i32_0 : i32, i32
  }
  func.func @transform_11(%arg0: i32) -> (i32, i32) {
    %c0_i32 = arith.constant 0 : i32
    %c0_i32_0 = arith.constant 0 : i32
    %c0_i32_1 = arith.constant 0 : i32
    return %c0_i32, %c0_i32_0 : i32, i32
  }
  func.func @transform_12(%arg0: i32) -> (i32, i32) {
    %c0_i32 = arith.constant 0 : i32
    %c0_i32_0 = arith.constant 0 : i32
    %c0_i32_1 = arith.constant 0 : i32
    return %c0_i32, %c0_i32_0 : i32, i32
  }
  func.func @transform_13(%arg0: i32) -> (i32, i32) {
    %c0_i32 = arith.constant 0 : i32
    %c0_i32_0 = arith.constant 0 : i32
    %c0_i32_1 = arith.constant 0 : i32
    return %c0_i32, %c0_i32_0 : i32, i32
  }
  func.func @transform_14(%arg0: i32) -> (i32, i32, i32) {
    %c0_i32 = arith.constant 0 : i32
    %c0_i32_0 = arith.constant 0 : i32
    %c0_i32_1 = arith.constant 0 : i32
    return %arg0, %c0_i32, %c0_i32_0 : i32, i32, i32
  }
}

module attributes {stable_mosaic.version = 11 : i64} {
  func.func @_adain_linear_kernel(%arg0: i32, %arg1: memref<1x16x128xf32, #tpu.memory_space<vmem>>, %arg2: memref<1x128xf32, #tpu.memory_space<vmem>>, %arg3: memref<1x128xf32, #tpu.memory_space<vmem>>, %arg4: memref<128x64xf32, #tpu.memory_space<vmem>>, %arg5: memref<1x64xf32, #tpu.memory_space<vmem>>, %arg6: memref<1x16x64xf32, #tpu.memory_space<vmem>>) attributes {dimension_semantics = [#tpu.dimension_semantics<parallel>], iteration_bounds = array<i64: 2>, scalar_prefetch = 0 : i64, scratch_operands = 0 : i64, tpu.core_type = #tpu.core_type<tc>, window_params = [{transform_indices = @transform_0, window_bounds = array<i64: 1, 16, 128>}, {pipeline_mode = #tpu.pipeline_mode<synchronous>, transform_indices = @transform_1, window_bounds = array<i64: 1, 128>}, {pipeline_mode = #tpu.pipeline_mode<synchronous>, transform_indices = @transform_2, window_bounds = array<i64: 1, 128>}, {pipeline_mode = #tpu.pipeline_mode<synchronous>, transform_indices = @transform_3, window_bounds = array<i64: 128, 64>}, {pipeline_mode = #tpu.pipeline_mode<synchronous>, transform_indices = @transform_4, window_bounds = array<i64: 1, 64>}, {transform_indices = @transform_5, window_bounds = array<i64: 1, 16, 64>}]} {
    %c0 = arith.constant 0 : index
    %c0_0 = arith.constant 0 : index
    %c0_1 = arith.constant 0 : index
    %0 = vector.load %arg1[%c0, %c0_0, %c0_1] : memref<1x16x128xf32, #tpu.memory_space<vmem>>, vector<1x16x128xf32>
    %1 = vector.shape_cast %0 : vector<1x16x128xf32> to vector<16x128xf32>
    %cst = arith.constant dense<0.000000e+00> : vector<128xf32>
    %2 = vector.multi_reduction <add>, %1, %cst [0] : vector<16x128xf32> to vector<128xf32>
    %3 = vector.shape_cast %2 : vector<128xf32> to vector<1x128xf32>
    %cst_2 = arith.constant 1.600000e+01 : f32
    %4 = vector.broadcast %cst_2 : f32 to vector<1x128xf32>
    %5 = arith.divf %3, %4 : vector<1x128xf32>
    %6 = vector.broadcast %5 : vector<1x128xf32> to vector<16x128xf32>
    %7 = arith.subf %1, %6 : vector<16x128xf32>
    %8 = arith.mulf %7, %7 : vector<16x128xf32>
    %cst_3 = arith.constant dense<0.000000e+00> : vector<128xf32>
    %9 = vector.multi_reduction <add>, %8, %cst_3 [0] : vector<16x128xf32> to vector<128xf32>
    %10 = vector.shape_cast %9 : vector<128xf32> to vector<1x128xf32>
    %cst_4 = arith.constant 1.600000e+01 : f32
    %11 = vector.broadcast %cst_4 : f32 to vector<1x128xf32>
    %12 = arith.divf %10, %11 : vector<1x128xf32>
    %c0_5 = arith.constant 0 : index
    %c0_6 = arith.constant 0 : index
    %13 = vector.load %arg2[%c0_5, %c0_6] : memref<1x128xf32, #tpu.memory_space<vmem>>, vector<1x128xf32>
    %cst_7 = arith.constant 9.99999974E-6 : f32
    %14 = vector.broadcast %cst_7 : f32 to vector<1x128xf32>
    %15 = arith.addf %12, %14 : vector<1x128xf32>
    %16 = math.rsqrt %15 : vector<1x128xf32>
    %17 = arith.mulf %13, %16 : vector<1x128xf32>
    %18 = vector.broadcast %5 : vector<1x128xf32> to vector<16x128xf32>
    %19 = arith.subf %1, %18 : vector<16x128xf32>
    %20 = vector.broadcast %17 : vector<1x128xf32> to vector<16x128xf32>
    %21 = arith.mulf %19, %20 : vector<16x128xf32>
    %c0_8 = arith.constant 0 : index
    %c0_9 = arith.constant 0 : index
    %22 = vector.load %arg3[%c0_8, %c0_9] : memref<1x128xf32, #tpu.memory_space<vmem>>, vector<1x128xf32>
    %23 = vector.broadcast %22 : vector<1x128xf32> to vector<16x128xf32>
    %24 = arith.addf %21, %23 : vector<16x128xf32>
    %c0_10 = arith.constant 0 : index
    %c0_11 = arith.constant 0 : index
    %25 = vector.load %arg4[%c0_10, %c0_11] : memref<128x64xf32, #tpu.memory_space<vmem>>, vector<128x64xf32>
    %cst_12 = arith.constant dense<0.000000e+00> : vector<16x64xf32>
    %26 = tpu.matmul %24, %25, %cst_12 {dimension_numbers = #tpu.dot_dimension_numbers<[1], [0], [0], [1], [0, 0, 1, 1], [], []>} : vector<16x128xf32>, vector<128x64xf32>, vector<16x64xf32> -> vector<16x64xf32>
    %c0_13 = arith.constant 0 : index
    %c0_14 = arith.constant 0 : index
    %27 = vector.load %arg5[%c0_13, %c0_14] : memref<1x64xf32, #tpu.memory_space<vmem>>, vector<1x64xf32>
    %28 = vector.broadcast %27 : vector<1x64xf32> to vector<16x64xf32>
    %29 = arith.addf %26, %28 : vector<16x64xf32>
    %c0_15 = arith.constant 0 : index
    %c0_16 = arith.constant 0 : index
    %c0_17 = arith.constant 0 : index
    %30 = vector.load %arg6[%c0_15, %c0_16, %c0_17] : memref<1x16x64xf32, #tpu.memory_space<vmem>>, vector<1x16x64xf32>
    %31 = vector.shape_cast %30 : vector<1x16x64xf32> to vector<16x64xf32>
    %32 = vector.shape_cast %29 : vector<16x64xf32> to vector<1x16x64xf32>
    tpu.vector_store %arg6[%c0_15, %c0_16, %c0_17], %32 {strides = array<i32>} : memref<1x16x64xf32, #tpu.memory_space<vmem>>, vector<1x16x64xf32>,
    return
  }
  func.func @transform_0(%arg0: i32) -> (i32, i32, i32) {
    %c0_i32 = arith.constant 0 : i32
    %c0_i32_0 = arith.constant 0 : i32
    %c0_i32_1 = arith.constant 0 : i32
    return %arg0, %c0_i32, %c0_i32_0 : i32, i32, i32
  }
  func.func @transform_1(%arg0: i32) -> (i32, i32) {
    %c0_i32 = arith.constant 0 : i32
    %c0_i32_0 = arith.constant 0 : i32
    %c0_i32_1 = arith.constant 0 : i32
    return %c0_i32, %c0_i32_0 : i32, i32
  }
  func.func @transform_2(%arg0: i32) -> (i32, i32) {
    %c0_i32 = arith.constant 0 : i32
    %c0_i32_0 = arith.constant 0 : i32
    %c0_i32_1 = arith.constant 0 : i32
    return %c0_i32, %c0_i32_0 : i32, i32
  }
  func.func @transform_3(%arg0: i32) -> (i32, i32) {
    %c0_i32 = arith.constant 0 : i32
    %c0_i32_0 = arith.constant 0 : i32
    %c0_i32_1 = arith.constant 0 : i32
    return %c0_i32, %c0_i32_0 : i32, i32
  }
  func.func @transform_4(%arg0: i32) -> (i32, i32) {
    %c0_i32 = arith.constant 0 : i32
    %c0_i32_0 = arith.constant 0 : i32
    %c0_i32_1 = arith.constant 0 : i32
    return %c0_i32, %c0_i32_0 : i32, i32
  }
  func.func @transform_5(%arg0: i32) -> (i32, i32, i32) {
    %c0_i32 = arith.constant 0 : i32
    %c0_i32_0 = arith.constant 0 : i32
    %c0_i32_1 = arith.constant 0 : i32
    return %arg0, %c0_i32, %c0_i32_0 : i32, i32, i32
  }
}

module attributes {stable_mosaic.version = 11 : i64} {
  func.func @_swin_block_kernel(%arg0: i32, %arg1: memref<1x16x64xf32, #tpu.memory_space<vmem>>, %arg2: memref<1x64xf32, #tpu.memory_space<vmem>>, %arg3: memref<1x64xf32, #tpu.memory_space<vmem>>, %arg4: memref<64x192xf32, #tpu.memory_space<vmem>>, %arg5: memref<1x192xf32, #tpu.memory_space<vmem>>, %arg6: memref<4x16x16xf32, #tpu.memory_space<vmem>>, %arg7: memref<64x64xf32, #tpu.memory_space<vmem>>, %arg8: memref<1x64xf32, #tpu.memory_space<vmem>>, %arg9: memref<1x64xf32, #tpu.memory_space<vmem>>, %arg10: memref<1x64xf32, #tpu.memory_space<vmem>>, %arg11: memref<64x128xf32, #tpu.memory_space<vmem>>, %arg12: memref<1x128xf32, #tpu.memory_space<vmem>>, %arg13: memref<128x64xf32, #tpu.memory_space<vmem>>, %arg14: memref<1x64xf32, #tpu.memory_space<vmem>>, %arg15: memref<1x16x64xf32, #tpu.memory_space<vmem>>) attributes {dimension_semantics = [#tpu.dimension_semantics<parallel>], iteration_bounds = array<i64: 2>, scalar_prefetch = 0 : i64, scratch_operands = 0 : i64, tpu.core_type = #tpu.core_type<tc>, window_params = [{transform_indices = @transform_0, window_bounds = array<i64: 1, 16, 64>}, {pipeline_mode = #tpu.pipeline_mode<synchronous>, transform_indices = @transform_1, window_bounds = array<i64: 1, 64>}, {pipeline_mode = #tpu.pipeline_mode<synchronous>, transform_indices = @transform_2, window_bounds = array<i64: 1, 64>}, {pipeline_mode = #tpu.pipeline_mode<synchronous>, transform_indices = @transform_3, window_bounds = array<i64: 64, 192>}, {pipeline_mode = #tpu.pipeline_mode<synchronous>, transform_indices = @transform_4, window_bounds = array<i64: 1, 192>}, {pipeline_mode = #tpu.pipeline_mode<synchronous>, transform_indices = @transform_5, window_bounds = array<i64: 4, 16, 16>}, {pipeline_mode = #tpu.pipeline_mode<synchronous>, transform_indices = @transform_6, window_bounds = array<i64: 64, 64>}, {pipeline_mode = #tpu.pipeline_mode<synchronous>, transform_indices = @transform_7, window_bounds = array<i64: 1, 64>}, {pipeline_mode = #tpu.pipeline_mode<synchronous>, transform_indices = @transform_8, window_bounds = array<i64: 1, 64>}, {pipeline_mode = #tpu.pipeline_mode<synchronous>, transform_indices = @transform_9, window_bounds = array<i64: 1, 64>}, {pipeline_mode = #tpu.pipeline_mode<synchronous>, transform_indices = @transform_10, window_bounds = array<i64: 64, 128>}, {pipeline_mode = #tpu.pipeline_mode<synchronous>, transform_indices = @transform_11, window_bounds = array<i64: 1, 128>}, {pipeline_mode = #tpu.pipeline_mode<synchronous>, transform_indices = @transform_12, window_bounds = array<i64: 128, 64>}, {pipeline_mode = #tpu.pipeline_mode<synchronous>, transform_indices = @transform_13, window_bounds = array<i64: 1, 64>}, {transform_indices = @transform_14, window_bounds = array<i64: 1, 16, 64>}]} {
    %c0 = arith.constant 0 : index
    %c0_0 = arith.constant 0 : index
    %c0_1 = arith.constant 0 : index
    %0 = vector.load %arg1[%c0, %c0_0, %c0_1] : memref<1x16x64xf32, #tpu.memory_space<vmem>>, vector<1x16x64xf32>
    %1 = vector.shape_cast %0 : vector<1x16x64xf32> to vector<16x64xf32>
    %cst = arith.constant dense<0.000000e+00> : vector<64xf32>
    %2 = vector.multi_reduction <add>, %1, %cst [0] : vector<16x64xf32> to vector<64xf32>
    %3 = vector.shape_cast %2 : vector<64xf32> to vector<1x64xf32>
    %cst_2 = arith.constant 1.600000e+01 : f32
    %4 = vector.broadcast %cst_2 : f32 to vector<1x64xf32>
    %5 = arith.divf %3, %4 : vector<1x64xf32>
    %6 = vector.broadcast %5 : vector<1x64xf32> to vector<16x64xf32>
    %7 = arith.subf %1, %6 : vector<16x64xf32>
    %8 = arith.mulf %7, %7 : vector<16x64xf32>
    %cst_3 = arith.constant dense<0.000000e+00> : vector<64xf32>
    %9 = vector.multi_reduction <add>, %8, %cst_3 [0] : vector<16x64xf32> to vector<64xf32>
    %10 = vector.shape_cast %9 : vector<64xf32> to vector<1x64xf32>
    %cst_4 = arith.constant 1.600000e+01 : f32
    %11 = vector.broadcast %cst_4 : f32 to vector<1x64xf32>
    %12 = arith.divf %10, %11 : vector<1x64xf32>
    %c0_5 = arith.constant 0 : index
    %c0_6 = arith.constant 0 : index
    %13 = vector.load %arg2[%c0_5, %c0_6] : memref<1x64xf32, #tpu.memory_space<vmem>>, vector<1x64xf32>
    %cst_7 = arith.constant 9.99999974E-6 : f32
    %14 = vector.broadcast %cst_7 : f32 to vector<1x64xf32>
    %15 = arith.addf %12, %14 : vector<1x64xf32>
    %16 = math.rsqrt %15 : vector<1x64xf32>
    %17 = arith.mulf %13, %16 : vector<1x64xf32>
    %18 = vector.broadcast %5 : vector<1x64xf32> to vector<16x64xf32>
    %19 = arith.subf %1, %18 : vector<16x64xf32>
    %20 = vector.broadcast %17 : vector<1x64xf32> to vector<16x64xf32>
    %21 = arith.mulf %19, %20 : vector<16x64xf32>
    %c0_8 = arith.constant 0 : index
    %c0_9 = arith.constant 0 : index
    %22 = vector.load %arg3[%c0_8, %c0_9] : memref<1x64xf32, #tpu.memory_space<vmem>>, vector<1x64xf32>
    %23 = vector.broadcast %22 : vector<1x64xf32> to vector<16x64xf32>
    %24 = arith.addf %21, %23 : vector<16x64xf32>
    %c0_10 = arith.constant 0 : index
    %c0_11 = arith.constant 0 : index
    %25 = vector.load %arg4[%c0_10, %c0_11] : memref<64x192xf32, #tpu.memory_space<vmem>>, vector<64x192xf32>
    %cst_12 = arith.constant dense<0.000000e+00> : vector<16x192xf32>
    %26 = tpu.matmul %24, %25, %cst_12 {dimension_numbers = #tpu.dot_dimension_numbers<[1], [0], [0], [1], [0, 0, 1, 1], [], []>} : vector<16x64xf32>, vector<64x192xf32>, vector<16x192xf32> -> vector<16x192xf32>
    %c0_13 = arith.constant 0 : index
    %c0_14 = arith.constant 0 : index
    %27 = vector.load %arg5[%c0_13, %c0_14] : memref<1x192xf32, #tpu.memory_space<vmem>>, vector<1x192xf32>
    %28 = vector.broadcast %27 : vector<1x192xf32> to vector<16x192xf32>
    %29 = arith.addf %26, %28 : vector<16x192xf32>
    %30 = vector.extract_strided_slice %29 {offsets = [0, 128], sizes = [16, 64], strides = [1, 1]} : vector<16x192xf32> to vector<16x64xf32>
    %31 = tpu.iota {dimensions = array<i32: 1>} : vector<1x64xi32>
    %cst_15 = arith.constant 0.000000e+00 : f32
    %32 = vector.broadcast %cst_15 : f32 to vector<16x64xf32>
    %33 = vector.extract_strided_slice %29 {offsets = [0, 0], sizes = [16, 16], strides = [1, 1]} : vector<16x192xf32> to vector<16x16xf32>
    %34 = vector.extract_strided_slice %29 {offsets = [0, 64], sizes = [16, 16], strides = [1, 1]} : vector<16x192xf32> to vector<16x16xf32>
    "tpu.trace_start"() <{level = 10 : i32, message = "nd,md->nm"}> : () -> ()
    %cst_16 = arith.constant dense<0.000000e+00> : vector<16x16xf32>
    %35 = tpu.matmul %33, %34, %cst_16 {dimension_numbers = #tpu.dot_dimension_numbers<[1], [1], [0], [0], [0, 0, 1, 0], [], []>} : vector<16x16xf32>, vector<16x16xf32>, vector<16x16xf32> -> vector<16x16xf32>
    "tpu.trace_stop"() : () -> ()
    %c0_17 = arith.constant 0 : index
    %c0_18 = arith.constant 0 : index
    %c0_19 = arith.constant 0 : index
    %36 = vector.load %arg6[%c0_17, %c0_18, %c0_19] : memref<4x16x16xf32, #tpu.memory_space<vmem>>, vector<1x16x16xf32>
    %37 = vector.shape_cast %36 : vector<1x16x16xf32> to vector<16x16xf32>
    %38 = arith.addf %35, %37 : vector<16x16xf32>
    %cst_20 = arith.constant dense<0xFF800000> : vector<16xf32>
    %39 = vector.multi_reduction <maximumf>, %38, %cst_20 [1] : vector<16x16xf32> to vector<16xf32>
    %40 = vector.shape_cast %39 : vector<16xf32> to vector<16x1xf32>
    %41 = vector.broadcast %40 : vector<16x1xf32> to vector<16x16xf32>
    %42 = arith.subf %38, %41 : vector<16x16xf32>
    %43 = math.exp %42 : vector<16x16xf32>
    %cst_21 = arith.constant dense<0.000000e+00> : vector<16xf32>
    %44 = vector.multi_reduction <add>, %43, %cst_21 [1] : vector<16x16xf32> to vector<16xf32>
    %45 = vector.shape_cast %44 : vector<16xf32> to vector<16x1xf32>
    %46 = tpu.reciprocal %45 {approx = true} : vector<16x1xf32> -> vector<16x1xf32>
    %47 = vector.broadcast %46 : vector<16x1xf32> to vector<16x16xf32>
    %48 = arith.mulf %43, %47 : vector<16x16xf32>
    %c0_i32 = arith.constant 0 : i32
    %49 = vector.broadcast %c0_i32 : i32 to vector<1x64xi32>
    %50 = arith.cmpi sge, %31, %49 : vector<1x64xi32>
    %c16_i32 = arith.constant 16 : i32
    %51 = vector.broadcast %c16_i32 : i32 to vector<1x64xi32>
    %52 = arith.cmpi slt, %31, %51 : vector<1x64xi32>
    %53 = arith.andi %50, %52 : vector<1x64xi1>
    %cst_22 = arith.constant 0.000000e+00 : f32
    %54 = vector.shape_cast %53 : vector<1x64xi1> to vector<1x64xi1>
    %55 = vector.broadcast %54 : vector<1x64xi1> to vector<16x64xi1>
    %56 = vector.broadcast %cst_22 : f32 to vector<16x64xf32>
    %57 = arith.select %55, %30, %56 : vector<16x64xi1>, vector<16x64xf32>
    %cst_23 = arith.constant dense<0.000000e+00> : vector<16x64xf32>
    %58 = tpu.matmul %48, %57, %cst_23 {dimension_numbers = #tpu.dot_dimension_numbers<[1], [0], [0], [1], [0, 0, 1, 1], [], []>} : vector<16x16xf32>, vector<16x64xf32>, vector<16x64xf32> -> vector<16x64xf32>
    %59 = arith.addf %32, %58 : vector<16x64xf32>
    %60 = vector.extract_strided_slice %29 {offsets = [0, 16], sizes = [16, 16], strides = [1, 1]} : vector<16x192xf32> to vector<16x16xf32>
    %61 = vector.extract_strided_slice %29 {offsets = [0, 80], sizes = [16, 16], strides = [1, 1]} : vector<16x192xf32> to vector<16x16xf32>
    "tpu.trace_start"() <{level = 10 : i32, message = "nd,md->nm"}> : () -> ()
    %cst_24 = arith.constant dense<0.000000e+00> : vector<16x16xf32>
    %62 = tpu.matmul %60, %61, %cst_24 {dimension_numbers = #tpu.dot_dimension_numbers<[1], [1], [0], [0], [0, 0, 1, 0], [], []>} : vector<16x16xf32>, vector<16x16xf32>, vector<16x16xf32> -> vector<16x16xf32>
    "tpu.trace_stop"() : () -> ()
    %c1 = arith.constant 1 : index
    %c0_25 = arith.constant 0 : index
    %c0_26 = arith.constant 0 : index
    %63 = vector.load %arg6[%c1, %c0_25, %c0_26] : memref<4x16x16xf32, #tpu.memory_space<vmem>>, vector<1x16x16xf32>
    %64 = vector.shape_cast %63 : vector<1x16x16xf32> to vector<16x16xf32>
    %65 = arith.addf %62, %64 : vector<16x16xf32>
    %cst_27 = arith.constant dense<0xFF800000> : vector<16xf32>
    %66 = vector.multi_reduction <maximumf>, %65, %cst_27 [1] : vector<16x16xf32> to vector<16xf32>
    %67 = vector.shape_cast %66 : vector<16xf32> to vector<16x1xf32>
    %68 = vector.broadcast %67 : vector<16x1xf32> to vector<16x16xf32>
    %69 = arith.subf %65, %68 : vector<16x16xf32>
    %70 = math.exp %69 : vector<16x16xf32>
    %cst_28 = arith.constant dense<0.000000e+00> : vector<16xf32>
    %71 = vector.multi_reduction <add>, %70, %cst_28 [1] : vector<16x16xf32> to vector<16xf32>
    %72 = vector.shape_cast %71 : vector<16xf32> to vector<16x1xf32>
    %73 = tpu.reciprocal %72 {approx = true} : vector<16x1xf32> -> vector<16x1xf32>
    %74 = vector.broadcast %73 : vector<16x1xf32> to vector<16x16xf32>
    %75 = arith.mulf %70, %74 : vector<16x16xf32>
    %c16_i32_29 = arith.constant 16 : i32
    %76 = vector.broadcast %c16_i32_29 : i32 to vector<1x64xi32>
    %77 = arith.cmpi sge, %31, %76 : vector<1x64xi32>
    %c32_i32 = arith.constant 32 : i32
    %78 = vector.broadcast %c32_i32 : i32 to vector<1x64xi32>
    %79 = arith.cmpi slt, %31, %78 : vector<1x64xi32>
    %80 = arith.andi %77, %79 : vector<1x64xi1>
    %cst_30 = arith.constant 0.000000e+00 : f32
    %81 = vector.shape_cast %80 : vector<1x64xi1> to vector<1x64xi1>
    %82 = vector.broadcast %81 : vector<1x64xi1> to vector<16x64xi1>
    %83 = vector.broadcast %cst_30 : f32 to vector<16x64xf32>
    %84 = arith.select %82, %30, %83 : vector<16x64xi1>, vector<16x64xf32>
    %cst_31 = arith.constant dense<0.000000e+00> : vector<16x64xf32>
    %85 = tpu.matmul %75, %84, %cst_31 {dimension_numbers = #tpu.dot_dimension_numbers<[1], [0], [0], [1], [0, 0, 1, 1], [], []>} : vector<16x16xf32>, vector<16x64xf32>, vector<16x64xf32> -> vector<16x64xf32>
    %86 = arith.addf %59, %85 : vector<16x64xf32>
    %87 = vector.extract_strided_slice %29 {offsets = [0, 32], sizes = [16, 16], strides = [1, 1]} : vector<16x192xf32> to vector<16x16xf32>
    %88 = vector.extract_strided_slice %29 {offsets = [0, 96], sizes = [16, 16], strides = [1, 1]} : vector<16x192xf32> to vector<16x16xf32>
    "tpu.trace_start"() <{level = 10 : i32, message = "nd,md->nm"}> : () -> ()
    %cst_32 = arith.constant dense<0.000000e+00> : vector<16x16xf32>
    %89 = tpu.matmul %87, %88, %cst_32 {dimension_numbers = #tpu.dot_dimension_numbers<[1], [1], [0], [0], [0, 0, 1, 0], [], []>} : vector<16x16xf32>, vector<16x16xf32>, vector<16x16xf32> -> vector<16x16xf32>
    "tpu.trace_stop"() : () -> ()
    %c2 = arith.constant 2 : index
    %c0_33 = arith.constant 0 : index
    %c0_34 = arith.constant 0 : index
    %90 = vector.load %arg6[%c2, %c0_33, %c0_34] : memref<4x16x16xf32, #tpu.memory_space<vmem>>, vector<1x16x16xf32>
    %91 = vector.shape_cast %90 : vector<1x16x16xf32> to vector<16x16xf32>
    %92 = arith.addf %89, %91 : vector<16x16xf32>
    %cst_35 = arith.constant dense<0xFF800000> : vector<16xf32>
    %93 = vector.multi_reduction <maximumf>, %92, %cst_35 [1] : vector<16x16xf32> to vector<16xf32>
    %94 = vector.shape_cast %93 : vector<16xf32> to vector<16x1xf32>
    %95 = vector.broadcast %94 : vector<16x1xf32> to vector<16x16xf32>
    %96 = arith.subf %92, %95 : vector<16x16xf32>
    %97 = math.exp %96 : vector<16x16xf32>
    %cst_36 = arith.constant dense<0.000000e+00> : vector<16xf32>
    %98 = vector.multi_reduction <add>, %97, %cst_36 [1] : vector<16x16xf32> to vector<16xf32>
    %99 = vector.shape_cast %98 : vector<16xf32> to vector<16x1xf32>
    %100 = tpu.reciprocal %99 {approx = true} : vector<16x1xf32> -> vector<16x1xf32>
    %101 = vector.broadcast %100 : vector<16x1xf32> to vector<16x16xf32>
    %102 = arith.mulf %97, %101 : vector<16x16xf32>
    %c32_i32_37 = arith.constant 32 : i32
    %103 = vector.broadcast %c32_i32_37 : i32 to vector<1x64xi32>
    %104 = arith.cmpi sge, %31, %103 : vector<1x64xi32>
    %c48_i32 = arith.constant 48 : i32
    %105 = vector.broadcast %c48_i32 : i32 to vector<1x64xi32>
    %106 = arith.cmpi slt, %31, %105 : vector<1x64xi32>
    %107 = arith.andi %104, %106 : vector<1x64xi1>
    %cst_38 = arith.constant 0.000000e+00 : f32
    %108 = vector.shape_cast %107 : vector<1x64xi1> to vector<1x64xi1>
    %109 = vector.broadcast %108 : vector<1x64xi1> to vector<16x64xi1>
    %110 = vector.broadcast %cst_38 : f32 to vector<16x64xf32>
    %111 = arith.select %109, %30, %110 : vector<16x64xi1>, vector<16x64xf32>
    %cst_39 = arith.constant dense<0.000000e+00> : vector<16x64xf32>
    %112 = tpu.matmul %102, %111, %cst_39 {dimension_numbers = #tpu.dot_dimension_numbers<[1], [0], [0], [1], [0, 0, 1, 1], [], []>} : vector<16x16xf32>, vector<16x64xf32>, vector<16x64xf32> -> vector<16x64xf32>
    %113 = arith.addf %86, %112 : vector<16x64xf32>
    %114 = vector.extract_strided_slice %29 {offsets = [0, 48], sizes = [16, 16], strides = [1, 1]} : vector<16x192xf32> to vector<16x16xf32>
    %115 = vector.extract_strided_slice %29 {offsets = [0, 112], sizes = [16, 16], strides = [1, 1]} : vector<16x192xf32> to vector<16x16xf32>
    "tpu.trace_start"() <{level = 10 : i32, message = "nd,md->nm"}> : () -> ()
    %cst_40 = arith.constant dense<0.000000e+00> : vector<16x16xf32>
    %116 = tpu.matmul %114, %115, %cst_40 {dimension_numbers = #tpu.dot_dimension_numbers<[1], [1], [0], [0], [0, 0, 1, 0], [], []>} : vector<16x16xf32>, vector<16x16xf32>, vector<16x16xf32> -> vector<16x16xf32>
    "tpu.trace_stop"() : () -> ()
    %c3 = arith.constant 3 : index
    %c0_41 = arith.constant 0 : index
    %c0_42 = arith.constant 0 : index
    %117 = vector.load %arg6[%c3, %c0_41, %c0_42] : memref<4x16x16xf32, #tpu.memory_space<vmem>>, vector<1x16x16xf32>
    %118 = vector.shape_cast %117 : vector<1x16x16xf32> to vector<16x16xf32>
    %119 = arith.addf %116, %118 : vector<16x16xf32>
    %cst_43 = arith.constant dense<0xFF800000> : vector<16xf32>
    %120 = vector.multi_reduction <maximumf>, %119, %cst_43 [1] : vector<16x16xf32> to vector<16xf32>
    %121 = vector.shape_cast %120 : vector<16xf32> to vector<16x1xf32>
    %122 = vector.broadcast %121 : vector<16x1xf32> to vector<16x16xf32>
    %123 = arith.subf %119, %122 : vector<16x16xf32>
    %124 = math.exp %123 : vector<16x16xf32>
    %cst_44 = arith.constant dense<0.000000e+00> : vector<16xf32>
    %125 = vector.multi_reduction <add>, %124, %cst_44 [1] : vector<16x16xf32> to vector<16xf32>
    %126 = vector.shape_cast %125 : vector<16xf32> to vector<16x1xf32>
    %127 = tpu.reciprocal %126 {approx = true} : vector<16x1xf32> -> vector<16x1xf32>
    %128 = vector.broadcast %127 : vector<16x1xf32> to vector<16x16xf32>
    %129 = arith.mulf %124, %128 : vector<16x16xf32>
    %c48_i32_45 = arith.constant 48 : i32
    %130 = vector.broadcast %c48_i32_45 : i32 to vector<1x64xi32>
    %131 = arith.cmpi sge, %31, %130 : vector<1x64xi32>
    %c64_i32 = arith.constant 64 : i32
    %132 = vector.broadcast %c64_i32 : i32 to vector<1x64xi32>
    %133 = arith.cmpi slt, %31, %132 : vector<1x64xi32>
    %134 = arith.andi %131, %133 : vector<1x64xi1>
    %cst_46 = arith.constant 0.000000e+00 : f32
    %135 = vector.shape_cast %134 : vector<1x64xi1> to vector<1x64xi1>
    %136 = vector.broadcast %135 : vector<1x64xi1> to vector<16x64xi1>
    %137 = vector.broadcast %cst_46 : f32 to vector<16x64xf32>
    %138 = arith.select %136, %30, %137 : vector<16x64xi1>, vector<16x64xf32>
    %cst_47 = arith.constant dense<0.000000e+00> : vector<16x64xf32>
    %139 = tpu.matmul %129, %138, %cst_47 {dimension_numbers = #tpu.dot_dimension_numbers<[1], [0], [0], [1], [0, 0, 1, 1], [], []>} : vector<16x16xf32>, vector<16x64xf32>, vector<16x64xf32> -> vector<16x64xf32>
    %140 = arith.addf %113, %139 : vector<16x64xf32>
    %c0_48 = arith.constant 0 : index
    %c0_49 = arith.constant 0 : index
    %141 = vector.load %arg7[%c0_48, %c0_49] : memref<64x64xf32, #tpu.memory_space<vmem>>, vector<64x64xf32>
    %cst_50 = arith.constant dense<0.000000e+00> : vector<16x64xf32>
    %142 = tpu.matmul %140, %141, %cst_50 {dimension_numbers = #tpu.dot_dimension_numbers<[1], [0], [0], [1], [0, 0, 1, 1], [], []>} : vector<16x64xf32>, vector<64x64xf32>, vector<16x64xf32> -> vector<16x64xf32>
    %c0_51 = arith.constant 0 : index
    %c0_52 = arith.constant 0 : index
    %143 = vector.load %arg8[%c0_51, %c0_52] : memref<1x64xf32, #tpu.memory_space<vmem>>, vector<1x64xf32>
    %144 = vector.broadcast %143 : vector<1x64xf32> to vector<16x64xf32>
    %145 = arith.addf %142, %144 : vector<16x64xf32>
    %146 = arith.addf %1, %145 : vector<16x64xf32>
    %cst_53 = arith.constant dense<0.000000e+00> : vector<64xf32>
    %147 = vector.multi_reduction <add>, %146, %cst_53 [0] : vector<16x64xf32> to vector<64xf32>
    %148 = vector.shape_cast %147 : vector<64xf32> to vector<1x64xf32>
    %cst_54 = arith.constant 1.600000e+01 : f32
    %149 = vector.broadcast %cst_54 : f32 to vector<1x64xf32>
    %150 = arith.divf %148, %149 : vector<1x64xf32>
    %151 = vector.broadcast %150 : vector<1x64xf32> to vector<16x64xf32>
    %152 = arith.subf %146, %151 : vector<16x64xf32>
    %153 = arith.mulf %152, %152 : vector<16x64xf32>
    %cst_55 = arith.constant dense<0.000000e+00> : vector<64xf32>
    %154 = vector.multi_reduction <add>, %153, %cst_55 [0] : vector<16x64xf32> to vector<64xf32>
    %155 = vector.shape_cast %154 : vector<64xf32> to vector<1x64xf32>
    %cst_56 = arith.constant 1.600000e+01 : f32
    %156 = vector.broadcast %cst_56 : f32 to vector<1x64xf32>
    %157 = arith.divf %155, %156 : vector<1x64xf32>
    %c0_57 = arith.constant 0 : index
    %c0_58 = arith.constant 0 : index
    %158 = vector.load %arg9[%c0_57, %c0_58] : memref<1x64xf32, #tpu.memory_space<vmem>>, vector<1x64xf32>
    %cst_59 = arith.constant 9.99999974E-6 : f32
    %159 = vector.broadcast %cst_59 : f32 to vector<1x64xf32>
    %160 = arith.addf %157, %159 : vector<1x64xf32>
    %161 = math.rsqrt %160 : vector<1x64xf32>
    %162 = arith.mulf %158, %161 : vector<1x64xf32>
    %163 = vector.broadcast %150 : vector<1x64xf32> to vector<16x64xf32>
    %164 = arith.subf %146, %163 : vector<16x64xf32>
    %165 = vector.broadcast %162 : vector<1x64xf32> to vector<16x64xf32>
    %166 = arith.mulf %164, %165 : vector<16x64xf32>
    %c0_60 = arith.constant 0 : index
    %c0_61 = arith.constant 0 : index
    %167 = vector.load %arg10[%c0_60, %c0_61] : memref<1x64xf32, #tpu.memory_space<vmem>>, vector<1x64xf32>
    %168 = vector.broadcast %167 : vector<1x64xf32> to vector<16x64xf32>
    %169 = arith.addf %166, %168 : vector<16x64xf32>
    %c0_62 = arith.constant 0 : index
    %c0_63 = arith.constant 0 : index
    %170 = vector.load %arg11[%c0_62, %c0_63] : memref<64x128xf32, #tpu.memory_space<vmem>>, vector<64x128xf32>
    %cst_64 = arith.constant dense<0.000000e+00> : vector<16x128xf32>
    %171 = tpu.matmul %169, %170, %cst_64 {dimension_numbers = #tpu.dot_dimension_numbers<[1], [0], [0], [1], [0, 0, 1, 1], [], []>} : vector<16x64xf32>, vector<64x128xf32>, vector<16x128xf32> -> vector<16x128xf32>
    %c0_65 = arith.constant 0 : index
    %c0_66 = arith.constant 0 : index
    %172 = vector.load %arg12[%c0_65, %c0_66] : memref<1x128xf32, #tpu.memory_space<vmem>>, vector<1x128xf32>
    %173 = vector.broadcast %172 : vector<1x128xf32> to vector<16x128xf32>
    %174 = arith.addf %171, %173 : vector<16x128xf32>
    %175 = arith.mulf %174, %174 : vector<16x128xf32>
    %176 = arith.mulf %174, %175 : vector<16x128xf32>
    %cst_67 = arith.constant 4.471500e-02 : f32
    %177 = vector.broadcast %cst_67 : f32 to vector<16x128xf32>
    %178 = arith.mulf %177, %176 : vector<16x128xf32>
    %179 = arith.addf %174, %178 : vector<16x128xf32>
    %cst_68 = arith.constant 0.797884583 : f32
    %180 = vector.broadcast %cst_68 : f32 to vector<16x128xf32>
    %181 = arith.mulf %180, %179 : vector<16x128xf32>
    %182 = math.tanh %181 : vector<16x128xf32>
    %cst_69 = arith.constant 1.000000e+00 : f32
    %183 = vector.broadcast %cst_69 : f32 to vector<16x128xf32>
    %184 = arith.addf %183, %182 : vector<16x128xf32>
    %cst_70 = arith.constant 5.000000e-01 : f32
    %185 = vector.broadcast %cst_70 : f32 to vector<16x128xf32>
    %186 = arith.mulf %185, %184 : vector<16x128xf32>
    %187 = arith.mulf %174, %186 : vector<16x128xf32>
    %c0_71 = arith.constant 0 : index
    %c0_72 = arith.constant 0 : index
    %188 = vector.load %arg13[%c0_71, %c0_72] : memref<128x64xf32, #tpu.memory_space<vmem>>, vector<128x64xf32>
    %cst_73 = arith.constant dense<0.000000e+00> : vector<16x64xf32>
    %189 = tpu.matmul %187, %188, %cst_73 {dimension_numbers = #tpu.dot_dimension_numbers<[1], [0], [0], [1], [0, 0, 1, 1], [], []>} : vector<16x128xf32>, vector<128x64xf32>, vector<16x64xf32> -> vector<16x64xf32>
    %c0_74 = arith.constant 0 : index
    %c0_75 = arith.constant 0 : index
    %190 = vector.load %arg14[%c0_74, %c0_75] : memref<1x64xf32, #tpu.memory_space<vmem>>, vector<1x64xf32>
    %191 = vector.broadcast %190 : vector<1x64xf32> to vector<16x64xf32>
    %192 = arith.addf %189, %191 : vector<16x64xf32>
    %193 = arith.addf %146, %192 : vector<16x64xf32>
    %c0_76 = arith.constant 0 : index
    %c0_77 = arith.constant 0 : index
    %c0_78 = arith.constant 0 : index
    %194 = vector.load %arg15[%c0_76, %c0_77, %c0_78] : memref<1x16x64xf32, #tpu.memory_space<vmem>>, vector<1x16x64xf32>
    %195 = vector.shape_cast %194 : vector<1x16x64xf32> to vector<16x64xf32>
    %196 = vector.shape_cast %193 : vector<16x64xf32> to vector<1x16x64xf32>
    tpu.vector_store %arg15[%c0_76, %c0_77, %c0_78], %196 {strides = array<i32>} : memref<1x16x64xf32, #tpu.memory_space<vmem>>, vector<1x16x64xf32>,
    return
  }
  func.func @transform_0(%arg0: i32) -> (i32, i32, i32) {
    %c0_i32 = arith.constant 0 : i32
    %c0_i32_0 = arith.constant 0 : i32
    %c0_i32_1 = arith.constant 0 : i32
    return %arg0, %c0_i32, %c0_i32_0 : i32, i32, i32
  }
  func.func @transform_1(%arg0: i32) -> (i32, i32) {
    %c0_i32 = arith.constant 0 : i32
    %c0_i32_0 = arith.constant 0 : i32
    %c0_i32_1 = arith.constant 0 : i32
    return %c0_i32, %c0_i32_0 : i32, i32
  }
  func.func @transform_2(%arg0: i32) -> (i32, i32) {
    %c0_i32 = arith.constant 0 : i32
    %c0_i32_0 = arith.constant 0 : i32
    %c0_i32_1 = arith.constant 0 : i32
    return %c0_i32, %c0_i32_0 : i32, i32
  }
  func.func @transform_3(%arg0: i32) -> (i32, i32) {
    %c0_i32 = arith.constant 0 : i32
    %c0_i32_0 = arith.constant 0 : i32
    %c0_i32_1 = arith.constant 0 : i32
    return %c0_i32, %c0_i32_0 : i32, i32
  }
  func.func @transform_4(%arg0: i32) -> (i32, i32) {
    %c0_i32 = arith.constant 0 : i32
    %c0_i32_0 = arith.constant 0 : i32
    %c0_i32_1 = arith.constant 0 : i32
    return %c0_i32, %c0_i32_0 : i32, i32
  }
  func.func @transform_5(%arg0: i32) -> (i32, i32, i32) {
    %c0_i32 = arith.constant 0 : i32
    %c0_i32_0 = arith.constant 0 : i32
    %c0_i32_1 = arith.constant 0 : i32
    %c0_i32_2 = arith.constant 0 : i32
    return %c0_i32, %c0_i32_0, %c0_i32_1 : i32, i32, i32
  }
  func.func @transform_6(%arg0: i32) -> (i32, i32) {
    %c0_i32 = arith.constant 0 : i32
    %c0_i32_0 = arith.constant 0 : i32
    %c0_i32_1 = arith.constant 0 : i32
    return %c0_i32, %c0_i32_0 : i32, i32
  }
  func.func @transform_7(%arg0: i32) -> (i32, i32) {
    %c0_i32 = arith.constant 0 : i32
    %c0_i32_0 = arith.constant 0 : i32
    %c0_i32_1 = arith.constant 0 : i32
    return %c0_i32, %c0_i32_0 : i32, i32
  }
  func.func @transform_8(%arg0: i32) -> (i32, i32) {
    %c0_i32 = arith.constant 0 : i32
    %c0_i32_0 = arith.constant 0 : i32
    %c0_i32_1 = arith.constant 0 : i32
    return %c0_i32, %c0_i32_0 : i32, i32
  }
  func.func @transform_9(%arg0: i32) -> (i32, i32) {
    %c0_i32 = arith.constant 0 : i32
    %c0_i32_0 = arith.constant 0 : i32
    %c0_i32_1 = arith.constant 0 : i32
    return %c0_i32, %c0_i32_0 : i32, i32
  }
  func.func @transform_10(%arg0: i32) -> (i32, i32) {
    %c0_i32 = arith.constant 0 : i32
    %c0_i32_0 = arith.constant 0 : i32
    %c0_i32_1 = arith.constant 0 : i32
    return %c0_i32, %c0_i32_0 : i32, i32
  }
  func.func @transform_11(%arg0: i32) -> (i32, i32) {
    %c0_i32 = arith.constant 0 : i32
    %c0_i32_0 = arith.constant 0 : i32
    %c0_i32_1 = arith.constant 0 : i32
    return %c0_i32, %c0_i32_0 : i32, i32
  }
  func.func @transform_12(%arg0: i32) -> (i32, i32) {
    %c0_i32 = arith.constant 0 : i32
    %c0_i32_0 = arith.constant 0 : i32
    %c0_i32_1 = arith.constant 0 : i32
    return %c0_i32, %c0_i32_0 : i32, i32
  }
  func.func @transform_13(%arg0: i32) -> (i32, i32) {
    %c0_i32 = arith.constant 0 : i32
    %c0_i32_0 = arith.constant 0 : i32
    %c0_i32_1 = arith.constant 0 : i32
    return %c0_i32, %c0_i32_0 : i32, i32
  }
  func.func @transform_14(%arg0: i32) -> (i32, i32, i32) {
    %c0_i32 = arith.constant 0 : i32
    %c0_i32_0 = arith.constant 0 : i32
    %c0_i32_1 = arith.constant 0 : i32
    return %arg0, %c0_i32, %c0_i32_0 : i32, i32, i32
  }
}

module attributes {stable_mosaic.version = 11 : i64} {
  func.func @_swin_block_kernel(%arg0: i32, %arg1: memref<1x16x64xf32, #tpu.memory_space<vmem>>, %arg2: memref<1x64xf32, #tpu.memory_space<vmem>>, %arg3: memref<1x64xf32, #tpu.memory_space<vmem>>, %arg4: memref<64x192xf32, #tpu.memory_space<vmem>>, %arg5: memref<1x192xf32, #tpu.memory_space<vmem>>, %arg6: memref<4x16x16xf32, #tpu.memory_space<vmem>>, %arg7: memref<64x64xf32, #tpu.memory_space<vmem>>, %arg8: memref<1x64xf32, #tpu.memory_space<vmem>>, %arg9: memref<1x64xf32, #tpu.memory_space<vmem>>, %arg10: memref<1x64xf32, #tpu.memory_space<vmem>>, %arg11: memref<64x128xf32, #tpu.memory_space<vmem>>, %arg12: memref<1x128xf32, #tpu.memory_space<vmem>>, %arg13: memref<128x64xf32, #tpu.memory_space<vmem>>, %arg14: memref<1x64xf32, #tpu.memory_space<vmem>>, %arg15: memref<1x16x64xf32, #tpu.memory_space<vmem>>) attributes {dimension_semantics = [#tpu.dimension_semantics<parallel>], iteration_bounds = array<i64: 2>, scalar_prefetch = 0 : i64, scratch_operands = 0 : i64, tpu.core_type = #tpu.core_type<tc>, window_params = [{transform_indices = @transform_0, window_bounds = array<i64: 1, 16, 64>}, {pipeline_mode = #tpu.pipeline_mode<synchronous>, transform_indices = @transform_1, window_bounds = array<i64: 1, 64>}, {pipeline_mode = #tpu.pipeline_mode<synchronous>, transform_indices = @transform_2, window_bounds = array<i64: 1, 64>}, {pipeline_mode = #tpu.pipeline_mode<synchronous>, transform_indices = @transform_3, window_bounds = array<i64: 64, 192>}, {pipeline_mode = #tpu.pipeline_mode<synchronous>, transform_indices = @transform_4, window_bounds = array<i64: 1, 192>}, {pipeline_mode = #tpu.pipeline_mode<synchronous>, transform_indices = @transform_5, window_bounds = array<i64: 4, 16, 16>}, {pipeline_mode = #tpu.pipeline_mode<synchronous>, transform_indices = @transform_6, window_bounds = array<i64: 64, 64>}, {pipeline_mode = #tpu.pipeline_mode<synchronous>, transform_indices = @transform_7, window_bounds = array<i64: 1, 64>}, {pipeline_mode = #tpu.pipeline_mode<synchronous>, transform_indices = @transform_8, window_bounds = array<i64: 1, 64>}, {pipeline_mode = #tpu.pipeline_mode<synchronous>, transform_indices = @transform_9, window_bounds = array<i64: 1, 64>}, {pipeline_mode = #tpu.pipeline_mode<synchronous>, transform_indices = @transform_10, window_bounds = array<i64: 64, 128>}, {pipeline_mode = #tpu.pipeline_mode<synchronous>, transform_indices = @transform_11, window_bounds = array<i64: 1, 128>}, {pipeline_mode = #tpu.pipeline_mode<synchronous>, transform_indices = @transform_12, window_bounds = array<i64: 128, 64>}, {pipeline_mode = #tpu.pipeline_mode<synchronous>, transform_indices = @transform_13, window_bounds = array<i64: 1, 64>}, {transform_indices = @transform_14, window_bounds = array<i64: 1, 16, 64>}]} {
    %c0 = arith.constant 0 : index
    %c0_0 = arith.constant 0 : index
    %c0_1 = arith.constant 0 : index
    %0 = vector.load %arg1[%c0, %c0_0, %c0_1] : memref<1x16x64xf32, #tpu.memory_space<vmem>>, vector<1x16x64xf32>
    %1 = vector.shape_cast %0 : vector<1x16x64xf32> to vector<16x64xf32>
    %cst = arith.constant dense<0.000000e+00> : vector<64xf32>
    %2 = vector.multi_reduction <add>, %1, %cst [0] : vector<16x64xf32> to vector<64xf32>
    %3 = vector.shape_cast %2 : vector<64xf32> to vector<1x64xf32>
    %cst_2 = arith.constant 1.600000e+01 : f32
    %4 = vector.broadcast %cst_2 : f32 to vector<1x64xf32>
    %5 = arith.divf %3, %4 : vector<1x64xf32>
    %6 = vector.broadcast %5 : vector<1x64xf32> to vector<16x64xf32>
    %7 = arith.subf %1, %6 : vector<16x64xf32>
    %8 = arith.mulf %7, %7 : vector<16x64xf32>
    %cst_3 = arith.constant dense<0.000000e+00> : vector<64xf32>
    %9 = vector.multi_reduction <add>, %8, %cst_3 [0] : vector<16x64xf32> to vector<64xf32>
    %10 = vector.shape_cast %9 : vector<64xf32> to vector<1x64xf32>
    %cst_4 = arith.constant 1.600000e+01 : f32
    %11 = vector.broadcast %cst_4 : f32 to vector<1x64xf32>
    %12 = arith.divf %10, %11 : vector<1x64xf32>
    %c0_5 = arith.constant 0 : index
    %c0_6 = arith.constant 0 : index
    %13 = vector.load %arg2[%c0_5, %c0_6] : memref<1x64xf32, #tpu.memory_space<vmem>>, vector<1x64xf32>
    %cst_7 = arith.constant 9.99999974E-6 : f32
    %14 = vector.broadcast %cst_7 : f32 to vector<1x64xf32>
    %15 = arith.addf %12, %14 : vector<1x64xf32>
    %16 = math.rsqrt %15 : vector<1x64xf32>
    %17 = arith.mulf %13, %16 : vector<1x64xf32>
    %18 = vector.broadcast %5 : vector<1x64xf32> to vector<16x64xf32>
    %19 = arith.subf %1, %18 : vector<16x64xf32>
    %20 = vector.broadcast %17 : vector<1x64xf32> to vector<16x64xf32>
    %21 = arith.mulf %19, %20 : vector<16x64xf32>
    %c0_8 = arith.constant 0 : index
    %c0_9 = arith.constant 0 : index
    %22 = vector.load %arg3[%c0_8, %c0_9] : memref<1x64xf32, #tpu.memory_space<vmem>>, vector<1x64xf32>
    %23 = vector.broadcast %22 : vector<1x64xf32> to vector<16x64xf32>
    %24 = arith.addf %21, %23 : vector<16x64xf32>
    %c0_10 = arith.constant 0 : index
    %c0_11 = arith.constant 0 : index
    %25 = vector.load %arg4[%c0_10, %c0_11] : memref<64x192xf32, #tpu.memory_space<vmem>>, vector<64x192xf32>
    %cst_12 = arith.constant dense<0.000000e+00> : vector<16x192xf32>
    %26 = tpu.matmul %24, %25, %cst_12 {dimension_numbers = #tpu.dot_dimension_numbers<[1], [0], [0], [1], [0, 0, 1, 1], [], []>} : vector<16x64xf32>, vector<64x192xf32>, vector<16x192xf32> -> vector<16x192xf32>
    %c0_13 = arith.constant 0 : index
    %c0_14 = arith.constant 0 : index
    %27 = vector.load %arg5[%c0_13, %c0_14] : memref<1x192xf32, #tpu.memory_space<vmem>>, vector<1x192xf32>
    %28 = vector.broadcast %27 : vector<1x192xf32> to vector<16x192xf32>
    %29 = arith.addf %26, %28 : vector<16x192xf32>
    %30 = vector.extract_strided_slice %29 {offsets = [0, 128], sizes = [16, 64], strides = [1, 1]} : vector<16x192xf32> to vector<16x64xf32>
    %31 = tpu.iota {dimensions = array<i32: 1>} : vector<1x64xi32>
    %cst_15 = arith.constant 0.000000e+00 : f32
    %32 = vector.broadcast %cst_15 : f32 to vector<16x64xf32>
    %33 = vector.extract_strided_slice %29 {offsets = [0, 0], sizes = [16, 16], strides = [1, 1]} : vector<16x192xf32> to vector<16x16xf32>
    %34 = vector.extract_strided_slice %29 {offsets = [0, 64], sizes = [16, 16], strides = [1, 1]} : vector<16x192xf32> to vector<16x16xf32>
    "tpu.trace_start"() <{level = 10 : i32, message = "nd,md->nm"}> : () -> ()
    %cst_16 = arith.constant dense<0.000000e+00> : vector<16x16xf32>
    %35 = tpu.matmul %33, %34, %cst_16 {dimension_numbers = #tpu.dot_dimension_numbers<[1], [1], [0], [0], [0, 0, 1, 0], [], []>} : vector<16x16xf32>, vector<16x16xf32>, vector<16x16xf32> -> vector<16x16xf32>
    "tpu.trace_stop"() : () -> ()
    %c0_17 = arith.constant 0 : index
    %c0_18 = arith.constant 0 : index
    %c0_19 = arith.constant 0 : index
    %36 = vector.load %arg6[%c0_17, %c0_18, %c0_19] : memref<4x16x16xf32, #tpu.memory_space<vmem>>, vector<1x16x16xf32>
    %37 = vector.shape_cast %36 : vector<1x16x16xf32> to vector<16x16xf32>
    %38 = arith.addf %35, %37 : vector<16x16xf32>
    %cst_20 = arith.constant dense<0xFF800000> : vector<16xf32>
    %39 = vector.multi_reduction <maximumf>, %38, %cst_20 [1] : vector<16x16xf32> to vector<16xf32>
    %40 = vector.shape_cast %39 : vector<16xf32> to vector<16x1xf32>
    %41 = vector.broadcast %40 : vector<16x1xf32> to vector<16x16xf32>
    %42 = arith.subf %38, %41 : vector<16x16xf32>
    %43 = math.exp %42 : vector<16x16xf32>
    %cst_21 = arith.constant dense<0.000000e+00> : vector<16xf32>
    %44 = vector.multi_reduction <add>, %43, %cst_21 [1] : vector<16x16xf32> to vector<16xf32>
    %45 = vector.shape_cast %44 : vector<16xf32> to vector<16x1xf32>
    %46 = tpu.reciprocal %45 {approx = true} : vector<16x1xf32> -> vector<16x1xf32>
    %47 = vector.broadcast %46 : vector<16x1xf32> to vector<16x16xf32>
    %48 = arith.mulf %43, %47 : vector<16x16xf32>
    %c0_i32 = arith.constant 0 : i32
    %49 = vector.broadcast %c0_i32 : i32 to vector<1x64xi32>
    %50 = arith.cmpi sge, %31, %49 : vector<1x64xi32>
    %c16_i32 = arith.constant 16 : i32
    %51 = vector.broadcast %c16_i32 : i32 to vector<1x64xi32>
    %52 = arith.cmpi slt, %31, %51 : vector<1x64xi32>
    %53 = arith.andi %50, %52 : vector<1x64xi1>
    %cst_22 = arith.constant 0.000000e+00 : f32
    %54 = vector.shape_cast %53 : vector<1x64xi1> to vector<1x64xi1>
    %55 = vector.broadcast %54 : vector<1x64xi1> to vector<16x64xi1>
    %56 = vector.broadcast %cst_22 : f32 to vector<16x64xf32>
    %57 = arith.select %55, %30, %56 : vector<16x64xi1>, vector<16x64xf32>
    %cst_23 = arith.constant dense<0.000000e+00> : vector<16x64xf32>
    %58 = tpu.matmul %48, %57, %cst_23 {dimension_numbers = #tpu.dot_dimension_numbers<[1], [0], [0], [1], [0, 0, 1, 1], [], []>} : vector<16x16xf32>, vector<16x64xf32>, vector<16x64xf32> -> vector<16x64xf32>
    %59 = arith.addf %32, %58 : vector<16x64xf32>
    %60 = vector.extract_strided_slice %29 {offsets = [0, 16], sizes = [16, 16], strides = [1, 1]} : vector<16x192xf32> to vector<16x16xf32>
    %61 = vector.extract_strided_slice %29 {offsets = [0, 80], sizes = [16, 16], strides = [1, 1]} : vector<16x192xf32> to vector<16x16xf32>
    "tpu.trace_start"() <{level = 10 : i32, message = "nd,md->nm"}> : () -> ()
    %cst_24 = arith.constant dense<0.000000e+00> : vector<16x16xf32>
    %62 = tpu.matmul %60, %61, %cst_24 {dimension_numbers = #tpu.dot_dimension_numbers<[1], [1], [0], [0], [0, 0, 1, 0], [], []>} : vector<16x16xf32>, vector<16x16xf32>, vector<16x16xf32> -> vector<16x16xf32>
    "tpu.trace_stop"() : () -> ()
    %c1 = arith.constant 1 : index
    %c0_25 = arith.constant 0 : index
    %c0_26 = arith.constant 0 : index
    %63 = vector.load %arg6[%c1, %c0_25, %c0_26] : memref<4x16x16xf32, #tpu.memory_space<vmem>>, vector<1x16x16xf32>
    %64 = vector.shape_cast %63 : vector<1x16x16xf32> to vector<16x16xf32>
    %65 = arith.addf %62, %64 : vector<16x16xf32>
    %cst_27 = arith.constant dense<0xFF800000> : vector<16xf32>
    %66 = vector.multi_reduction <maximumf>, %65, %cst_27 [1] : vector<16x16xf32> to vector<16xf32>
    %67 = vector.shape_cast %66 : vector<16xf32> to vector<16x1xf32>
    %68 = vector.broadcast %67 : vector<16x1xf32> to vector<16x16xf32>
    %69 = arith.subf %65, %68 : vector<16x16xf32>
    %70 = math.exp %69 : vector<16x16xf32>
    %cst_28 = arith.constant dense<0.000000e+00> : vector<16xf32>
    %71 = vector.multi_reduction <add>, %70, %cst_28 [1] : vector<16x16xf32> to vector<16xf32>
    %72 = vector.shape_cast %71 : vector<16xf32> to vector<16x1xf32>
    %73 = tpu.reciprocal %72 {approx = true} : vector<16x1xf32> -> vector<16x1xf32>
    %74 = vector.broadcast %73 : vector<16x1xf32> to vector<16x16xf32>
    %75 = arith.mulf %70, %74 : vector<16x16xf32>
    %c16_i32_29 = arith.constant 16 : i32
    %76 = vector.broadcast %c16_i32_29 : i32 to vector<1x64xi32>
    %77 = arith.cmpi sge, %31, %76 : vector<1x64xi32>
    %c32_i32 = arith.constant 32 : i32
    %78 = vector.broadcast %c32_i32 : i32 to vector<1x64xi32>
    %79 = arith.cmpi slt, %31, %78 : vector<1x64xi32>
    %80 = arith.andi %77, %79 : vector<1x64xi1>
    %cst_30 = arith.constant 0.000000e+00 : f32
    %81 = vector.shape_cast %80 : vector<1x64xi1> to vector<1x64xi1>
    %82 = vector.broadcast %81 : vector<1x64xi1> to vector<16x64xi1>
    %83 = vector.broadcast %cst_30 : f32 to vector<16x64xf32>
    %84 = arith.select %82, %30, %83 : vector<16x64xi1>, vector<16x64xf32>
    %cst_31 = arith.constant dense<0.000000e+00> : vector<16x64xf32>
    %85 = tpu.matmul %75, %84, %cst_31 {dimension_numbers = #tpu.dot_dimension_numbers<[1], [0], [0], [1], [0, 0, 1, 1], [], []>} : vector<16x16xf32>, vector<16x64xf32>, vector<16x64xf32> -> vector<16x64xf32>
    %86 = arith.addf %59, %85 : vector<16x64xf32>
    %87 = vector.extract_strided_slice %29 {offsets = [0, 32], sizes = [16, 16], strides = [1, 1]} : vector<16x192xf32> to vector<16x16xf32>
    %88 = vector.extract_strided_slice %29 {offsets = [0, 96], sizes = [16, 16], strides = [1, 1]} : vector<16x192xf32> to vector<16x16xf32>
    "tpu.trace_start"() <{level = 10 : i32, message = "nd,md->nm"}> : () -> ()
    %cst_32 = arith.constant dense<0.000000e+00> : vector<16x16xf32>
    %89 = tpu.matmul %87, %88, %cst_32 {dimension_numbers = #tpu.dot_dimension_numbers<[1], [1], [0], [0], [0, 0, 1, 0], [], []>} : vector<16x16xf32>, vector<16x16xf32>, vector<16x16xf32> -> vector<16x16xf32>
    "tpu.trace_stop"() : () -> ()
    %c2 = arith.constant 2 : index
    %c0_33 = arith.constant 0 : index
    %c0_34 = arith.constant 0 : index
    %90 = vector.load %arg6[%c2, %c0_33, %c0_34] : memref<4x16x16xf32, #tpu.memory_space<vmem>>, vector<1x16x16xf32>
    %91 = vector.shape_cast %90 : vector<1x16x16xf32> to vector<16x16xf32>
    %92 = arith.addf %89, %91 : vector<16x16xf32>
    %cst_35 = arith.constant dense<0xFF800000> : vector<16xf32>
    %93 = vector.multi_reduction <maximumf>, %92, %cst_35 [1] : vector<16x16xf32> to vector<16xf32>
    %94 = vector.shape_cast %93 : vector<16xf32> to vector<16x1xf32>
    %95 = vector.broadcast %94 : vector<16x1xf32> to vector<16x16xf32>
    %96 = arith.subf %92, %95 : vector<16x16xf32>
    %97 = math.exp %96 : vector<16x16xf32>
    %cst_36 = arith.constant dense<0.000000e+00> : vector<16xf32>
    %98 = vector.multi_reduction <add>, %97, %cst_36 [1] : vector<16x16xf32> to vector<16xf32>
    %99 = vector.shape_cast %98 : vector<16xf32> to vector<16x1xf32>
    %100 = tpu.reciprocal %99 {approx = true} : vector<16x1xf32> -> vector<16x1xf32>
    %101 = vector.broadcast %100 : vector<16x1xf32> to vector<16x16xf32>
    %102 = arith.mulf %97, %101 : vector<16x16xf32>
    %c32_i32_37 = arith.constant 32 : i32
    %103 = vector.broadcast %c32_i32_37 : i32 to vector<1x64xi32>
    %104 = arith.cmpi sge, %31, %103 : vector<1x64xi32>
    %c48_i32 = arith.constant 48 : i32
    %105 = vector.broadcast %c48_i32 : i32 to vector<1x64xi32>
    %106 = arith.cmpi slt, %31, %105 : vector<1x64xi32>
    %107 = arith.andi %104, %106 : vector<1x64xi1>
    %cst_38 = arith.constant 0.000000e+00 : f32
    %108 = vector.shape_cast %107 : vector<1x64xi1> to vector<1x64xi1>
    %109 = vector.broadcast %108 : vector<1x64xi1> to vector<16x64xi1>
    %110 = vector.broadcast %cst_38 : f32 to vector<16x64xf32>
    %111 = arith.select %109, %30, %110 : vector<16x64xi1>, vector<16x64xf32>
    %cst_39 = arith.constant dense<0.000000e+00> : vector<16x64xf32>
    %112 = tpu.matmul %102, %111, %cst_39 {dimension_numbers = #tpu.dot_dimension_numbers<[1], [0], [0], [1], [0, 0, 1, 1], [], []>} : vector<16x16xf32>, vector<16x64xf32>, vector<16x64xf32> -> vector<16x64xf32>
    %113 = arith.addf %86, %112 : vector<16x64xf32>
    %114 = vector.extract_strided_slice %29 {offsets = [0, 48], sizes = [16, 16], strides = [1, 1]} : vector<16x192xf32> to vector<16x16xf32>
    %115 = vector.extract_strided_slice %29 {offsets = [0, 112], sizes = [16, 16], strides = [1, 1]} : vector<16x192xf32> to vector<16x16xf32>
    "tpu.trace_start"() <{level = 10 : i32, message = "nd,md->nm"}> : () -> ()
    %cst_40 = arith.constant dense<0.000000e+00> : vector<16x16xf32>
    %116 = tpu.matmul %114, %115, %cst_40 {dimension_numbers = #tpu.dot_dimension_numbers<[1], [1], [0], [0], [0, 0, 1, 0], [], []>} : vector<16x16xf32>, vector<16x16xf32>, vector<16x16xf32> -> vector<16x16xf32>
    "tpu.trace_stop"() : () -> ()
    %c3 = arith.constant 3 : index
    %c0_41 = arith.constant 0 : index
    %c0_42 = arith.constant 0 : index
    %117 = vector.load %arg6[%c3, %c0_41, %c0_42] : memref<4x16x16xf32, #tpu.memory_space<vmem>>, vector<1x16x16xf32>
    %118 = vector.shape_cast %117 : vector<1x16x16xf32> to vector<16x16xf32>
    %119 = arith.addf %116, %118 : vector<16x16xf32>
    %cst_43 = arith.constant dense<0xFF800000> : vector<16xf32>
    %120 = vector.multi_reduction <maximumf>, %119, %cst_43 [1] : vector<16x16xf32> to vector<16xf32>
    %121 = vector.shape_cast %120 : vector<16xf32> to vector<16x1xf32>
    %122 = vector.broadcast %121 : vector<16x1xf32> to vector<16x16xf32>
    %123 = arith.subf %119, %122 : vector<16x16xf32>
    %124 = math.exp %123 : vector<16x16xf32>
    %cst_44 = arith.constant dense<0.000000e+00> : vector<16xf32>
    %125 = vector.multi_reduction <add>, %124, %cst_44 [1] : vector<16x16xf32> to vector<16xf32>
    %126 = vector.shape_cast %125 : vector<16xf32> to vector<16x1xf32>
    %127 = tpu.reciprocal %126 {approx = true} : vector<16x1xf32> -> vector<16x1xf32>
    %128 = vector.broadcast %127 : vector<16x1xf32> to vector<16x16xf32>
    %129 = arith.mulf %124, %128 : vector<16x16xf32>
    %c48_i32_45 = arith.constant 48 : i32
    %130 = vector.broadcast %c48_i32_45 : i32 to vector<1x64xi32>
    %131 = arith.cmpi sge, %31, %130 : vector<1x64xi32>
    %c64_i32 = arith.constant 64 : i32
    %132 = vector.broadcast %c64_i32 : i32 to vector<1x64xi32>
    %133 = arith.cmpi slt, %31, %132 : vector<1x64xi32>
    %134 = arith.andi %131, %133 : vector<1x64xi1>
    %cst_46 = arith.constant 0.000000e+00 : f32
    %135 = vector.shape_cast %134 : vector<1x64xi1> to vector<1x64xi1>
    %136 = vector.broadcast %135 : vector<1x64xi1> to vector<16x64xi1>
    %137 = vector.broadcast %cst_46 : f32 to vector<16x64xf32>
    %138 = arith.select %136, %30, %137 : vector<16x64xi1>, vector<16x64xf32>
    %cst_47 = arith.constant dense<0.000000e+00> : vector<16x64xf32>
    %139 = tpu.matmul %129, %138, %cst_47 {dimension_numbers = #tpu.dot_dimension_numbers<[1], [0], [0], [1], [0, 0, 1, 1], [], []>} : vector<16x16xf32>, vector<16x64xf32>, vector<16x64xf32> -> vector<16x64xf32>
    %140 = arith.addf %113, %139 : vector<16x64xf32>
    %c0_48 = arith.constant 0 : index
    %c0_49 = arith.constant 0 : index
    %141 = vector.load %arg7[%c0_48, %c0_49] : memref<64x64xf32, #tpu.memory_space<vmem>>, vector<64x64xf32>
    %cst_50 = arith.constant dense<0.000000e+00> : vector<16x64xf32>
    %142 = tpu.matmul %140, %141, %cst_50 {dimension_numbers = #tpu.dot_dimension_numbers<[1], [0], [0], [1], [0, 0, 1, 1], [], []>} : vector<16x64xf32>, vector<64x64xf32>, vector<16x64xf32> -> vector<16x64xf32>
    %c0_51 = arith.constant 0 : index
    %c0_52 = arith.constant 0 : index
    %143 = vector.load %arg8[%c0_51, %c0_52] : memref<1x64xf32, #tpu.memory_space<vmem>>, vector<1x64xf32>
    %144 = vector.broadcast %143 : vector<1x64xf32> to vector<16x64xf32>
    %145 = arith.addf %142, %144 : vector<16x64xf32>
    %146 = arith.addf %1, %145 : vector<16x64xf32>
    %cst_53 = arith.constant dense<0.000000e+00> : vector<64xf32>
    %147 = vector.multi_reduction <add>, %146, %cst_53 [0] : vector<16x64xf32> to vector<64xf32>
    %148 = vector.shape_cast %147 : vector<64xf32> to vector<1x64xf32>
    %cst_54 = arith.constant 1.600000e+01 : f32
    %149 = vector.broadcast %cst_54 : f32 to vector<1x64xf32>
    %150 = arith.divf %148, %149 : vector<1x64xf32>
    %151 = vector.broadcast %150 : vector<1x64xf32> to vector<16x64xf32>
    %152 = arith.subf %146, %151 : vector<16x64xf32>
    %153 = arith.mulf %152, %152 : vector<16x64xf32>
    %cst_55 = arith.constant dense<0.000000e+00> : vector<64xf32>
    %154 = vector.multi_reduction <add>, %153, %cst_55 [0] : vector<16x64xf32> to vector<64xf32>
    %155 = vector.shape_cast %154 : vector<64xf32> to vector<1x64xf32>
    %cst_56 = arith.constant 1.600000e+01 : f32
    %156 = vector.broadcast %cst_56 : f32 to vector<1x64xf32>
    %157 = arith.divf %155, %156 : vector<1x64xf32>
    %c0_57 = arith.constant 0 : index
    %c0_58 = arith.constant 0 : index
    %158 = vector.load %arg9[%c0_57, %c0_58] : memref<1x64xf32, #tpu.memory_space<vmem>>, vector<1x64xf32>
    %cst_59 = arith.constant 9.99999974E-6 : f32
    %159 = vector.broadcast %cst_59 : f32 to vector<1x64xf32>
    %160 = arith.addf %157, %159 : vector<1x64xf32>
    %161 = math.rsqrt %160 : vector<1x64xf32>
    %162 = arith.mulf %158, %161 : vector<1x64xf32>
    %163 = vector.broadcast %150 : vector<1x64xf32> to vector<16x64xf32>
    %164 = arith.subf %146, %163 : vector<16x64xf32>
    %165 = vector.broadcast %162 : vector<1x64xf32> to vector<16x64xf32>
    %166 = arith.mulf %164, %165 : vector<16x64xf32>
    %c0_60 = arith.constant 0 : index
    %c0_61 = arith.constant 0 : index
    %167 = vector.load %arg10[%c0_60, %c0_61] : memref<1x64xf32, #tpu.memory_space<vmem>>, vector<1x64xf32>
    %168 = vector.broadcast %167 : vector<1x64xf32> to vector<16x64xf32>
    %169 = arith.addf %166, %168 : vector<16x64xf32>
    %c0_62 = arith.constant 0 : index
    %c0_63 = arith.constant 0 : index
    %170 = vector.load %arg11[%c0_62, %c0_63] : memref<64x128xf32, #tpu.memory_space<vmem>>, vector<64x128xf32>
    %cst_64 = arith.constant dense<0.000000e+00> : vector<16x128xf32>
    %171 = tpu.matmul %169, %170, %cst_64 {dimension_numbers = #tpu.dot_dimension_numbers<[1], [0], [0], [1], [0, 0, 1, 1], [], []>} : vector<16x64xf32>, vector<64x128xf32>, vector<16x128xf32> -> vector<16x128xf32>
    %c0_65 = arith.constant 0 : index
    %c0_66 = arith.constant 0 : index
    %172 = vector.load %arg12[%c0_65, %c0_66] : memref<1x128xf32, #tpu.memory_space<vmem>>, vector<1x128xf32>
    %173 = vector.broadcast %172 : vector<1x128xf32> to vector<16x128xf32>
    %174 = arith.addf %171, %173 : vector<16x128xf32>
    %175 = arith.mulf %174, %174 : vector<16x128xf32>
    %176 = arith.mulf %174, %175 : vector<16x128xf32>
    %cst_67 = arith.constant 4.471500e-02 : f32
    %177 = vector.broadcast %cst_67 : f32 to vector<16x128xf32>
    %178 = arith.mulf %177, %176 : vector<16x128xf32>
    %179 = arith.addf %174, %178 : vector<16x128xf32>
    %cst_68 = arith.constant 0.797884583 : f32
    %180 = vector.broadcast %cst_68 : f32 to vector<16x128xf32>
    %181 = arith.mulf %180, %179 : vector<16x128xf32>
    %182 = math.tanh %181 : vector<16x128xf32>
    %cst_69 = arith.constant 1.000000e+00 : f32
    %183 = vector.broadcast %cst_69 : f32 to vector<16x128xf32>
    %184 = arith.addf %183, %182 : vector<16x128xf32>
    %cst_70 = arith.constant 5.000000e-01 : f32
    %185 = vector.broadcast %cst_70 : f32 to vector<16x128xf32>
    %186 = arith.mulf %185, %184 : vector<16x128xf32>
    %187 = arith.mulf %174, %186 : vector<16x128xf32>
    %c0_71 = arith.constant 0 : index
    %c0_72 = arith.constant 0 : index
    %188 = vector.load %arg13[%c0_71, %c0_72] : memref<128x64xf32, #tpu.memory_space<vmem>>, vector<128x64xf32>
    %cst_73 = arith.constant dense<0.000000e+00> : vector<16x64xf32>
    %189 = tpu.matmul %187, %188, %cst_73 {dimension_numbers = #tpu.dot_dimension_numbers<[1], [0], [0], [1], [0, 0, 1, 1], [], []>} : vector<16x128xf32>, vector<128x64xf32>, vector<16x64xf32> -> vector<16x64xf32>
    %c0_74 = arith.constant 0 : index
    %c0_75 = arith.constant 0 : index
    %190 = vector.load %arg14[%c0_74, %c0_75] : memref<1x64xf32, #tpu.memory_space<vmem>>, vector<1x64xf32>
    %191 = vector.broadcast %190 : vector<1x64xf32> to vector<16x64xf32>
    %192 = arith.addf %189, %191 : vector<16x64xf32>
    %193 = arith.addf %146, %192 : vector<16x64xf32>
    %c0_76 = arith.constant 0 : index
    %c0_77 = arith.constant 0 : index
    %c0_78 = arith.constant 0 : index
    %194 = vector.load %arg15[%c0_76, %c0_77, %c0_78] : memref<1x16x64xf32, #tpu.memory_space<vmem>>, vector<1x16x64xf32>
    %195 = vector.shape_cast %194 : vector<1x16x64xf32> to vector<16x64xf32>
    %196 = vector.shape_cast %193 : vector<16x64xf32> to vector<1x16x64xf32>
    tpu.vector_store %arg15[%c0_76, %c0_77, %c0_78], %196 {strides = array<i32>} : memref<1x16x64xf32, #tpu.memory_space<vmem>>, vector<1x16x64xf32>,
    return
  }
  func.func @transform_0(%arg0: i32) -> (i32, i32, i32) {
    %c0_i32 = arith.constant 0 : i32
    %c0_i32_0 = arith.constant 0 : i32
    %c0_i32_1 = arith.constant 0 : i32
    return %arg0, %c0_i32, %c0_i32_0 : i32, i32, i32
  }
  func.func @transform_1(%arg0: i32) -> (i32, i32) {
    %c0_i32 = arith.constant 0 : i32
    %c0_i32_0 = arith.constant 0 : i32
    %c0_i32_1 = arith.constant 0 : i32
    return %c0_i32, %c0_i32_0 : i32, i32
  }
  func.func @transform_2(%arg0: i32) -> (i32, i32) {
    %c0_i32 = arith.constant 0 : i32
    %c0_i32_0 = arith.constant 0 : i32
    %c0_i32_1 = arith.constant 0 : i32
    return %c0_i32, %c0_i32_0 : i32, i32
  }
  func.func @transform_3(%arg0: i32) -> (i32, i32) {
    %c0_i32 = arith.constant 0 : i32
    %c0_i32_0 = arith.constant 0 : i32
    %c0_i32_1 = arith.constant 0 : i32
    return %c0_i32, %c0_i32_0 : i32, i32
  }
  func.func @transform_4(%arg0: i32) -> (i32, i32) {
    %c0_i32 = arith.constant 0 : i32
    %c0_i32_0 = arith.constant 0 : i32
    %c0_i32_1 = arith.constant 0 : i32
    return %c0_i32, %c0_i32_0 : i32, i32
  }
  func.func @transform_5(%arg0: i32) -> (i32, i32, i32) {
    %c0_i32 = arith.constant 0 : i32
    %c0_i32_0 = arith.constant 0 : i32
    %c0_i32_1 = arith.constant 0 : i32
    %c0_i32_2 = arith.constant 0 : i32
    return %c0_i32, %c0_i32_0, %c0_i32_1 : i32, i32, i32
  }
  func.func @transform_6(%arg0: i32) -> (i32, i32) {
    %c0_i32 = arith.constant 0 : i32
    %c0_i32_0 = arith.constant 0 : i32
    %c0_i32_1 = arith.constant 0 : i32
    return %c0_i32, %c0_i32_0 : i32, i32
  }
  func.func @transform_7(%arg0: i32) -> (i32, i32) {
    %c0_i32 = arith.constant 0 : i32
    %c0_i32_0 = arith.constant 0 : i32
    %c0_i32_1 = arith.constant 0 : i32
    return %c0_i32, %c0_i32_0 : i32, i32
  }
  func.func @transform_8(%arg0: i32) -> (i32, i32) {
    %c0_i32 = arith.constant 0 : i32
    %c0_i32_0 = arith.constant 0 : i32
    %c0_i32_1 = arith.constant 0 : i32
    return %c0_i32, %c0_i32_0 : i32, i32
  }
  func.func @transform_9(%arg0: i32) -> (i32, i32) {
    %c0_i32 = arith.constant 0 : i32
    %c0_i32_0 = arith.constant 0 : i32
    %c0_i32_1 = arith.constant 0 : i32
    return %c0_i32, %c0_i32_0 : i32, i32
  }
  func.func @transform_10(%arg0: i32) -> (i32, i32) {
    %c0_i32 = arith.constant 0 : i32
    %c0_i32_0 = arith.constant 0 : i32
    %c0_i32_1 = arith.constant 0 : i32
    return %c0_i32, %c0_i32_0 : i32, i32
  }
  func.func @transform_11(%arg0: i32) -> (i32, i32) {
    %c0_i32 = arith.constant 0 : i32
    %c0_i32_0 = arith.constant 0 : i32
    %c0_i32_1 = arith.constant 0 : i32
    return %c0_i32, %c0_i32_0 : i32, i32
  }
  func.func @transform_12(%arg0: i32) -> (i32, i32) {
    %c0_i32 = arith.constant 0 : i32
    %c0_i32_0 = arith.constant 0 : i32
    %c0_i32_1 = arith.constant 0 : i32
    return %c0_i32, %c0_i32_0 : i32, i32
  }
  func.func @transform_13(%arg0: i32) -> (i32, i32) {
    %c0_i32 = arith.constant 0 : i32
    %c0_i32_0 = arith.constant 0 : i32
    %c0_i32_1 = arith.constant 0 : i32
    return %c0_i32, %c0_i32_0 : i32, i32
  }
  func.func @transform_14(%arg0: i32) -> (i32, i32, i32) {
    %c0_i32 = arith.constant 0 : i32
    %c0_i32_0 = arith.constant 0 : i32
    %c0_i32_1 = arith.constant 0 : i32
    return %arg0, %c0_i32, %c0_i32_0 : i32, i32, i32
  }
}

</mosaic_0001>

<llo_original>
// kernel: _lambda_.7
$region0: #{_lambda_.7}
  #allocation0 [shape = 'u32[]', space=smem, size = 0x4, offset = 0x4, fixed_abs, tag = 'smem constant byte address 0x4 - core index']
  #allocation1 [shape = 'u32[72,128]{1,0:T(1,128)}', space=vmem, size = 0x9000, scoped, tag = 'internal scratch']
  %s0 = inlined_call_operand.vmem [shape: f32[2,16,128], index: 0, kind: input, shape index: {}]
  %s1 = inlined_call_operand.vmem [shape: f32[1,128], index: 1, kind: input, shape index: {}]
  %s2 = inlined_call_operand.vmem [shape: f32[1,128], index: 2, kind: input, shape index: {}]
  %s3 = inlined_call_operand.hbm [shape: f32[128,64], index: 3, kind: input, shape index: {}]
  %s4 = inlined_call_operand.vmem [shape: f32[1,64], index: 4, kind: input, shape index: {}]
  %s5 = inlined_call_operand.vmem [shape: f32[2,16,64], index: 5, kind: output, shape index: {}]
  %s6 = sld [smem:[#allocation0]]
  $region57: #{_lambda_.7} parent=0
    _
  %s8 = ssub.s32 1, %s6
  %s9 = scalar_select 0, %s8, %s6
  $region1: #{_lambda_.7} parent=0
    #allocation2 [shape = 'u8[65536]{0}', space=vmem, size = 0x10000, scoped, tag = 'input window, operand 3, single buffered']
    #allocation3 [shape = 's32[2]{0}', space=sflag, size = 0x8, scoped, tag = 'scoped memory for _lambda_.7']
    %10 = vsyncpa [#allocation3], 0
    loop: start=0, step=1, limit=4
    $region2: #{_lambda_.7} parent=1 // loop_pre_header
      _
    $region3: #{_lambda_.7} parent=1 // loop_header
      %s12 = sphi 0, %s16
      %p13 = scmp.ge.s32.totalorder %s12, 4
      %s22 = sphi 0, %s24
      %s25 = sphi 0, %s22
      %s26 = sphi 0, %s25
      %s42 = sphi 0, %s26
      %s46 = sphi 0, %s46
      %s48 = sphi 0, %s46
      %s49 = sphi 0, %s48
      %s63 = sphi 0, %s49
      %s67 = sphi 0, %s67
      %s69 = sphi 0, %s67
      %s70 = sphi 0, %s69
      %s84 = sphi 0, %s70
      %s88 = sphi 0, %s88
      %s90 = sphi 0, %s88
      %s91 = sphi 0, %s90
      %s105 = sphi 0, %s91
      %s109 = sphi 0, %s109
      %s111 = sphi 0, %s109
      %s112 = sphi 0, %s111
      %s126 = sphi 0, %s112
      %s132 = sphi 0, %s134
      %s135 = sphi 0, %s132
      %s136 = sphi 0, %s135
      %s152 = sphi 0, %s136
    $region4: #{_lambda_.7} parent=1 // loop_header_branch
      %15 = sbr.rel (%p13) target = $region8
    $region5: #{_lambda_.7} parent=1 // loop_body
      %s17 = ssub.s32 %s12, 1
      %s18 = ssub.s32 %s12, 2
      %s19 = sadd.s32 %s12, 1
      %s20 = ssub.s32 %s12, %s19
      %p21 = scmp.eq.s32.totalorder %s20, 0
      %s23 = sadd.s32 %s22, 1
      %s24 = scalar_select %p21, %s22, %s23
      %p27 = pneg %p21
      %p28 = scmp.eq.s32.totalorder %s12, 1
      %p29 = por %p27, %p28
      %p30 = scmp.ne.s32.totalorder %s22, %s25
      %p31 = scmp.eq.s32.totalorder %s12, 0
      %p32 = por %p30, %p31
      %p33 = scmp.ne.s32.totalorder %s22, %s25
      %p34 = scmp.eq.s32.totalorder %s17, 1
      %p35 = por %p33, %p34
      %p36 = scmp.ne.s32.totalorder %s25, %s26
      %p37 = scmp.eq.s32.totalorder %s17, 0
      %p38 = por %p36, %p37
      %p39 = scmp.ne.s32.totalorder %s25, %s26
      %p40 = scmp.eq.s32.totalorder %s18, 1
      %p41 = por %p39, %p40
      %p43 = scmp.ne.s32.totalorder %s26, %s42
      %p44 = scmp.eq.s32.totalorder %s18, 0
      %p45 = por %p43, %p44
      %s47 = sadd.s32 %s46, 1
      %p50 = scmp.eq.s32.totalorder %s12, 1
      %p51 = scmp.ne.s32.totalorder %s46, %s48
      %p52 = scmp.eq.s32.totalorder %s12, 0
      %p53 = por %p51, %p52
      %p54 = scmp.ne.s32.totalorder %s46, %s48
      %p55 = scmp.eq.s32.totalorder %s17, 1
      %p56 = por %p54, %p55
      %p57 = scmp.ne.s32.totalorder %s48, %s49
      %p58 = scmp.eq.s32.totalorder %s17, 0
      %p59 = por %p57, %p58
      %p60 = scmp.ne.s32.totalorder %s48, %s49
      %p61 = scmp.eq.s32.totalorder %s18, 1
      %p62 = por %p60, %p61
      %p64 = scmp.ne.s32.totalorder %s49, %s63
      %p65 = scmp.eq.s32.totalorder %s18, 0
      %p66 = por %p64, %p65
      %s68 = sadd.s32 %s67, 1
      %p71 = scmp.eq.s32.totalorder %s12, 1
      %p72 = scmp.ne.s32.totalorder %s67, %s69
      %p73 = scmp.eq.s32.totalorder %s12, 0
      %p74 = por %p72, %p73
      %p75 = scmp.ne.s32.totalorder %s67, %s69
      %p76 = scmp.eq.s32.totalorder %s17, 1
      %p77 = por %p75, %p76
      %p78 = scmp.ne.s32.totalorder %s69, %s70
      %p79 = scmp.eq.s32.totalorder %s17, 0
      %p80 = por %p78, %p79
      %p81 = scmp.ne.s32.totalorder %s69, %s70
      %p82 = scmp.eq.s32.totalorder %s18, 1
      %p83 = por %p81, %p82
      %p85 = scmp.ne.s32.totalorder %s70, %s84
      %p86 = scmp.eq.s32.totalorder %s18, 0
      %p87 = por %p85, %p86
      %s89 = sadd.s32 %s88, 1
      %p92 = scmp.eq.s32.totalorder %s12, 1
      %p93 = scmp.ne.s32.totalorder %s88, %s90
      %p94 = scmp.eq.s32.totalorder %s12, 0
      %p95 = por %p93, %p94
      %p96 = scmp.ne.s32.totalorder %s88, %s90
      %p97 = scmp.eq.s32.totalorder %s17, 1
      %p98 = por %p96, %p97
      %p99 = scmp.ne.s32.totalorder %s90, %s91
      %p100 = scmp.eq.s32.totalorder %s17, 0
      %p101 = por %p99, %p100
      %p102 = scmp.ne.s32.totalorder %s90, %s91
      %p103 = scmp.eq.s32.totalorder %s18, 1
      %p104 = por %p102, %p103
      %p106 = scmp.ne.s32.totalorder %s91, %s105
      %p107 = scmp.eq.s32.totalorder %s18, 0
      %p108 = por %p106, %p107
      %s110 = sadd.s32 %s109, 1
      %p113 = scmp.eq.s32.totalorder %s12, 1
      %p114 = scmp.ne.s32.totalorder %s109, %s111
      %p115 = scmp.eq.s32.totalorder %s12, 0
      %p116 = por %p114, %p115
      %p117 = scmp.ne.s32.totalorder %s109, %s111
      %p118 = scmp.eq.s32.totalorder %s17, 1
      %p119 = por %p117, %p118
      %p120 = scmp.ne.s32.totalorder %s111, %s112
      %p121 = scmp.eq.s32.totalorder %s17, 0
      %p122 = por %p120, %p121
      %p123 = scmp.ne.s32.totalorder %s111, %s112
      %p124 = scmp.eq.s32.totalorder %s18, 1
      %p125 = por %p123, %p124
      %p127 = scmp.ne.s32.totalorder %s112, %s126
      %p128 = scmp.eq.s32.totalorder %s18, 0
      %p129 = por %p127, %p128
      %s130 = ssub.s32 %s12, %s19
      %p131 = scmp.eq.s32.totalorder %s130, 0
      %s133 = sadd.s32 %s132, 1
      %s134 = scalar_select %p131, %s132, %s133
      %p137 = pneg %p131
      %p138 = scmp.eq.s32.totalorder %s12, 1
      %p139 = por %p137, %p138
      %p140 = scmp.ne.s32.totalorder %s132, %s135
      %p141 = scmp.eq.s32.totalorder %s12, 0
      %p142 = por %p140, %p141
      %p143 = scmp.ne.s32.totalorder %s132, %s135
      %p144 = scmp.eq.s32.totalorder %s17, 1
      %p145 = por %p143, %p144
      %p146 = scmp.ne.s32.totalorder %s135, %s136
      %p147 = scmp.eq.s32.totalorder %s17, 0
      %p148 = por %p146, %p147
      %p149 = scmp.ne.s32.totalorder %s135, %s136
      %p150 = scmp.eq.s32.totalorder %s18, 1
      %p151 = por %p149, %p150
      %p153 = scmp.ne.s32.totalorder %s136, %s152
      %p154 = scmp.eq.s32.totalorder %s18, 0
      %p155 = por %p153, %p154
      %p156 = scmp.le.s32.totalorder 1, %s12
      %p157 = scmp.lt.s32.totalorder %s12, 3
      %p158 = pnand %p156, %p157
      %p159 = pneg %p158
      // Predicated region
      $region9: #{_lambda_.7} parent=5 // pred_check
        _
      $region10: #{_lambda_.7} parent=5 // pred_check_branch
        %161 = sbr.rel (%p158) target = $region12
      $region11: #{_lambda_.7} parent=5 // pred_region
        %s162 = ssub.s32 %s12, 1
        // Predicated region
        $region13: #{_lambda_.7} parent=11 // pred_check
          %p163 = pneg %p59
        $region14: #{_lambda_.7} parent=11 // pred_check_branch
          %165 = sbr.rel (%p163) target = $region16
        $region15: #{_lambda_.7} parent=11 // pred_region
          _
        $region16: #{_lambda_.7} parent=11 // pred_fallthru
          _
        // Predicated region
        $region17: #{_lambda_.7} parent=11 // pred_check
          %p166 = pneg %p80
        $region18: #{_lambda_.7} parent=11 // pred_check_branch
          %168 = sbr.rel (%p166) target = $region20
        $region19: #{_lambda_.7} parent=11 // pred_region
          _
        $region20: #{_lambda_.7} parent=11 // pred_fallthru
          _
        // Predicated region
        $region21: #{_lambda_.7} parent=11 // pred_check
          %p169 = pneg %p101
        $region22: #{_lambda_.7} parent=11 // pred_check_branch
          %171 = sbr.rel (%p169) target = $region24
        $region23: #{_lambda_.7} parent=11 // pred_region
          %173 = vsyncadd [#allocation3], 0
          %s174 = sshll.u32 %s3, 4
          %s175 = int_to_ptr.hbm [resolvable:$true] %s174
          %s176 = sshll.u32 [#allocation2], 4
          %s177 = int_to_ptr.vmem [resolvable:$true] %s176
          %182 = dma.hbm_to_vmem [thread:$0]  %s175, 2048, %s177, [#allocation3], 128, 128, 8
        $region24: #{_lambda_.7} parent=11 // pred_fallthru
          _
        // Predicated region
        $region25: #{_lambda_.7} parent=11 // pred_check
          %p183 = pneg %p122
        $region26: #{_lambda_.7} parent=11 // pred_check_branch
          %185 = sbr.rel (%p183) target = $region28
        $region27: #{_lambda_.7} parent=11 // pred_region
          _
        $region28: #{_lambda_.7} parent=11 // pred_fallthru
          _
      $region12: #{_lambda_.7} parent=5 // pred_fallthru
        _
      %p186 = scmp.lt.s32.totalorder %s12, 2
      // Predicated region
      $region29: #{_lambda_.7} parent=5 // pred_check
        %p187 = pneg %p186
      $region30: #{_lambda_.7} parent=5 // pred_check_branch
        %189 = sbr.rel (%p187) target = $region32
      $region31: #{_lambda_.7} parent=5 // pred_region
        // Predicated region
        $region33: #{_lambda_.7} parent=31 // pred_check
          %p190 = pneg %p32
        $region34: #{_lambda_.7} parent=31 // pred_check_branch
          %192 = sbr.rel (%p190) target = $region36
        $region35: #{_lambda_.7} parent=31 // pred_region
          %p193 = scmp.lt.s32.totalorder %s12, 1
          %s194 = scalar_select %p193, %s12, 1
          %s195 = smul.addr %s194, 2
          %s196 = smul.addr %s195, 8
          %s197 = scalar_lea.vmem %s0, %s196
        $region36: #{_lambda_.7} parent=31 // pred_fallthru
          _
      $region32: #{_lambda_.7} parent=5 // pred_fallthru
        _
      %p198 = scmp.le.s32.totalorder 1, %s12
      %p199 = scmp.lt.s32.totalorder %s12, 3
      %p200 = pnand %p198, %p199
      %p201 = pneg %p200
      // Predicated region
      $region37: #{_lambda_.7} parent=5 // pred_check
        _
      $region38: #{_lambda_.7} parent=5 // pred_check_branch
        %203 = sbr.rel (%p200) target = $region40
      $region39: #{_lambda_.7} parent=5 // pred_region
        %s204 = ssub.s32 %s12, 1
        // Predicated region
        $region41: #{_lambda_.7} parent=39 // pred_check
          %p205 = pneg %p101
        $region42: #{_lambda_.7} parent=39 // pred_check_branch
          %207 = sbr.rel (%p205) target = $region44
        $region43: #{_lambda_.7} parent=39 // pred_region
          %209 = dma.done [#allocation3], 2048
        $region44: #{_lambda_.7} parent=39 // pred_fallthru
          _
        %p210 = scmp.lt.s32.totalorder %s17, 1
        %s211 = scalar_select %p210, %s17, 1
        %s212 = smul.addr %s211, 2
        %s213 = smul.addr %s212, 8
        %s214 = scalar_lea.vmem %s0, %s213
        %p215 = pneg %p38
        %p216 = pneg %p35
        %p217 = pneg %p59
        %p218 = pneg %p56
        %p219 = pneg %p80
        %p220 = pneg %p77
        %p221 = pneg %p101
        %p222 = pneg %p98
        %p223 = pneg %p122
        %p224 = pneg %p119
        %p225 = pneg %p148
        %p226 = pneg %p145
        %p227 = scmp.lt.s32.totalorder %s17, 1
        %s228 = scalar_select %p227, %s17, 1
        %s229 = smul.addr %s228, 2
        %s230 = smul.addr %s229, 8
        %s231 = scalar_lea.vmem %s5, %s230
        %p232 = scmp.lt.s32.totalorder %s17, 1
        %s233 = scalar_select %p232, %s17, 1
        %s234 = smul.addr %s233, 2
        %s235 = smul.addr %s234, 8
        %s236 = scalar_lea.vmem %s0, %s235
        %p237 = scmp.lt.s32.totalorder %s17, 1
        %s238 = scalar_select %p237, %s17, 1
        %s239 = smul.addr %s238, 2
        %s240 = smul.addr %s239, 8
        %s241 = scalar_lea.vmem %s5, %s240
        %v242 = vld [vmem:[%s236] sm:$0xff]
        %v243 = vld [vmem:[%s236 + $0x8] sm:$0xff]
        %v244 = vadd.f32 %v242, %v243
        %v245 = vrot.slane %v244, 4
        %v246 = vadd.f32 %v244, %v245
        %v247 = vrot.slane %v246, 2
        %v248 = vadd.f32 %v246, %v247
        %v249 = vrot.slane %v248, 1
        %v250 = vadd.f32 %v248, %v249
        %v251 = vrcp.pop 16.0
        %v252 = vmul.f32 16.0, %v251
        %v253 = vsub.f32 1.0, %v252
        %v254 = vmul.f32 %v251, %v253
        %v255 = vadd.f32 %v251, %v254
        %vm256 = vweird.f32 %v251
        %v257 = vsel %vm256, %v251, %v255
        %v258 = vmul.f32 %v250, %v257
        %v259 = vsub.f32 %v242, %v258
        %v260 = vsub.f32 %v243, %v258
        %v261 = vmul.f32 %v259, %v259
        %v262 = vmul.f32 %v260, %v260
        %v263 = vadd.f32 %v261, %v262
        %v264 = vrot.slane %v263, 4
        %v265 = vadd.f32 %v263, %v264
        %v266 = vrot.slane %v265, 2
        %v267 = vadd.f32 %v265, %v266
        %v268 = vrot.slane %v267, 1
        %v269 = vadd.f32 %v267, %v268
        %v270 = vmul.f32 %v269, %v257
        %v271 = vld [vmem:[%s1] sm:$0x1]
        %v272 = vadd.f32 %v270, 1e-05
        %v273 = vrsqrt.pop %v272
        %v274 = vmul.f32 %v273, %v272
        %v275 = vmul.f32 %v274, %v273
        %v276 = vmul.f32 0.5, %v275
        %v277 = vsub.f32 1.5, %v276
        %v278 = vmul.f32 %v273, %v277
        %vm279 = vweird.f32 %v272
        %vm280 = vweird.f32 %v273
        %vm281 = vmor %vm279, %vm280
        %v282 = vsel %vm281, %v273, %v278
        %v283 = vmul.f32 %v271, %v282
        %v285 = vperm.slane %v283, 0
        %v287 = vmul.f32 %v259, %v285
        %v288 = vmul.f32 %v260, %v285
        %v289 = vld [vmem:[%s2] sm:$0x1]
        %v291 = vperm.slane %v289, 0
        %v293 = vadd.f32 %v287, %v291
        %v294 = vadd.f32 %v288, %v291
        %v295 = vld [vmem:[#allocation2] sm:$0xff]
        %v296 = vld [vmem:[#allocation2 + $0x8] sm:$0xff]
        %v297 = vld [vmem:[#allocation2 + $0x10] sm:$0xff]
        %v298 = vld [vmem:[#allocation2 + $0x18] sm:$0xff]
        %v299 = vld [vmem:[#allocation2 + $0x20] sm:$0xff]
        %v300 = vld [vmem:[#allocation2 + $0x28] sm:$0xff]
        %v301 = vld [vmem:[#allocation2 + $0x30] sm:$0xff]
        %v302 = vld [vmem:[#allocation2 + $0x38] sm:$0xff]
        %v303 = vld [vmem:[#allocation2 + $0x40] sm:$0xff]
        %v304 = vld [vmem:[#allocation2 + $0x48] sm:$0xff]
        %v305 = vld [vmem:[#allocation2 + $0x50] sm:$0xff]
        %v306 = vld [vmem:[#allocation2 + $0x58] sm:$0xff]
        %v307 = vld [vmem:[#allocation2 + $0x60] sm:$0xff]
        %v308 = vld [vmem:[#allocation2 + $0x68] sm:$0xff]
        %v309 = vld [vmem:[#allocation2 + $0x70] sm:$0xff]
        %v310 = vld [vmem:[#allocation2 + $0x78] sm:$0xff]
        %v311 = vld [vmem:[%s4] sm:$0x1]
        %v313 = vperm.slane %v311, 0
        %315 = vmatpush.msra.mxu0 %v310
        %316 = vmatpush.msra.mxu0 %v309
        %317 = vmatpush.msra.mxu0 %v308
        %318 = vmatpush.msra.mxu0 %v307
        %319 = vmatpush.msra.mxu0 %v306
        %320 = vmatpush.msra.mxu0 %v305
        %321 = vmatpush.msra.mxu0 %v304
        %322 = vmatpush.msra.mxu0 %v303
        %323 = vmatpush.msra.mxu0 %v302
        %324 = vmatpush.msra.mxu0 %v301
        %325 = vmatpush.msra.mxu0 %v300
        %326 = vmatpush.msra.mxu0 %v299
        %327 = vmatpush.msra.mxu0 %v298
        %328 = vmatpush.msra.mxu0 %v297
        %329 = vmatpush.msra.mxu0 %v296
        %330 = vmatpush.msra.mxu0 %v295
        %331 = vmatmul.f32.gmra.mxu0 %v293
        %v332 = vpop.f32.mrf.mxu0
        %v333 = vadd.f32 %v313, %v332
        %334 = vmatmul.f32.gmra.mxu0 %v294
        %v335 = vpop.f32.mrf.mxu0
        %v336 = vadd.f32 %v313, %v335
        %337 = vdwg.mxu0
        %vm338 = vcmask 523264
        %339 = vst.msk [vmem:[%s241] sm:$0xff] %vm338, %v333
        %340 = vst.msk [vmem:[%s241 + $0x8] sm:$0xff] %vm338, %v336
        %p341 = scmp.lt.s32.totalorder %s17, 1
        %s342 = scalar_select %p341, %s17, 1
        %s343 = smul.addr %s342, 2
        %s344 = smul.addr %s343, 8
        %s345 = scalar_lea.vmem %s5, %s344
        // Predicated region
        $region45: #{_lambda_.7} parent=39 // pred_check
          %p346 = pneg %p145
        $region46: #{_lambda_.7} parent=39 // pred_check_branch
          %348 = sbr.rel (%p346) target = $region48
        $region47: #{_lambda_.7} parent=39 // pred_region
          _
        $region48: #{_lambda_.7} parent=39 // pred_fallthru
          _
      $region40: #{_lambda_.7} parent=5 // pred_fallthru
        _
      %p349 = scmp.le.s32.totalorder 2, %s12
      // Predicated region
      $region49: #{_lambda_.7} parent=5 // pred_check
        %p350 = pneg %p349
      $region50: #{_lambda_.7} parent=5 // pred_check_branch
        %352 = sbr.rel (%p350) target = $region52
      $region51: #{_lambda_.7} parent=5 // pred_region
        %s353 = ssub.s32 %s12, 2
        // Predicated region
        $region53: #{_lambda_.7} parent=51 // pred_check
          %p354 = pneg %p151
        $region54: #{_lambda_.7} parent=51 // pred_check_branch
          %356 = sbr.rel (%p354) target = $region56
        $region55: #{_lambda_.7} parent=51 // pred_region
          %p357 = scmp.lt.s32.totalorder %s18, 1
          %s358 = scalar_select %p357, %s18, 1
          %s359 = smul.addr %s358, 2
          %s360 = smul.addr %s359, 8
          %s361 = scalar_lea.vmem %s5, %s360
        $region56: #{_lambda_.7} parent=51 // pred_fallthru
          _
      $region52: #{_lambda_.7} parent=5 // pred_fallthru
        _
    $region6: #{_lambda_.7} parent=1 // loop_footer
      %s16 = sadd.s32 1, %s12
    $region7: #{_lambda_.7} parent=1 // loop_footer_branch
      %11 = sbr.rel target = $region3
    $region8: #{_lambda_.7} parent=1 // loop_exit
      _
    %362 = vsyncpa [#allocation3], 1
    %s363 = scalar_lea.sflag [#allocation3], 1
    %364 = vsyncpa %s363, 1

// kernel: _lambda_.6
$region0: #{_lambda_.6}
  #allocation0 [shape = 'u32[]', space=smem, size = 0x4, offset = 0x4, fixed_abs, tag = 'smem constant byte address 0x4 - core index']
  #allocation1 [shape = 'u32[72,128]{1,0:T(1,128)}', space=vmem, size = 0x9000, scoped, tag = 'internal scratch']
  %s0 = inlined_call_operand.vmem [shape: f32[2,64,32], index: 0, kind: input, shape index: {}]
  %s1 = inlined_call_operand.vmem [shape: f32[1,32], index: 1, kind: input, shape index: {}, may-alias: {1,8}]
  %s2 = inlined_call_operand.vmem [shape: f32[1,32], index: 2, kind: input, shape index: {}, may-alias: {2,7,9,13}]
  %s3 = inlined_call_operand.hbm [shape: f32[32,96], index: 3, kind: input, shape index: {}]
  %s4 = inlined_call_operand.vmem [shape: f32[1,96], index: 4, kind: input, shape index: {}]
  %s5 = inlined_call_operand.vmem [shape: f32[2,64,64], index: 5, kind: input, shape index: {}]
  %s6 = inlined_call_operand.hbm [shape: f32[32,32], index: 6, kind: input, shape index: {}]
  %s7 = inlined_call_operand.vmem [shape: f32[1,32], index: 7, kind: input, shape index: {}, may-alias: {2,7,9,13}]
  %s8 = inlined_call_operand.vmem [shape: f32[1,32], index: 8, kind: input, shape index: {}, may-alias: {1,8}]
  %s9 = inlined_call_operand.vmem [shape: f32[1,32], index: 9, kind: input, shape index: {}, may-alias: {2,7,9,13}]
  %s10 = inlined_call_operand.hbm [shape: f32[32,64], index: 10, kind: input, shape index: {}]
  %s11 = inlined_call_operand.vmem [shape: f32[1,64], index: 11, kind: input, shape index: {}]
  %s12 = inlined_call_operand.hbm [shape: f32[64,32], index: 12, kind: input, shape index: {}]
  %s13 = inlined_call_operand.vmem [shape: f32[1,32], index: 13, kind: input, shape index: {}, may-alias: {2,7,9,13}]
  %s14 = inlined_call_operand.vmem [shape: f32[2,64,32], index: 14, kind: output, shape index: {}]
  %s15 = sld [smem:[#allocation0]]
  $region105: #{_lambda_.6} parent=0
    _
  %s17 = ssub.s32 1, %s15
  %s18 = scalar_select 0, %s17, %s15
  $region1: #{_lambda_.6} parent=0
    #allocation2 [shape = 'u8[16384]{0}', space=vmem, size = 0x4000, scoped, tag = 'input window, operand 3, single buffered']
    #allocation3 [shape = 's32[2]{0}', space=sflag, size = 0x8, scoped, tag = 'scoped memory for _lambda_.6']
    #allocation4 [shape = 'u8[16384]{0}', space=vmem, size = 0x4000, scoped, tag = 'input window, operand 6, single buffered']
    #allocation5 [shape = 's32[1]{0}', space=sflag, size = 0x4, scoped, tag = 'scoped memory for _lambda_.6']
    #allocation6 [shape = 'u8[16384]{0}', space=vmem, size = 0x4000, scoped, tag = 'input window, operand 10, single buffered']
    #allocation7 [shape = 'u8[32768]{0}', space=vmem, size = 0x8000, scoped, tag = 'input window, operand 12, single buffered']
    #allocation8 [shape = 's32[1]{0}', space=sflag, size = 0x4, scoped, tag = 'scoped memory for _lambda_.6']
    %19 = vsyncpa [#allocation3], 0
    %20 = vsyncpa [#allocation5], 0
    %21 = vsyncpa [#allocation8], 0
    loop: start=0, step=1, limit=4
    $region2: #{_lambda_.6} parent=1 // loop_pre_header
      _
    $region3: #{_lambda_.6} parent=1 // loop_header
      %s23 = sphi 0, %s27
      %p24 = scmp.ge.s32.totalorder %s23, 4
      %s33 = sphi 0, %s35
      %s36 = sphi 0, %s33
      %s37 = sphi 0, %s36
      %s53 = sphi 0, %s37
      %s57 = sphi 0, %s57
      %s59 = sphi 0, %s57
      %s60 = sphi 0, %s59
      %s74 = sphi 0, %s60
      %s78 = sphi 0, %s78
      %s80 = sphi 0, %s78
      %s81 = sphi 0, %s80
      %s95 = sphi 0, %s81
      %s99 = sphi 0, %s99
      %s101 = sphi 0, %s99
      %s102 = sphi 0, %s101
      %s116 = sphi 0, %s102
      %s120 = sphi 0, %s120
      %s122 = sphi 0, %s120
      %s123 = sphi 0, %s122
      %s137 = sphi 0, %s123
      %s141 = sphi 0, %s141
      %s143 = sphi 0, %s141
      %s144 = sphi 0, %s143
      %s158 = sphi 0, %s144
      %s162 = sphi 0, %s162
      %s164 = sphi 0, %s162
      %s165 = sphi 0, %s164
      %s179 = sphi 0, %s165
      %s183 = sphi 0, %s183
      %s185 = sphi 0, %s183
      %s186 = sphi 0, %s185
      %s200 = sphi 0, %s186
      %s204 = sphi 0, %s204
      %s206 = sphi 0, %s204
      %s207 = sphi 0, %s206
      %s221 = sphi 0, %s207
      %s225 = sphi 0, %s225
      %s227 = sphi 0, %s225
      %s228 = sphi 0, %s227
      %s242 = sphi 0, %s228
      %s246 = sphi 0, %s246
      %s248 = sphi 0, %s246
      %s249 = sphi 0, %s248
      %s263 = sphi 0, %s249
      %s267 = sphi 0, %s267
      %s269 = sphi 0, %s267
      %s270 = sphi 0, %s269
      %s284 = sphi 0, %s270
      %s288 = sphi 0, %s288
      %s290 = sphi 0, %s288
      %s291 = sphi 0, %s290
      %s305 = sphi 0, %s291
      %s309 = sphi 0, %s309
      %s311 = sphi 0, %s309
      %s312 = sphi 0, %s311
      %s326 = sphi 0, %s312
      %s332 = sphi 0, %s334
      %s335 = sphi 0, %s332
      %s336 = sphi 0, %s335
      %s352 = sphi 0, %s336
    $region4: #{_lambda_.6} parent=1 // loop_header_branch
      %26 = sbr.rel (%p24) target = $region8
    $region5: #{_lambda_.6} parent=1 // loop_body
      %s28 = ssub.s32 %s23, 1
      %s29 = ssub.s32 %s23, 2
      %s30 = sadd.s32 %s23, 1
      %s31 = ssub.s32 %s23, %s30
      %p32 = scmp.eq.s32.totalorder %s31, 0
      %s34 = sadd.s32 %s33, 1
      %s35 = scalar_select %p32, %s33, %s34
      %p38 = pneg %p32
      %p39 = scmp.eq.s32.totalorder %s23, 1
      %p40 = por %p38, %p39
      %p41 = scmp.ne.s32.totalorder %s33, %s36
      %p42 = scmp.eq.s32.totalorder %s23, 0
      %p43 = por %p41, %p42
      %p44 = scmp.ne.s32.totalorder %s33, %s36
      %p45 = scmp.eq.s32.totalorder %s28, 1
      %p46 = por %p44, %p45
      %p47 = scmp.ne.s32.totalorder %s36, %s37
      %p48 = scmp.eq.s32.totalorder %s28, 0
      %p49 = por %p47, %p48
      %p50 = scmp.ne.s32.totalorder %s36, %s37
      %p51 = scmp.eq.s32.totalorder %s29, 1
      %p52 = por %p50, %p51
      %p54 = scmp.ne.s32.totalorder %s37, %s53
      %p55 = scmp.eq.s32.totalorder %s29, 0
      %p56 = por %p54, %p55
      %s58 = sadd.s32 %s57, 1
      %p61 = scmp.eq.s32.totalorder %s23, 1
      %p62 = scmp.ne.s32.totalorder %s57, %s59
      %p63 = scmp.eq.s32.totalorder %s23, 0
      %p64 = por %p62, %p63
      %p65 = scmp.ne.s32.totalorder %s57, %s59
      %p66 = scmp.eq.s32.totalorder %s28, 1
      %p67 = por %p65, %p66
      %p68 = scmp.ne.s32.totalorder %s59, %s60
      %p69 = scmp.eq.s32.totalorder %s28, 0
      %p70 = por %p68, %p69
      %p71 = scmp.ne.s32.totalorder %s59, %s60
      %p72 = scmp.eq.s32.totalorder %s29, 1
      %p73 = por %p71, %p72
      %p75 = scmp.ne.s32.totalorder %s60, %s74
      %p76 = scmp.eq.s32.totalorder %s29, 0
      %p77 = por %p75, %p76
      %s79 = sadd.s32 %s78, 1
      %p82 = scmp.eq.s32.totalorder %s23, 1
      %p83 = scmp.ne.s32.totalorder %s78, %s80
      %p84 = scmp.eq.s32.totalorder %s23, 0
      %p85 = por %p83, %p84
      %p86 = scmp.ne.s32.totalorder %s78, %s80
      %p87 = scmp.eq.s32.totalorder %s28, 1
      %p88 = por %p86, %p87
      %p89 = scmp.ne.s32.totalorder %s80, %s81
      %p90 = scmp.eq.s32.totalorder %s28, 0
      %p91 = por %p89, %p90
      %p92 = scmp.ne.s32.totalorder %s80, %s81
      %p93 = scmp.eq.s32.totalorder %s29, 1
      %p94 = por %p92, %p93
      %p96 = scmp.ne.s32.totalorder %s81, %s95
      %p97 = scmp.eq.s32.totalorder %s29, 0
      %p98 = por %p96, %p97
      %s100 = sadd.s32 %s99, 1
      %p103 = scmp.eq.s32.totalorder %s23, 1
      %p104 = scmp.ne.s32.totalorder %s99, %s101
      %p105 = scmp.eq.s32.totalorder %s23, 0
      %p106 = por %p104, %p105
      %p107 = scmp.ne.s32.totalorder %s99, %s101
      %p108 = scmp.eq.s32.totalorder %s28, 1
      %p109 = por %p107, %p108
      %p110 = scmp.ne.s32.totalorder %s101, %s102
      %p111 = scmp.eq.s32.totalorder %s28, 0
      %p112 = por %p110, %p111
      %p113 = scmp.ne.s32.totalorder %s101, %s102
      %p114 = scmp.eq.s32.totalorder %s29, 1
      %p115 = por %p113, %p114
      %p117 = scmp.ne.s32.totalorder %s102, %s116
      %p118 = scmp.eq.s32.totalorder %s29, 0
      %p119 = por %p117, %p118
      %s121 = sadd.s32 %s120, 1
      %p124 = scmp.eq.s32.totalorder %s23, 1
      %p125 = scmp.ne.s32.totalorder %s120, %s122
      %p126 = scmp.eq.s32.totalorder %s23, 0
      %p127 = por %p125, %p126
      %p128 = scmp.ne.s32.totalorder %s120, %s122
      %p129 = scmp.eq.s32.totalorder %s28, 1
      %p130 = por %p128, %p129
      %p131 = scmp.ne.s32.totalorder %s122, %s123
      %p132 = scmp.eq.s32.totalorder %s28, 0
      %p133 = por %p131, %p132
      %p134 = scmp.ne.s32.totalorder %s122, %s123
      %p135 = scmp.eq.s32.totalorder %s29, 1
      %p136 = por %p134, %p135
      %p138 = scmp.ne.s32.totalorder %s123, %s137
      %p139 = scmp.eq.s32.totalorder %s29, 0
      %p140 = por %p138, %p139
      %s142 = sadd.s32 %s141, 1
      %p145 = scmp.eq.s32.totalorder %s23, 1
      %p146 = scmp.ne.s32.totalorder %s141, %s143
      %p147 = scmp.eq.s32.totalorder %s23, 0
      %p148 = por %p146, %p147
      %p149 = scmp.ne.s32.totalorder %s141, %s143
      %p150 = scmp.eq.s32.totalorder %s28, 1
      %p151 = por %p149, %p150
      %p152 = scmp.ne.s32.totalorder %s143, %s144
      %p153 = scmp.eq.s32.totalorder %s28, 0
      %p154 = por %p152, %p153
      %p155 = scmp.ne.s32.totalorder %s143, %s144
      %p156 = scmp.eq.s32.totalorder %s29, 1
      %p157 = por %p155, %p156
      %p159 = scmp.ne.s32.totalorder %s144, %s158
      %p160 = scmp.eq.s32.totalorder %s29, 0
      %p161 = por %p159, %p160
      %s163 = sadd.s32 %s162, 1
      %p166 = scmp.eq.s32.totalorder %s23, 1
      %p167 = scmp.ne.s32.totalorder %s162, %s164
      %p168 = scmp.eq.s32.totalorder %s23, 0
      %p169 = por %p167, %p168
      %p170 = scmp.ne.s32.totalorder %s162, %s164
      %p171 = scmp.eq.s32.totalorder %s28, 1
      %p172 = por %p170, %p171
      %p173 = scmp.ne.s32.totalorder %s164, %s165
      %p174 = scmp.eq.s32.totalorder %s28, 0
      %p175 = por %p173, %p174
      %p176 = scmp.ne.s32.totalorder %s164, %s165
      %p177 = scmp.eq.s32.totalorder %s29, 1
      %p178 = por %p176, %p177
      %p180 = scmp.ne.s32.totalorder %s165, %s179
      %p181 = scmp.eq.s32.totalorder %s29, 0
      %p182 = por %p180, %p181
      %s184 = sadd.s32 %s183, 1
      %p187 = scmp.eq.s32.totalorder %s23, 1
      %p188 = scmp.ne.s32.totalorder %s183, %s185
      %p189 = scmp.eq.s32.totalorder %s23, 0
      %p190 = por %p188, %p189
      %p191 = scmp.ne.s32.totalorder %s183, %s185
      %p192 = scmp.eq.s32.totalorder %s28, 1
      %p193 = por %p191, %p192
      %p194 = scmp.ne.s32.totalorder %s185, %s186
      %p195 = scmp.eq.s32.totalorder %s28, 0
      %p196 = por %p194, %p195
      %p197 = scmp.ne.s32.totalorder %s185, %s186
      %p198 = scmp.eq.s32.totalorder %s29, 1
      %p199 = por %p197, %p198
      %p201 = scmp.ne.s32.totalorder %s186, %s200
      %p202 = scmp.eq.s32.totalorder %s29, 0
      %p203 = por %p201, %p202
      %s205 = sadd.s32 %s204, 1
      %p208 = scmp.eq.s32.totalorder %s23, 1
      %p209 = scmp.ne.s32.totalorder %s204, %s206
      %p210 = scmp.eq.s32.totalorder %s23, 0
      %p211 = por %p209, %p210
      %p212 = scmp.ne.s32.totalorder %s204, %s206
      %p213 = scmp.eq.s32.totalorder %s28, 1
      %p214 = por %p212, %p213
      %p215 = scmp.ne.s32.totalorder %s206, %s207
      %p216 = scmp.eq.s32.totalorder %s28, 0
      %p217 = por %p215, %p216
      %p218 = scmp.ne.s32.totalorder %s206, %s207
      %p219 = scmp.eq.s32.totalorder %s29, 1
      %p220 = por %p218, %p219
      %p222 = scmp.ne.s32.totalorder %s207, %s221
      %p223 = scmp.eq.s32.totalorder %s29, 0
      %p224 = por %p222, %p223
      %s226 = sadd.s32 %s225, 1
      %p229 = scmp.eq.s32.totalorder %s23, 1
      %p230 = scmp.ne.s32.totalorder %s225, %s227
      %p231 = scmp.eq.s32.totalorder %s23, 0
      %p232 = por %p230, %p231
      %p233 = scmp.ne.s32.totalorder %s225, %s227
      %p234 = scmp.eq.s32.totalorder %s28, 1
      %p235 = por %p233, %p234
      %p236 = scmp.ne.s32.totalorder %s227, %s228
      %p237 = scmp.eq.s32.totalorder %s28, 0
      %p238 = por %p236, %p237
      %p239 = scmp.ne.s32.totalorder %s227, %s228
      %p240 = scmp.eq.s32.totalorder %s29, 1
      %p241 = por %p239, %p240
      %p243 = scmp.ne.s32.totalorder %s228, %s242
      %p244 = scmp.eq.s32.totalorder %s29, 0
      %p245 = por %p243, %p244
      %s247 = sadd.s32 %s246, 1
      %p250 = scmp.eq.s32.totalorder %s23, 1
      %p251 = scmp.ne.s32.totalorder %s246, %s248
      %p252 = scmp.eq.s32.totalorder %s23, 0
      %p253 = por %p251, %p252
      %p254 = scmp.ne.s32.totalorder %s246, %s248
      %p255 = scmp.eq.s32.totalorder %s28, 1
      %p256 = por %p254, %p255
      %p257 = scmp.ne.s32.totalorder %s248, %s249
      %p258 = scmp.eq.s32.totalorder %s28, 0
      %p259 = por %p257, %p258
      %p260 = scmp.ne.s32.totalorder %s248, %s249
      %p261 = scmp.eq.s32.totalorder %s29, 1
      %p262 = por %p260, %p261
      %p264 = scmp.ne.s32.totalorder %s249, %s263
      %p265 = scmp.eq.s32.totalorder %s29, 0
      %p266 = por %p264, %p265
      %s268 = sadd.s32 %s267, 1
      %p271 = scmp.eq.s32.totalorder %s23, 1
      %p272 = scmp.ne.s32.totalorder %s267, %s269
      %p273 = scmp.eq.s32.totalorder %s23, 0
      %p274 = por %p272, %p273
      %p275 = scmp.ne.s32.totalorder %s267, %s269
      %p276 = scmp.eq.s32.totalorder %s28, 1
      %p277 = por %p275, %p276
      %p278 = scmp.ne.s32.totalorder %s269, %s270
      %p279 = scmp.eq.s32.totalorder %s28, 0
      %p280 = por %p278, %p279
      %p281 = scmp.ne.s32.totalorder %s269, %s270
      %p282 = scmp.eq.s32.totalorder %s29, 1
      %p283 = por %p281, %p282
      %p285 = scmp.ne.s32.totalorder %s270, %s284
      %p286 = scmp.eq.s32.totalorder %s29, 0
      %p287 = por %p285, %p286
      %s289 = sadd.s32 %s288, 1
      %p292 = scmp.eq.s32.totalorder %s23, 1
      %p293 = scmp.ne.s32.totalorder %s288, %s290
      %p294 = scmp.eq.s32.totalorder %s23, 0
      %p295 = por %p293, %p294
      %p296 = scmp.ne.s32.totalorder %s288, %s290
      %p297 = scmp.eq.s32.totalorder %s28, 1
      %p298 = por %p296, %p297
      %p299 = scmp.ne.s32.totalorder %s290, %s291
      %p300 = scmp.eq.s32.totalorder %s28, 0
      %p301 = por %p299, %p300
      %p302 = scmp.ne.s32.totalorder %s290, %s291
      %p303 = scmp.eq.s32.totalorder %s29, 1
      %p304 = por %p302, %p303
      %p306 = scmp.ne.s32.totalorder %s291, %s305
      %p307 = scmp.eq.s32.totalorder %s29, 0
      %p308 = por %p306, %p307
      %s310 = sadd.s32 %s309, 1
      %p313 = scmp.eq.s32.totalorder %s23, 1
      %p314 = scmp.ne.s32.totalorder %s309, %s311
      %p315 = scmp.eq.s32.totalorder %s23, 0
      %p316 = por %p314, %p315
      %p317 = scmp.ne.s32.totalorder %s309, %s311
      %p318 = scmp.eq.s32.totalorder %s28, 1
      %p319 = por %p317, %p318
      %p320 = scmp.ne.s32.totalorder %s311, %s312
      %p321 = scmp.eq.s32.totalorder %s28, 0
      %p322 = por %p320, %p321
      %p323 = scmp.ne.s32.totalorder %s311, %s312
      %p324 = scmp.eq.s32.totalorder %s29, 1
      %p325 = por %p323, %p324
      %p327 = scmp.ne.s32.totalorder %s312, %s326
      %p328 = scmp.eq.s32.totalorder %s29, 0
      %p329 = por %p327, %p328
      %s330 = ssub.s32 %s23, %s30
      %p331 = scmp.eq.s32.totalorder %s330, 0
      %s333 = sadd.s32 %s332, 1
      %s334 = scalar_select %p331, %s332, %s333
      %p337 = pneg %p331
      %p338 = scmp.eq.s32.totalorder %s23, 1
      %p339 = por %p337, %p338
      %p340 = scmp.ne.s32.totalorder %s332, %s335
      %p341 = scmp.eq.s32.totalorder %s23, 0
      %p342 = por %p340, %p341
      %p343 = scmp.ne.s32.totalorder %s332, %s335
      %p344 = scmp.eq.s32.totalorder %s28, 1
      %p345 = por %p343, %p344
      %p346 = scmp.ne.s32.totalorder %s335, %s336
      %p347 = scmp.eq.s32.totalorder %s28, 0
      %p348 = por %p346, %p347
      %p349 = scmp.ne.s32.totalorder %s335, %s336
      %p350 = scmp.eq.s32.totalorder %s29, 1
      %p351 = por %p349, %p350
      %p353 = scmp.ne.s32.totalorder %s336, %s352
      %p354 = scmp.eq.s32.totalorder %s29, 0
      %p355 = por %p353, %p354
      %p356 = scmp.le.s32.totalorder 1, %s23
      %p357 = scmp.lt.s32.totalorder %s23, 3
      %p358 = pnand %p356, %p357
      %p359 = pneg %p358
      // Predicated region
      $region9: #{_lambda_.6} parent=5 // pred_check
        _
      $region10: #{_lambda_.6} parent=5 // pred_check_branch
        %361 = sbr.rel (%p358) target = $region12
      $region11: #{_lambda_.6} parent=5 // pred_region
        %s362 = ssub.s32 %s23, 1
        // Predicated region
        $region13: #{_lambda_.6} parent=11 // pred_check
          %p363 = pneg %p70
        $region14: #{_lambda_.6} parent=11 // pred_check_branch
          %365 = sbr.rel (%p363) target = $region16
        $region15: #{_lambda_.6} parent=11 // pred_region
          _
        $region16: #{_lambda_.6} parent=11 // pred_fallthru
          _
        // Predicated region
        $region17: #{_lambda_.6} parent=11 // pred_check
          %p366 = pneg %p91
        $region18: #{_lambda_.6} parent=11 // pred_check_branch
          %368 = sbr.rel (%p366) target = $region20
        $region19: #{_lambda_.6} parent=11 // pred_region
          _
        $region20: #{_lambda_.6} parent=11 // pred_fallthru
          _
        // Predicated region
        $region21: #{_lambda_.6} parent=11 // pred_check
          %p369 = pneg %p112
        $region22: #{_lambda_.6} parent=11 // pred_check_branch
          %371 = sbr.rel (%p369) target = $region24
        $region23: #{_lambda_.6} parent=11 // pred_region
          %373 = vsyncadd [#allocation3], 0
          %s374 = sshll.u32 %s3, 4
          %s375 = int_to_ptr.hbm [resolvable:$true] %s374
          %s376 = sshll.u32 [#allocation2], 4
          %s377 = int_to_ptr.vmem [resolvable:$true] %s376
          %382 = dma.hbm_to_vmem [thread:$0]  %s375, 512, %s377, [#allocation3], 128, 128, 8
        $region24: #{_lambda_.6} parent=11 // pred_fallthru
          _
        // Predicated region
        $region25: #{_lambda_.6} parent=11 // pred_check
          %p383 = pneg %p133
        $region26: #{_lambda_.6} parent=11 // pred_check_branch
          %385 = sbr.rel (%p383) target = $region28
        $region27: #{_lambda_.6} parent=11 // pred_region
          _
        $region28: #{_lambda_.6} parent=11 // pred_fallthru
          _
        // Predicated region
        $region29: #{_lambda_.6} parent=11 // pred_check
          %p386 = pneg %p154
        $region30: #{_lambda_.6} parent=11 // pred_check_branch
          %388 = sbr.rel (%p386) target = $region32
        $region31: #{_lambda_.6} parent=11 // pred_region
          _
        $region32: #{_lambda_.6} parent=11 // pred_fallthru
          _
        // Predicated region
        $region33: #{_lambda_.6} parent=11 // pred_check
          %p389 = pneg %p175
        $region34: #{_lambda_.6} parent=11 // pred_check_branch
          %391 = sbr.rel (%p389) target = $region36
        $region35: #{_lambda_.6} parent=11 // pred_region
          %393 = vsyncadd [#allocation5], 0
          %s394 = sshll.u32 %s6, 4
          %s395 = int_to_ptr.hbm [resolvable:$true] %s394
          %s396 = sshll.u32 [#allocation4], 4
          %s397 = int_to_ptr.vmem [resolvable:$true] %s396
          %402 = dma.hbm_to_vmem [thread:$0]  %s395, 512, %s397, [#allocation5], 128, 128, 8
        $region36: #{_lambda_.6} parent=11 // pred_fallthru
          _
        // Predicated region
        $region37: #{_lambda_.6} parent=11 // pred_check
          %p403 = pneg %p196
        $region38: #{_lambda_.6} parent=11 // pred_check_branch
          %405 = sbr.rel (%p403) target = $region40
        $region39: #{_lambda_.6} parent=11 // pred_region
          _
        $region40: #{_lambda_.6} parent=11 // pred_fallthru
          _
        // Predicated region
        $region41: #{_lambda_.6} parent=11 // pred_check
          %p406 = pneg %p217
        $region42: #{_lambda_.6} parent=11 // pred_check_branch
          %408 = sbr.rel (%p406) target = $region44
        $region43: #{_lambda_.6} parent=11 // pred_region
          _
        $region44: #{_lambda_.6} parent=11 // pred_fallthru
          _
        // Predicated region
        $region45: #{_lambda_.6} parent=11 // pred_check
          %p409 = pneg %p238
        $region46: #{_lambda_.6} parent=11 // pred_check_branch
          %411 = sbr.rel (%p409) target = $region48
        $region47: #{_lambda_.6} parent=11 // pred_region
          _
        $region48: #{_lambda_.6} parent=11 // pred_fallthru
          _
        // Predicated region
        $region49: #{_lambda_.6} parent=11 // pred_check
          %p412 = pneg %p259
        $region50: #{_lambda_.6} parent=11 // pred_check_branch
          %414 = sbr.rel (%p412) target = $region52
        $region51: #{_lambda_.6} parent=11 // pred_region
          %416 = vsyncadd [#allocation5], 0
          %s417 = sshll.u32 %s10, 4
          %s418 = int_to_ptr.hbm [resolvable:$true] %s417
          %s419 = sshll.u32 [#allocation6], 4
          %s420 = int_to_ptr.vmem [resolvable:$true] %s419
          %425 = dma.hbm_to_vmem [thread:$0]  %s418, 512, %s420, [#allocation5], 128, 128, 8
        $region52: #{_lambda_.6} parent=11 // pred_fallthru
          _
        // Predicated region
        $region53: #{_lambda_.6} parent=11 // pred_check
          %p426 = pneg %p280
        $region54: #{_lambda_.6} parent=11 // pred_check_branch
          %428 = sbr.rel (%p426) target = $region56
        $region55: #{_lambda_.6} parent=11 // pred_region
          _
        $region56: #{_lambda_.6} parent=11 // pred_fallthru
          _
        // Predicated region
        $region57: #{_lambda_.6} parent=11 // pred_check
          %p429 = pneg %p301
        $region58: #{_lambda_.6} parent=11 // pred_check_branch
          %431 = sbr.rel (%p429) target = $region60
        $region59: #{_lambda_.6} parent=11 // pred_region
          %433 = vsyncadd [#allocation8], 0
          %s434 = sshll.u32 %s12, 4
          %s435 = int_to_ptr.hbm [resolvable:$true] %s434
          %s436 = sshll.u32 [#allocation7], 4
          %s437 = int_to_ptr.vmem [resolvable:$true] %s436
          %442 = dma.hbm_to_vmem [thread:$0]  %s435, 1024, %s437, [#allocation8], 128, 128, 8
        $region60: #{_lambda_.6} parent=11 // pred_fallthru
          _
        // Predicated region
        $region61: #{_lambda_.6} parent=11 // pred_check
          %p443 = pneg %p322
        $region62: #{_lambda_.6} parent=11 // pred_check_branch
          %445 = sbr.rel (%p443) target = $region64
        $region63: #{_lambda_.6} parent=11 // pred_region
          _
        $region64: #{_lambda_.6} parent=11 // pred_fallthru
          _
      $region12: #{_lambda_.6} parent=5 // pred_fallthru
        _
      %p446 = scmp.lt.s32.totalorder %s23, 2
      // Predicated region
      $region65: #{_lambda_.6} parent=5 // pred_check
        %p447 = pneg %p446
      $region66: #{_lambda_.6} parent=5 // pred_check_branch
        %449 = sbr.rel (%p447) target = $region68
      $region67: #{_lambda_.6} parent=5 // pred_region
        // Predicated region
        $region69: #{_lambda_.6} parent=67 // pred_check
          %p450 = pneg %p43
        $region70: #{_lambda_.6} parent=67 // pred_check_branch
          %452 = sbr.rel (%p450) target = $region72
        $region71: #{_lambda_.6} parent=67 // pred_region
          %p453 = scmp.lt.s32.totalorder %s23, 1
          %s454 = scalar_select %p453, %s23, 1
          %s455 = smul.addr %s454, 8
          %s456 = smul.addr %s455, 8
          %s457 = scalar_lea.vmem %s0, %s456
        $region72: #{_lambda_.6} parent=67 // pred_fallthru
          _
      $region68: #{_lambda_.6} parent=5 // pred_fallthru
        _
      %p458 = scmp.le.s32.totalorder 1, %s23
      %p459 = scmp.lt.s32.totalorder %s23, 3
      %p460 = pnand %p458, %p459
      %p461 = pneg %p460
      // Predicated region
      $region73: #{_lambda_.6} parent=5 // pred_check
        _
      $region74: #{_lambda_.6} parent=5 // pred_check_branch
        %463 = sbr.rel (%p460) target = $region76
      $region75: #{_lambda_.6} parent=5 // pred_region
        %s464 = ssub.s32 %s23, 1
        // Predicated region
        $region77: #{_lambda_.6} parent=75 // pred_check
          %p465 = pneg %p112
        $region78: #{_lambda_.6} parent=75 // pred_check_branch
          %467 = sbr.rel (%p465) target = $region80
        $region79: #{_lambda_.6} parent=75 // pred_region
          %469 = dma.done [#allocation3], 512
        $region80: #{_lambda_.6} parent=75 // pred_fallthru
          _
        // Predicated region
        $region81: #{_lambda_.6} parent=75 // pred_check
          %p470 = pneg %p175
        $region82: #{_lambda_.6} parent=75 // pred_check_branch
          %472 = sbr.rel (%p470) target = $region84
        $region83: #{_lambda_.6} parent=75 // pred_region
          %474 = dma.done [#allocation5], 512
        $region84: #{_lambda_.6} parent=75 // pred_fallthru
          _
        // Predicated region
        $region85: #{_lambda_.6} parent=75 // pred_check
          %p475 = pneg %p259
        $region86: #{_lambda_.6} parent=75 // pred_check_branch
          %477 = sbr.rel (%p475) target = $region88
        $region87: #{_lambda_.6} parent=75 // pred_region
          %479 = dma.done [#allocation5], 512
        $region88: #{_lambda_.6} parent=75 // pred_fallthru
          _
        // Predicated region
        $region89: #{_lambda_.6} parent=75 // pred_check
          %p480 = pneg %p301
        $region90: #{_lambda_.6} parent=75 // pred_check_branch
          %482 = sbr.rel (%p480) target = $region92
        $region91: #{_lambda_.6} parent=75 // pred_region
          %484 = dma.done [#allocation8], 1024
        $region92: #{_lambda_.6} parent=75 // pred_fallthru
          _
        %p485 = scmp.lt.s32.totalorder %s28, 1
        %s486 = scalar_select %p485, %s28, 1
        %s487 = smul.addr %s486, 8
        %s488 = smul.addr %s487, 8
        %s489 = scalar_lea.vmem %s0, %s488
        %p490 = pneg %p49
        %p491 = pneg %p46
        %p492 = pneg %p70
        %p493 = pneg %p67
        %p494 = pneg %p91
        %p495 = pneg %p88
        %p496 = pneg %p112
        %p497 = pneg %p109
        %p498 = pneg %p133
        %p499 = pneg %p130
        %p500 = pneg %p154
        %p501 = pneg %p151
        %p502 = pneg %p175
        %p503 = pneg %p172
        %p504 = pneg %p196
        %p505 = pneg %p193
        %p506 = pneg %p217
        %p507 = pneg %p214
        %p508 = pneg %p238
        %p509 = pneg %p235
        %p510 = pneg %p259
        %p511 = pneg %p256
        %p512 = pneg %p280
        %p513 = pneg %p277
        %p514 = pneg %p301
        %p515 = pneg %p298
        %p516 = pneg %p322
        %p517 = pneg %p319
        %p518 = pneg %p348
        %p519 = pneg %p345
        %p520 = scmp.lt.s32.totalorder %s28, 1
        %s521 = scalar_select %p520, %s28, 1
        %s522 = smul.addr %s521, 8
        %s523 = smul.addr %s522, 8
        %s524 = scalar_lea.vmem %s14, %s523
        %p525 = scmp.lt.s32.totalorder %s28, 1
        %s526 = scalar_select %p525, %s28, 1
        %s527 = smul.addr %s526, 8
        %s528 = smul.addr %s527, 8
        %s529 = scalar_lea.vmem %s0, %s528
        %p530 = scmp.lt.s32.totalorder %s28, 1
        %s531 = scalar_select %p530, %s28, 1
        %s532 = smul.addr %s531, 8
        %s533 = smul.addr %s532, 8
        %s534 = scalar_lea.vmem %s14, %s533
        %v535 = vld [vmem:[%s529] sm:$0xff]
        %v536 = vld [vmem:[%s529 + $0x8] sm:$0xff]
        %v537 = vld [vmem:[%s529 + $0x10] sm:$0xff]
        %v538 = vld [vmem:[%s529 + $0x18] sm:$0xff]
        %v539 = vld [vmem:[%s529 + $0x20] sm:$0xff]
        %v540 = vld [vmem:[%s529 + $0x28] sm:$0xff]
        %v541 = vld [vmem:[%s529 + $0x30] sm:$0xff]
        %v542 = vld [vmem:[%s529 + $0x38] sm:$0xff]
        %vm543 = vcmask 261120
        %v544 = vsel %vm543, %v535, 0.0
        %v545 = vsel %vm543, %v536, 0.0
        %v546 = vadd.f32 %v544, %v545
        %v547 = vsel %vm543, %v537, 0.0
        %v548 = vadd.f32 %v546, %v547
        %v549 = vsel %vm543, %v538, 0.0
        %v550 = vadd.f32 %v548, %v549
        %v551 = vsel %vm543, %v539, 0.0
        %v552 = vadd.f32 %v550, %v551
        %v553 = vsel %vm543, %v540, 0.0
        %v554 = vadd.f32 %v552, %v553
        %v555 = vsel %vm543, %v541, 0.0
        %v556 = vadd.f32 %v554, %v555
        %v557 = vsel %vm543, %v542, 0.0
        %v558 = vadd.f32 %v556, %v557
        %v559 = vrot.slane %v558, 4
        %v560 = vadd.f32 %v558, %v559
        %v561 = vrot.slane %v560, 2
        %v562 = vadd.f32 %v560, %v561
        %v563 = vrot.slane %v562, 1
        %v564 = vadd.f32 %v562, %v563
        %v565 = vrcp.pop 64.0
        %v566 = vmul.f32 64.0, %v565
        %v567 = vsub.f32 1.0, %v566
        %v568 = vmul.f32 %v565, %v567
        %v569 = vadd.f32 %v565, %v568
        %vm570 = vweird.f32 %v565
        %v571 = vsel %vm570, %v565, %v569
        %v572 = vmul.f32 %v564, %v571
        %v573 = vsub.f32 %v535, %v572
        %v574 = vsub.f32 %v536, %v572
        %v575 = vsub.f32 %v537, %v572
        %v576 = vsub.f32 %v538, %v572
        %v577 = vsub.f32 %v539, %v572
        %v578 = vsub.f32 %v540, %v572
        %v579 = vsub.f32 %v541, %v572
        %v580 = vsub.f32 %v542, %v572
        %v581 = vmul.f32 %v573, %v573
        %v582 = vmul.f32 %v574, %v574
        %v583 = vmul.f32 %v575, %v575
        %v584 = vmul.f32 %v576, %v576
        %v585 = vmul.f32 %v577, %v577
        %v586 = vmul.f32 %v578, %v578
        %v587 = vmul.f32 %v579, %v579
        %v588 = vmul.f32 %v580, %v580
        %v589 = vsel %vm543, %v581, 0.0
        %v590 = vsel %vm543, %v582, 0.0
        %v591 = vadd.f32 %v589, %v590
        %v592 = vsel %vm543, %v583, 0.0
        %v593 = vadd.f32 %v591, %v592
        %v594 = vsel %vm543, %v584, 0.0
        %v595 = vadd.f32 %v593, %v594
        %v596 = vsel %vm543, %v585, 0.0
        %v597 = vadd.f32 %v595, %v596
        %v598 = vsel %vm543, %v586, 0.0
        %v599 = vadd.f32 %v597, %v598
        %v600 = vsel %vm543, %v587, 0.0
        %v601 = vadd.f32 %v599, %v600
        %v602 = vsel %vm543, %v588, 0.0
        %v603 = vadd.f32 %v601, %v602
        %v604 = vrot.slane %v603, 4
        %v605 = vadd.f32 %v603, %v604
        %v606 = vrot.slane %v605, 2
        %v607 = vadd.f32 %v605, %v606
        %v608 = vrot.slane %v607, 1
        %v609 = vadd.f32 %v607, %v608
        %v610 = vmul.f32 %v609, %v571
        %v611 = vld [vmem:[%s1] sm:$0x1]
        %v612 = vadd.f32 %v610, 1e-05
        %v613 = vrsqrt.pop %v612
        %v614 = vmul.f32 %v613, %v612
        %v615 = vmul.f32 %v614, %v613
        %v616 = vmul.f32 0.5, %v615
        %v617 = vsub.f32 1.5, %v616
        %v618 = vmul.f32 %v613, %v617
        %vm619 = vweird.f32 %v612
        %vm620 = vweird.f32 %v613
        %vm621 = vmor %vm619, %vm620
        %v622 = vsel %vm621, %v613, %v618
        %v623 = vmul.f32 %v611, %v622
        %v625 = vperm.slane %v623, 0
        %v627 = vmul.f32 %v573, %v625
        %v628 = vmul.f32 %v574, %v625
        %v629 = vmul.f32 %v575, %v625
        %v630 = vmul.f32 %v576, %v625
        %v631 = vmul.f32 %v577, %v625
        %v632 = vmul.f32 %v578, %v625
        %v633 = vmul.f32 %v579, %v625
        %v634 = vmul.f32 %v580, %v625
        %v635 = vld [vmem:[%s2] sm:$0x1]
        %v637 = vperm.slane %v635, 0
        %v639 = vadd.f32 %v627, %v637
        %v640 = vadd.f32 %v628, %v637
        %v641 = vadd.f32 %v629, %v637
        %v642 = vadd.f32 %v630, %v637
        %v643 = vadd.f32 %v631, %v637
        %v644 = vadd.f32 %v632, %v637
        %v645 = vadd.f32 %v633, %v637
        %v646 = vadd.f32 %v634, %v637
        %v647 = vld [vmem:[#allocation2] sm:$0xff]
        %v648 = vld [vmem:[#allocation2 + $0x8] sm:$0xff]
        %v649 = vld [vmem:[#allocation2 + $0x10] sm:$0xff]
        %v650 = vld [vmem:[#allocation2 + $0x18] sm:$0xff]
        %v651 = vld [vmem:[%s4] sm:$0x1]
        %v653 = vperm.slane %v651, 0
        %v656 = vsel %vm543, %v639, 0
        %v659 = vsel %vm543, %v640, 0
        %v662 = vsel %vm543, %v641, 0
        %v665 = vsel %vm543, %v642, 0
        %v668 = vsel %vm543, %v643, 0
        %v671 = vsel %vm543, %v644, 0
        %v674 = vsel %vm543, %v645, 0
        %v677 = vsel %vm543, %v646, 0
        %679 = vmatpush.msra.mxu0 0.0
        %680 = vmatpush.msra.mxu0 0.0
        %681 = vmatpush.msra.mxu0 0.0
        %682 = vmatpush.msra.mxu0 0.0
        %683 = vmatpush.msra.mxu0 0.0
        %684 = vmatpush.msra.mxu0 0.0
        %685 = vmatpush.msra.mxu0 0.0
        %686 = vmatpush.msra.mxu0 0.0
        %687 = vmatpush.msra.mxu0 0.0
        %688 = vmatpush.msra.mxu0 0.0
        %689 = vmatpush.msra.mxu0 0.0
        %690 = vmatpush.msra.mxu0 0.0
        %691 = vmatpush.msra.mxu0 %v650
        %692 = vmatpush.msra.mxu0 %v649
        %693 = vmatpush.msra.mxu0 %v648
        %694 = vmatpush.msra.mxu0 %v647
        %695 = vmatmul.f32.gmra.mxu0 %v656
        %v696 = vpop.f32.mrf.mxu0
        %v697 = vadd.f32 %v653, %v696
        %698 = vmatmul.f32.gmra.mxu0 %v659
        %v699 = vpop.f32.mrf.mxu0
        %v700 = vadd.f32 %v653, %v699
        %701 = vmatmul.f32.gmra.mxu0 %v662
        %v702 = vpop.f32.mrf.mxu0
        %v703 = vadd.f32 %v653, %v702
        %704 = vmatmul.f32.gmra.mxu0 %v665
        %v705 = vpop.f32.mrf.mxu0
        %v706 = vadd.f32 %v653, %v705
        %707 = vmatmul.f32.gmra.mxu0 %v668
        %v708 = vpop.f32.mrf.mxu0
        %v709 = vadd.f32 %v653, %v708
        %710 = vmatmul.f32.gmra.mxu0 %v671
        %v711 = vpop.f32.mrf.mxu0
        %v712 = vadd.f32 %v653, %v711
        %713 = vmatmul.f32.gmra.mxu0 %v674
        %v714 = vpop.f32.mrf.mxu0
        %v715 = vadd.f32 %v653, %v714
        %716 = vmatmul.f32.gmra.mxu0 %v677
        %v717 = vpop.f32.mrf.mxu0
        %v718 = vadd.f32 %v653, %v717
        %719 = vdwg.mxu0
        %v720 = vlaneseq
        %v721 = vand.u32 %v720, 127
        %v722 = vld [vmem:[%s5] sm:$0xff]
        %v723 = vld [vmem:[%s5 + $0x8] sm:$0xff]
        %v724 = vld [vmem:[%s5 + $0x10] sm:$0xff]
        %v725 = vld [vmem:[%s5 + $0x18] sm:$0xff]
        %v726 = vld [vmem:[%s5 + $0x20] sm:$0xff]
        %v727 = vld [vmem:[%s5 + $0x28] sm:$0xff]
        %v728 = vld [vmem:[%s5 + $0x30] sm:$0xff]
        %v729 = vld [vmem:[%s5 + $0x38] sm:$0xff]
        %738 = vrot.lane.b32.xlu0 %v697, 96
        %v739 = vpop.permute.xlu0 %738
        %740 = vrot.lane.b32.xlu0 %v700, 96
        %v741 = vpop.permute.xlu0 %740
        %742 = vrot.lane.b32.xlu0 %v703, 96
        %v743 = vpop.permute.xlu0 %742
        %744 = vrot.lane.b32.xlu0 %v706, 96
        %v745 = vpop.permute.xlu0 %744
        %746 = vrot.lane.b32.xlu0 %v709, 96
        %v747 = vpop.permute.xlu0 %746
        %748 = vrot.lane.b32.xlu0 %v712, 96
        %v749 = vpop.permute.xlu0 %748
        %750 = vrot.lane.b32.xlu0 %v715, 96
        %v751 = vpop.permute.xlu0 %750
        %752 = vrot.lane.b32.xlu0 %v718, 96
        %v753 = vpop.permute.xlu0 %752
        %vm754 = vcmask 130048
        %v755 = vsel %vm754, %v697, 0
        %v757 = vsel %vm754, %v700, 0
        %v759 = vsel %vm754, %v703, 0
        %v761 = vsel %vm754, %v706, 0
        %v763 = vsel %vm754, %v709, 0
        %v765 = vsel %vm754, %v712, 0
        %v767 = vsel %vm754, %v715, 0
        %v769 = vsel %vm754, %v718, 0
        %v771 = vsel %vm754, %v739, 0
        %v773 = vsel %vm754, %v741, 0
        %v775 = vsel %vm754, %v743, 0
        %v777 = vsel %vm754, %v745, 0
        %v779 = vsel %vm754, %v747, 0
        %v781 = vsel %vm754, %v749, 0
        %v783 = vsel %vm754, %v751, 0
        %v785 = vsel %vm754, %v753, 0
        %787 = vmatpush.xpose.msra.mxu0 0.0
        %788 = vmatpush.xpose.msra.mxu0 0.0
        %789 = vmatpush.xpose.msra.mxu0 0.0
        %790 = vmatpush.xpose.msra.mxu0 0.0
        %791 = vmatpush.xpose.msra.mxu0 0.0
        %792 = vmatpush.xpose.msra.mxu0 0.0
        %793 = vmatpush.xpose.msra.mxu0 0.0
        %794 = vmatpush.xpose.msra.mxu0 0.0
        %795 = vmatpush.xpose.msra.mxu0 %v785
        %796 = vmatpush.xpose.msra.mxu0 %v783
        %797 = vmatpush.xpose.msra.mxu0 %v781
        %798 = vmatpush.xpose.msra.mxu0 %v779
        %799 = vmatpush.xpose.msra.mxu0 %v777
        %800 = vmatpush.xpose.msra.mxu0 %v775
        %801 = vmatpush.xpose.msra.mxu0 %v773
        %802 = vmatpush.xpose.msra.mxu0 %v771
        %803 = vmatmul.f32.gmra.mxu0 %v755
        %v804 = vpop.f32.mrf.mxu0
        %v805 = vadd.f32 %v722, %v804
        %806 = vmatmul.f32.gmra.mxu0 %v757
        %v807 = vpop.f32.mrf.mxu0
        %v808 = vadd.f32 %v723, %v807
        %809 = vmatmul.f32.gmra.mxu0 %v759
        %v810 = vpop.f32.mrf.mxu0
        %v811 = vadd.f32 %v724, %v810
        %812 = vmatmul.f32.gmra.mxu0 %v761
        %v813 = vpop.f32.mrf.mxu0
        %v814 = vadd.f32 %v725, %v813
        %815 = vmatmul.f32.gmra.mxu0 %v763
        %v816 = vpop.f32.mrf.mxu0
        %v817 = vadd.f32 %v726, %v816
        %818 = vmatmul.f32.gmra.mxu0 %v765
        %v819 = vpop.f32.mrf.mxu0
        %v820 = vadd.f32 %v727, %v819
        %821 = vmatmul.f32.gmra.mxu0 %v767
        %v822 = vpop.f32.mrf.mxu0
        %v823 = vadd.f32 %v728, %v822
        %824 = vmatmul.f32.gmra.mxu0 %v769
        %v825 = vpop.f32.mrf.mxu0
        %v826 = vadd.f32 %v729, %v825
        %827 = vdwg.mxu0
        %vm828 = vcmask 523264
        %v829 = vsel %vm828, %v805, -inf
        %830 = vmax.xlane.f32.xlu0 %v829
        %v831 = vpop.xlane.xlu0 %830
        %v832 = vsel %vm828, %v808, -inf
        %833 = vmax.xlane.f32.xlu0 %v832
        %v834 = vpop.xlane.xlu0 %833
        %v835 = vsel %vm828, %v811, -inf
        %836 = vmax.xlane.f32.xlu0 %v835
        %v837 = vpop.xlane.xlu0 %836
        %v838 = vsel %vm828, %v814, -inf
        %839 = vmax.xlane.f32.xlu0 %v838
        %v840 = vpop.xlane.xlu0 %839
        %v841 = vsel %vm828, %v817, -inf
        %842 = vmax.xlane.f32.xlu0 %v841
        %v843 = vpop.xlane.xlu0 %842
        %v844 = vsel %vm828, %v820, -inf
        %845 = vmax.xlane.f32.xlu0 %v844
        %v846 = vpop.xlane.xlu0 %845
        %v847 = vsel %vm828, %v823, -inf
        %848 = vmax.xlane.f32.xlu0 %v847
        %v849 = vpop.xlane.xlu0 %848
        %v850 = vsel %vm828, %v826, -inf
        %851 = vmax.xlane.f32.xlu0 %v850
        %v852 = vpop.xlane.xlu0 %851
        %v853 = vsub.f32 %v805, %v831
        %v854 = vsub.f32 %v808, %v834
        %v855 = vsub.f32 %v811, %v837
        %v856 = vsub.f32 %v814, %v840
        %v857 = vsub.f32 %v817, %v843
        %v858 = vsub.f32 %v820, %v846
        %v859 = vsub.f32 %v823, %v849
        %v860 = vsub.f32 %v826, %v852
        %v861 = vmul.f32 %v853, 1.442695
        %v862 = vpow.pop %v861
        %v863 = vmul.f32 %v854, 1.442695
        %v864 = vpow.pop %v863
        %v865 = vmul.f32 %v855, 1.442695
        %v866 = vpow.pop %v865
        %v867 = vmul.f32 %v856, 1.442695
        %v868 = vpow.pop %v867
        %v869 = vmul.f32 %v857, 1.442695
        %v870 = vpow.pop %v869
        %v871 = vmul.f32 %v858, 1.442695
        %v872 = vpow.pop %v871
        %v873 = vmul.f32 %v859, 1.442695
        %v874 = vpow.pop %v873
        %v875 = vmul.f32 %v860, 1.442695
        %v876 = vpow.pop %v875
        %v877 = vsel %vm828, %v862, 0.0
        %878 = vadd.xlane.f32.xlu0 %v877
        %v879 = vpop.xlane.xlu0 %878
        %v880 = vsel %vm828, %v864, 0.0
        %881 = vadd.xlane.f32.xlu0 %v880
        %v882 = vpop.xlane.xlu0 %881
        %v883 = vsel %vm828, %v866, 0.0
        %884 = vadd.xlane.f32.xlu0 %v883
        %v885 = vpop.xlane.xlu0 %884
        %v886 = vsel %vm828, %v868, 0.0
        %887 = vadd.xlane.f32.xlu0 %v886
        %v888 = vpop.xlane.xlu0 %887
        %v889 = vsel %vm828, %v870, 0.0
        %890 = vadd.xlane.f32.xlu0 %v889
        %v891 = vpop.xlane.xlu0 %890
        %v892 = vsel %vm828, %v872, 0.0
        %893 = vadd.xlane.f32.xlu0 %v892
        %v894 = vpop.xlane.xlu0 %893
        %v895 = vsel %vm828, %v874, 0.0
        %896 = vadd.xlane.f32.xlu0 %v895
        %v897 = vpop.xlane.xlu0 %896
        %v898 = vsel %vm828, %v876, 0.0
        %899 = vadd.xlane.f32.xlu0 %v898
        %v900 = vpop.xlane.xlu0 %899
        %v901 = vrcp.pop %v879
        %v902 = vrcp.pop %v882
        %v903 = vrcp.pop %v885
        %v904 = vrcp.pop %v888
        %v905 = vrcp.pop %v891
        %v906 = vrcp.pop %v894
        %v907 = vrcp.pop %v897
        %v908 = vrcp.pop %v900
        %v909 = vmul.f32 %v862, %v901
        %v910 = vmul.f32 %v864, %v902
        %v911 = vmul.f32 %v866, %v903
        %v912 = vmul.f32 %v868, %v904
        %v913 = vmul.f32 %v870, %v905
        %v914 = vmul.f32 %v872, %v906
        %v915 = vmul.f32 %v874, %v907
        %v916 = vmul.f32 %v876, %v908
        %vm917 = vcmp.ge.s32.totalorder %v721, 0
        %vm918 = vcmp.lt.s32.totalorder %v721, 16
        %vm919 = vmand %vm917, %vm918
        %v920 = vsel %vm919, 1, 0
        %vm921 = vcmp.eq.s32.totalorder %v920, 1
        %922 = vrot.lane.b32.xlu0 %v697, 64
        %v923 = vpop.permute.xlu0 %922
        %924 = vrot.lane.b32.xlu0 %v700, 64
        %v925 = vpop.permute.xlu0 %924
        %926 = vrot.lane.b32.xlu0 %v703, 64
        %v927 = vpop.permute.xlu0 %926
        %928 = vrot.lane.b32.xlu0 %v706, 64
        %v929 = vpop.permute.xlu0 %928
        %930 = vrot.lane.b32.xlu0 %v709, 64
        %v931 = vpop.permute.xlu0 %930
        %932 = vrot.lane.b32.xlu0 %v712, 64
        %v933 = vpop.permute.xlu0 %932
        %934 = vrot.lane.b32.xlu0 %v715, 64
        %v935 = vpop.permute.xlu0 %934
        %936 = vrot.lane.b32.xlu0 %v718, 64
        %v937 = vpop.permute.xlu0 %936
        %v946 = vsel %vm921, %v923, 0.0
        %v947 = vsel %vm921, %v925, 0.0
        %v948 = vsel %vm921, %v927, 0.0
        %v949 = vsel %vm921, %v929, 0.0
        %v950 = vsel %vm921, %v931, 0.0
        %v951 = vsel %vm921, %v933, 0.0
        %v952 = vsel %vm921, %v935, 0.0
        %v953 = vsel %vm921, %v937, 0.0
        %s954 = scalar_lea.vmem %s5, 64
        %v955 = vld [vmem:[%s954] sm:$0xff]
        %v956 = vld [vmem:[%s954 + $0x8] sm:$0xff]
        %v957 = vld [vmem:[%s954 + $0x10] sm:$0xff]
        %v958 = vld [vmem:[%s954 + $0x18] sm:$0xff]
        %v959 = vld [vmem:[%s954 + $0x20] sm:$0xff]
        %v960 = vld [vmem:[%s954 + $0x28] sm:$0xff]
        %v961 = vld [vmem:[%s954 + $0x30] sm:$0xff]
        %v962 = vld [vmem:[%s954 + $0x38] sm:$0xff]
        %963 = vrot.lane.b32.xlu0 %v697, 112
        %v964 = vpop.permute.xlu0 %963
        %965 = vrot.lane.b32.xlu0 %v700, 112
        %v966 = vpop.permute.xlu0 %965
        %967 = vrot.lane.b32.xlu0 %v703, 112
        %v968 = vpop.permute.xlu0 %967
        %969 = vrot.lane.b32.xlu0 %v706, 112
        %v970 = vpop.permute.xlu0 %969
        %971 = vrot.lane.b32.xlu0 %v709, 112
        %v972 = vpop.permute.xlu0 %971
        %973 = vrot.lane.b32.xlu0 %v712, 112
        %v974 = vpop.permute.xlu0 %973
        %975 = vrot.lane.b32.xlu0 %v715, 112
        %v976 = vpop.permute.xlu0 %975
        %977 = vrot.lane.b32.xlu0 %v718, 112
        %v978 = vpop.permute.xlu0 %977
        %979 = vrot.lane.b32.xlu0 %v697, 80
        %v980 = vpop.permute.xlu0 %979
        %981 = vrot.lane.b32.xlu0 %v700, 80
        %v982 = vpop.permute.xlu0 %981
        %983 = vrot.lane.b32.xlu0 %v703, 80
        %v984 = vpop.permute.xlu0 %983
        %985 = vrot.lane.b32.xlu0 %v706, 80
        %v986 = vpop.permute.xlu0 %985
        %987 = vrot.lane.b32.xlu0 %v709, 80
        %v988 = vpop.permute.xlu0 %987
        %989 = vrot.lane.b32.xlu0 %v712, 80
        %v990 = vpop.permute.xlu0 %989
        %991 = vrot.lane.b32.xlu0 %v715, 80
        %v992 = vpop.permute.xlu0 %991
        %993 = vrot.lane.b32.xlu0 %v718, 80
        %v994 = vpop.permute.xlu0 %993
        %v995 = vsel %vm754, %v964, 0
        %v997 = vsel %vm754, %v966, 0
        %v999 = vsel %vm754, %v968, 0
        %v1001 = vsel %vm754, %v970, 0
        %v1003 = vsel %vm754, %v972, 0
        %v1005 = vsel %vm754, %v974, 0
        %v1007 = vsel %vm754, %v976, 0
        %v1009 = vsel %vm754, %v978, 0
        %v1011 = vsel %vm754, %v980, 0
        %v1013 = vsel %vm754, %v982, 0
        %v1015 = vsel %vm754, %v984, 0
        %v1017 = vsel %vm754, %v986, 0
        %v1019 = vsel %vm754, %v988, 0
        %v1021 = vsel %vm754, %v990, 0
        %v1023 = vsel %vm754, %v992, 0
        %v1025 = vsel %vm754, %v994, 0
        %1027 = vmatpush.xpose.msra.mxu0 0.0
        %1028 = vmatpush.xpose.msra.mxu0 0.0
        %1029 = vmatpush.xpose.msra.mxu0 0.0
        %1030 = vmatpush.xpose.msra.mxu0 0.0
        %1031 = vmatpush.xpose.msra.mxu0 0.0
        %1032 = vmatpush.xpose.msra.mxu0 0.0
        %1033 = vmatpush.xpose.msra.mxu0 0.0
        %1034 = vmatpush.xpose.msra.mxu0 0.0
        %1035 = vmatpush.xpose.msra.mxu0 %v1025
        %1036 = vmatpush.xpose.msra.mxu0 %v1023
        %1037 = vmatpush.xpose.msra.mxu0 %v1021
        %1038 = vmatpush.xpose.msra.mxu0 %v1019
        %1039 = vmatpush.xpose.msra.mxu0 %v1017
        %1040 = vmatpush.xpose.msra.mxu0 %v1015
        %1041 = vmatpush.xpose.msra.mxu0 %v1013
        %1042 = vmatpush.xpose.msra.mxu0 %v1011
        %1043 = vmatmul.f32.gmra.mxu0 %v995
        %v1044 = vpop.f32.mrf.mxu0
        %v1045 = vadd.f32 %v955, %v1044
        %1046 = vmatmul.f32.gmra.mxu0 %v997
        %v1047 = vpop.f32.mrf.mxu0
        %v1048 = vadd.f32 %v956, %v1047
        %1049 = vmatmul.f32.gmra.mxu0 %v999
        %v1050 = vpop.f32.mrf.mxu0
        %v1051 = vadd.f32 %v957, %v1050
        %1052 = vmatmul.f32.gmra.mxu0 %v1001
        %v1053 = vpop.f32.mrf.mxu0
        %v1054 = vadd.f32 %v958, %v1053
        %1055 = vmatmul.f32.gmra.mxu0 %v1003
        %v1056 = vpop.f32.mrf.mxu0
        %v1057 = vadd.f32 %v959, %v1056
        %1058 = vmatmul.f32.gmra.mxu0 %v1005
        %v1059 = vpop.f32.mrf.mxu0
        %v1060 = vadd.f32 %v960, %v1059
        %1061 = vmatmul.f32.gmra.mxu0 %v1007
        %v1062 = vpop.f32.mrf.mxu0
        %v1063 = vadd.f32 %v961, %v1062
        %1064 = vmatmul.f32.gmra.mxu0 %v1009
        %v1065 = vpop.f32.mrf.mxu0
        %v1066 = vadd.f32 %v962, %v1065
        %1067 = vdwg.mxu0
        %v1068 = vsel %vm828, %v1045, -inf
        %1069 = vmax.xlane.f32.xlu0 %v1068
        %v1070 = vpop.xlane.xlu0 %1069
        %v1071 = vsel %vm828, %v1048, -inf
        %1072 = vmax.xlane.f32.xlu0 %v1071
        %v1073 = vpop.xlane.xlu0 %1072
        %v1074 = vsel %vm828, %v1051, -inf
        %1075 = vmax.xlane.f32.xlu0 %v1074
        %v1076 = vpop.xlane.xlu0 %1075
        %v1077 = vsel %vm828, %v1054, -inf
        %1078 = vmax.xlane.f32.xlu0 %v1077
        %v1079 = vpop.xlane.xlu0 %1078
        %v1080 = vsel %vm828, %v1057, -inf
        %1081 = vmax.xlane.f32.xlu0 %v1080
        %v1082 = vpop.xlane.xlu0 %1081
        %v1083 = vsel %vm828, %v1060, -inf
        %1084 = vmax.xlane.f32.xlu0 %v1083
        %v1085 = vpop.xlane.xlu0 %1084
        %v1086 = vsel %vm828, %v1063, -inf
        %1087 = vmax.xlane.f32.xlu0 %v1086
        %v1088 = vpop.xlane.xlu0 %1087
        %v1089 = vsel %vm828, %v1066, -inf
        %1090 = vmax.xlane.f32.xlu0 %v1089
        %v1091 = vpop.xlane.xlu0 %1090
        %v1092 = vsub.f32 %v1045, %v1070
        %v1093 = vsub.f32 %v1048, %v1073
        %v1094 = vsub.f32 %v1051, %v1076
        %v1095 = vsub.f32 %v1054, %v1079
        %v1096 = vsub.f32 %v1057, %v1082
        %v1097 = vsub.f32 %v1060, %v1085
        %v1098 = vsub.f32 %v1063, %v1088
        %v1099 = vsub.f32 %v1066, %v1091
        %v1100 = vmul.f32 %v1092, 1.442695
        %v1101 = vpow.pop %v1100
        %v1102 = vmul.f32 %v1093, 1.442695
        %v1103 = vpow.pop %v1102
        %v1104 = vmul.f32 %v1094, 1.442695
        %v1105 = vpow.pop %v1104
        %v1106 = vmul.f32 %v1095, 1.442695
        %v1107 = vpow.pop %v1106
        %v1108 = vmul.f32 %v1096, 1.442695
        %v1109 = vpow.pop %v1108
        %v1110 = vmul.f32 %v1097, 1.442695
        %v1111 = vpow.pop %v1110
        %v1112 = vmul.f32 %v1098, 1.442695
        %v1113 = vpow.pop %v1112
        %v1114 = vmul.f32 %v1099, 1.442695
        %v1115 = vpow.pop %v1114
        %v1116 = vsel %vm828, %v1101, 0.0
        %1117 = vadd.xlane.f32.xlu0 %v1116
        %v1118 = vpop.xlane.xlu0 %1117
        %v1119 = vsel %vm828, %v1103, 0.0
        %1120 = vadd.xlane.f32.xlu0 %v1119
        %v1121 = vpop.xlane.xlu0 %1120
        %v1122 = vsel %vm828, %v1105, 0.0
        %1123 = vadd.xlane.f32.xlu0 %v1122
        %v1124 = vpop.xlane.xlu0 %1123
        %v1125 = vsel %vm828, %v1107, 0.0
        %1126 = vadd.xlane.f32.xlu0 %v1125
        %v1127 = vpop.xlane.xlu0 %1126
        %v1128 = vsel %vm828, %v1109, 0.0
        %1129 = vadd.xlane.f32.xlu0 %v1128
        %v1130 = vpop.xlane.xlu0 %1129
        %v1131 = vsel %vm828, %v1111, 0.0
        %1132 = vadd.xlane.f32.xlu0 %v1131
        %v1133 = vpop.xlane.xlu0 %1132
        %v1134 = vsel %vm828, %v1113, 0.0
        %1135 = vadd.xlane.f32.xlu0 %v1134
        %v1136 = vpop.xlane.xlu0 %1135
        %v1137 = vsel %vm828, %v1115, 0.0
        %1138 = vadd.xlane.f32.xlu0 %v1137
        %v1139 = vpop.xlane.xlu0 %1138
        %v1140 = vrcp.pop %v1118
        %v1141 = vrcp.pop %v1121
        %v1142 = vrcp.pop %v1124
        %v1143 = vrcp.pop %v1127
        %v1144 = vrcp.pop %v1130
        %v1145 = vrcp.pop %v1133
        %v1146 = vrcp.pop %v1136
        %v1147 = vrcp.pop %v1139
        %v1148 = vmul.f32 %v1101, %v1140
        %v1149 = vmul.f32 %v1103, %v1141
        %v1150 = vmul.f32 %v1105, %v1142
        %v1151 = vmul.f32 %v1107, %v1143
        %v1152 = vmul.f32 %v1109, %v1144
        %v1153 = vmul.f32 %v1111, %v1145
        %v1154 = vmul.f32 %v1113, %v1146
        %v1155 = vmul.f32 %v1115, %v1147
        %vm1156 = vcmp.ge.s32.totalorder %v721, 16
        %vm1157 = vcmp.lt.s32.totalorder %v721, 32
        %vm1158 = vmand %vm1156, %vm1157
        %v1159 = vsel %vm1158, 1, 0
        %vm1160 = vcmp.eq.s32.totalorder %v1159, 1
        %v1161 = vsel %vm1160, %v923, 0.0
        %v1162 = vsel %vm1160, %v925, 0.0
        %v1163 = vsel %vm1160, %v927, 0.0
        %v1164 = vsel %vm1160, %v929, 0.0
        %v1165 = vsel %vm1160, %v931, 0.0
        %v1166 = vsel %vm1160, %v933, 0.0
        %v1167 = vsel %vm1160, %v935, 0.0
        %v1168 = vsel %vm1160, %v937, 0.0
        %v1170 = vsel %vm828, %v1148, 0
        %v1173 = vsel %vm828, %v1149, 0
        %v1176 = vsel %vm828, %v1150, 0
        %v1179 = vsel %vm828, %v1151, 0
        %v1182 = vsel %vm828, %v1152, 0
        %v1185 = vsel %vm828, %v1153, 0
        %v1188 = vsel %vm828, %v1154, 0
        %v1191 = vsel %vm828, %v1155, 0
        %1193 = vmatpush.msra.mxu0 0.0
        %1194 = vmatpush.msra.mxu0 0.0
        %1195 = vmatpush.msra.mxu0 0.0
        %1196 = vmatpush.msra.mxu0 0.0
        %1197 = vmatpush.msra.mxu0 0.0
        %1198 = vmatpush.msra.mxu0 0.0
        %1199 = vmatpush.msra.mxu0 0.0
        %1200 = vmatpush.msra.mxu0 0.0
        %1201 = vmatpush.msra.mxu0 %v1168
        %1202 = vmatpush.msra.mxu0 %v1167
        %1203 = vmatpush.msra.mxu0 %v1166
        %1204 = vmatpush.msra.mxu0 %v1165
        %1205 = vmatpush.msra.mxu0 %v1164
        %1206 = vmatpush.msra.mxu0 %v1163
        %1207 = vmatpush.msra.mxu0 %v1162
        %1208 = vmatpush.msra.mxu0 %v1161
        %1209 = vmatmul.f32.gmra.mxu0 %v1170
        %v1210 = vpop.f32.mrf.mxu0
        %v1211 = vadd.f32 0.0, %v1210
        %1212 = vmatmul.f32.gmra.mxu0 %v1173
        %v1213 = vpop.f32.mrf.mxu0
        %v1214 = vadd.f32 0.0, %v1213
        %1215 = vmatmul.f32.gmra.mxu0 %v1176
        %v1216 = vpop.f32.mrf.mxu0
        %v1217 = vadd.f32 0.0, %v1216
        %1218 = vmatmul.f32.gmra.mxu0 %v1179
        %v1219 = vpop.f32.mrf.mxu0
        %v1220 = vadd.f32 0.0, %v1219
        %1221 = vmatmul.f32.gmra.mxu0 %v1182
        %v1222 = vpop.f32.mrf.mxu0
        %v1223 = vadd.f32 0.0, %v1222
        %1224 = vmatmul.f32.gmra.mxu0 %v1185
        %v1225 = vpop.f32.mrf.mxu0
        %v1226 = vadd.f32 0.0, %v1225
        %1227 = vmatmul.f32.gmra.mxu0 %v1188
        %v1228 = vpop.f32.mrf.mxu0
        %v1229 = vadd.f32 0.0, %v1228
        %1230 = vmatmul.f32.gmra.mxu0 %v1191
        %v1231 = vpop.f32.mrf.mxu0
        %v1232 = vadd.f32 0.0, %v1231
        %1233 = vdwg.mxu0
        %v1235 = vsel %vm828, %v909, 0
        %v1238 = vsel %vm828, %v910, 0
        %v1241 = vsel %vm828, %v911, 0
        %v1244 = vsel %vm828, %v912, 0
        %v1247 = vsel %vm828, %v913, 0
        %v1250 = vsel %vm828, %v914, 0
        %v1253 = vsel %vm828, %v915, 0
        %v1256 = vsel %vm828, %v916, 0
        %1258 = vmatpush.msra.mxu0 0.0
        %1259 = vmatpush.msra.mxu0 0.0
        %1260 = vmatpush.msra.mxu0 0.0
        %1261 = vmatpush.msra.mxu0 0.0
        %1262 = vmatpush.msra.mxu0 0.0
        %1263 = vmatpush.msra.mxu0 0.0
        %1264 = vmatpush.msra.mxu0 0.0
        %1265 = vmatpush.msra.mxu0 0.0
        %1266 = vmatpush.msra.mxu0 %v953
        %1267 = vmatpush.msra.mxu0 %v952
        %1268 = vmatpush.msra.mxu0 %v951
        %1269 = vmatpush.msra.mxu0 %v950
        %1270 = vmatpush.msra.mxu0 %v949
        %1271 = vmatpush.msra.mxu0 %v948
        %1272 = vmatpush.msra.mxu0 %v947
        %1273 = vmatpush.msra.mxu0 %v946
        %1274 = vmatmul.f32.gmra.mxu0 %v1235
        %v1275 = vpop.f32.mrf.mxu0
        %v1276 = vadd.f32 %v1211, %v1275
        %1277 = vmatmul.f32.gmra.mxu0 %v1238
        %v1278 = vpop.f32.mrf.mxu0
        %v1279 = vadd.f32 %v1214, %v1278
        %1280 = vmatmul.f32.gmra.mxu0 %v1241
        %v1281 = vpop.f32.mrf.mxu0
        %v1282 = vadd.f32 %v1217, %v1281
        %1283 = vmatmul.f32.gmra.mxu0 %v1244
        %v1284 = vpop.f32.mrf.mxu0
        %v1285 = vadd.f32 %v1220, %v1284
        %1286 = vmatmul.f32.gmra.mxu0 %v1247
        %v1287 = vpop.f32.mrf.mxu0
        %v1288 = vadd.f32 %v1223, %v1287
        %1289 = vmatmul.f32.gmra.mxu0 %v1250
        %v1290 = vpop.f32.mrf.mxu0
        %v1291 = vadd.f32 %v1226, %v1290
        %1292 = vmatmul.f32.gmra.mxu0 %v1253
        %v1293 = vpop.f32.mrf.mxu0
        %v1294 = vadd.f32 %v1229, %v1293
        %1295 = vmatmul.f32.gmra.mxu0 %v1256
        %v1296 = vpop.f32.mrf.mxu0
        %v1297 = vadd.f32 %v1232, %v1296
        %1298 = vdwg.mxu0
        %v1299 = vld [vmem:[#allocation4] sm:$0xff]
        %v1300 = vld [vmem:[#allocation4 + $0x8] sm:$0xff]
        %v1301 = vld [vmem:[#allocation4 + $0x10] sm:$0xff]
        %v1302 = vld [vmem:[#allocation4 + $0x18] sm:$0xff]
        %v1303 = vld [vmem:[%s7] sm:$0x1]
        %v1305 = vperm.slane %v1303, 0
        %v1308 = vsel %vm543, %v1276, 0
        %v1311 = vsel %vm543, %v1279, 0
        %v1314 = vsel %vm543, %v1282, 0
        %v1317 = vsel %vm543, %v1285, 0
        %v1320 = vsel %vm543, %v1288, 0
        %v1323 = vsel %vm543, %v1291, 0
        %v1326 = vsel %vm543, %v1294, 0
        %v1329 = vsel %vm543, %v1297, 0
        %1331 = vmatpush.msra.mxu0 0.0
        %1332 = vmatpush.msra.mxu0 0.0
        %1333 = vmatpush.msra.mxu0 0.0
        %1334 = vmatpush.msra.mxu0 0.0
        %1335 = vmatpush.msra.mxu0 0.0
        %1336 = vmatpush.msra.mxu0 0.0
        %1337 = vmatpush.msra.mxu0 0.0
        %1338 = vmatpush.msra.mxu0 0.0
        %1339 = vmatpush.msra.mxu0 0.0
        %1340 = vmatpush.msra.mxu0 0.0
        %1341 = vmatpush.msra.mxu0 0.0
        %1342 = vmatpush.msra.mxu0 0.0
        %1343 = vmatpush.msra.mxu0 %v1302
        %1344 = vmatpush.msra.mxu0 %v1301
        %1345 = vmatpush.msra.mxu0 %v1300
        %1346 = vmatpush.msra.mxu0 %v1299
        %1347 = vmatmul.f32.gmra.mxu0 %v1308
        %v1348 = vpop.f32.mrf.mxu0
        %v1349 = vadd.f32 %v1305, %v1348
        %1350 = vmatmul.f32.gmra.mxu0 %v1311
        %v1351 = vpop.f32.mrf.mxu0
        %v1352 = vadd.f32 %v1305, %v1351
        %1353 = vmatmul.f32.gmra.mxu0 %v1314
        %v1354 = vpop.f32.mrf.mxu0
        %v1355 = vadd.f32 %v1305, %v1354
        %1356 = vmatmul.f32.gmra.mxu0 %v1317
        %v1357 = vpop.f32.mrf.mxu0
        %v1358 = vadd.f32 %v1305, %v1357
        %1359 = vmatmul.f32.gmra.mxu0 %v1320
        %v1360 = vpop.f32.mrf.mxu0
        %v1361 = vadd.f32 %v1305, %v1360
        %1362 = vmatmul.f32.gmra.mxu0 %v1323
        %v1363 = vpop.f32.mrf.mxu0
        %v1364 = vadd.f32 %v1305, %v1363
        %1365 = vmatmul.f32.gmra.mxu0 %v1326
        %v1366 = vpop.f32.mrf.mxu0
        %v1367 = vadd.f32 %v1305, %v1366
        %1368 = vmatmul.f32.gmra.mxu0 %v1329
        %v1369 = vpop.f32.mrf.mxu0
        %v1370 = vadd.f32 %v1305, %v1369
        %1371 = vdwg.mxu0
        %v1372 = vadd.f32 %v535, %v1349
        %v1373 = vadd.f32 %v536, %v1352
        %v1374 = vadd.f32 %v537, %v1355
        %v1375 = vadd.f32 %v538, %v1358
        %v1376 = vadd.f32 %v539, %v1361
        %v1377 = vadd.f32 %v540, %v1364
        %v1378 = vadd.f32 %v541, %v1367
        %v1379 = vadd.f32 %v542, %v1370
        %v1380 = vsel %vm543, %v1372, 0.0
        %v1381 = vsel %vm543, %v1373, 0.0
        %v1382 = vadd.f32 %v1380, %v1381
        %v1383 = vsel %vm543, %v1374, 0.0
        %v1384 = vadd.f32 %v1382, %v1383
        %v1385 = vsel %vm543, %v1375, 0.0
        %v1386 = vadd.f32 %v1384, %v1385
        %v1387 = vsel %vm543, %v1376, 0.0
        %v1388 = vadd.f32 %v1386, %v1387
        %v1389 = vsel %vm543, %v1377, 0.0
        %v1390 = vadd.f32 %v1388, %v1389
        %v1391 = vsel %vm543, %v1378, 0.0
        %v1392 = vadd.f32 %v1390, %v1391
        %v1393 = vsel %vm543, %v1379, 0.0
        %v1394 = vadd.f32 %v1392, %v1393
        %v1395 = vrot.slane %v1394, 4
        %v1396 = vadd.f32 %v1394, %v1395
        %v1397 = vrot.slane %v1396, 2
        %v1398 = vadd.f32 %v1396, %v1397
        %v1399 = vrot.slane %v1398, 1
        %v1400 = vadd.f32 %v1398, %v1399
        %v1401 = vmul.f32 %v1400, %v571
        %v1402 = vsub.f32 %v1372, %v1401
        %v1403 = vsub.f32 %v1373, %v1401
        %v1404 = vsub.f32 %v1374, %v1401
        %v1405 = vsub.f32 %v1375, %v1401
        %v1406 = vsub.f32 %v1376, %v1401
        %v1407 = vsub.f32 %v1377, %v1401
        %v1408 = vsub.f32 %v1378, %v1401
        %v1409 = vsub.f32 %v1379, %v1401
        %v1410 = vmul.f32 %v1402, %v1402
        %v1411 = vmul.f32 %v1403, %v1403
        %v1412 = vmul.f32 %v1404, %v1404
        %v1413 = vmul.f32 %v1405, %v1405
        %v1414 = vmul.f32 %v1406, %v1406
        %v1415 = vmul.f32 %v1407, %v1407
        %v1416 = vmul.f32 %v1408, %v1408
        %v1417 = vmul.f32 %v1409, %v1409
        %v1418 = vsel %vm543, %v1410, 0.0
        %v1419 = vsel %vm543, %v1411, 0.0
        %v1420 = vadd.f32 %v1418, %v1419
        %v1421 = vsel %vm543, %v1412, 0.0
        %v1422 = vadd.f32 %v1420, %v1421
        %v1423 = vsel %vm543, %v1413, 0.0
        %v1424 = vadd.f32 %v1422, %v1423
        %v1425 = vsel %vm543, %v1414, 0.0
        %v1426 = vadd.f32 %v1424, %v1425
        %v1427 = vsel %vm543, %v1415, 0.0
        %v1428 = vadd.f32 %v1426, %v1427
        %v1429 = vsel %vm543, %v1416, 0.0
        %v1430 = vadd.f32 %v1428, %v1429
        %v1431 = vsel %vm543, %v1417, 0.0
        %v1432 = vadd.f32 %v1430, %v1431
        %v1433 = vrot.slane %v1432, 4
        %v1434 = vadd.f32 %v1432, %v1433
        %v1435 = vrot.slane %v1434, 2
        %v1436 = vadd.f32 %v1434, %v1435
        %v1437 = vrot.slane %v1436, 1
        %v1438 = vadd.f32 %v1436, %v1437
        %v1439 = vmul.f32 %v1438, %v571
        %v1440 = vld [vmem:[%s8] sm:$0x1]
        %v1441 = vadd.f32 %v1439, 1e-05
        %v1442 = vrsqrt.pop %v1441
        %v1443 = vmul.f32 %v1442, %v1441
        %v1444 = vmul.f32 %v1443, %v1442
        %v1445 = vmul.f32 0.5, %v1444
        %v1446 = vsub.f32 1.5, %v1445
        %v1447 = vmul.f32 %v1442, %v1446
        %vm1448 = vweird.f32 %v1441
        %vm1449 = vweird.f32 %v1442
        %vm1450 = vmor %vm1448, %vm1449
        %v1451 = vsel %vm1450, %v1442, %v1447
        %v1452 = vmul.f32 %v1440, %v1451
        %v1454 = vperm.slane %v1452, 0
        %v1456 = vmul.f32 %v1402, %v1454
        %v1457 = vmul.f32 %v1403, %v1454
        %v1458 = vmul.f32 %v1404, %v1454
        %v1459 = vmul.f32 %v1405, %v1454
        %v1460 = vmul.f32 %v1406, %v1454
        %v1461 = vmul.f32 %v1407, %v1454
        %v1462 = vmul.f32 %v1408, %v1454
        %v1463 = vmul.f32 %v1409, %v1454
        %v1464 = vld [vmem:[%s9] sm:$0x1]
        %v1466 = vperm.slane %v1464, 0
        %v1468 = vadd.f32 %v1456, %v1466
        %v1469 = vadd.f32 %v1457, %v1466
        %v1470 = vadd.f32 %v1458, %v1466
        %v1471 = vadd.f32 %v1459, %v1466
        %v1472 = vadd.f32 %v1460, %v1466
        %v1473 = vadd.f32 %v1461, %v1466
        %v1474 = vadd.f32 %v1462, %v1466
        %v1475 = vadd.f32 %v1463, %v1466
        %v1476 = vld [vmem:[#allocation6] sm:$0xff]
        %v1477 = vld [vmem:[#allocation6 + $0x8] sm:$0xff]
        %v1478 = vld [vmem:[#allocation6 + $0x10] sm:$0xff]
        %v1479 = vld [vmem:[#allocation6 + $0x18] sm:$0xff]
        %v1480 = vld [vmem:[%s11] sm:$0x1]
        %v1482 = vperm.slane %v1480, 0
        %v1485 = vsel %vm543, %v1468, 0
        %v1488 = vsel %vm543, %v1469, 0
        %v1491 = vsel %vm543, %v1470, 0
        %v1494 = vsel %vm543, %v1471, 0
        %v1497 = vsel %vm543, %v1472, 0
        %v1500 = vsel %vm543, %v1473, 0
        %v1503 = vsel %vm543, %v1474, 0
        %v1506 = vsel %vm543, %v1475, 0
        %1508 = vmatpush.msra.mxu0 0.0
        %1509 = vmatpush.msra.mxu0 0.0
        %1510 = vmatpush.msra.mxu0 0.0
        %1511 = vmatpush.msra.mxu0 0.0
        %1512 = vmatpush.msra.mxu0 0.0
        %1513 = vmatpush.msra.mxu0 0.0
        %1514 = vmatpush.msra.mxu0 0.0
        %1515 = vmatpush.msra.mxu0 0.0
        %1516 = vmatpush.msra.mxu0 0.0
        %1517 = vmatpush.msra.mxu0 0.0
        %1518 = vmatpush.msra.mxu0 0.0
        %1519 = vmatpush.msra.mxu0 0.0
        %1520 = vmatpush.msra.mxu0 %v1479
        %1521 = vmatpush.msra.mxu0 %v1478
        %1522 = vmatpush.msra.mxu0 %v1477
        %1523 = vmatpush.msra.mxu0 %v1476
        %1524 = vmatmul.f32.gmra.mxu0 %v1485
        %v1525 = vpop.f32.mrf.mxu0
        %v1526 = vadd.f32 %v1482, %v1525
        %1527 = vmatmul.f32.gmra.mxu0 %v1488
        %v1528 = vpop.f32.mrf.mxu0
        %v1529 = vadd.f32 %v1482, %v1528
        %1530 = vmatmul.f32.gmra.mxu0 %v1491
        %v1531 = vpop.f32.mrf.mxu0
        %v1532 = vadd.f32 %v1482, %v1531
        %1533 = vmatmul.f32.gmra.mxu0 %v1494
        %v1534 = vpop.f32.mrf.mxu0
        %v1535 = vadd.f32 %v1482, %v1534
        %1536 = vmatmul.f32.gmra.mxu0 %v1497
        %v1537 = vpop.f32.mrf.mxu0
        %v1538 = vadd.f32 %v1482, %v1537
        %1539 = vmatmul.f32.gmra.mxu0 %v1500
        %v1540 = vpop.f32.mrf.mxu0
        %v1541 = vadd.f32 %v1482, %v1540
        %1542 = vmatmul.f32.gmra.mxu0 %v1503
        %v1543 = vpop.f32.mrf.mxu0
        %v1544 = vadd.f32 %v1482, %v1543
        %1545 = vmatmul.f32.gmra.mxu0 %v1506
        %v1546 = vpop.f32.mrf.mxu0
        %v1547 = vadd.f32 %v1482, %v1546
        %1548 = vdwg.mxu0
        %v1549 = vmul.f32 %v1526, %v1526
        %v1550 = vmul.f32 %v1529, %v1529
        %v1551 = vmul.f32 %v1532, %v1532
        %v1552 = vmul.f32 %v1535, %v1535
        %v1553 = vmul.f32 %v1538, %v1538
        %v1554 = vmul.f32 %v1541, %v1541
        %v1555 = vmul.f32 %v1544, %v1544
        %v1556 = vmul.f32 %v1547, %v1547
        %v1557 = vmul.f32 %v1526, %v1549
        %v1558 = vmul.f32 %v1529, %v1550
        %v1559 = vmul.f32 %v1532, %v1551
        %v1560 = vmul.f32 %v1535, %v1552
        %v1561 = vmul.f32 %v1538, %v1553
        %v1562 = vmul.f32 %v1541, %v1554
        %v1563 = vmul.f32 %v1544, %v1555
        %v1564 = vmul.f32 %v1547, %v1556
        %v1565 = vmul.f32 %v1557, 0.044715
        %v1566 = vmul.f32 %v1558, 0.044715
        %v1567 = vmul.f32 %v1559, 0.044715
        %v1568 = vmul.f32 %v1560, 0.044715
        %v1569 = vmul.f32 %v1561, 0.044715
        %v1570 = vmul.f32 %v1562, 0.044715
        %v1571 = vmul.f32 %v1563, 0.044715
        %v1572 = vmul.f32 %v1564, 0.044715
        %v1573 = vadd.f32 %v1526, %v1565
        %v1574 = vadd.f32 %v1529, %v1566
        %v1575 = vadd.f32 %v1532, %v1567
        %v1576 = vadd.f32 %v1535, %v1568
        %v1577 = vadd.f32 %v1538, %v1569
        %v1578 = vadd.f32 %v1541, %v1570
        %v1579 = vadd.f32 %v1544, %v1571
        %v1580 = vadd.f32 %v1547, %v1572
        %v1581 = vmul.f32 %v1573, 0.7978846
        %v1582 = vmul.f32 %v1574, 0.7978846
        %v1583 = vmul.f32 %v1575, 0.7978846
        %v1584 = vmul.f32 %v1576, 0.7978846
        %v1585 = vmul.f32 %v1577, 0.7978846
        %v1586 = vmul.f32 %v1578, 0.7978846
        %v1587 = vmul.f32 %v1579, 0.7978846
        %v1588 = vmul.f32 %v1580, 0.7978846
        %v1589 = vtanh.pop %v1581
        %v1590 = vtanh.pop %v1582
        %v1591 = vtanh.pop %v1583
        %v1592 = vtanh.pop %v1584
        %v1593 = vtanh.pop %v1585
        %v1594 = vtanh.pop %v1586
        %v1595 = vtanh.pop %v1587
        %v1596 = vtanh.pop %v1588
        %v1597 = vadd.f32 %v1589, 1.0
        %v1598 = vadd.f32 %v1590, 1.0
        %v1599 = vadd.f32 %v1591, 1.0
        %v1600 = vadd.f32 %v1592, 1.0
        %v1601 = vadd.f32 %v1593, 1.0
        %v1602 = vadd.f32 %v1594, 1.0
        %v1603 = vadd.f32 %v1595, 1.0
        %v1604 = vadd.f32 %v1596, 1.0
        %v1605 = vmul.f32 %v1597, 0.5
        %v1606 = vmul.f32 %v1598, 0.5
        %v1607 = vmul.f32 %v1599, 0.5
        %v1608 = vmul.f32 %v1600, 0.5
        %v1609 = vmul.f32 %v1601, 0.5
        %v1610 = vmul.f32 %v1602, 0.5
        %v1611 = vmul.f32 %v1603, 0.5
        %v1612 = vmul.f32 %v1604, 0.5
        %v1613 = vmul.f32 %v1526, %v1605
        %v1614 = vmul.f32 %v1529, %v1606
        %v1615 = vmul.f32 %v1532, %v1607
        %v1616 = vmul.f32 %v1535, %v1608
        %v1617 = vmul.f32 %v1538, %v1609
        %v1618 = vmul.f32 %v1541, %v1610
        %v1619 = vmul.f32 %v1544, %v1611
        %v1620 = vmul.f32 %v1547, %v1612
        %v1621 = vld [vmem:[#allocation7] sm:$0xff]
        %v1622 = vld [vmem:[#allocation7 + $0x8] sm:$0xff]
        %v1623 = vld [vmem:[#allocation7 + $0x10] sm:$0xff]
        %v1624 = vld [vmem:[#allocation7 + $0x18] sm:$0xff]
        %v1625 = vld [vmem:[#allocation7 + $0x20] sm:$0xff]
        %v1626 = vld [vmem:[#allocation7 + $0x28] sm:$0xff]
        %v1627 = vld [vmem:[#allocation7 + $0x30] sm:$0xff]
        %v1628 = vld [vmem:[#allocation7 + $0x38] sm:$0xff]
        %v1629 = vld [vmem:[%s13] sm:$0x1]
        %v1631 = vperm.slane %v1629, 0
        %v1634 = vsel %vm828, %v1613, 0
        %v1637 = vsel %vm828, %v1614, 0
        %v1640 = vsel %vm828, %v1615, 0
        %v1643 = vsel %vm828, %v1616, 0
        %v1646 = vsel %vm828, %v1617, 0
        %v1649 = vsel %vm828, %v1618, 0
        %v1652 = vsel %vm828, %v1619, 0
        %v1655 = vsel %vm828, %v1620, 0
        %1657 = vmatpush.msra.mxu0 0.0
        %1658 = vmatpush.msra.mxu0 0.0
        %1659 = vmatpush.msra.mxu0 0.0
        %1660 = vmatpush.msra.mxu0 0.0
        %1661 = vmatpush.msra.mxu0 0.0
        %1662 = vmatpush.msra.mxu0 0.0
        %1663 = vmatpush.msra.mxu0 0.0
        %1664 = vmatpush.msra.mxu0 0.0
        %1665 = vmatpush.msra.mxu0 %v1628
        %1666 = vmatpush.msra.mxu0 %v1627
        %1667 = vmatpush.msra.mxu0 %v1626
        %1668 = vmatpush.msra.mxu0 %v1625
        %1669 = vmatpush.msra.mxu0 %v1624
        %1670 = vmatpush.msra.mxu0 %v1623
        %1671 = vmatpush.msra.mxu0 %v1622
        %1672 = vmatpush.msra.mxu0 %v1621
        %1673 = vmatmul.f32.gmra.mxu0 %v1634
        %v1674 = vpop.f32.mrf.mxu0
        %v1675 = vadd.f32 %v1631, %v1674
        %1676 = vmatmul.f32.gmra.mxu0 %v1637
        %v1677 = vpop.f32.mrf.mxu0
        %v1678 = vadd.f32 %v1631, %v1677
        %1679 = vmatmul.f32.gmra.mxu0 %v1640
        %v1680 = vpop.f32.mrf.mxu0
        %v1681 = vadd.f32 %v1631, %v1680
        %1682 = vmatmul.f32.gmra.mxu0 %v1643
        %v1683 = vpop.f32.mrf.mxu0
        %v1684 = vadd.f32 %v1631, %v1683
        %1685 = vmatmul.f32.gmra.mxu0 %v1646
        %v1686 = vpop.f32.mrf.mxu0
        %v1687 = vadd.f32 %v1631, %v1686
        %1688 = vmatmul.f32.gmra.mxu0 %v1649
        %v1689 = vpop.f32.mrf.mxu0
        %v1690 = vadd.f32 %v1631, %v1689
        %1691 = vmatmul.f32.gmra.mxu0 %v1652
        %v1692 = vpop.f32.mrf.mxu0
        %v1693 = vadd.f32 %v1631, %v1692
        %1694 = vmatmul.f32.gmra.mxu0 %v1655
        %v1695 = vpop.f32.mrf.mxu0
        %v1696 = vadd.f32 %v1631, %v1695
        %1697 = vdwg.mxu0
        %v1698 = vadd.f32 %v1372, %v1675
        %v1699 = vadd.f32 %v1373, %v1678
        %v1700 = vadd.f32 %v1374, %v1681
        %v1701 = vadd.f32 %v1375, %v1684
        %v1702 = vadd.f32 %v1376, %v1687
        %v1703 = vadd.f32 %v1377, %v1690
        %v1704 = vadd.f32 %v1378, %v1693
        %v1705 = vadd.f32 %v1379, %v1696
        %1706 = vst.msk [vmem:[%s534] sm:$0xff] %vm543, %v1698
        %1707 = vst.msk [vmem:[%s534 + $0x8] sm:$0xff] %vm543, %v1699
        %1708 = vst.msk [vmem:[%s534 + $0x10] sm:$0xff] %vm543, %v1700
        %1709 = vst.msk [vmem:[%s534 + $0x18] sm:$0xff] %vm543, %v1701
        %1710 = vst.msk [vmem:[%s534 + $0x20] sm:$0xff] %vm543, %v1702
        %1711 = vst.msk [vmem:[%s534 + $0x28] sm:$0xff] %vm543, %v1703
        %1712 = vst.msk [vmem:[%s534 + $0x30] sm:$0xff] %vm543, %v1704
        %1713 = vst.msk [vmem:[%s534 + $0x38] sm:$0xff] %vm543, %v1705
        %p1714 = scmp.lt.s32.totalorder %s28, 1
        %s1715 = scalar_select %p1714, %s28, 1
        %s1716 = smul.addr %s1715, 8
        %s1717 = smul.addr %s1716, 8
        %s1718 = scalar_lea.vmem %s14, %s1717
        // Predicated region
        $region93: #{_lambda_.6} parent=75 // pred_check
          %p1719 = pneg %p345
        $region94: #{_lambda_.6} parent=75 // pred_check_branch
          %1721 = sbr.rel (%p1719) target = $region96
        $region95: #{_lambda_.6} parent=75 // pred_region
          _
        $region96: #{_lambda_.6} parent=75 // pred_fallthru
          _
      $region76: #{_lambda_.6} parent=5 // pred_fallthru
        _
      %p1722 = scmp.le.s32.totalorder 2, %s23
      // Predicated region
      $region97: #{_lambda_.6} parent=5 // pred_check
        %p1723 = pneg %p1722
      $region98: #{_lambda_.6} parent=5 // pred_check_branch
        %1725 = sbr.rel (%p1723) target = $region100
      $region99: #{_lambda_.6} parent=5 // pred_region
        %s1726 = ssub.s32 %s23, 2
        // Predicated region
        $region101: #{_lambda_.6} parent=99 // pred_check
          %p1727 = pneg %p351
        $region102: #{_lambda_.6} parent=99 // pred_check_branch
          %1729 = sbr.rel (%p1727) target = $region104
        $region103: #{_lambda_.6} parent=99 // pred_region
          %p1730 = scmp.lt.s32.totalorder %s29, 1
          %s1731 = scalar_select %p1730, %s29, 1
          %s1732 = smul.addr %s1731, 8
          %s1733 = smul.addr %s1732, 8
          %s1734 = scalar_lea.vmem %s14, %s1733
        $region104: #{_lambda_.6} parent=99 // pred_fallthru
          _
      $region100: #{_lambda_.6} parent=5 // pred_fallthru
        _
    $region6: #{_lambda_.6} parent=1 // loop_footer
      %s27 = sadd.s32 1, %s23
    $region7: #{_lambda_.6} parent=1 // loop_footer_branch
      %22 = sbr.rel target = $region3
    $region8: #{_lambda_.6} parent=1 // loop_exit
      _
    %1735 = vsyncpa [#allocation3], 1
    %s1736 = scalar_lea.sflag [#allocation3], 1
    %1737 = vsyncpa %s1736, 1
    %1738 = vsyncpa [#allocation5], 1
    %1739 = vsyncpa [#allocation8], 1

// kernel: _lambda_.5
$region0: #{_lambda_.5}
  #allocation0 [shape = 'u32[]', space=smem, size = 0x4, offset = 0x4, fixed_abs, tag = 'smem constant byte address 0x4 - core index']
  #allocation1 [shape = 'u32[72,128]{1,0:T(1,128)}', space=vmem, size = 0x9000, scoped, tag = 'internal scratch']
  %s0 = inlined_call_operand.vmem [shape: f32[2,64,32], index: 0, kind: input, shape index: {}]
  %s1 = inlined_call_operand.vmem [shape: f32[1,32], index: 1, kind: input, shape index: {}, may-alias: {1,8}]
  %s2 = inlined_call_operand.vmem [shape: f32[1,32], index: 2, kind: input, shape index: {}, may-alias: {2,7,9,13}]
  %s3 = inlined_call_operand.hbm [shape: f32[32,96], index: 3, kind: input, shape index: {}]
  %s4 = inlined_call_operand.vmem [shape: f32[1,96], index: 4, kind: input, shape index: {}]
  %s5 = inlined_call_operand.hbm [shape: f32[2,64,64], index: 5, kind: input, shape index: {}]
  %s6 = inlined_call_operand.hbm [shape: f32[32,32], index: 6, kind: input, shape index: {}]
  %s7 = inlined_call_operand.vmem [shape: f32[1,32], index: 7, kind: input, shape index: {}, may-alias: {2,7,9,13}]
  %s8 = inlined_call_operand.vmem [shape: f32[1,32], index: 8, kind: input, shape index: {}, may-alias: {1,8}]
  %s9 = inlined_call_operand.vmem [shape: f32[1,32], index: 9, kind: input, shape index: {}, may-alias: {2,7,9,13}]
  %s10 = inlined_call_operand.hbm [shape: f32[32,64], index: 10, kind: input, shape index: {}]
  %s11 = inlined_call_operand.vmem [shape: f32[1,64], index: 11, kind: input, shape index: {}]
  %s12 = inlined_call_operand.hbm [shape: f32[64,32], index: 12, kind: input, shape index: {}]
  %s13 = inlined_call_operand.vmem [shape: f32[1,32], index: 13, kind: input, shape index: {}, may-alias: {2,7,9,13}]
  %s14 = inlined_call_operand.vmem [shape: f32[2,64,32], index: 14, kind: output, shape index: {}]
  %s15 = sld [smem:[#allocation0]]
  $region109: #{_lambda_.5} parent=0
    _
  %s17 = ssub.s32 1, %s15
  %s18 = scalar_select 0, %s17, %s15
  $region1: #{_lambda_.5} parent=0
    #allocation2 [shape = 'u8[16384]{0}', space=vmem, size = 0x4000, scoped, tag = 'input window, operand 3, single buffered']
    #allocation3 [shape = 's32[2]{0}', space=sflag, size = 0x8, scoped, tag = 'scoped memory for _lambda_.5']
    #allocation4 [shape = 'u8[65536]{0}', space=vmem, size = 0x10000, scoped, tag = 'input window, operand 5, single buffered']
    #allocation5 [shape = 's32[1]{0}', space=sflag, size = 0x4, scoped, tag = 'scoped memory for _lambda_.5']
    #allocation6 [shape = 'u8[16384]{0}', space=vmem, size = 0x4000, scoped, tag = 'input window, operand 6, single buffered']
    #allocation7 [shape = 'u8[16384]{0}', space=vmem, size = 0x4000, scoped, tag = 'input window, operand 10, single buffered']
    #allocation8 [shape = 's32[1]{0}', space=sflag, size = 0x4, scoped, tag = 'scoped memory for _lambda_.5']
    #allocation9 [shape = 'u8[32768]{0}', space=vmem, size = 0x8000, scoped, tag = 'input window, operand 12, single buffered']
    %19 = vsyncpa [#allocation3], 0
    %20 = vsyncpa [#allocation5], 0
    %21 = vsyncpa [#allocation8], 0
    loop: start=0, step=1, limit=4
    $region2: #{_lambda_.5} parent=1 // loop_pre_header
      _
    $region3: #{_lambda_.5} parent=1 // loop_header
      %s23 = sphi 0, %s27
      %p24 = scmp.ge.s32.totalorder %s23, 4
      %s33 = sphi 0, %s35
      %s36 = sphi 0, %s33
      %s37 = sphi 0, %s36
      %s53 = sphi 0, %s37
      %s57 = sphi 0, %s57
      %s59 = sphi 0, %s57
      %s60 = sphi 0, %s59
      %s74 = sphi 0, %s60
      %s78 = sphi 0, %s78
      %s80 = sphi 0, %s78
      %s81 = sphi 0, %s80
      %s95 = sphi 0, %s81
      %s99 = sphi 0, %s99
      %s101 = sphi 0, %s99
      %s102 = sphi 0, %s101
      %s116 = sphi 0, %s102
      %s120 = sphi 0, %s120
      %s122 = sphi 0, %s120
      %s123 = sphi 0, %s122
      %s137 = sphi 0, %s123
      %s141 = sphi 0, %s141
      %s143 = sphi 0, %s141
      %s144 = sphi 0, %s143
      %s158 = sphi 0, %s144
      %s162 = sphi 0, %s162
      %s164 = sphi 0, %s162
      %s165 = sphi 0, %s164
      %s179 = sphi 0, %s165
      %s183 = sphi 0, %s183
      %s185 = sphi 0, %s183
      %s186 = sphi 0, %s185
      %s200 = sphi 0, %s186
      %s204 = sphi 0, %s204
      %s206 = sphi 0, %s204
      %s207 = sphi 0, %s206
      %s221 = sphi 0, %s207
      %s225 = sphi 0, %s225
      %s227 = sphi 0, %s225
      %s228 = sphi 0, %s227
      %s242 = sphi 0, %s228
      %s246 = sphi 0, %s246
      %s248 = sphi 0, %s246
      %s249 = sphi 0, %s248
      %s263 = sphi 0, %s249
      %s267 = sphi 0, %s267
      %s269 = sphi 0, %s267
      %s270 = sphi 0, %s269
      %s284 = sphi 0, %s270
      %s288 = sphi 0, %s288
      %s290 = sphi 0, %s288
      %s291 = sphi 0, %s290
      %s305 = sphi 0, %s291
      %s309 = sphi 0, %s309
      %s311 = sphi 0, %s309
      %s312 = sphi 0, %s311
      %s326 = sphi 0, %s312
      %s332 = sphi 0, %s334
      %s335 = sphi 0, %s332
      %s336 = sphi 0, %s335
      %s352 = sphi 0, %s336
    $region4: #{_lambda_.5} parent=1 // loop_header_branch
      %26 = sbr.rel (%p24) target = $region8
    $region5: #{_lambda_.5} parent=1 // loop_body
      %s28 = ssub.s32 %s23, 1
      %s29 = ssub.s32 %s23, 2
      %s30 = sadd.s32 %s23, 1
      %s31 = ssub.s32 %s23, %s30
      %p32 = scmp.eq.s32.totalorder %s31, 0
      %s34 = sadd.s32 %s33, 1
      %s35 = scalar_select %p32, %s33, %s34
      %p38 = pneg %p32
      %p39 = scmp.eq.s32.totalorder %s23, 1
      %p40 = por %p38, %p39
      %p41 = scmp.ne.s32.totalorder %s33, %s36
      %p42 = scmp.eq.s32.totalorder %s23, 0
      %p43 = por %p41, %p42
      %p44 = scmp.ne.s32.totalorder %s33, %s36
      %p45 = scmp.eq.s32.totalorder %s28, 1
      %p46 = por %p44, %p45
      %p47 = scmp.ne.s32.totalorder %s36, %s37
      %p48 = scmp.eq.s32.totalorder %s28, 0
      %p49 = por %p47, %p48
      %p50 = scmp.ne.s32.totalorder %s36, %s37
      %p51 = scmp.eq.s32.totalorder %s29, 1
      %p52 = por %p50, %p51
      %p54 = scmp.ne.s32.totalorder %s37, %s53
      %p55 = scmp.eq.s32.totalorder %s29, 0
      %p56 = por %p54, %p55
      %s58 = sadd.s32 %s57, 1
      %p61 = scmp.eq.s32.totalorder %s23, 1
      %p62 = scmp.ne.s32.totalorder %s57, %s59
      %p63 = scmp.eq.s32.totalorder %s23, 0
      %p64 = por %p62, %p63
      %p65 = scmp.ne.s32.totalorder %s57, %s59
      %p66 = scmp.eq.s32.totalorder %s28, 1
      %p67 = por %p65, %p66
      %p68 = scmp.ne.s32.totalorder %s59, %s60
      %p69 = scmp.eq.s32.totalorder %s28, 0
      %p70 = por %p68, %p69
      %p71 = scmp.ne.s32.totalorder %s59, %s60
      %p72 = scmp.eq.s32.totalorder %s29, 1
      %p73 = por %p71, %p72
      %p75 = scmp.ne.s32.totalorder %s60, %s74
      %p76 = scmp.eq.s32.totalorder %s29, 0
      %p77 = por %p75, %p76
      %s79 = sadd.s32 %s78, 1
      %p82 = scmp.eq.s32.totalorder %s23, 1
      %p83 = scmp.ne.s32.totalorder %s78, %s80
      %p84 = scmp.eq.s32.totalorder %s23, 0
      %p85 = por %p83, %p84
      %p86 = scmp.ne.s32.totalorder %s78, %s80
      %p87 = scmp.eq.s32.totalorder %s28, 1
      %p88 = por %p86, %p87
      %p89 = scmp.ne.s32.totalorder %s80, %s81
      %p90 = scmp.eq.s32.totalorder %s28, 0
      %p91 = por %p89, %p90
      %p92 = scmp.ne.s32.totalorder %s80, %s81
      %p93 = scmp.eq.s32.totalorder %s29, 1
      %p94 = por %p92, %p93
      %p96 = scmp.ne.s32.totalorder %s81, %s95
      %p97 = scmp.eq.s32.totalorder %s29, 0
      %p98 = por %p96, %p97
      %s100 = sadd.s32 %s99, 1
      %p103 = scmp.eq.s32.totalorder %s23, 1
      %p104 = scmp.ne.s32.totalorder %s99, %s101
      %p105 = scmp.eq.s32.totalorder %s23, 0
      %p106 = por %p104, %p105
      %p107 = scmp.ne.s32.totalorder %s99, %s101
      %p108 = scmp.eq.s32.totalorder %s28, 1
      %p109 = por %p107, %p108
      %p110 = scmp.ne.s32.totalorder %s101, %s102
      %p111 = scmp.eq.s32.totalorder %s28, 0
      %p112 = por %p110, %p111
      %p113 = scmp.ne.s32.totalorder %s101, %s102
      %p114 = scmp.eq.s32.totalorder %s29, 1
      %p115 = por %p113, %p114
      %p117 = scmp.ne.s32.totalorder %s102, %s116
      %p118 = scmp.eq.s32.totalorder %s29, 0
      %p119 = por %p117, %p118
      %s121 = sadd.s32 %s120, 1
      %p124 = scmp.eq.s32.totalorder %s23, 1
      %p125 = scmp.ne.s32.totalorder %s120, %s122
      %p126 = scmp.eq.s32.totalorder %s23, 0
      %p127 = por %p125, %p126
      %p128 = scmp.ne.s32.totalorder %s120, %s122
      %p129 = scmp.eq.s32.totalorder %s28, 1
      %p130 = por %p128, %p129
      %p131 = scmp.ne.s32.totalorder %s122, %s123
      %p132 = scmp.eq.s32.totalorder %s28, 0
      %p133 = por %p131, %p132
      %p134 = scmp.ne.s32.totalorder %s122, %s123
      %p135 = scmp.eq.s32.totalorder %s29, 1
      %p136 = por %p134, %p135
      %p138 = scmp.ne.s32.totalorder %s123, %s137
      %p139 = scmp.eq.s32.totalorder %s29, 0
      %p140 = por %p138, %p139
      %s142 = sadd.s32 %s141, 1
      %p145 = scmp.eq.s32.totalorder %s23, 1
      %p146 = scmp.ne.s32.totalorder %s141, %s143
      %p147 = scmp.eq.s32.totalorder %s23, 0
      %p148 = por %p146, %p147
      %p149 = scmp.ne.s32.totalorder %s141, %s143
      %p150 = scmp.eq.s32.totalorder %s28, 1
      %p151 = por %p149, %p150
      %p152 = scmp.ne.s32.totalorder %s143, %s144
      %p153 = scmp.eq.s32.totalorder %s28, 0
      %p154 = por %p152, %p153
      %p155 = scmp.ne.s32.totalorder %s143, %s144
      %p156 = scmp.eq.s32.totalorder %s29, 1
      %p157 = por %p155, %p156
      %p159 = scmp.ne.s32.totalorder %s144, %s158
      %p160 = scmp.eq.s32.totalorder %s29, 0
      %p161 = por %p159, %p160
      %s163 = sadd.s32 %s162, 1
      %p166 = scmp.eq.s32.totalorder %s23, 1
      %p167 = scmp.ne.s32.totalorder %s162, %s164
      %p168 = scmp.eq.s32.totalorder %s23, 0
      %p169 = por %p167, %p168
      %p170 = scmp.ne.s32.totalorder %s162, %s164
      %p171 = scmp.eq.s32.totalorder %s28, 1
      %p172 = por %p170, %p171
      %p173 = scmp.ne.s32.totalorder %s164, %s165
      %p174 = scmp.eq.s32.totalorder %s28, 0
      %p175 = por %p173, %p174
      %p176 = scmp.ne.s32.totalorder %s164, %s165
      %p177 = scmp.eq.s32.totalorder %s29, 1
      %p178 = por %p176, %p177
      %p180 = scmp.ne.s32.totalorder %s165, %s179
      %p181 = scmp.eq.s32.totalorder %s29, 0
      %p182 = por %p180, %p181
      %s184 = sadd.s32 %s183, 1
      %p187 = scmp.eq.s32.totalorder %s23, 1
      %p188 = scmp.ne.s32.totalorder %s183, %s185
      %p189 = scmp.eq.s32.totalorder %s23, 0
      %p190 = por %p188, %p189
      %p191 = scmp.ne.s32.totalorder %s183, %s185
      %p192 = scmp.eq.s32.totalorder %s28, 1
      %p193 = por %p191, %p192
      %p194 = scmp.ne.s32.totalorder %s185, %s186
      %p195 = scmp.eq.s32.totalorder %s28, 0
      %p196 = por %p194, %p195
      %p197 = scmp.ne.s32.totalorder %s185, %s186
      %p198 = scmp.eq.s32.totalorder %s29, 1
      %p199 = por %p197, %p198
      %p201 = scmp.ne.s32.totalorder %s186, %s200
      %p202 = scmp.eq.s32.totalorder %s29, 0
      %p203 = por %p201, %p202
      %s205 = sadd.s32 %s204, 1
      %p208 = scmp.eq.s32.totalorder %s23, 1
      %p209 = scmp.ne.s32.totalorder %s204, %s206
      %p210 = scmp.eq.s32.totalorder %s23, 0
      %p211 = por %p209, %p210
      %p212 = scmp.ne.s32.totalorder %s204, %s206
      %p213 = scmp.eq.s32.totalorder %s28, 1
      %p214 = por %p212, %p213
      %p215 = scmp.ne.s32.totalorder %s206, %s207
      %p216 = scmp.eq.s32.totalorder %s28, 0
      %p217 = por %p215, %p216
      %p218 = scmp.ne.s32.totalorder %s206, %s207
      %p219 = scmp.eq.s32.totalorder %s29, 1
      %p220 = por %p218, %p219
      %p222 = scmp.ne.s32.totalorder %s207, %s221
      %p223 = scmp.eq.s32.totalorder %s29, 0
      %p224 = por %p222, %p223
      %s226 = sadd.s32 %s225, 1
      %p229 = scmp.eq.s32.totalorder %s23, 1
      %p230 = scmp.ne.s32.totalorder %s225, %s227
      %p231 = scmp.eq.s32.totalorder %s23, 0
      %p232 = por %p230, %p231
      %p233 = scmp.ne.s32.totalorder %s225, %s227
      %p234 = scmp.eq.s32.totalorder %s28, 1
      %p235 = por %p233, %p234
      %p236 = scmp.ne.s32.totalorder %s227, %s228
      %p237 = scmp.eq.s32.totalorder %s28, 0
      %p238 = por %p236, %p237
      %p239 = scmp.ne.s32.totalorder %s227, %s228
      %p240 = scmp.eq.s32.totalorder %s29, 1
      %p241 = por %p239, %p240
      %p243 = scmp.ne.s32.totalorder %s228, %s242
      %p244 = scmp.eq.s32.totalorder %s29, 0
      %p245 = por %p243, %p244
      %s247 = sadd.s32 %s246, 1
      %p250 = scmp.eq.s32.totalorder %s23, 1
      %p251 = scmp.ne.s32.totalorder %s246, %s248
      %p252 = scmp.eq.s32.totalorder %s23, 0
      %p253 = por %p251, %p252
      %p254 = scmp.ne.s32.totalorder %s246, %s248
      %p255 = scmp.eq.s32.totalorder %s28, 1
      %p256 = por %p254, %p255
      %p257 = scmp.ne.s32.totalorder %s248, %s249
      %p258 = scmp.eq.s32.totalorder %s28, 0
      %p259 = por %p257, %p258
      %p260 = scmp.ne.s32.totalorder %s248, %s249
      %p261 = scmp.eq.s32.totalorder %s29, 1
      %p262 = por %p260, %p261
      %p264 = scmp.ne.s32.totalorder %s249, %s263
      %p265 = scmp.eq.s32.totalorder %s29, 0
      %p266 = por %p264, %p265
      %s268 = sadd.s32 %s267, 1
      %p271 = scmp.eq.s32.totalorder %s23, 1
      %p272 = scmp.ne.s32.totalorder %s267, %s269
      %p273 = scmp.eq.s32.totalorder %s23, 0
      %p274 = por %p272, %p273
      %p275 = scmp.ne.s32.totalorder %s267, %s269
      %p276 = scmp.eq.s32.totalorder %s28, 1
      %p277 = por %p275, %p276
      %p278 = scmp.ne.s32.totalorder %s269, %s270
      %p279 = scmp.eq.s32.totalorder %s28, 0
      %p280 = por %p278, %p279
      %p281 = scmp.ne.s32.totalorder %s269, %s270
      %p282 = scmp.eq.s32.totalorder %s29, 1
      %p283 = por %p281, %p282
      %p285 = scmp.ne.s32.totalorder %s270, %s284
      %p286 = scmp.eq.s32.totalorder %s29, 0
      %p287 = por %p285, %p286
      %s289 = sadd.s32 %s288, 1
      %p292 = scmp.eq.s32.totalorder %s23, 1
      %p293 = scmp.ne.s32.totalorder %s288, %s290
      %p294 = scmp.eq.s32.totalorder %s23, 0
      %p295 = por %p293, %p294
      %p296 = scmp.ne.s32.totalorder %s288, %s290
      %p297 = scmp.eq.s32.totalorder %s28, 1
      %p298 = por %p296, %p297
      %p299 = scmp.ne.s32.totalorder %s290, %s291
      %p300 = scmp.eq.s32.totalorder %s28, 0
      %p301 = por %p299, %p300
      %p302 = scmp.ne.s32.totalorder %s290, %s291
      %p303 = scmp.eq.s32.totalorder %s29, 1
      %p304 = por %p302, %p303
      %p306 = scmp.ne.s32.totalorder %s291, %s305
      %p307 = scmp.eq.s32.totalorder %s29, 0
      %p308 = por %p306, %p307
      %s310 = sadd.s32 %s309, 1
      %p313 = scmp.eq.s32.totalorder %s23, 1
      %p314 = scmp.ne.s32.totalorder %s309, %s311
      %p315 = scmp.eq.s32.totalorder %s23, 0
      %p316 = por %p314, %p315
      %p317 = scmp.ne.s32.totalorder %s309, %s311
      %p318 = scmp.eq.s32.totalorder %s28, 1
      %p319 = por %p317, %p318
      %p320 = scmp.ne.s32.totalorder %s311, %s312
      %p321 = scmp.eq.s32.totalorder %s28, 0
      %p322 = por %p320, %p321
      %p323 = scmp.ne.s32.totalorder %s311, %s312
      %p324 = scmp.eq.s32.totalorder %s29, 1
      %p325 = por %p323, %p324
      %p327 = scmp.ne.s32.totalorder %s312, %s326
      %p328 = scmp.eq.s32.totalorder %s29, 0
      %p329 = por %p327, %p328
      %s330 = ssub.s32 %s23, %s30
      %p331 = scmp.eq.s32.totalorder %s330, 0
      %s333 = sadd.s32 %s332, 1
      %s334 = scalar_select %p331, %s332, %s333
      %p337 = pneg %p331
      %p338 = scmp.eq.s32.totalorder %s23, 1
      %p339 = por %p337, %p338
      %p340 = scmp.ne.s32.totalorder %s332, %s335
      %p341 = scmp.eq.s32.totalorder %s23, 0
      %p342 = por %p340, %p341
      %p343 = scmp.ne.s32.totalorder %s332, %s335
      %p344 = scmp.eq.s32.totalorder %s28, 1
      %p345 = por %p343, %p344
      %p346 = scmp.ne.s32.totalorder %s335, %s336
      %p347 = scmp.eq.s32.totalorder %s28, 0
      %p348 = por %p346, %p347
      %p349 = scmp.ne.s32.totalorder %s335, %s336
      %p350 = scmp.eq.s32.totalorder %s29, 1
      %p351 = por %p349, %p350
      %p353 = scmp.ne.s32.totalorder %s336, %s352
      %p354 = scmp.eq.s32.totalorder %s29, 0
      %p355 = por %p353, %p354
      %p356 = scmp.le.s32.totalorder 1, %s23
      %p357 = scmp.lt.s32.totalorder %s23, 3
      %p358 = pnand %p356, %p357
      %p359 = pneg %p358
      // Predicated region
      $region9: #{_lambda_.5} parent=5 // pred_check
        _
      $region10: #{_lambda_.5} parent=5 // pred_check_branch
        %361 = sbr.rel (%p358) target = $region12
      $region11: #{_lambda_.5} parent=5 // pred_region
        %s362 = ssub.s32 %s23, 1
        // Predicated region
        $region13: #{_lambda_.5} parent=11 // pred_check
          %p363 = pneg %p70
        $region14: #{_lambda_.5} parent=11 // pred_check_branch
          %365 = sbr.rel (%p363) target = $region16
        $region15: #{_lambda_.5} parent=11 // pred_region
          _
        $region16: #{_lambda_.5} parent=11 // pred_fallthru
          _
        // Predicated region
        $region17: #{_lambda_.5} parent=11 // pred_check
          %p366 = pneg %p91
        $region18: #{_lambda_.5} parent=11 // pred_check_branch
          %368 = sbr.rel (%p366) target = $region20
        $region19: #{_lambda_.5} parent=11 // pred_region
          _
        $region20: #{_lambda_.5} parent=11 // pred_fallthru
          _
        // Predicated region
        $region21: #{_lambda_.5} parent=11 // pred_check
          %p369 = pneg %p112
        $region22: #{_lambda_.5} parent=11 // pred_check_branch
          %371 = sbr.rel (%p369) target = $region24
        $region23: #{_lambda_.5} parent=11 // pred_region
          %373 = vsyncadd [#allocation3], 0
          %s374 = sshll.u32 %s3, 4
          %s375 = int_to_ptr.hbm [resolvable:$true] %s374
          %s376 = sshll.u32 [#allocation2], 4
          %s377 = int_to_ptr.vmem [resolvable:$true] %s376
          %382 = dma.hbm_to_vmem [thread:$0]  %s375, 512, %s377, [#allocation3], 128, 128, 8
        $region24: #{_lambda_.5} parent=11 // pred_fallthru
          _
        // Predicated region
        $region25: #{_lambda_.5} parent=11 // pred_check
          %p383 = pneg %p133
        $region26: #{_lambda_.5} parent=11 // pred_check_branch
          %385 = sbr.rel (%p383) target = $region28
        $region27: #{_lambda_.5} parent=11 // pred_region
          _
        $region28: #{_lambda_.5} parent=11 // pred_fallthru
          _
        // Predicated region
        $region29: #{_lambda_.5} parent=11 // pred_check
          %p386 = pneg %p154
        $region30: #{_lambda_.5} parent=11 // pred_check_branch
          %388 = sbr.rel (%p386) target = $region32
        $region31: #{_lambda_.5} parent=11 // pred_region
          %390 = vsyncadd [#allocation5], 0
          %s391 = sshll.u32 %s5, 4
          %s392 = int_to_ptr.hbm [resolvable:$true] %s391
          %s393 = sshll.u32 [#allocation4], 4
          %s394 = int_to_ptr.vmem [resolvable:$true] %s393
          %399 = dma.hbm_to_vmem [thread:$0]  %s392, 2048, %s394, [#allocation5], 128, 128, 8
        $region32: #{_lambda_.5} parent=11 // pred_fallthru
          _
        // Predicated region
        $region33: #{_lambda_.5} parent=11 // pred_check
          %p400 = pneg %p175
        $region34: #{_lambda_.5} parent=11 // pred_check_branch
          %402 = sbr.rel (%p400) target = $region36
        $region35: #{_lambda_.5} parent=11 // pred_region
          %404 = vsyncadd [#allocation5], 0
          %s405 = sshll.u32 %s6, 4
          %s406 = int_to_ptr.hbm [resolvable:$true] %s405
          %s407 = sshll.u32 [#allocation6], 4
          %s408 = int_to_ptr.vmem [resolvable:$true] %s407
          %413 = dma.hbm_to_vmem [thread:$0]  %s406, 512, %s408, [#allocation5], 128, 128, 8
        $region36: #{_lambda_.5} parent=11 // pred_fallthru
          _
        // Predicated region
        $region37: #{_lambda_.5} parent=11 // pred_check
          %p414 = pneg %p196
        $region38: #{_lambda_.5} parent=11 // pred_check_branch
          %416 = sbr.rel (%p414) target = $region40
        $region39: #{_lambda_.5} parent=11 // pred_region
          _
        $region40: #{_lambda_.5} parent=11 // pred_fallthru
          _
        // Predicated region
        $region41: #{_lambda_.5} parent=11 // pred_check
          %p417 = pneg %p217
        $region42: #{_lambda_.5} parent=11 // pred_check_branch
          %419 = sbr.rel (%p417) target = $region44
        $region43: #{_lambda_.5} parent=11 // pred_region
          _
        $region44: #{_lambda_.5} parent=11 // pred_fallthru
          _
        // Predicated region
        $region45: #{_lambda_.5} parent=11 // pred_check
          %p420 = pneg %p238
        $region46: #{_lambda_.5} parent=11 // pred_check_branch
          %422 = sbr.rel (%p420) target = $region48
        $region47: #{_lambda_.5} parent=11 // pred_region
          _
        $region48: #{_lambda_.5} parent=11 // pred_fallthru
          _
        // Predicated region
        $region49: #{_lambda_.5} parent=11 // pred_check
          %p423 = pneg %p259
        $region50: #{_lambda_.5} parent=11 // pred_check_branch
          %425 = sbr.rel (%p423) target = $region52
        $region51: #{_lambda_.5} parent=11 // pred_region
          %427 = vsyncadd [#allocation8], 0
          %s428 = sshll.u32 %s10, 4
          %s429 = int_to_ptr.hbm [resolvable:$true] %s428
          %s430 = sshll.u32 [#allocation7], 4
          %s431 = int_to_ptr.vmem [resolvable:$true] %s430
          %436 = dma.hbm_to_vmem [thread:$0]  %s429, 512, %s431, [#allocation8], 128, 128, 8
        $region52: #{_lambda_.5} parent=11 // pred_fallthru
          _
        // Predicated region
        $region53: #{_lambda_.5} parent=11 // pred_check
          %p437 = pneg %p280
        $region54: #{_lambda_.5} parent=11 // pred_check_branch
          %439 = sbr.rel (%p437) target = $region56
        $region55: #{_lambda_.5} parent=11 // pred_region
          _
        $region56: #{_lambda_.5} parent=11 // pred_fallthru
          _
        // Predicated region
        $region57: #{_lambda_.5} parent=11 // pred_check
          %p440 = pneg %p301
        $region58: #{_lambda_.5} parent=11 // pred_check_branch
          %442 = sbr.rel (%p440) target = $region60
        $region59: #{_lambda_.5} parent=11 // pred_region
          %444 = vsyncadd [#allocation8], 0
          %s445 = sshll.u32 %s12, 4
          %s446 = int_to_ptr.hbm [resolvable:$true] %s445
          %s447 = sshll.u32 [#allocation9], 4
          %s448 = int_to_ptr.vmem [resolvable:$true] %s447
          %453 = dma.hbm_to_vmem [thread:$0]  %s446, 1024, %s448, [#allocation8], 128, 128, 8
        $region60: #{_lambda_.5} parent=11 // pred_fallthru
          _
        // Predicated region
        $region61: #{_lambda_.5} parent=11 // pred_check
          %p454 = pneg %p322
        $region62: #{_lambda_.5} parent=11 // pred_check_branch
          %456 = sbr.rel (%p454) target = $region64
        $region63: #{_lambda_.5} parent=11 // pred_region
          _
        $region64: #{_lambda_.5} parent=11 // pred_fallthru
          _
      $region12: #{_lambda_.5} parent=5 // pred_fallthru
        _
      %p457 = scmp.lt.s32.totalorder %s23, 2
      // Predicated region
      $region65: #{_lambda_.5} parent=5 // pred_check
        %p458 = pneg %p457
      $region66: #{_lambda_.5} parent=5 // pred_check_branch
        %460 = sbr.rel (%p458) target = $region68
      $region67: #{_lambda_.5} parent=5 // pred_region
        // Predicated region
        $region69: #{_lambda_.5} parent=67 // pred_check
          %p461 = pneg %p43
        $region70: #{_lambda_.5} parent=67 // pred_check_branch
          %463 = sbr.rel (%p461) target = $region72
        $region71: #{_lambda_.5} parent=67 // pred_region
          %p464 = scmp.lt.s32.totalorder %s23, 1
          %s465 = scalar_select %p464, %s23, 1
          %s466 = smul.addr %s465, 8
          %s467 = smul.addr %s466, 8
          %s468 = scalar_lea.vmem %s0, %s467
        $region72: #{_lambda_.5} parent=67 // pred_fallthru
          _
      $region68: #{_lambda_.5} parent=5 // pred_fallthru
        _
      %p469 = scmp.le.s32.totalorder 1, %s23
      %p470 = scmp.lt.s32.totalorder %s23, 3
      %p471 = pnand %p469, %p470
      %p472 = pneg %p471
      // Predicated region
      $region73: #{_lambda_.5} parent=5 // pred_check
        _
      $region74: #{_lambda_.5} parent=5 // pred_check_branch
        %474 = sbr.rel (%p471) target = $region76
      $region75: #{_lambda_.5} parent=5 // pred_region
        %s475 = ssub.s32 %s23, 1
        // Predicated region
        $region77: #{_lambda_.5} parent=75 // pred_check
          %p476 = pneg %p112
        $region78: #{_lambda_.5} parent=75 // pred_check_branch
          %478 = sbr.rel (%p476) target = $region80
        $region79: #{_lambda_.5} parent=75 // pred_region
          %480 = dma.done [#allocation3], 512
        $region80: #{_lambda_.5} parent=75 // pred_fallthru
          _
        // Predicated region
        $region81: #{_lambda_.5} parent=75 // pred_check
          %p481 = pneg %p154
        $region82: #{_lambda_.5} parent=75 // pred_check_branch
          %483 = sbr.rel (%p481) target = $region84
        $region83: #{_lambda_.5} parent=75 // pred_region
          %485 = dma.done [#allocation5], 2048
        $region84: #{_lambda_.5} parent=75 // pred_fallthru
          _
        // Predicated region
        $region85: #{_lambda_.5} parent=75 // pred_check
          %p486 = pneg %p175
        $region86: #{_lambda_.5} parent=75 // pred_check_branch
          %488 = sbr.rel (%p486) target = $region88
        $region87: #{_lambda_.5} parent=75 // pred_region
          %490 = dma.done [#allocation5], 512
        $region88: #{_lambda_.5} parent=75 // pred_fallthru
          _
        // Predicated region
        $region89: #{_lambda_.5} parent=75 // pred_check
          %p491 = pneg %p259
        $region90: #{_lambda_.5} parent=75 // pred_check_branch
          %493 = sbr.rel (%p491) target = $region92
        $region91: #{_lambda_.5} parent=75 // pred_region
          %495 = dma.done [#allocation8], 512
        $region92: #{_lambda_.5} parent=75 // pred_fallthru
          _
        // Predicated region
        $region93: #{_lambda_.5} parent=75 // pred_check
          %p496 = pneg %p301
        $region94: #{_lambda_.5} parent=75 // pred_check_branch
          %498 = sbr.rel (%p496) target = $region96
        $region95: #{_lambda_.5} parent=75 // pred_region
          %500 = dma.done [#allocation8], 1024
        $region96: #{_lambda_.5} parent=75 // pred_fallthru
          _
        %p501 = scmp.lt.s32.totalorder %s28, 1
        %s502 = scalar_select %p501, %s28, 1
        %s503 = smul.addr %s502, 8
        %s504 = smul.addr %s503, 8
        %s505 = scalar_lea.vmem %s0, %s504
        %p506 = pneg %p49
        %p507 = pneg %p46
        %p508 = pneg %p70
        %p509 = pneg %p67
        %p510 = pneg %p91
        %p511 = pneg %p88
        %p512 = pneg %p112
        %p513 = pneg %p109
        %p514 = pneg %p133
        %p515 = pneg %p130
        %p516 = pneg %p154
        %p517 = pneg %p151
        %p518 = pneg %p175
        %p519 = pneg %p172
        %p520 = pneg %p196
        %p521 = pneg %p193
        %p522 = pneg %p217
        %p523 = pneg %p214
        %p524 = pneg %p238
        %p525 = pneg %p235
        %p526 = pneg %p259
        %p527 = pneg %p256
        %p528 = pneg %p280
        %p529 = pneg %p277
        %p530 = pneg %p301
        %p531 = pneg %p298
        %p532 = pneg %p322
        %p533 = pneg %p319
        %p534 = pneg %p348
        %p535 = pneg %p345
        %p536 = scmp.lt.s32.totalorder %s28, 1
        %s537 = scalar_select %p536, %s28, 1
        %s538 = smul.addr %s537, 8
        %s539 = smul.addr %s538, 8
        %s540 = scalar_lea.vmem %s14, %s539
        %p541 = scmp.lt.s32.totalorder %s28, 1
        %s542 = scalar_select %p541, %s28, 1
        %s543 = smul.addr %s542, 8
        %s544 = smul.addr %s543, 8
        %s545 = scalar_lea.vmem %s0, %s544
        %p546 = scmp.lt.s32.totalorder %s28, 1
        %s547 = scalar_select %p546, %s28, 1
        %s548 = smul.addr %s547, 8
        %s549 = smul.addr %s548, 8
        %s550 = scalar_lea.vmem %s14, %s549
        %v551 = vld [vmem:[%s545] sm:$0xff]
        %v552 = vld [vmem:[%s545 + $0x8] sm:$0xff]
        %v553 = vld [vmem:[%s545 + $0x10] sm:$0xff]
        %v554 = vld [vmem:[%s545 + $0x18] sm:$0xff]
        %v555 = vld [vmem:[%s545 + $0x20] sm:$0xff]
        %v556 = vld [vmem:[%s545 + $0x28] sm:$0xff]
        %v557 = vld [vmem:[%s545 + $0x30] sm:$0xff]
        %v558 = vld [vmem:[%s545 + $0x38] sm:$0xff]
        %vm559 = vcmask 261120
        %v560 = vsel %vm559, %v551, 0.0
        %v561 = vsel %vm559, %v552, 0.0
        %v562 = vadd.f32 %v560, %v561
        %v563 = vsel %vm559, %v553, 0.0
        %v564 = vadd.f32 %v562, %v563
        %v565 = vsel %vm559, %v554, 0.0
        %v566 = vadd.f32 %v564, %v565
        %v567 = vsel %vm559, %v555, 0.0
        %v568 = vadd.f32 %v566, %v567
        %v569 = vsel %vm559, %v556, 0.0
        %v570 = vadd.f32 %v568, %v569
        %v571 = vsel %vm559, %v557, 0.0
        %v572 = vadd.f32 %v570, %v571
        %v573 = vsel %vm559, %v558, 0.0
        %v574 = vadd.f32 %v572, %v573
        %v575 = vrot.slane %v574, 4
        %v576 = vadd.f32 %v574, %v575
        %v577 = vrot.slane %v576, 2
        %v578 = vadd.f32 %v576, %v577
        %v579 = vrot.slane %v578, 1
        %v580 = vadd.f32 %v578, %v579
        %v581 = vrcp.pop 64.0
        %v582 = vmul.f32 64.0, %v581
        %v583 = vsub.f32 1.0, %v582
        %v584 = vmul.f32 %v581, %v583
        %v585 = vadd.f32 %v581, %v584
        %vm586 = vweird.f32 %v581
        %v587 = vsel %vm586, %v581, %v585
        %v588 = vmul.f32 %v580, %v587
        %v589 = vsub.f32 %v551, %v588
        %v590 = vsub.f32 %v552, %v588
        %v591 = vsub.f32 %v553, %v588
        %v592 = vsub.f32 %v554, %v588
        %v593 = vsub.f32 %v555, %v588
        %v594 = vsub.f32 %v556, %v588
        %v595 = vsub.f32 %v557, %v588
        %v596 = vsub.f32 %v558, %v588
        %v597 = vmul.f32 %v589, %v589
        %v598 = vmul.f32 %v590, %v590
        %v599 = vmul.f32 %v591, %v591
        %v600 = vmul.f32 %v592, %v592
        %v601 = vmul.f32 %v593, %v593
        %v602 = vmul.f32 %v594, %v594
        %v603 = vmul.f32 %v595, %v595
        %v604 = vmul.f32 %v596, %v596
        %v605 = vsel %vm559, %v597, 0.0
        %v606 = vsel %vm559, %v598, 0.0
        %v607 = vadd.f32 %v605, %v606
        %v608 = vsel %vm559, %v599, 0.0
        %v609 = vadd.f32 %v607, %v608
        %v610 = vsel %vm559, %v600, 0.0
        %v611 = vadd.f32 %v609, %v610
        %v612 = vsel %vm559, %v601, 0.0
        %v613 = vadd.f32 %v611, %v612
        %v614 = vsel %vm559, %v602, 0.0
        %v615 = vadd.f32 %v613, %v614
        %v616 = vsel %vm559, %v603, 0.0
        %v617 = vadd.f32 %v615, %v616
        %v618 = vsel %vm559, %v604, 0.0
        %v619 = vadd.f32 %v617, %v618
        %v620 = vrot.slane %v619, 4
        %v621 = vadd.f32 %v619, %v620
        %v622 = vrot.slane %v621, 2
        %v623 = vadd.f32 %v621, %v622
        %v624 = vrot.slane %v623, 1
        %v625 = vadd.f32 %v623, %v624
        %v626 = vmul.f32 %v625, %v587
        %v627 = vld [vmem:[%s1] sm:$0x1]
        %v628 = vadd.f32 %v626, 1e-05
        %v629 = vrsqrt.pop %v628
        %v630 = vmul.f32 %v629, %v628
        %v631 = vmul.f32 %v630, %v629
        %v632 = vmul.f32 0.5, %v631
        %v633 = vsub.f32 1.5, %v632
        %v634 = vmul.f32 %v629, %v633
        %vm635 = vweird.f32 %v628
        %vm636 = vweird.f32 %v629
        %vm637 = vmor %vm635, %vm636
        %v638 = vsel %vm637, %v629, %v634
        %v639 = vmul.f32 %v627, %v638
        %v641 = vperm.slane %v639, 0
        %v643 = vmul.f32 %v589, %v641
        %v644 = vmul.f32 %v590, %v641
        %v645 = vmul.f32 %v591, %v641
        %v646 = vmul.f32 %v592, %v641
        %v647 = vmul.f32 %v593, %v641
        %v648 = vmul.f32 %v594, %v641
        %v649 = vmul.f32 %v595, %v641
        %v650 = vmul.f32 %v596, %v641
        %v651 = vld [vmem:[%s2] sm:$0x1]
        %v653 = vperm.slane %v651, 0
        %v655 = vadd.f32 %v643, %v653
        %v656 = vadd.f32 %v644, %v653
        %v657 = vadd.f32 %v645, %v653
        %v658 = vadd.f32 %v646, %v653
        %v659 = vadd.f32 %v647, %v653
        %v660 = vadd.f32 %v648, %v653
        %v661 = vadd.f32 %v649, %v653
        %v662 = vadd.f32 %v650, %v653
        %v663 = vld [vmem:[#allocation2] sm:$0xff]
        %v664 = vld [vmem:[#allocation2 + $0x8] sm:$0xff]
        %v665 = vld [vmem:[#allocation2 + $0x10] sm:$0xff]
        %v666 = vld [vmem:[#allocation2 + $0x18] sm:$0xff]
        %v667 = vld [vmem:[%s4] sm:$0x1]
        %v669 = vperm.slane %v667, 0
        %v672 = vsel %vm559, %v655, 0
        %v675 = vsel %vm559, %v656, 0
        %v678 = vsel %vm559, %v657, 0
        %v681 = vsel %vm559, %v658, 0
        %v684 = vsel %vm559, %v659, 0
        %v687 = vsel %vm559, %v660, 0
        %v690 = vsel %vm559, %v661, 0
        %v693 = vsel %vm559, %v662, 0
        %695 = vmatpush.msra.mxu0 0.0
        %696 = vmatpush.msra.mxu0 0.0
        %697 = vmatpush.msra.mxu0 0.0
        %698 = vmatpush.msra.mxu0 0.0
        %699 = vmatpush.msra.mxu0 0.0
        %700 = vmatpush.msra.mxu0 0.0
        %701 = vmatpush.msra.mxu0 0.0
        %702 = vmatpush.msra.mxu0 0.0
        %703 = vmatpush.msra.mxu0 0.0
        %704 = vmatpush.msra.mxu0 0.0
        %705 = vmatpush.msra.mxu0 0.0
        %706 = vmatpush.msra.mxu0 0.0
        %707 = vmatpush.msra.mxu0 %v666
        %708 = vmatpush.msra.mxu0 %v665
        %709 = vmatpush.msra.mxu0 %v664
        %710 = vmatpush.msra.mxu0 %v663
        %711 = vmatmul.f32.gmra.mxu0 %v672
        %v712 = vpop.f32.mrf.mxu0
        %v713 = vadd.f32 %v669, %v712
        %714 = vmatmul.f32.gmra.mxu0 %v675
        %v715 = vpop.f32.mrf.mxu0
        %v716 = vadd.f32 %v669, %v715
        %717 = vmatmul.f32.gmra.mxu0 %v678
        %v718 = vpop.f32.mrf.mxu0
        %v719 = vadd.f32 %v669, %v718
        %720 = vmatmul.f32.gmra.mxu0 %v681
        %v721 = vpop.f32.mrf.mxu0
        %v722 = vadd.f32 %v669, %v721
        %723 = vmatmul.f32.gmra.mxu0 %v684
        %v724 = vpop.f32.mrf.mxu0
        %v725 = vadd.f32 %v669, %v724
        %726 = vmatmul.f32.gmra.mxu0 %v687
        %v727 = vpop.f32.mrf.mxu0
        %v728 = vadd.f32 %v669, %v727
        %729 = vmatmul.f32.gmra.mxu0 %v690
        %v730 = vpop.f32.mrf.mxu0
        %v731 = vadd.f32 %v669, %v730
        %732 = vmatmul.f32.gmra.mxu0 %v693
        %v733 = vpop.f32.mrf.mxu0
        %v734 = vadd.f32 %v669, %v733
        %735 = vdwg.mxu0
        %v736 = vlaneseq
        %v737 = vand.u32 %v736, 127
        %v738 = vld [vmem:[#allocation4] sm:$0xff]
        %v739 = vld [vmem:[#allocation4 + $0x8] sm:$0xff]
        %v740 = vld [vmem:[#allocation4 + $0x10] sm:$0xff]
        %v741 = vld [vmem:[#allocation4 + $0x18] sm:$0xff]
        %v742 = vld [vmem:[#allocation4 + $0x20] sm:$0xff]
        %v743 = vld [vmem:[#allocation4 + $0x28] sm:$0xff]
        %v744 = vld [vmem:[#allocation4 + $0x30] sm:$0xff]
        %v745 = vld [vmem:[#allocation4 + $0x38] sm:$0xff]
        %754 = vrot.lane.b32.xlu0 %v713, 96
        %v755 = vpop.permute.xlu0 %754
        %756 = vrot.lane.b32.xlu0 %v716, 96
        %v757 = vpop.permute.xlu0 %756
        %758 = vrot.lane.b32.xlu0 %v719, 96
        %v759 = vpop.permute.xlu0 %758
        %760 = vrot.lane.b32.xlu0 %v722, 96
        %v761 = vpop.permute.xlu0 %760
        %762 = vrot.lane.b32.xlu0 %v725, 96
        %v763 = vpop.permute.xlu0 %762
        %764 = vrot.lane.b32.xlu0 %v728, 96
        %v765 = vpop.permute.xlu0 %764
        %766 = vrot.lane.b32.xlu0 %v731, 96
        %v767 = vpop.permute.xlu0 %766
        %768 = vrot.lane.b32.xlu0 %v734, 96
        %v769 = vpop.permute.xlu0 %768
        %vm770 = vcmask 130048
        %v771 = vsel %vm770, %v713, 0
        %v773 = vsel %vm770, %v716, 0
        %v775 = vsel %vm770, %v719, 0
        %v777 = vsel %vm770, %v722, 0
        %v779 = vsel %vm770, %v725, 0
        %v781 = vsel %vm770, %v728, 0
        %v783 = vsel %vm770, %v731, 0
        %v785 = vsel %vm770, %v734, 0
        %v787 = vsel %vm770, %v755, 0
        %v789 = vsel %vm770, %v757, 0
        %v791 = vsel %vm770, %v759, 0
        %v793 = vsel %vm770, %v761, 0
        %v795 = vsel %vm770, %v763, 0
        %v797 = vsel %vm770, %v765, 0
        %v799 = vsel %vm770, %v767, 0
        %v801 = vsel %vm770, %v769, 0
        %803 = vmatpush.xpose.msra.mxu0 0.0
        %804 = vmatpush.xpose.msra.mxu0 0.0
        %805 = vmatpush.xpose.msra.mxu0 0.0
        %806 = vmatpush.xpose.msra.mxu0 0.0
        %807 = vmatpush.xpose.msra.mxu0 0.0
        %808 = vmatpush.xpose.msra.mxu0 0.0
        %809 = vmatpush.xpose.msra.mxu0 0.0
        %810 = vmatpush.xpose.msra.mxu0 0.0
        %811 = vmatpush.xpose.msra.mxu0 %v801
        %812 = vmatpush.xpose.msra.mxu0 %v799
        %813 = vmatpush.xpose.msra.mxu0 %v797
        %814 = vmatpush.xpose.msra.mxu0 %v795
        %815 = vmatpush.xpose.msra.mxu0 %v793
        %816 = vmatpush.xpose.msra.mxu0 %v791
        %817 = vmatpush.xpose.msra.mxu0 %v789
        %818 = vmatpush.xpose.msra.mxu0 %v787
        %819 = vmatmul.f32.gmra.mxu0 %v771
        %v820 = vpop.f32.mrf.mxu0
        %v821 = vadd.f32 %v738, %v820
        %822 = vmatmul.f32.gmra.mxu0 %v773
        %v823 = vpop.f32.mrf.mxu0
        %v824 = vadd.f32 %v739, %v823
        %825 = vmatmul.f32.gmra.mxu0 %v775
        %v826 = vpop.f32.mrf.mxu0
        %v827 = vadd.f32 %v740, %v826
        %828 = vmatmul.f32.gmra.mxu0 %v777
        %v829 = vpop.f32.mrf.mxu0
        %v830 = vadd.f32 %v741, %v829
        %831 = vmatmul.f32.gmra.mxu0 %v779
        %v832 = vpop.f32.mrf.mxu0
        %v833 = vadd.f32 %v742, %v832
        %834 = vmatmul.f32.gmra.mxu0 %v781
        %v835 = vpop.f32.mrf.mxu0
        %v836 = vadd.f32 %v743, %v835
        %837 = vmatmul.f32.gmra.mxu0 %v783
        %v838 = vpop.f32.mrf.mxu0
        %v839 = vadd.f32 %v744, %v838
        %840 = vmatmul.f32.gmra.mxu0 %v785
        %v841 = vpop.f32.mrf.mxu0
        %v842 = vadd.f32 %v745, %v841
        %843 = vdwg.mxu0
        %vm844 = vcmask 523264
        %v845 = vsel %vm844, %v821, -inf
        %846 = vmax.xlane.f32.xlu0 %v845
        %v847 = vpop.xlane.xlu0 %846
        %v848 = vsel %vm844, %v824, -inf
        %849 = vmax.xlane.f32.xlu0 %v848
        %v850 = vpop.xlane.xlu0 %849
        %v851 = vsel %vm844, %v827, -inf
        %852 = vmax.xlane.f32.xlu0 %v851
        %v853 = vpop.xlane.xlu0 %852
        %v854 = vsel %vm844, %v830, -inf
        %855 = vmax.xlane.f32.xlu0 %v854
        %v856 = vpop.xlane.xlu0 %855
        %v857 = vsel %vm844, %v833, -inf
        %858 = vmax.xlane.f32.xlu0 %v857
        %v859 = vpop.xlane.xlu0 %858
        %v860 = vsel %vm844, %v836, -inf
        %861 = vmax.xlane.f32.xlu0 %v860
        %v862 = vpop.xlane.xlu0 %861
        %v863 = vsel %vm844, %v839, -inf
        %864 = vmax.xlane.f32.xlu0 %v863
        %v865 = vpop.xlane.xlu0 %864
        %v866 = vsel %vm844, %v842, -inf
        %867 = vmax.xlane.f32.xlu0 %v866
        %v868 = vpop.xlane.xlu0 %867
        %v869 = vsub.f32 %v821, %v847
        %v870 = vsub.f32 %v824, %v850
        %v871 = vsub.f32 %v827, %v853
        %v872 = vsub.f32 %v830, %v856
        %v873 = vsub.f32 %v833, %v859
        %v874 = vsub.f32 %v836, %v862
        %v875 = vsub.f32 %v839, %v865
        %v876 = vsub.f32 %v842, %v868
        %v877 = vmul.f32 %v869, 1.442695
        %v878 = vpow.pop %v877
        %v879 = vmul.f32 %v870, 1.442695
        %v880 = vpow.pop %v879
        %v881 = vmul.f32 %v871, 1.442695
        %v882 = vpow.pop %v881
        %v883 = vmul.f32 %v872, 1.442695
        %v884 = vpow.pop %v883
        %v885 = vmul.f32 %v873, 1.442695
        %v886 = vpow.pop %v885
        %v887 = vmul.f32 %v874, 1.442695
        %v888 = vpow.pop %v887
        %v889 = vmul.f32 %v875, 1.442695
        %v890 = vpow.pop %v889
        %v891 = vmul.f32 %v876, 1.442695
        %v892 = vpow.pop %v891
        %v893 = vsel %vm844, %v878, 0.0
        %894 = vadd.xlane.f32.xlu0 %v893
        %v895 = vpop.xlane.xlu0 %894
        %v896 = vsel %vm844, %v880, 0.0
        %897 = vadd.xlane.f32.xlu0 %v896
        %v898 = vpop.xlane.xlu0 %897
        %v899 = vsel %vm844, %v882, 0.0
        %900 = vadd.xlane.f32.xlu0 %v899
        %v901 = vpop.xlane.xlu0 %900
        %v902 = vsel %vm844, %v884, 0.0
        %903 = vadd.xlane.f32.xlu0 %v902
        %v904 = vpop.xlane.xlu0 %903
        %v905 = vsel %vm844, %v886, 0.0
        %906 = vadd.xlane.f32.xlu0 %v905
        %v907 = vpop.xlane.xlu0 %906
        %v908 = vsel %vm844, %v888, 0.0
        %909 = vadd.xlane.f32.xlu0 %v908
        %v910 = vpop.xlane.xlu0 %909
        %v911 = vsel %vm844, %v890, 0.0
        %912 = vadd.xlane.f32.xlu0 %v911
        %v913 = vpop.xlane.xlu0 %912
        %v914 = vsel %vm844, %v892, 0.0
        %915 = vadd.xlane.f32.xlu0 %v914
        %v916 = vpop.xlane.xlu0 %915
        %v917 = vrcp.pop %v895
        %v918 = vrcp.pop %v898
        %v919 = vrcp.pop %v901
        %v920 = vrcp.pop %v904
        %v921 = vrcp.pop %v907
        %v922 = vrcp.pop %v910
        %v923 = vrcp.pop %v913
        %v924 = vrcp.pop %v916
        %v925 = vmul.f32 %v878, %v917
        %v926 = vmul.f32 %v880, %v918
        %v927 = vmul.f32 %v882, %v919
        %v928 = vmul.f32 %v884, %v920
        %v929 = vmul.f32 %v886, %v921
        %v930 = vmul.f32 %v888, %v922
        %v931 = vmul.f32 %v890, %v923
        %v932 = vmul.f32 %v892, %v924
        %vm933 = vcmp.ge.s32.totalorder %v737, 0
        %vm934 = vcmp.lt.s32.totalorder %v737, 16
        %vm935 = vmand %vm933, %vm934
        %v936 = vsel %vm935, 1, 0
        %vm937 = vcmp.eq.s32.totalorder %v936, 1
        %938 = vrot.lane.b32.xlu0 %v713, 64
        %v939 = vpop.permute.xlu0 %938
        %940 = vrot.lane.b32.xlu0 %v716, 64
        %v941 = vpop.permute.xlu0 %940
        %942 = vrot.lane.b32.xlu0 %v719, 64
        %v943 = vpop.permute.xlu0 %942
        %944 = vrot.lane.b32.xlu0 %v722, 64
        %v945 = vpop.permute.xlu0 %944
        %946 = vrot.lane.b32.xlu0 %v725, 64
        %v947 = vpop.permute.xlu0 %946
        %948 = vrot.lane.b32.xlu0 %v728, 64
        %v949 = vpop.permute.xlu0 %948
        %950 = vrot.lane.b32.xlu0 %v731, 64
        %v951 = vpop.permute.xlu0 %950
        %952 = vrot.lane.b32.xlu0 %v734, 64
        %v953 = vpop.permute.xlu0 %952
        %v962 = vsel %vm937, %v939, 0.0
        %v963 = vsel %vm937, %v941, 0.0
        %v964 = vsel %vm937, %v943, 0.0
        %v965 = vsel %vm937, %v945, 0.0
        %v966 = vsel %vm937, %v947, 0.0
        %v967 = vsel %vm937, %v949, 0.0
        %v968 = vsel %vm937, %v951, 0.0
        %v969 = vsel %vm937, %v953, 0.0
        %s970 = scalar_lea.vmem [#allocation4], 64
        %v971 = vld [vmem:[%s970] sm:$0xff]
        %v972 = vld [vmem:[%s970 + $0x8] sm:$0xff]
        %v973 = vld [vmem:[%s970 + $0x10] sm:$0xff]
        %v974 = vld [vmem:[%s970 + $0x18] sm:$0xff]
        %v975 = vld [vmem:[%s970 + $0x20] sm:$0xff]
        %v976 = vld [vmem:[%s970 + $0x28] sm:$0xff]
        %v977 = vld [vmem:[%s970 + $0x30] sm:$0xff]
        %v978 = vld [vmem:[%s970 + $0x38] sm:$0xff]
        %979 = vrot.lane.b32.xlu0 %v713, 112
        %v980 = vpop.permute.xlu0 %979
        %981 = vrot.lane.b32.xlu0 %v716, 112
        %v982 = vpop.permute.xlu0 %981
        %983 = vrot.lane.b32.xlu0 %v719, 112
        %v984 = vpop.permute.xlu0 %983
        %985 = vrot.lane.b32.xlu0 %v722, 112
        %v986 = vpop.permute.xlu0 %985
        %987 = vrot.lane.b32.xlu0 %v725, 112
        %v988 = vpop.permute.xlu0 %987
        %989 = vrot.lane.b32.xlu0 %v728, 112
        %v990 = vpop.permute.xlu0 %989
        %991 = vrot.lane.b32.xlu0 %v731, 112
        %v992 = vpop.permute.xlu0 %991
        %993 = vrot.lane.b32.xlu0 %v734, 112
        %v994 = vpop.permute.xlu0 %993
        %995 = vrot.lane.b32.xlu0 %v713, 80
        %v996 = vpop.permute.xlu0 %995
        %997 = vrot.lane.b32.xlu0 %v716, 80
        %v998 = vpop.permute.xlu0 %997
        %999 = vrot.lane.b32.xlu0 %v719, 80
        %v1000 = vpop.permute.xlu0 %999
        %1001 = vrot.lane.b32.xlu0 %v722, 80
        %v1002 = vpop.permute.xlu0 %1001
        %1003 = vrot.lane.b32.xlu0 %v725, 80
        %v1004 = vpop.permute.xlu0 %1003
        %1005 = vrot.lane.b32.xlu0 %v728, 80
        %v1006 = vpop.permute.xlu0 %1005
        %1007 = vrot.lane.b32.xlu0 %v731, 80
        %v1008 = vpop.permute.xlu0 %1007
        %1009 = vrot.lane.b32.xlu0 %v734, 80
        %v1010 = vpop.permute.xlu0 %1009
        %v1011 = vsel %vm770, %v980, 0
        %v1013 = vsel %vm770, %v982, 0
        %v1015 = vsel %vm770, %v984, 0
        %v1017 = vsel %vm770, %v986, 0
        %v1019 = vsel %vm770, %v988, 0
        %v1021 = vsel %vm770, %v990, 0
        %v1023 = vsel %vm770, %v992, 0
        %v1025 = vsel %vm770, %v994, 0
        %v1027 = vsel %vm770, %v996, 0
        %v1029 = vsel %vm770, %v998, 0
        %v1031 = vsel %vm770, %v1000, 0
        %v1033 = vsel %vm770, %v1002, 0
        %v1035 = vsel %vm770, %v1004, 0
        %v1037 = vsel %vm770, %v1006, 0
        %v1039 = vsel %vm770, %v1008, 0
        %v1041 = vsel %vm770, %v1010, 0
        %1043 = vmatpush.xpose.msra.mxu0 0.0
        %1044 = vmatpush.xpose.msra.mxu0 0.0
        %1045 = vmatpush.xpose.msra.mxu0 0.0
        %1046 = vmatpush.xpose.msra.mxu0 0.0
        %1047 = vmatpush.xpose.msra.mxu0 0.0
        %1048 = vmatpush.xpose.msra.mxu0 0.0
        %1049 = vmatpush.xpose.msra.mxu0 0.0
        %1050 = vmatpush.xpose.msra.mxu0 0.0
        %1051 = vmatpush.xpose.msra.mxu0 %v1041
        %1052 = vmatpush.xpose.msra.mxu0 %v1039
        %1053 = vmatpush.xpose.msra.mxu0 %v1037
        %1054 = vmatpush.xpose.msra.mxu0 %v1035
        %1055 = vmatpush.xpose.msra.mxu0 %v1033
        %1056 = vmatpush.xpose.msra.mxu0 %v1031
        %1057 = vmatpush.xpose.msra.mxu0 %v1029
        %1058 = vmatpush.xpose.msra.mxu0 %v1027
        %1059 = vmatmul.f32.gmra.mxu0 %v1011
        %v1060 = vpop.f32.mrf.mxu0
        %v1061 = vadd.f32 %v971, %v1060
        %1062 = vmatmul.f32.gmra.mxu0 %v1013
        %v1063 = vpop.f32.mrf.mxu0
        %v1064 = vadd.f32 %v972, %v1063
        %1065 = vmatmul.f32.gmra.mxu0 %v1015
        %v1066 = vpop.f32.mrf.mxu0
        %v1067 = vadd.f32 %v973, %v1066
        %1068 = vmatmul.f32.gmra.mxu0 %v1017
        %v1069 = vpop.f32.mrf.mxu0
        %v1070 = vadd.f32 %v974, %v1069
        %1071 = vmatmul.f32.gmra.mxu0 %v1019
        %v1072 = vpop.f32.mrf.mxu0
        %v1073 = vadd.f32 %v975, %v1072
        %1074 = vmatmul.f32.gmra.mxu0 %v1021
        %v1075 = vpop.f32.mrf.mxu0
        %v1076 = vadd.f32 %v976, %v1075
        %1077 = vmatmul.f32.gmra.mxu0 %v1023
        %v1078 = vpop.f32.mrf.mxu0
        %v1079 = vadd.f32 %v977, %v1078
        %1080 = vmatmul.f32.gmra.mxu0 %v1025
        %v1081 = vpop.f32.mrf.mxu0
        %v1082 = vadd.f32 %v978, %v1081
        %1083 = vdwg.mxu0
        %v1084 = vsel %vm844, %v1061, -inf
        %1085 = vmax.xlane.f32.xlu0 %v1084
        %v1086 = vpop.xlane.xlu0 %1085
        %v1087 = vsel %vm844, %v1064, -inf
        %1088 = vmax.xlane.f32.xlu0 %v1087
        %v1089 = vpop.xlane.xlu0 %1088
        %v1090 = vsel %vm844, %v1067, -inf
        %1091 = vmax.xlane.f32.xlu0 %v1090
        %v1092 = vpop.xlane.xlu0 %1091
        %v1093 = vsel %vm844, %v1070, -inf
        %1094 = vmax.xlane.f32.xlu0 %v1093
        %v1095 = vpop.xlane.xlu0 %1094
        %v1096 = vsel %vm844, %v1073, -inf
        %1097 = vmax.xlane.f32.xlu0 %v1096
        %v1098 = vpop.xlane.xlu0 %1097
        %v1099 = vsel %vm844, %v1076, -inf
        %1100 = vmax.xlane.f32.xlu0 %v1099
        %v1101 = vpop.xlane.xlu0 %1100
        %v1102 = vsel %vm844, %v1079, -inf
        %1103 = vmax.xlane.f32.xlu0 %v1102
        %v1104 = vpop.xlane.xlu0 %1103
        %v1105 = vsel %vm844, %v1082, -inf
        %1106 = vmax.xlane.f32.xlu0 %v1105
        %v1107 = vpop.xlane.xlu0 %1106
        %v1108 = vsub.f32 %v1061, %v1086
        %v1109 = vsub.f32 %v1064, %v1089
        %v1110 = vsub.f32 %v1067, %v1092
        %v1111 = vsub.f32 %v1070, %v1095
        %v1112 = vsub.f32 %v1073, %v1098
        %v1113 = vsub.f32 %v1076, %v1101
        %v1114 = vsub.f32 %v1079, %v1104
        %v1115 = vsub.f32 %v1082, %v1107
        %v1116 = vmul.f32 %v1108, 1.442695
        %v1117 = vpow.pop %v1116
        %v1118 = vmul.f32 %v1109, 1.442695
        %v1119 = vpow.pop %v1118
        %v1120 = vmul.f32 %v1110, 1.442695
        %v1121 = vpow.pop %v1120
        %v1122 = vmul.f32 %v1111, 1.442695
        %v1123 = vpow.pop %v1122
        %v1124 = vmul.f32 %v1112, 1.442695
        %v1125 = vpow.pop %v1124
        %v1126 = vmul.f32 %v1113, 1.442695
        %v1127 = vpow.pop %v1126
        %v1128 = vmul.f32 %v1114, 1.442695
        %v1129 = vpow.pop %v1128
        %v1130 = vmul.f32 %v1115, 1.442695
        %v1131 = vpow.pop %v1130
        %v1132 = vsel %vm844, %v1117, 0.0
        %1133 = vadd.xlane.f32.xlu0 %v1132
        %v1134 = vpop.xlane.xlu0 %1133
        %v1135 = vsel %vm844, %v1119, 0.0
        %1136 = vadd.xlane.f32.xlu0 %v1135
        %v1137 = vpop.xlane.xlu0 %1136
        %v1138 = vsel %vm844, %v1121, 0.0
        %1139 = vadd.xlane.f32.xlu0 %v1138
        %v1140 = vpop.xlane.xlu0 %1139
        %v1141 = vsel %vm844, %v1123, 0.0
        %1142 = vadd.xlane.f32.xlu0 %v1141
        %v1143 = vpop.xlane.xlu0 %1142
        %v1144 = vsel %vm844, %v1125, 0.0
        %1145 = vadd.xlane.f32.xlu0 %v1144
        %v1146 = vpop.xlane.xlu0 %1145
        %v1147 = vsel %vm844, %v1127, 0.0
        %1148 = vadd.xlane.f32.xlu0 %v1147
        %v1149 = vpop.xlane.xlu0 %1148
        %v1150 = vsel %vm844, %v1129, 0.0
        %1151 = vadd.xlane.f32.xlu0 %v1150
        %v1152 = vpop.xlane.xlu0 %1151
        %v1153 = vsel %vm844, %v1131, 0.0
        %1154 = vadd.xlane.f32.xlu0 %v1153
        %v1155 = vpop.xlane.xlu0 %1154
        %v1156 = vrcp.pop %v1134
        %v1157 = vrcp.pop %v1137
        %v1158 = vrcp.pop %v1140
        %v1159 = vrcp.pop %v1143
        %v1160 = vrcp.pop %v1146
        %v1161 = vrcp.pop %v1149
        %v1162 = vrcp.pop %v1152
        %v1163 = vrcp.pop %v1155
        %v1164 = vmul.f32 %v1117, %v1156
        %v1165 = vmul.f32 %v1119, %v1157
        %v1166 = vmul.f32 %v1121, %v1158
        %v1167 = vmul.f32 %v1123, %v1159
        %v1168 = vmul.f32 %v1125, %v1160
        %v1169 = vmul.f32 %v1127, %v1161
        %v1170 = vmul.f32 %v1129, %v1162
        %v1171 = vmul.f32 %v1131, %v1163
        %vm1172 = vcmp.ge.s32.totalorder %v737, 16
        %vm1173 = vcmp.lt.s32.totalorder %v737, 32
        %vm1174 = vmand %vm1172, %vm1173
        %v1175 = vsel %vm1174, 1, 0
        %vm1176 = vcmp.eq.s32.totalorder %v1175, 1
        %v1177 = vsel %vm1176, %v939, 0.0
        %v1178 = vsel %vm1176, %v941, 0.0
        %v1179 = vsel %vm1176, %v943, 0.0
        %v1180 = vsel %vm1176, %v945, 0.0
        %v1181 = vsel %vm1176, %v947, 0.0
        %v1182 = vsel %vm1176, %v949, 0.0
        %v1183 = vsel %vm1176, %v951, 0.0
        %v1184 = vsel %vm1176, %v953, 0.0
        %v1186 = vsel %vm844, %v1164, 0
        %v1189 = vsel %vm844, %v1165, 0
        %v1192 = vsel %vm844, %v1166, 0
        %v1195 = vsel %vm844, %v1167, 0
        %v1198 = vsel %vm844, %v1168, 0
        %v1201 = vsel %vm844, %v1169, 0
        %v1204 = vsel %vm844, %v1170, 0
        %v1207 = vsel %vm844, %v1171, 0
        %1209 = vmatpush.msra.mxu0 0.0
        %1210 = vmatpush.msra.mxu0 0.0
        %1211 = vmatpush.msra.mxu0 0.0
        %1212 = vmatpush.msra.mxu0 0.0
        %1213 = vmatpush.msra.mxu0 0.0
        %1214 = vmatpush.msra.mxu0 0.0
        %1215 = vmatpush.msra.mxu0 0.0
        %1216 = vmatpush.msra.mxu0 0.0
        %1217 = vmatpush.msra.mxu0 %v1184
        %1218 = vmatpush.msra.mxu0 %v1183
        %1219 = vmatpush.msra.mxu0 %v1182
        %1220 = vmatpush.msra.mxu0 %v1181
        %1221 = vmatpush.msra.mxu0 %v1180
        %1222 = vmatpush.msra.mxu0 %v1179
        %1223 = vmatpush.msra.mxu0 %v1178
        %1224 = vmatpush.msra.mxu0 %v1177
        %1225 = vmatmul.f32.gmra.mxu0 %v1186
        %v1226 = vpop.f32.mrf.mxu0
        %v1227 = vadd.f32 0.0, %v1226
        %1228 = vmatmul.f32.gmra.mxu0 %v1189
        %v1229 = vpop.f32.mrf.mxu0
        %v1230 = vadd.f32 0.0, %v1229
        %1231 = vmatmul.f32.gmra.mxu0 %v1192
        %v1232 = vpop.f32.mrf.mxu0
        %v1233 = vadd.f32 0.0, %v1232
        %1234 = vmatmul.f32.gmra.mxu0 %v1195
        %v1235 = vpop.f32.mrf.mxu0
        %v1236 = vadd.f32 0.0, %v1235
        %1237 = vmatmul.f32.gmra.mxu0 %v1198
        %v1238 = vpop.f32.mrf.mxu0
        %v1239 = vadd.f32 0.0, %v1238
        %1240 = vmatmul.f32.gmra.mxu0 %v1201
        %v1241 = vpop.f32.mrf.mxu0
        %v1242 = vadd.f32 0.0, %v1241
        %1243 = vmatmul.f32.gmra.mxu0 %v1204
        %v1244 = vpop.f32.mrf.mxu0
        %v1245 = vadd.f32 0.0, %v1244
        %1246 = vmatmul.f32.gmra.mxu0 %v1207
        %v1247 = vpop.f32.mrf.mxu0
        %v1248 = vadd.f32 0.0, %v1247
        %1249 = vdwg.mxu0
        %v1251 = vsel %vm844, %v925, 0
        %v1254 = vsel %vm844, %v926, 0
        %v1257 = vsel %vm844, %v927, 0
        %v1260 = vsel %vm844, %v928, 0
        %v1263 = vsel %vm844, %v929, 0
        %v1266 = vsel %vm844, %v930, 0
        %v1269 = vsel %vm844, %v931, 0
        %v1272 = vsel %vm844, %v932, 0
        %1274 = vmatpush.msra.mxu0 0.0
        %1275 = vmatpush.msra.mxu0 0.0
        %1276 = vmatpush.msra.mxu0 0.0
        %1277 = vmatpush.msra.mxu0 0.0
        %1278 = vmatpush.msra.mxu0 0.0
        %1279 = vmatpush.msra.mxu0 0.0
        %1280 = vmatpush.msra.mxu0 0.0
        %1281 = vmatpush.msra.mxu0 0.0
        %1282 = vmatpush.msra.mxu0 %v969
        %1283 = vmatpush.msra.mxu0 %v968
        %1284 = vmatpush.msra.mxu0 %v967
        %1285 = vmatpush.msra.mxu0 %v966
        %1286 = vmatpush.msra.mxu0 %v965
        %1287 = vmatpush.msra.mxu0 %v964
        %1288 = vmatpush.msra.mxu0 %v963
        %1289 = vmatpush.msra.mxu0 %v962
        %1290 = vmatmul.f32.gmra.mxu0 %v1251
        %v1291 = vpop.f32.mrf.mxu0
        %v1292 = vadd.f32 %v1227, %v1291
        %1293 = vmatmul.f32.gmra.mxu0 %v1254
        %v1294 = vpop.f32.mrf.mxu0
        %v1295 = vadd.f32 %v1230, %v1294
        %1296 = vmatmul.f32.gmra.mxu0 %v1257
        %v1297 = vpop.f32.mrf.mxu0
        %v1298 = vadd.f32 %v1233, %v1297
        %1299 = vmatmul.f32.gmra.mxu0 %v1260
        %v1300 = vpop.f32.mrf.mxu0
        %v1301 = vadd.f32 %v1236, %v1300
        %1302 = vmatmul.f32.gmra.mxu0 %v1263
        %v1303 = vpop.f32.mrf.mxu0
        %v1304 = vadd.f32 %v1239, %v1303
        %1305 = vmatmul.f32.gmra.mxu0 %v1266
        %v1306 = vpop.f32.mrf.mxu0
        %v1307 = vadd.f32 %v1242, %v1306
        %1308 = vmatmul.f32.gmra.mxu0 %v1269
        %v1309 = vpop.f32.mrf.mxu0
        %v1310 = vadd.f32 %v1245, %v1309
        %1311 = vmatmul.f32.gmra.mxu0 %v1272
        %v1312 = vpop.f32.mrf.mxu0
        %v1313 = vadd.f32 %v1248, %v1312
        %1314 = vdwg.mxu0
        %v1315 = vld [vmem:[#allocation6] sm:$0xff]
        %v1316 = vld [vmem:[#allocation6 + $0x8] sm:$0xff]
        %v1317 = vld [vmem:[#allocation6 + $0x10] sm:$0xff]
        %v1318 = vld [vmem:[#allocation6 + $0x18] sm:$0xff]
        %v1319 = vld [vmem:[%s7] sm:$0x1]
        %v1321 = vperm.slane %v1319, 0
        %v1324 = vsel %vm559, %v1292, 0
        %v1327 = vsel %vm559, %v1295, 0
        %v1330 = vsel %vm559, %v1298, 0
        %v1333 = vsel %vm559, %v1301, 0
        %v1336 = vsel %vm559, %v1304, 0
        %v1339 = vsel %vm559, %v1307, 0
        %v1342 = vsel %vm559, %v1310, 0
        %v1345 = vsel %vm559, %v1313, 0
        %1347 = vmatpush.msra.mxu0 0.0
        %1348 = vmatpush.msra.mxu0 0.0
        %1349 = vmatpush.msra.mxu0 0.0
        %1350 = vmatpush.msra.mxu0 0.0
        %1351 = vmatpush.msra.mxu0 0.0
        %1352 = vmatpush.msra.mxu0 0.0
        %1353 = vmatpush.msra.mxu0 0.0
        %1354 = vmatpush.msra.mxu0 0.0
        %1355 = vmatpush.msra.mxu0 0.0
        %1356 = vmatpush.msra.mxu0 0.0
        %1357 = vmatpush.msra.mxu0 0.0
        %1358 = vmatpush.msra.mxu0 0.0
        %1359 = vmatpush.msra.mxu0 %v1318
        %1360 = vmatpush.msra.mxu0 %v1317
        %1361 = vmatpush.msra.mxu0 %v1316
        %1362 = vmatpush.msra.mxu0 %v1315
        %1363 = vmatmul.f32.gmra.mxu0 %v1324
        %v1364 = vpop.f32.mrf.mxu0
        %v1365 = vadd.f32 %v1321, %v1364
        %1366 = vmatmul.f32.gmra.mxu0 %v1327
        %v1367 = vpop.f32.mrf.mxu0
        %v1368 = vadd.f32 %v1321, %v1367
        %1369 = vmatmul.f32.gmra.mxu0 %v1330
        %v1370 = vpop.f32.mrf.mxu0
        %v1371 = vadd.f32 %v1321, %v1370
        %1372 = vmatmul.f32.gmra.mxu0 %v1333
        %v1373 = vpop.f32.mrf.mxu0
        %v1374 = vadd.f32 %v1321, %v1373
        %1375 = vmatmul.f32.gmra.mxu0 %v1336
        %v1376 = vpop.f32.mrf.mxu0
        %v1377 = vadd.f32 %v1321, %v1376
        %1378 = vmatmul.f32.gmra.mxu0 %v1339
        %v1379 = vpop.f32.mrf.mxu0
        %v1380 = vadd.f32 %v1321, %v1379
        %1381 = vmatmul.f32.gmra.mxu0 %v1342
        %v1382 = vpop.f32.mrf.mxu0
        %v1383 = vadd.f32 %v1321, %v1382
        %1384 = vmatmul.f32.gmra.mxu0 %v1345
        %v1385 = vpop.f32.mrf.mxu0
        %v1386 = vadd.f32 %v1321, %v1385
        %1387 = vdwg.mxu0
        %v1388 = vadd.f32 %v551, %v1365
        %v1389 = vadd.f32 %v552, %v1368
        %v1390 = vadd.f32 %v553, %v1371
        %v1391 = vadd.f32 %v554, %v1374
        %v1392 = vadd.f32 %v555, %v1377
        %v1393 = vadd.f32 %v556, %v1380
        %v1394 = vadd.f32 %v557, %v1383
        %v1395 = vadd.f32 %v558, %v1386
        %v1396 = vsel %vm559, %v1388, 0.0
        %v1397 = vsel %vm559, %v1389, 0.0
        %v1398 = vadd.f32 %v1396, %v1397
        %v1399 = vsel %vm559, %v1390, 0.0
        %v1400 = vadd.f32 %v1398, %v1399
        %v1401 = vsel %vm559, %v1391, 0.0
        %v1402 = vadd.f32 %v1400, %v1401
        %v1403 = vsel %vm559, %v1392, 0.0
        %v1404 = vadd.f32 %v1402, %v1403
        %v1405 = vsel %vm559, %v1393, 0.0
        %v1406 = vadd.f32 %v1404, %v1405
        %v1407 = vsel %vm559, %v1394, 0.0
        %v1408 = vadd.f32 %v1406, %v1407
        %v1409 = vsel %vm559, %v1395, 0.0
        %v1410 = vadd.f32 %v1408, %v1409
        %v1411 = vrot.slane %v1410, 4
        %v1412 = vadd.f32 %v1410, %v1411
        %v1413 = vrot.slane %v1412, 2
        %v1414 = vadd.f32 %v1412, %v1413
        %v1415 = vrot.slane %v1414, 1
        %v1416 = vadd.f32 %v1414, %v1415
        %v1417 = vmul.f32 %v1416, %v587
        %v1418 = vsub.f32 %v1388, %v1417
        %v1419 = vsub.f32 %v1389, %v1417
        %v1420 = vsub.f32 %v1390, %v1417
        %v1421 = vsub.f32 %v1391, %v1417
        %v1422 = vsub.f32 %v1392, %v1417
        %v1423 = vsub.f32 %v1393, %v1417
        %v1424 = vsub.f32 %v1394, %v1417
        %v1425 = vsub.f32 %v1395, %v1417
        %v1426 = vmul.f32 %v1418, %v1418
        %v1427 = vmul.f32 %v1419, %v1419
        %v1428 = vmul.f32 %v1420, %v1420
        %v1429 = vmul.f32 %v1421, %v1421
        %v1430 = vmul.f32 %v1422, %v1422
        %v1431 = vmul.f32 %v1423, %v1423
        %v1432 = vmul.f32 %v1424, %v1424
        %v1433 = vmul.f32 %v1425, %v1425
        %v1434 = vsel %vm559, %v1426, 0.0
        %v1435 = vsel %vm559, %v1427, 0.0
        %v1436 = vadd.f32 %v1434, %v1435
        %v1437 = vsel %vm559, %v1428, 0.0
        %v1438 = vadd.f32 %v1436, %v1437
        %v1439 = vsel %vm559, %v1429, 0.0
        %v1440 = vadd.f32 %v1438, %v1439
        %v1441 = vsel %vm559, %v1430, 0.0
        %v1442 = vadd.f32 %v1440, %v1441
        %v1443 = vsel %vm559, %v1431, 0.0
        %v1444 = vadd.f32 %v1442, %v1443
        %v1445 = vsel %vm559, %v1432, 0.0
        %v1446 = vadd.f32 %v1444, %v1445
        %v1447 = vsel %vm559, %v1433, 0.0
        %v1448 = vadd.f32 %v1446, %v1447
        %v1449 = vrot.slane %v1448, 4
        %v1450 = vadd.f32 %v1448, %v1449
        %v1451 = vrot.slane %v1450, 2
        %v1452 = vadd.f32 %v1450, %v1451
        %v1453 = vrot.slane %v1452, 1
        %v1454 = vadd.f32 %v1452, %v1453
        %v1455 = vmul.f32 %v1454, %v587
        %v1456 = vld [vmem:[%s8] sm:$0x1]
        %v1457 = vadd.f32 %v1455, 1e-05
        %v1458 = vrsqrt.pop %v1457
        %v1459 = vmul.f32 %v1458, %v1457
        %v1460 = vmul.f32 %v1459, %v1458
        %v1461 = vmul.f32 0.5, %v1460
        %v1462 = vsub.f32 1.5, %v1461
        %v1463 = vmul.f32 %v1458, %v1462
        %vm1464 = vweird.f32 %v1457
        %vm1465 = vweird.f32 %v1458
        %vm1466 = vmor %vm1464, %vm1465
        %v1467 = vsel %vm1466, %v1458, %v1463
        %v1468 = vmul.f32 %v1456, %v1467
        %v1470 = vperm.slane %v1468, 0
        %v1472 = vmul.f32 %v1418, %v1470
        %v1473 = vmul.f32 %v1419, %v1470
        %v1474 = vmul.f32 %v1420, %v1470
        %v1475 = vmul.f32 %v1421, %v1470
        %v1476 = vmul.f32 %v1422, %v1470
        %v1477 = vmul.f32 %v1423, %v1470
        %v1478 = vmul.f32 %v1424, %v1470
        %v1479 = vmul.f32 %v1425, %v1470
        %v1480 = vld [vmem:[%s9] sm:$0x1]
        %v1482 = vperm.slane %v1480, 0
        %v1484 = vadd.f32 %v1472, %v1482
        %v1485 = vadd.f32 %v1473, %v1482
        %v1486 = vadd.f32 %v1474, %v1482
        %v1487 = vadd.f32 %v1475, %v1482
        %v1488 = vadd.f32 %v1476, %v1482
        %v1489 = vadd.f32 %v1477, %v1482
        %v1490 = vadd.f32 %v1478, %v1482
        %v1491 = vadd.f32 %v1479, %v1482
        %v1492 = vld [vmem:[#allocation7] sm:$0xff]
        %v1493 = vld [vmem:[#allocation7 + $0x8] sm:$0xff]
        %v1494 = vld [vmem:[#allocation7 + $0x10] sm:$0xff]
        %v1495 = vld [vmem:[#allocation7 + $0x18] sm:$0xff]
        %v1496 = vld [vmem:[%s11] sm:$0x1]
        %v1498 = vperm.slane %v1496, 0
        %v1501 = vsel %vm559, %v1484, 0
        %v1504 = vsel %vm559, %v1485, 0
        %v1507 = vsel %vm559, %v1486, 0
        %v1510 = vsel %vm559, %v1487, 0
        %v1513 = vsel %vm559, %v1488, 0
        %v1516 = vsel %vm559, %v1489, 0
        %v1519 = vsel %vm559, %v1490, 0
        %v1522 = vsel %vm559, %v1491, 0
        %1524 = vmatpush.msra.mxu0 0.0
        %1525 = vmatpush.msra.mxu0 0.0
        %1526 = vmatpush.msra.mxu0 0.0
        %1527 = vmatpush.msra.mxu0 0.0
        %1528 = vmatpush.msra.mxu0 0.0
        %1529 = vmatpush.msra.mxu0 0.0
        %1530 = vmatpush.msra.mxu0 0.0
        %1531 = vmatpush.msra.mxu0 0.0
        %1532 = vmatpush.msra.mxu0 0.0
        %1533 = vmatpush.msra.mxu0 0.0
        %1534 = vmatpush.msra.mxu0 0.0
        %1535 = vmatpush.msra.mxu0 0.0
        %1536 = vmatpush.msra.mxu0 %v1495
        %1537 = vmatpush.msra.mxu0 %v1494
        %1538 = vmatpush.msra.mxu0 %v1493
        %1539 = vmatpush.msra.mxu0 %v1492
        %1540 = vmatmul.f32.gmra.mxu0 %v1501
        %v1541 = vpop.f32.mrf.mxu0
        %v1542 = vadd.f32 %v1498, %v1541
        %1543 = vmatmul.f32.gmra.mxu0 %v1504
        %v1544 = vpop.f32.mrf.mxu0
        %v1545 = vadd.f32 %v1498, %v1544
        %1546 = vmatmul.f32.gmra.mxu0 %v1507
        %v1547 = vpop.f32.mrf.mxu0
        %v1548 = vadd.f32 %v1498, %v1547
        %1549 = vmatmul.f32.gmra.mxu0 %v1510
        %v1550 = vpop.f32.mrf.mxu0
        %v1551 = vadd.f32 %v1498, %v1550
        %1552 = vmatmul.f32.gmra.mxu0 %v1513
        %v1553 = vpop.f32.mrf.mxu0
        %v1554 = vadd.f32 %v1498, %v1553
        %1555 = vmatmul.f32.gmra.mxu0 %v1516
        %v1556 = vpop.f32.mrf.mxu0
        %v1557 = vadd.f32 %v1498, %v1556
        %1558 = vmatmul.f32.gmra.mxu0 %v1519
        %v1559 = vpop.f32.mrf.mxu0
        %v1560 = vadd.f32 %v1498, %v1559
        %1561 = vmatmul.f32.gmra.mxu0 %v1522
        %v1562 = vpop.f32.mrf.mxu0
        %v1563 = vadd.f32 %v1498, %v1562
        %1564 = vdwg.mxu0
        %v1565 = vmul.f32 %v1542, %v1542
        %v1566 = vmul.f32 %v1545, %v1545
        %v1567 = vmul.f32 %v1548, %v1548
        %v1568 = vmul.f32 %v1551, %v1551
        %v1569 = vmul.f32 %v1554, %v1554
        %v1570 = vmul.f32 %v1557, %v1557
        %v1571 = vmul.f32 %v1560, %v1560
        %v1572 = vmul.f32 %v1563, %v1563
        %v1573 = vmul.f32 %v1542, %v1565
        %v1574 = vmul.f32 %v1545, %v1566
        %v1575 = vmul.f32 %v1548, %v1567
        %v1576 = vmul.f32 %v1551, %v1568
        %v1577 = vmul.f32 %v1554, %v1569
        %v1578 = vmul.f32 %v1557, %v1570
        %v1579 = vmul.f32 %v1560, %v1571
        %v1580 = vmul.f32 %v1563, %v1572
        %v1581 = vmul.f32 %v1573, 0.044715
        %v1582 = vmul.f32 %v1574, 0.044715
        %v1583 = vmul.f32 %v1575, 0.044715
        %v1584 = vmul.f32 %v1576, 0.044715
        %v1585 = vmul.f32 %v1577, 0.044715
        %v1586 = vmul.f32 %v1578, 0.044715
        %v1587 = vmul.f32 %v1579, 0.044715
        %v1588 = vmul.f32 %v1580, 0.044715
        %v1589 = vadd.f32 %v1542, %v1581
        %v1590 = vadd.f32 %v1545, %v1582
        %v1591 = vadd.f32 %v1548, %v1583
        %v1592 = vadd.f32 %v1551, %v1584
        %v1593 = vadd.f32 %v1554, %v1585
        %v1594 = vadd.f32 %v1557, %v1586
        %v1595 = vadd.f32 %v1560, %v1587
        %v1596 = vadd.f32 %v1563, %v1588
        %v1597 = vmul.f32 %v1589, 0.7978846
        %v1598 = vmul.f32 %v1590, 0.7978846
        %v1599 = vmul.f32 %v1591, 0.7978846
        %v1600 = vmul.f32 %v1592, 0.7978846
        %v1601 = vmul.f32 %v1593, 0.7978846
        %v1602 = vmul.f32 %v1594, 0.7978846
        %v1603 = vmul.f32 %v1595, 0.7978846
        %v1604 = vmul.f32 %v1596, 0.7978846
        %v1605 = vtanh.pop %v1597
        %v1606 = vtanh.pop %v1598
        %v1607 = vtanh.pop %v1599
        %v1608 = vtanh.pop %v1600
        %v1609 = vtanh.pop %v1601
        %v1610 = vtanh.pop %v1602
        %v1611 = vtanh.pop %v1603
        %v1612 = vtanh.pop %v1604
        %v1613 = vadd.f32 %v1605, 1.0
        %v1614 = vadd.f32 %v1606, 1.0
        %v1615 = vadd.f32 %v1607, 1.0
        %v1616 = vadd.f32 %v1608, 1.0
        %v1617 = vadd.f32 %v1609, 1.0
        %v1618 = vadd.f32 %v1610, 1.0
        %v1619 = vadd.f32 %v1611, 1.0
        %v1620 = vadd.f32 %v1612, 1.0
        %v1621 = vmul.f32 %v1613, 0.5
        %v1622 = vmul.f32 %v1614, 0.5
        %v1623 = vmul.f32 %v1615, 0.5
        %v1624 = vmul.f32 %v1616, 0.5
        %v1625 = vmul.f32 %v1617, 0.5
        %v1626 = vmul.f32 %v1618, 0.5
        %v1627 = vmul.f32 %v1619, 0.5
        %v1628 = vmul.f32 %v1620, 0.5
        %v1629 = vmul.f32 %v1542, %v1621
        %v1630 = vmul.f32 %v1545, %v1622
        %v1631 = vmul.f32 %v1548, %v1623
        %v1632 = vmul.f32 %v1551, %v1624
        %v1633 = vmul.f32 %v1554, %v1625
        %v1634 = vmul.f32 %v1557, %v1626
        %v1635 = vmul.f32 %v1560, %v1627
        %v1636 = vmul.f32 %v1563, %v1628
        %v1637 = vld [vmem:[#allocation9] sm:$0xff]
        %v1638 = vld [vmem:[#allocation9 + $0x8] sm:$0xff]
        %v1639 = vld [vmem:[#allocation9 + $0x10] sm:$0xff]
        %v1640 = vld [vmem:[#allocation9 + $0x18] sm:$0xff]
        %v1641 = vld [vmem:[#allocation9 + $0x20] sm:$0xff]
        %v1642 = vld [vmem:[#allocation9 + $0x28] sm:$0xff]
        %v1643 = vld [vmem:[#allocation9 + $0x30] sm:$0xff]
        %v1644 = vld [vmem:[#allocation9 + $0x38] sm:$0xff]
        %v1645 = vld [vmem:[%s13] sm:$0x1]
        %v1647 = vperm.slane %v1645, 0
        %v1650 = vsel %vm844, %v1629, 0
        %v1653 = vsel %vm844, %v1630, 0
        %v1656 = vsel %vm844, %v1631, 0
        %v1659 = vsel %vm844, %v1632, 0
        %v1662 = vsel %vm844, %v1633, 0
        %v1665 = vsel %vm844, %v1634, 0
        %v1668 = vsel %vm844, %v1635, 0
        %v1671 = vsel %vm844, %v1636, 0
        %1673 = vmatpush.msra.mxu0 0.0
        %1674 = vmatpush.msra.mxu0 0.0
        %1675 = vmatpush.msra.mxu0 0.0
        %1676 = vmatpush.msra.mxu0 0.0
        %1677 = vmatpush.msra.mxu0 0.0
        %1678 = vmatpush.msra.mxu0 0.0
        %1679 = vmatpush.msra.mxu0 0.0
        %1680 = vmatpush.msra.mxu0 0.0
        %1681 = vmatpush.msra.mxu0 %v1644
        %1682 = vmatpush.msra.mxu0 %v1643
        %1683 = vmatpush.msra.mxu0 %v1642
        %1684 = vmatpush.msra.mxu0 %v1641
        %1685 = vmatpush.msra.mxu0 %v1640
        %1686 = vmatpush.msra.mxu0 %v1639
        %1687 = vmatpush.msra.mxu0 %v1638
        %1688 = vmatpush.msra.mxu0 %v1637
        %1689 = vmatmul.f32.gmra.mxu0 %v1650
        %v1690 = vpop.f32.mrf.mxu0
        %v1691 = vadd.f32 %v1647, %v1690
        %1692 = vmatmul.f32.gmra.mxu0 %v1653
        %v1693 = vpop.f32.mrf.mxu0
        %v1694 = vadd.f32 %v1647, %v1693
        %1695 = vmatmul.f32.gmra.mxu0 %v1656
        %v1696 = vpop.f32.mrf.mxu0
        %v1697 = vadd.f32 %v1647, %v1696
        %1698 = vmatmul.f32.gmra.mxu0 %v1659
        %v1699 = vpop.f32.mrf.mxu0
        %v1700 = vadd.f32 %v1647, %v1699
        %1701 = vmatmul.f32.gmra.mxu0 %v1662
        %v1702 = vpop.f32.mrf.mxu0
        %v1703 = vadd.f32 %v1647, %v1702
        %1704 = vmatmul.f32.gmra.mxu0 %v1665
        %v1705 = vpop.f32.mrf.mxu0
        %v1706 = vadd.f32 %v1647, %v1705
        %1707 = vmatmul.f32.gmra.mxu0 %v1668
        %v1708 = vpop.f32.mrf.mxu0
        %v1709 = vadd.f32 %v1647, %v1708
        %1710 = vmatmul.f32.gmra.mxu0 %v1671
        %v1711 = vpop.f32.mrf.mxu0
        %v1712 = vadd.f32 %v1647, %v1711
        %1713 = vdwg.mxu0
        %v1714 = vadd.f32 %v1388, %v1691
        %v1715 = vadd.f32 %v1389, %v1694
        %v1716 = vadd.f32 %v1390, %v1697
        %v1717 = vadd.f32 %v1391, %v1700
        %v1718 = vadd.f32 %v1392, %v1703
        %v1719 = vadd.f32 %v1393, %v1706
        %v1720 = vadd.f32 %v1394, %v1709
        %v1721 = vadd.f32 %v1395, %v1712
        %1722 = vst.msk [vmem:[%s550] sm:$0xff] %vm559, %v1714
        %1723 = vst.msk [vmem:[%s550 + $0x8] sm:$0xff] %vm559, %v1715
        %1724 = vst.msk [vmem:[%s550 + $0x10] sm:$0xff] %vm559, %v1716
        %1725 = vst.msk [vmem:[%s550 + $0x18] sm:$0xff] %vm559, %v1717
        %1726 = vst.msk [vmem:[%s550 + $0x20] sm:$0xff] %vm559, %v1718
        %1727 = vst.msk [vmem:[%s550 + $0x28] sm:$0xff] %vm559, %v1719
        %1728 = vst.msk [vmem:[%s550 + $0x30] sm:$0xff] %vm559, %v1720
        %1729 = vst.msk [vmem:[%s550 + $0x38] sm:$0xff] %vm559, %v1721
        %p1730 = scmp.lt.s32.totalorder %s28, 1
        %s1731 = scalar_select %p1730, %s28, 1
        %s1732 = smul.addr %s1731, 8
        %s1733 = smul.addr %s1732, 8
        %s1734 = scalar_lea.vmem %s14, %s1733
        // Predicated region
        $region97: #{_lambda_.5} parent=75 // pred_check
          %p1735 = pneg %p345
        $region98: #{_lambda_.5} parent=75 // pred_check_branch
          %1737 = sbr.rel (%p1735) target = $region100
        $region99: #{_lambda_.5} parent=75 // pred_region
          _
        $region100: #{_lambda_.5} parent=75 // pred_fallthru
          _
      $region76: #{_lambda_.5} parent=5 // pred_fallthru
        _
      %p1738 = scmp.le.s32.totalorder 2, %s23
      // Predicated region
      $region101: #{_lambda_.5} parent=5 // pred_check
        %p1739 = pneg %p1738
      $region102: #{_lambda_.5} parent=5 // pred_check_branch
        %1741 = sbr.rel (%p1739) target = $region104
      $region103: #{_lambda_.5} parent=5 // pred_region
        %s1742 = ssub.s32 %s23, 2
        // Predicated region
        $region105: #{_lambda_.5} parent=103 // pred_check
          %p1743 = pneg %p351
        $region106: #{_lambda_.5} parent=103 // pred_check_branch
          %1745 = sbr.rel (%p1743) target = $region108
        $region107: #{_lambda_.5} parent=103 // pred_region
          %p1746 = scmp.lt.s32.totalorder %s29, 1
          %s1747 = scalar_select %p1746, %s29, 1
          %s1748 = smul.addr %s1747, 8
          %s1749 = smul.addr %s1748, 8
          %s1750 = scalar_lea.vmem %s14, %s1749
        $region108: #{_lambda_.5} parent=103 // pred_fallthru
          _
      $region104: #{_lambda_.5} parent=5 // pred_fallthru
        _
    $region6: #{_lambda_.5} parent=1 // loop_footer
      %s27 = sadd.s32 1, %s23
    $region7: #{_lambda_.5} parent=1 // loop_footer_branch
      %22 = sbr.rel target = $region3
    $region8: #{_lambda_.5} parent=1 // loop_exit
      _
    %1751 = vsyncpa [#allocation3], 1
    %s1752 = scalar_lea.sflag [#allocation3], 1
    %1753 = vsyncpa %s1752, 1
    %1754 = vsyncpa [#allocation5], 1
    %1755 = vsyncpa [#allocation8], 1

// kernel: _lambda_.8
$region0: #{_lambda_.8}
  #allocation0 [shape = 'u32[]', space=smem, size = 0x4, offset = 0x4, fixed_abs, tag = 'smem constant byte address 0x4 - core index']
  #allocation1 [shape = 'u32[72,128]{1,0:T(1,128)}', space=vmem, size = 0x9000, scoped, tag = 'internal scratch']
  %s0 = inlined_call_operand.vmem [shape: f32[2,16,64], index: 0, kind: input, shape index: {}]
  %s1 = inlined_call_operand.vmem [shape: f32[1,64], index: 1, kind: input, shape index: {}, may-alias: {1,8}]
  %s2 = inlined_call_operand.vmem [shape: f32[1,64], index: 2, kind: input, shape index: {}, may-alias: {2,7,9,13}]
  %s3 = inlined_call_operand.vmem [shape: f32[64,192], index: 3, kind: input, shape index: {}]
  %s4 = inlined_call_operand.vmem [shape: f32[1,192], index: 4, kind: input, shape index: {}]
  %s5 = inlined_call_operand.hbm [shape: f32[4,16,16], index: 5, kind: input, shape index: {}]
  %s6 = inlined_call_operand.hbm [shape: f32[64,64], index: 6, kind: input, shape index: {}]
  %s7 = inlined_call_operand.vmem [shape: f32[1,64], index: 7, kind: input, shape index: {}, may-alias: {2,7,9,13}]
  %s8 = inlined_call_operand.vmem [shape: f32[1,64], index: 8, kind: input, shape index: {}, may-alias: {1,8}]
  %s9 = inlined_call_operand.vmem [shape: f32[1,64], index: 9, kind: input, shape index: {}, may-alias: {2,7,9,13}]
  %s10 = inlined_call_operand.hbm [shape: f32[64,128], index: 10, kind: input, shape index: {}]
  %s11 = inlined_call_operand.vmem [shape: f32[1,128], index: 11, kind: input, shape index: {}]
  %s12 = inlined_call_operand.vmem [shape: f32[128,64], index: 12, kind: input, shape index: {}]
  %s13 = inlined_call_operand.vmem [shape: f32[1,64], index: 13, kind: input, shape index: {}, may-alias: {2,7,9,13}]
  %s14 = inlined_call_operand.vmem [shape: f32[2,16,64], index: 14, kind: output, shape index: {}]
  %s15 = sld [smem:[#allocation0]]
  $region101: #{_lambda_.8} parent=0
    _
  %s17 = ssub.s32 1, %s15
  %s18 = scalar_select 0, %s17, %s15
  $region1: #{_lambda_.8} parent=0
    #allocation2 [shape = 'u8[32768]{0}', space=vmem, size = 0x8000, scoped, tag = 'input window, operand 5, single buffered']
    #allocation3 [shape = 's32[2]{0}', space=sflag, size = 0x8, scoped, tag = 'scoped memory for _lambda_.8']
    #allocation4 [shape = 'u8[32768]{0}', space=vmem, size = 0x8000, scoped, tag = 'input window, operand 6, single buffered']
    #allocation5 [shape = 's32[1]{0}', space=sflag, size = 0x4, scoped, tag = 'scoped memory for _lambda_.8']
    #allocation6 [shape = 'u8[32768]{0}', space=vmem, size = 0x8000, scoped, tag = 'input window, operand 10, single buffered']
    %19 = vsyncpa [#allocation3], 0
    %20 = vsyncpa [#allocation5], 0
    loop: start=0, step=1, limit=4
    $region2: #{_lambda_.8} parent=1 // loop_pre_header
      _
    $region3: #{_lambda_.8} parent=1 // loop_header
      %s22 = sphi 0, %s26
      %p23 = scmp.ge.s32.totalorder %s22, 4
      %s32 = sphi 0, %s34
      %s35 = sphi 0, %s32
      %s36 = sphi 0, %s35
      %s52 = sphi 0, %s36
      %s56 = sphi 0, %s56
      %s58 = sphi 0, %s56
      %s59 = sphi 0, %s58
      %s73 = sphi 0, %s59
      %s77 = sphi 0, %s77
      %s79 = sphi 0, %s77
      %s80 = sphi 0, %s79
      %s94 = sphi 0, %s80
      %s98 = sphi 0, %s98
      %s100 = sphi 0, %s98
      %s101 = sphi 0, %s100
      %s115 = sphi 0, %s101
      %s119 = sphi 0, %s119
      %s121 = sphi 0, %s119
      %s122 = sphi 0, %s121
      %s136 = sphi 0, %s122
      %s140 = sphi 0, %s140
      %s142 = sphi 0, %s140
      %s143 = sphi 0, %s142
      %s157 = sphi 0, %s143
      %s161 = sphi 0, %s161
      %s163 = sphi 0, %s161
      %s164 = sphi 0, %s163
      %s178 = sphi 0, %s164
      %s182 = sphi 0, %s182
      %s184 = sphi 0, %s182
      %s185 = sphi 0, %s184
      %s199 = sphi 0, %s185
      %s203 = sphi 0, %s203
      %s205 = sphi 0, %s203
      %s206 = sphi 0, %s205
      %s220 = sphi 0, %s206
      %s224 = sphi 0, %s224
      %s226 = sphi 0, %s224
      %s227 = sphi 0, %s226
      %s241 = sphi 0, %s227
      %s245 = sphi 0, %s245
      %s247 = sphi 0, %s245
      %s248 = sphi 0, %s247
      %s262 = sphi 0, %s248
      %s266 = sphi 0, %s266
      %s268 = sphi 0, %s266
      %s269 = sphi 0, %s268
      %s283 = sphi 0, %s269
      %s287 = sphi 0, %s287
      %s289 = sphi 0, %s287
      %s290 = sphi 0, %s289
      %s304 = sphi 0, %s290
      %s308 = sphi 0, %s308
      %s310 = sphi 0, %s308
      %s311 = sphi 0, %s310
      %s325 = sphi 0, %s311
      %s331 = sphi 0, %s333
      %s334 = sphi 0, %s331
      %s335 = sphi 0, %s334
      %s351 = sphi 0, %s335
    $region4: #{_lambda_.8} parent=1 // loop_header_branch
      %25 = sbr.rel (%p23) target = $region8
    $region5: #{_lambda_.8} parent=1 // loop_body
      %s27 = ssub.s32 %s22, 1
      %s28 = ssub.s32 %s22, 2
      %s29 = sadd.s32 %s22, 1
      %s30 = ssub.s32 %s22, %s29
      %p31 = scmp.eq.s32.totalorder %s30, 0
      %s33 = sadd.s32 %s32, 1
      %s34 = scalar_select %p31, %s32, %s33
      %p37 = pneg %p31
      %p38 = scmp.eq.s32.totalorder %s22, 1
      %p39 = por %p37, %p38
      %p40 = scmp.ne.s32.totalorder %s32, %s35
      %p41 = scmp.eq.s32.totalorder %s22, 0
      %p42 = por %p40, %p41
      %p43 = scmp.ne.s32.totalorder %s32, %s35
      %p44 = scmp.eq.s32.totalorder %s27, 1
      %p45 = por %p43, %p44
      %p46 = scmp.ne.s32.totalorder %s35, %s36
      %p47 = scmp.eq.s32.totalorder %s27, 0
      %p48 = por %p46, %p47
      %p49 = scmp.ne.s32.totalorder %s35, %s36
      %p50 = scmp.eq.s32.totalorder %s28, 1
      %p51 = por %p49, %p50
      %p53 = scmp.ne.s32.totalorder %s36, %s52
      %p54 = scmp.eq.s32.totalorder %s28, 0
      %p55 = por %p53, %p54
      %s57 = sadd.s32 %s56, 1
      %p60 = scmp.eq.s32.totalorder %s22, 1
      %p61 = scmp.ne.s32.totalorder %s56, %s58
      %p62 = scmp.eq.s32.totalorder %s22, 0
      %p63 = por %p61, %p62
      %p64 = scmp.ne.s32.totalorder %s56, %s58
      %p65 = scmp.eq.s32.totalorder %s27, 1
      %p66 = por %p64, %p65
      %p67 = scmp.ne.s32.totalorder %s58, %s59
      %p68 = scmp.eq.s32.totalorder %s27, 0
      %p69 = por %p67, %p68
      %p70 = scmp.ne.s32.totalorder %s58, %s59
      %p71 = scmp.eq.s32.totalorder %s28, 1
      %p72 = por %p70, %p71
      %p74 = scmp.ne.s32.totalorder %s59, %s73
      %p75 = scmp.eq.s32.totalorder %s28, 0
      %p76 = por %p74, %p75
      %s78 = sadd.s32 %s77, 1
      %p81 = scmp.eq.s32.totalorder %s22, 1
      %p82 = scmp.ne.s32.totalorder %s77, %s79
      %p83 = scmp.eq.s32.totalorder %s22, 0
      %p84 = por %p82, %p83
      %p85 = scmp.ne.s32.totalorder %s77, %s79
      %p86 = scmp.eq.s32.totalorder %s27, 1
      %p87 = por %p85, %p86
      %p88 = scmp.ne.s32.totalorder %s79, %s80
      %p89 = scmp.eq.s32.totalorder %s27, 0
      %p90 = por %p88, %p89
      %p91 = scmp.ne.s32.totalorder %s79, %s80
      %p92 = scmp.eq.s32.totalorder %s28, 1
      %p93 = por %p91, %p92
      %p95 = scmp.ne.s32.totalorder %s80, %s94
      %p96 = scmp.eq.s32.totalorder %s28, 0
      %p97 = por %p95, %p96
      %s99 = sadd.s32 %s98, 1
      %p102 = scmp.eq.s32.totalorder %s22, 1
      %p103 = scmp.ne.s32.totalorder %s98, %s100
      %p104 = scmp.eq.s32.totalorder %s22, 0
      %p105 = por %p103, %p104
      %p106 = scmp.ne.s32.totalorder %s98, %s100
      %p107 = scmp.eq.s32.totalorder %s27, 1
      %p108 = por %p106, %p107
      %p109 = scmp.ne.s32.totalorder %s100, %s101
      %p110 = scmp.eq.s32.totalorder %s27, 0
      %p111 = por %p109, %p110
      %p112 = scmp.ne.s32.totalorder %s100, %s101
      %p113 = scmp.eq.s32.totalorder %s28, 1
      %p114 = por %p112, %p113
      %p116 = scmp.ne.s32.totalorder %s101, %s115
      %p117 = scmp.eq.s32.totalorder %s28, 0
      %p118 = por %p116, %p117
      %s120 = sadd.s32 %s119, 1
      %p123 = scmp.eq.s32.totalorder %s22, 1
      %p124 = scmp.ne.s32.totalorder %s119, %s121
      %p125 = scmp.eq.s32.totalorder %s22, 0
      %p126 = por %p124, %p125
      %p127 = scmp.ne.s32.totalorder %s119, %s121
      %p128 = scmp.eq.s32.totalorder %s27, 1
      %p129 = por %p127, %p128
      %p130 = scmp.ne.s32.totalorder %s121, %s122
      %p131 = scmp.eq.s32.totalorder %s27, 0
      %p132 = por %p130, %p131
      %p133 = scmp.ne.s32.totalorder %s121, %s122
      %p134 = scmp.eq.s32.totalorder %s28, 1
      %p135 = por %p133, %p134
      %p137 = scmp.ne.s32.totalorder %s122, %s136
      %p138 = scmp.eq.s32.totalorder %s28, 0
      %p139 = por %p137, %p138
      %s141 = sadd.s32 %s140, 1
      %p144 = scmp.eq.s32.totalorder %s22, 1
      %p145 = scmp.ne.s32.totalorder %s140, %s142
      %p146 = scmp.eq.s32.totalorder %s22, 0
      %p147 = por %p145, %p146
      %p148 = scmp.ne.s32.totalorder %s140, %s142
      %p149 = scmp.eq.s32.totalorder %s27, 1
      %p150 = por %p148, %p149
      %p151 = scmp.ne.s32.totalorder %s142, %s143
      %p152 = scmp.eq.s32.totalorder %s27, 0
      %p153 = por %p151, %p152
      %p154 = scmp.ne.s32.totalorder %s142, %s143
      %p155 = scmp.eq.s32.totalorder %s28, 1
      %p156 = por %p154, %p155
      %p158 = scmp.ne.s32.totalorder %s143, %s157
      %p159 = scmp.eq.s32.totalorder %s28, 0
      %p160 = por %p158, %p159
      %s162 = sadd.s32 %s161, 1
      %p165 = scmp.eq.s32.totalorder %s22, 1
      %p166 = scmp.ne.s32.totalorder %s161, %s163
      %p167 = scmp.eq.s32.totalorder %s22, 0
      %p168 = por %p166, %p167
      %p169 = scmp.ne.s32.totalorder %s161, %s163
      %p170 = scmp.eq.s32.totalorder %s27, 1
      %p171 = por %p169, %p170
      %p172 = scmp.ne.s32.totalorder %s163, %s164
      %p173 = scmp.eq.s32.totalorder %s27, 0
      %p174 = por %p172, %p173
      %p175 = scmp.ne.s32.totalorder %s163, %s164
      %p176 = scmp.eq.s32.totalorder %s28, 1
      %p177 = por %p175, %p176
      %p179 = scmp.ne.s32.totalorder %s164, %s178
      %p180 = scmp.eq.s32.totalorder %s28, 0
      %p181 = por %p179, %p180
      %s183 = sadd.s32 %s182, 1
      %p186 = scmp.eq.s32.totalorder %s22, 1
      %p187 = scmp.ne.s32.totalorder %s182, %s184
      %p188 = scmp.eq.s32.totalorder %s22, 0
      %p189 = por %p187, %p188
      %p190 = scmp.ne.s32.totalorder %s182, %s184
      %p191 = scmp.eq.s32.totalorder %s27, 1
      %p192 = por %p190, %p191
      %p193 = scmp.ne.s32.totalorder %s184, %s185
      %p194 = scmp.eq.s32.totalorder %s27, 0
      %p195 = por %p193, %p194
      %p196 = scmp.ne.s32.totalorder %s184, %s185
      %p197 = scmp.eq.s32.totalorder %s28, 1
      %p198 = por %p196, %p197
      %p200 = scmp.ne.s32.totalorder %s185, %s199
      %p201 = scmp.eq.s32.totalorder %s28, 0
      %p202 = por %p200, %p201
      %s204 = sadd.s32 %s203, 1
      %p207 = scmp.eq.s32.totalorder %s22, 1
      %p208 = scmp.ne.s32.totalorder %s203, %s205
      %p209 = scmp.eq.s32.totalorder %s22, 0
      %p210 = por %p208, %p209
      %p211 = scmp.ne.s32.totalorder %s203, %s205
      %p212 = scmp.eq.s32.totalorder %s27, 1
      %p213 = por %p211, %p212
      %p214 = scmp.ne.s32.totalorder %s205, %s206
      %p215 = scmp.eq.s32.totalorder %s27, 0
      %p216 = por %p214, %p215
      %p217 = scmp.ne.s32.totalorder %s205, %s206
      %p218 = scmp.eq.s32.totalorder %s28, 1
      %p219 = por %p217, %p218
      %p221 = scmp.ne.s32.totalorder %s206, %s220
      %p222 = scmp.eq.s32.totalorder %s28, 0
      %p223 = por %p221, %p222
      %s225 = sadd.s32 %s224, 1
      %p228 = scmp.eq.s32.totalorder %s22, 1
      %p229 = scmp.ne.s32.totalorder %s224, %s226
      %p230 = scmp.eq.s32.totalorder %s22, 0
      %p231 = por %p229, %p230
      %p232 = scmp.ne.s32.totalorder %s224, %s226
      %p233 = scmp.eq.s32.totalorder %s27, 1
      %p234 = por %p232, %p233
      %p235 = scmp.ne.s32.totalorder %s226, %s227
      %p236 = scmp.eq.s32.totalorder %s27, 0
      %p237 = por %p235, %p236
      %p238 = scmp.ne.s32.totalorder %s226, %s227
      %p239 = scmp.eq.s32.totalorder %s28, 1
      %p240 = por %p238, %p239
      %p242 = scmp.ne.s32.totalorder %s227, %s241
      %p243 = scmp.eq.s32.totalorder %s28, 0
      %p244 = por %p242, %p243
      %s246 = sadd.s32 %s245, 1
      %p249 = scmp.eq.s32.totalorder %s22, 1
      %p250 = scmp.ne.s32.totalorder %s245, %s247
      %p251 = scmp.eq.s32.totalorder %s22, 0
      %p252 = por %p250, %p251
      %p253 = scmp.ne.s32.totalorder %s245, %s247
      %p254 = scmp.eq.s32.totalorder %s27, 1
      %p255 = por %p253, %p254
      %p256 = scmp.ne.s32.totalorder %s247, %s248
      %p257 = scmp.eq.s32.totalorder %s27, 0
      %p258 = por %p256, %p257
      %p259 = scmp.ne.s32.totalorder %s247, %s248
      %p260 = scmp.eq.s32.totalorder %s28, 1
      %p261 = por %p259, %p260
      %p263 = scmp.ne.s32.totalorder %s248, %s262
      %p264 = scmp.eq.s32.totalorder %s28, 0
      %p265 = por %p263, %p264
      %s267 = sadd.s32 %s266, 1
      %p270 = scmp.eq.s32.totalorder %s22, 1
      %p271 = scmp.ne.s32.totalorder %s266, %s268
      %p272 = scmp.eq.s32.totalorder %s22, 0
      %p273 = por %p271, %p272
      %p274 = scmp.ne.s32.totalorder %s266, %s268
      %p275 = scmp.eq.s32.totalorder %s27, 1
      %p276 = por %p274, %p275
      %p277 = scmp.ne.s32.totalorder %s268, %s269
      %p278 = scmp.eq.s32.totalorder %s27, 0
      %p279 = por %p277, %p278
      %p280 = scmp.ne.s32.totalorder %s268, %s269
      %p281 = scmp.eq.s32.totalorder %s28, 1
      %p282 = por %p280, %p281
      %p284 = scmp.ne.s32.totalorder %s269, %s283
      %p285 = scmp.eq.s32.totalorder %s28, 0
      %p286 = por %p284, %p285
      %s288 = sadd.s32 %s287, 1
      %p291 = scmp.eq.s32.totalorder %s22, 1
      %p292 = scmp.ne.s32.totalorder %s287, %s289
      %p293 = scmp.eq.s32.totalorder %s22, 0
      %p294 = por %p292, %p293
      %p295 = scmp.ne.s32.totalorder %s287, %s289
      %p296 = scmp.eq.s32.totalorder %s27, 1
      %p297 = por %p295, %p296
      %p298 = scmp.ne.s32.totalorder %s289, %s290
      %p299 = scmp.eq.s32.totalorder %s27, 0
      %p300 = por %p298, %p299
      %p301 = scmp.ne.s32.totalorder %s289, %s290
      %p302 = scmp.eq.s32.totalorder %s28, 1
      %p303 = por %p301, %p302
      %p305 = scmp.ne.s32.totalorder %s290, %s304
      %p306 = scmp.eq.s32.totalorder %s28, 0
      %p307 = por %p305, %p306
      %s309 = sadd.s32 %s308, 1
      %p312 = scmp.eq.s32.totalorder %s22, 1
      %p313 = scmp.ne.s32.totalorder %s308, %s310
      %p314 = scmp.eq.s32.totalorder %s22, 0
      %p315 = por %p313, %p314
      %p316 = scmp.ne.s32.totalorder %s308, %s310
      %p317 = scmp.eq.s32.totalorder %s27, 1
      %p318 = por %p316, %p317
      %p319 = scmp.ne.s32.totalorder %s310, %s311
      %p320 = scmp.eq.s32.totalorder %s27, 0
      %p321 = por %p319, %p320
      %p322 = scmp.ne.s32.totalorder %s310, %s311
      %p323 = scmp.eq.s32.totalorder %s28, 1
      %p324 = por %p322, %p323
      %p326 = scmp.ne.s32.totalorder %s311, %s325
      %p327 = scmp.eq.s32.totalorder %s28, 0
      %p328 = por %p326, %p327
      %s329 = ssub.s32 %s22, %s29
      %p330 = scmp.eq.s32.totalorder %s329, 0
      %s332 = sadd.s32 %s331, 1
      %s333 = scalar_select %p330, %s331, %s332
      %p336 = pneg %p330
      %p337 = scmp.eq.s32.totalorder %s22, 1
      %p338 = por %p336, %p337
      %p339 = scmp.ne.s32.totalorder %s331, %s334
      %p340 = scmp.eq.s32.totalorder %s22, 0
      %p341 = por %p339, %p340
      %p342 = scmp.ne.s32.totalorder %s331, %s334
      %p343 = scmp.eq.s32.totalorder %s27, 1
      %p344 = por %p342, %p343
      %p345 = scmp.ne.s32.totalorder %s334, %s335
      %p346 = scmp.eq.s32.totalorder %s27, 0
      %p347 = por %p345, %p346
      %p348 = scmp.ne.s32.totalorder %s334, %s335
      %p349 = scmp.eq.s32.totalorder %s28, 1
      %p350 = por %p348, %p349
      %p352 = scmp.ne.s32.totalorder %s335, %s351
      %p353 = scmp.eq.s32.totalorder %s28, 0
      %p354 = por %p352, %p353
      %p355 = scmp.le.s32.totalorder 1, %s22
      %p356 = scmp.lt.s32.totalorder %s22, 3
      %p357 = pnand %p355, %p356
      %p358 = pneg %p357
      // Predicated region
      $region9: #{_lambda_.8} parent=5 // pred_check
        _
      $region10: #{_lambda_.8} parent=5 // pred_check_branch
        %360 = sbr.rel (%p357) target = $region12
      $region11: #{_lambda_.8} parent=5 // pred_region
        %s361 = ssub.s32 %s22, 1
        // Predicated region
        $region13: #{_lambda_.8} parent=11 // pred_check
          %p362 = pneg %p69
        $region14: #{_lambda_.8} parent=11 // pred_check_branch
          %364 = sbr.rel (%p362) target = $region16
        $region15: #{_lambda_.8} parent=11 // pred_region
          _
        $region16: #{_lambda_.8} parent=11 // pred_fallthru
          _
        // Predicated region
        $region17: #{_lambda_.8} parent=11 // pred_check
          %p365 = pneg %p90
        $region18: #{_lambda_.8} parent=11 // pred_check_branch
          %367 = sbr.rel (%p365) target = $region20
        $region19: #{_lambda_.8} parent=11 // pred_region
          _
        $region20: #{_lambda_.8} parent=11 // pred_fallthru
          _
        // Predicated region
        $region21: #{_lambda_.8} parent=11 // pred_check
          %p368 = pneg %p111
        $region22: #{_lambda_.8} parent=11 // pred_check_branch
          %370 = sbr.rel (%p368) target = $region24
        $region23: #{_lambda_.8} parent=11 // pred_region
          _
        $region24: #{_lambda_.8} parent=11 // pred_fallthru
          _
        // Predicated region
        $region25: #{_lambda_.8} parent=11 // pred_check
          %p371 = pneg %p132
        $region26: #{_lambda_.8} parent=11 // pred_check_branch
          %373 = sbr.rel (%p371) target = $region28
        $region27: #{_lambda_.8} parent=11 // pred_region
          _
        $region28: #{_lambda_.8} parent=11 // pred_fallthru
          _
        // Predicated region
        $region29: #{_lambda_.8} parent=11 // pred_check
          %p374 = pneg %p153
        $region30: #{_lambda_.8} parent=11 // pred_check_branch
          %376 = sbr.rel (%p374) target = $region32
        $region31: #{_lambda_.8} parent=11 // pred_region
          %378 = vsyncadd [#allocation3], 0
          %s379 = sshll.u32 %s5, 4
          %s380 = int_to_ptr.hbm [resolvable:$true] %s379
          %s381 = sshll.u32 [#allocation2], 4
          %s382 = int_to_ptr.vmem [resolvable:$true] %s381
          %387 = dma.hbm_to_vmem [thread:$0]  %s380, 1024, %s382, [#allocation3], 128, 128, 8
        $region32: #{_lambda_.8} parent=11 // pred_fallthru
          _
        // Predicated region
        $region33: #{_lambda_.8} parent=11 // pred_check
          %p388 = pneg %p174
        $region34: #{_lambda_.8} parent=11 // pred_check_branch
          %390 = sbr.rel (%p388) target = $region36
        $region35: #{_lambda_.8} parent=11 // pred_region
          %392 = vsyncadd [#allocation5], 0
          %s393 = sshll.u32 %s6, 4
          %s394 = int_to_ptr.hbm [resolvable:$true] %s393
          %s395 = sshll.u32 [#allocation4], 4
          %s396 = int_to_ptr.vmem [resolvable:$true] %s395
          %401 = dma.hbm_to_vmem [thread:$0]  %s394, 1024, %s396, [#allocation5], 128, 128, 8
        $region36: #{_lambda_.8} parent=11 // pred_fallthru
          _
        // Predicated region
        $region37: #{_lambda_.8} parent=11 // pred_check
          %p402 = pneg %p195
        $region38: #{_lambda_.8} parent=11 // pred_check_branch
          %404 = sbr.rel (%p402) target = $region40
        $region39: #{_lambda_.8} parent=11 // pred_region
          _
        $region40: #{_lambda_.8} parent=11 // pred_fallthru
          _
        // Predicated region
        $region41: #{_lambda_.8} parent=11 // pred_check
          %p405 = pneg %p216
        $region42: #{_lambda_.8} parent=11 // pred_check_branch
          %407 = sbr.rel (%p405) target = $region44
        $region43: #{_lambda_.8} parent=11 // pred_region
          _
        $region44: #{_lambda_.8} parent=11 // pred_fallthru
          _
        // Predicated region
        $region45: #{_lambda_.8} parent=11 // pred_check
          %p408 = pneg %p237
        $region46: #{_lambda_.8} parent=11 // pred_check_branch
          %410 = sbr.rel (%p408) target = $region48
        $region47: #{_lambda_.8} parent=11 // pred_region
          _
        $region48: #{_lambda_.8} parent=11 // pred_fallthru
          _
        // Predicated region
        $region49: #{_lambda_.8} parent=11 // pred_check
          %p411 = pneg %p258
        $region50: #{_lambda_.8} parent=11 // pred_check_branch
          %413 = sbr.rel (%p411) target = $region52
        $region51: #{_lambda_.8} parent=11 // pred_region
          %415 = vsyncadd [#allocation5], 0
          %s416 = sshll.u32 %s10, 4
          %s417 = int_to_ptr.hbm [resolvable:$true] %s416
          %s418 = sshll.u32 [#allocation6], 4
          %s419 = int_to_ptr.vmem [resolvable:$true] %s418
          %424 = dma.hbm_to_vmem [thread:$0]  %s417, 1024, %s419, [#allocation5], 128, 128, 8
        $region52: #{_lambda_.8} parent=11 // pred_fallthru
          _
        // Predicated region
        $region53: #{_lambda_.8} parent=11 // pred_check
          %p425 = pneg %p279
        $region54: #{_lambda_.8} parent=11 // pred_check_branch
          %427 = sbr.rel (%p425) target = $region56
        $region55: #{_lambda_.8} parent=11 // pred_region
          _
        $region56: #{_lambda_.8} parent=11 // pred_fallthru
          _
        // Predicated region
        $region57: #{_lambda_.8} parent=11 // pred_check
          %p428 = pneg %p300
        $region58: #{_lambda_.8} parent=11 // pred_check_branch
          %430 = sbr.rel (%p428) target = $region60
        $region59: #{_lambda_.8} parent=11 // pred_region
          _
        $region60: #{_lambda_.8} parent=11 // pred_fallthru
          _
        // Predicated region
        $region61: #{_lambda_.8} parent=11 // pred_check
          %p431 = pneg %p321
        $region62: #{_lambda_.8} parent=11 // pred_check_branch
          %433 = sbr.rel (%p431) target = $region64
        $region63: #{_lambda_.8} parent=11 // pred_region
          _
        $region64: #{_lambda_.8} parent=11 // pred_fallthru
          _
      $region12: #{_lambda_.8} parent=5 // pred_fallthru
        _
      %p434 = scmp.lt.s32.totalorder %s22, 2
      // Predicated region
      $region65: #{_lambda_.8} parent=5 // pred_check
        %p435 = pneg %p434
      $region66: #{_lambda_.8} parent=5 // pred_check_branch
        %437 = sbr.rel (%p435) target = $region68
      $region67: #{_lambda_.8} parent=5 // pred_region
        // Predicated region
        $region69: #{_lambda_.8} parent=67 // pred_check
          %p438 = pneg %p42
        $region70: #{_lambda_.8} parent=67 // pred_check_branch
          %440 = sbr.rel (%p438) target = $region72
        $region71: #{_lambda_.8} parent=67 // pred_region
          %p441 = scmp.lt.s32.totalorder %s22, 1
          %s442 = scalar_select %p441, %s22, 1
          %s443 = smul.addr %s442, 2
          %s444 = smul.addr %s443, 8
          %s445 = scalar_lea.vmem %s0, %s444
        $region72: #{_lambda_.8} parent=67 // pred_fallthru
          _
      $region68: #{_lambda_.8} parent=5 // pred_fallthru
        _
      %p446 = scmp.le.s32.totalorder 1, %s22
      %p447 = scmp.lt.s32.totalorder %s22, 3
      %p448 = pnand %p446, %p447
      %p449 = pneg %p448
      // Predicated region
      $region73: #{_lambda_.8} parent=5 // pred_check
        _
      $region74: #{_lambda_.8} parent=5 // pred_check_branch
        %451 = sbr.rel (%p448) target = $region76
      $region75: #{_lambda_.8} parent=5 // pred_region
        %s452 = ssub.s32 %s22, 1
        // Predicated region
        $region77: #{_lambda_.8} parent=75 // pred_check
          %p453 = pneg %p153
        $region78: #{_lambda_.8} parent=75 // pred_check_branch
          %455 = sbr.rel (%p453) target = $region80
        $region79: #{_lambda_.8} parent=75 // pred_region
          %457 = dma.done [#allocation3], 1024
        $region80: #{_lambda_.8} parent=75 // pred_fallthru
          _
        // Predicated region
        $region81: #{_lambda_.8} parent=75 // pred_check
          %p458 = pneg %p174
        $region82: #{_lambda_.8} parent=75 // pred_check_branch
          %460 = sbr.rel (%p458) target = $region84
        $region83: #{_lambda_.8} parent=75 // pred_region
          %462 = dma.done [#allocation5], 1024
        $region84: #{_lambda_.8} parent=75 // pred_fallthru
          _
        // Predicated region
        $region85: #{_lambda_.8} parent=75 // pred_check
          %p463 = pneg %p258
        $region86: #{_lambda_.8} parent=75 // pred_check_branch
          %465 = sbr.rel (%p463) target = $region88
        $region87: #{_lambda_.8} parent=75 // pred_region
          %467 = dma.done [#allocation5], 1024
        $region88: #{_lambda_.8} parent=75 // pred_fallthru
          _
        %p468 = scmp.lt.s32.totalorder %s27, 1
        %s469 = scalar_select %p468, %s27, 1
        %s470 = smul.addr %s469, 2
        %s471 = smul.addr %s470, 8
        %s472 = scalar_lea.vmem %s0, %s471
        %p473 = pneg %p48
        %p474 = pneg %p45
        %p475 = pneg %p69
        %p476 = pneg %p66
        %p477 = pneg %p90
        %p478 = pneg %p87
        %p479 = pneg %p111
        %p480 = pneg %p108
        %p481 = pneg %p132
        %p482 = pneg %p129
        %p483 = pneg %p153
        %p484 = pneg %p150
        %p485 = pneg %p174
        %p486 = pneg %p171
        %p487 = pneg %p195
        %p488 = pneg %p192
        %p489 = pneg %p216
        %p490 = pneg %p213
        %p491 = pneg %p237
        %p492 = pneg %p234
        %p493 = pneg %p258
        %p494 = pneg %p255
        %p495 = pneg %p279
        %p496 = pneg %p276
        %p497 = pneg %p300
        %p498 = pneg %p297
        %p499 = pneg %p321
        %p500 = pneg %p318
        %p501 = pneg %p347
        %p502 = pneg %p344
        %p503 = scmp.lt.s32.totalorder %s27, 1
        %s504 = scalar_select %p503, %s27, 1
        %s505 = smul.addr %s504, 2
        %s506 = smul.addr %s505, 8
        %s507 = scalar_lea.vmem %s14, %s506
        %p508 = scmp.lt.s32.totalorder %s27, 1
        %s509 = scalar_select %p508, %s27, 1
        %s510 = smul.addr %s509, 2
        %s511 = smul.addr %s510, 8
        %s512 = scalar_lea.vmem %s0, %s511
        %p513 = scmp.lt.s32.totalorder %s27, 1
        %s514 = scalar_select %p513, %s27, 1
        %s515 = smul.addr %s514, 2
        %s516 = smul.addr %s515, 8
        %s517 = scalar_lea.vmem %s14, %s516
        %v518 = vld [vmem:[%s512] sm:$0xff]
        %v519 = vld [vmem:[%s512 + $0x8] sm:$0xff]
        %vm520 = vcmask 523264
        %v521 = vsel %vm520, %v518, 0.0
        %v522 = vsel %vm520, %v519, 0.0
        %v523 = vadd.f32 %v521, %v522
        %v524 = vrot.slane %v523, 4
        %v525 = vadd.f32 %v523, %v524
        %v526 = vrot.slane %v525, 2
        %v527 = vadd.f32 %v525, %v526
        %v528 = vrot.slane %v527, 1
        %v529 = vadd.f32 %v527, %v528
        %v530 = vrcp.pop 16.0
        %v531 = vmul.f32 16.0, %v530
        %v532 = vsub.f32 1.0, %v531
        %v533 = vmul.f32 %v530, %v532
        %v534 = vadd.f32 %v530, %v533
        %vm535 = vweird.f32 %v530
        %v536 = vsel %vm535, %v530, %v534
        %v537 = vmul.f32 %v529, %v536
        %v538 = vsub.f32 %v518, %v537
        %v539 = vsub.f32 %v519, %v537
        %v540 = vmul.f32 %v538, %v538
        %v541 = vmul.f32 %v539, %v539
        %v542 = vsel %vm520, %v540, 0.0
        %v543 = vsel %vm520, %v541, 0.0
        %v544 = vadd.f32 %v542, %v543
        %v545 = vrot.slane %v544, 4
        %v546 = vadd.f32 %v544, %v545
        %v547 = vrot.slane %v546, 2
        %v548 = vadd.f32 %v546, %v547
        %v549 = vrot.slane %v548, 1
        %v550 = vadd.f32 %v548, %v549
        %v551 = vmul.f32 %v550, %v536
        %v552 = vld [vmem:[%s1] sm:$0x1]
        %v553 = vadd.f32 %v551, 1e-05
        %v554 = vrsqrt.pop %v553
        %v555 = vmul.f32 %v554, %v553
        %v556 = vmul.f32 %v555, %v554
        %v557 = vmul.f32 0.5, %v556
        %v558 = vsub.f32 1.5, %v557
        %v559 = vmul.f32 %v554, %v558
        %vm560 = vweird.f32 %v553
        %vm561 = vweird.f32 %v554
        %vm562 = vmor %vm560, %vm561
        %v563 = vsel %vm562, %v554, %v559
        %v564 = vmul.f32 %v552, %v563
        %v566 = vperm.slane %v564, 0
        %v568 = vmul.f32 %v538, %v566
        %v569 = vmul.f32 %v539, %v566
        %v570 = vld [vmem:[%s2] sm:$0x1]
        %v572 = vperm.slane %v570, 0
        %v574 = vadd.f32 %v568, %v572
        %v575 = vadd.f32 %v569, %v572
        %v576 = vld [vmem:[%s3] sm:$0xff]
        %v577 = vld [vmem:[%s3 + $0x8] sm:$0xff]
        %v578 = vld [vmem:[%s3 + $0x10] sm:$0xff]
        %v579 = vld [vmem:[%s3 + $0x18] sm:$0xff]
        %v580 = vld [vmem:[%s3 + $0x20] sm:$0xff]
        %v581 = vld [vmem:[%s3 + $0x28] sm:$0xff]
        %v582 = vld [vmem:[%s3 + $0x30] sm:$0xff]
        %v583 = vld [vmem:[%s3 + $0x38] sm:$0xff]
        %v584 = vld [vmem:[%s3 + $0x40] sm:$0xff]
        %v585 = vld [vmem:[%s3 + $0x48] sm:$0xff]
        %v586 = vld [vmem:[%s3 + $0x50] sm:$0xff]
        %v587 = vld [vmem:[%s3 + $0x58] sm:$0xff]
        %v588 = vld [vmem:[%s3 + $0x60] sm:$0xff]
        %v589 = vld [vmem:[%s3 + $0x68] sm:$0xff]
        %v590 = vld [vmem:[%s3 + $0x70] sm:$0xff]
        %v591 = vld [vmem:[%s3 + $0x78] sm:$0xff]
        %v592 = vld [vmem:[%s4] sm:$0x3]
        %v594 = vperm.slane %v592, 0
        %v595 = vperm.slane %v592, 1
        %v599 = vsel %vm520, %v574, 0
        %v602 = vsel %vm520, %v575, 0
        %604 = vmatpush.msra.mxu0 0.0
        %605 = vmatpush.msra.mxu0 0.0
        %606 = vmatpush.msra.mxu0 0.0
        %607 = vmatpush.msra.mxu0 0.0
        %608 = vmatpush.msra.mxu0 0.0
        %609 = vmatpush.msra.mxu0 0.0
        %610 = vmatpush.msra.mxu0 0.0
        %611 = vmatpush.msra.mxu0 0.0
        %612 = vmatpush.msra.mxu0 %v590
        %613 = vmatpush.msra.mxu0 %v588
        %614 = vmatpush.msra.mxu0 %v586
        %615 = vmatpush.msra.mxu0 %v584
        %616 = vmatpush.msra.mxu0 %v582
        %617 = vmatpush.msra.mxu0 %v580
        %618 = vmatpush.msra.mxu0 %v578
        %619 = vmatpush.msra.mxu0 %v576
        %620 = vmatmul.f32.gmra.mxu0 %v599
        %v621 = vpop.f32.mrf.mxu0
        %v622 = vadd.f32 %v594, %v621
        %623 = vmatmul.f32.gmra.mxu0 %v602
        %v624 = vpop.f32.mrf.mxu0
        %v625 = vadd.f32 %v594, %v624
        %626 = vdwg.mxu0
        %627 = vmatpush.msra.mxu0 0.0
        %628 = vmatpush.msra.mxu0 0.0
        %629 = vmatpush.msra.mxu0 0.0
        %630 = vmatpush.msra.mxu0 0.0
        %631 = vmatpush.msra.mxu0 0.0
        %632 = vmatpush.msra.mxu0 0.0
        %633 = vmatpush.msra.mxu0 0.0
        %634 = vmatpush.msra.mxu0 0.0
        %635 = vmatpush.msra.mxu0 %v591
        %636 = vmatpush.msra.mxu0 %v589
        %637 = vmatpush.msra.mxu0 %v587
        %638 = vmatpush.msra.mxu0 %v585
        %639 = vmatpush.msra.mxu0 %v583
        %640 = vmatpush.msra.mxu0 %v581
        %641 = vmatpush.msra.mxu0 %v579
        %642 = vmatpush.msra.mxu0 %v577
        %643 = vmatmul.f32.gmra.mxu0 %v599
        %v644 = vpop.f32.mrf.mxu0
        %v645 = vadd.f32 %v595, %v644
        %646 = vmatmul.f32.gmra.mxu0 %v602
        %v647 = vpop.f32.mrf.mxu0
        %v648 = vadd.f32 %v595, %v647
        %649 = vdwg.mxu0
        %v650 = vlaneseq
        %v651 = vand.u32 %v650, 127
        %v652 = vld [vmem:[#allocation2] sm:$0xff]
        %v653 = vld [vmem:[#allocation2 + $0x8] sm:$0xff]
        %656 = vrot.lane.b32.xlu0 %v622, 64
        %v657 = vpop.permute.xlu0 %656
        %658 = vrot.lane.b32.xlu0 %v625, 64
        %v659 = vpop.permute.xlu0 %658
        %vm660 = vcmask 130048
        %v661 = vsel %vm660, %v622, 0
        %v663 = vsel %vm660, %v625, 0
        %v665 = vsel %vm660, %v657, 0
        %v667 = vsel %vm660, %v659, 0
        %669 = vmatpush.xpose.msra.mxu0 0.0
        %670 = vmatpush.xpose.msra.mxu0 0.0
        %671 = vmatpush.xpose.msra.mxu0 0.0
        %672 = vmatpush.xpose.msra.mxu0 0.0
        %673 = vmatpush.xpose.msra.mxu0 0.0
        %674 = vmatpush.xpose.msra.mxu0 0.0
        %675 = vmatpush.xpose.msra.mxu0 0.0
        %676 = vmatpush.xpose.msra.mxu0 0.0
        %677 = vmatpush.xpose.msra.mxu0 0.0
        %678 = vmatpush.xpose.msra.mxu0 0.0
        %679 = vmatpush.xpose.msra.mxu0 0.0
        %680 = vmatpush.xpose.msra.mxu0 0.0
        %681 = vmatpush.xpose.msra.mxu0 0.0
        %682 = vmatpush.xpose.msra.mxu0 0.0
        %683 = vmatpush.xpose.msra.mxu0 %v667
        %684 = vmatpush.xpose.msra.mxu0 %v665
        %685 = vmatmul.f32.gmra.mxu0 %v661
        %v686 = vpop.f32.mrf.mxu0
        %v687 = vadd.f32 %v652, %v686
        %688 = vmatmul.f32.gmra.mxu0 %v663
        %v689 = vpop.f32.mrf.mxu0
        %v690 = vadd.f32 %v653, %v689
        %691 = vdwg.mxu0
        %v692 = vsel %vm660, %v687, -inf
        %693 = vmax.xlane.f32.xlu0 %v692
        %v694 = vpop.xlane.xlu0 %693
        %v695 = vsel %vm660, %v690, -inf
        %696 = vmax.xlane.f32.xlu0 %v695
        %v697 = vpop.xlane.xlu0 %696
        %v698 = vsub.f32 %v687, %v694
        %v699 = vsub.f32 %v690, %v697
        %v700 = vmul.f32 %v698, 1.442695
        %v701 = vpow.pop %v700
        %v702 = vmul.f32 %v699, 1.442695
        %v703 = vpow.pop %v702
        %v704 = vsel %vm660, %v701, 0.0
        %705 = vadd.xlane.f32.xlu0 %v704
        %v706 = vpop.xlane.xlu0 %705
        %v707 = vsel %vm660, %v703, 0.0
        %708 = vadd.xlane.f32.xlu0 %v707
        %v709 = vpop.xlane.xlu0 %708
        %v710 = vrcp.pop %v706
        %v711 = vrcp.pop %v709
        %v712 = vmul.f32 %v701, %v710
        %v713 = vmul.f32 %v703, %v711
        %vm714 = vcmp.ge.s32.totalorder %v651, 0
        %vm715 = vcmp.lt.s32.totalorder %v651, 16
        %vm716 = vmand %vm714, %vm715
        %v717 = vsel %vm716, 1, 0
        %vm718 = vcmp.eq.s32.totalorder %v717, 1
        %v719 = vsel %vm718, %v645, 0.0
        %v720 = vsel %vm718, %v648, 0.0
        %s721 = scalar_lea.vmem [#allocation2], 16
        %v722 = vld [vmem:[%s721] sm:$0xff]
        %v723 = vld [vmem:[%s721 + $0x8] sm:$0xff]
        %724 = vrot.lane.b32.xlu0 %v622, 112
        %v725 = vpop.permute.xlu0 %724
        %726 = vrot.lane.b32.xlu0 %v625, 112
        %v727 = vpop.permute.xlu0 %726
        %728 = vrot.lane.b32.xlu0 %v622, 48
        %v729 = vpop.permute.xlu0 %728
        %730 = vrot.lane.b32.xlu0 %v625, 48
        %v731 = vpop.permute.xlu0 %730
        %v732 = vsel %vm660, %v725, 0
        %v734 = vsel %vm660, %v727, 0
        %v736 = vsel %vm660, %v729, 0
        %v738 = vsel %vm660, %v731, 0
        %740 = vmatpush.xpose.msra.mxu0 0.0
        %741 = vmatpush.xpose.msra.mxu0 0.0
        %742 = vmatpush.xpose.msra.mxu0 0.0
        %743 = vmatpush.xpose.msra.mxu0 0.0
        %744 = vmatpush.xpose.msra.mxu0 0.0
        %745 = vmatpush.xpose.msra.mxu0 0.0
        %746 = vmatpush.xpose.msra.mxu0 0.0
        %747 = vmatpush.xpose.msra.mxu0 0.0
        %748 = vmatpush.xpose.msra.mxu0 0.0
        %749 = vmatpush.xpose.msra.mxu0 0.0
        %750 = vmatpush.xpose.msra.mxu0 0.0
        %751 = vmatpush.xpose.msra.mxu0 0.0
        %752 = vmatpush.xpose.msra.mxu0 0.0
        %753 = vmatpush.xpose.msra.mxu0 0.0
        %754 = vmatpush.xpose.msra.mxu0 %v738
        %755 = vmatpush.xpose.msra.mxu0 %v736
        %756 = vmatmul.f32.gmra.mxu0 %v732
        %v757 = vpop.f32.mrf.mxu0
        %v758 = vadd.f32 %v722, %v757
        %759 = vmatmul.f32.gmra.mxu0 %v734
        %v760 = vpop.f32.mrf.mxu0
        %v761 = vadd.f32 %v723, %v760
        %762 = vdwg.mxu0
        %v763 = vsel %vm660, %v758, -inf
        %764 = vmax.xlane.f32.xlu0 %v763
        %v765 = vpop.xlane.xlu0 %764
        %v766 = vsel %vm660, %v761, -inf
        %767 = vmax.xlane.f32.xlu0 %v766
        %v768 = vpop.xlane.xlu0 %767
        %v769 = vsub.f32 %v758, %v765
        %v770 = vsub.f32 %v761, %v768
        %v771 = vmul.f32 %v769, 1.442695
        %v772 = vpow.pop %v771
        %v773 = vmul.f32 %v770, 1.442695
        %v774 = vpow.pop %v773
        %v775 = vsel %vm660, %v772, 0.0
        %776 = vadd.xlane.f32.xlu0 %v775
        %v777 = vpop.xlane.xlu0 %776
        %v778 = vsel %vm660, %v774, 0.0
        %779 = vadd.xlane.f32.xlu0 %v778
        %v780 = vpop.xlane.xlu0 %779
        %v781 = vrcp.pop %v777
        %v782 = vrcp.pop %v780
        %v783 = vmul.f32 %v772, %v781
        %v784 = vmul.f32 %v774, %v782
        %vm785 = vcmp.ge.s32.totalorder %v651, 16
        %vm786 = vcmp.lt.s32.totalorder %v651, 32
        %vm787 = vmand %vm785, %vm786
        %v788 = vsel %vm787, 1, 0
        %vm789 = vcmp.eq.s32.totalorder %v788, 1
        %v790 = vsel %vm789, %v645, 0.0
        %v791 = vsel %vm789, %v648, 0.0
        %v793 = vsel %vm660, %v783, 0
        %v796 = vsel %vm660, %v784, 0
        %798 = vmatpush.msra.mxu0 0.0
        %799 = vmatpush.msra.mxu0 0.0
        %800 = vmatpush.msra.mxu0 0.0
        %801 = vmatpush.msra.mxu0 0.0
        %802 = vmatpush.msra.mxu0 0.0
        %803 = vmatpush.msra.mxu0 0.0
        %804 = vmatpush.msra.mxu0 0.0
        %805 = vmatpush.msra.mxu0 0.0
        %806 = vmatpush.msra.mxu0 0.0
        %807 = vmatpush.msra.mxu0 0.0
        %808 = vmatpush.msra.mxu0 0.0
        %809 = vmatpush.msra.mxu0 0.0
        %810 = vmatpush.msra.mxu0 0.0
        %811 = vmatpush.msra.mxu0 0.0
        %812 = vmatpush.msra.mxu0 %v791
        %813 = vmatpush.msra.mxu0 %v790
        %814 = vmatmul.f32.gmra.mxu0 %v793
        %v815 = vpop.f32.mrf.mxu0
        %v816 = vadd.f32 0.0, %v815
        %817 = vmatmul.f32.gmra.mxu0 %v796
        %v818 = vpop.f32.mrf.mxu0
        %v819 = vadd.f32 0.0, %v818
        %820 = vdwg.mxu0
        %v822 = vsel %vm660, %v712, 0
        %v825 = vsel %vm660, %v713, 0
        %827 = vmatpush.msra.mxu0 0.0
        %828 = vmatpush.msra.mxu0 0.0
        %829 = vmatpush.msra.mxu0 0.0
        %830 = vmatpush.msra.mxu0 0.0
        %831 = vmatpush.msra.mxu0 0.0
        %832 = vmatpush.msra.mxu0 0.0
        %833 = vmatpush.msra.mxu0 0.0
        %834 = vmatpush.msra.mxu0 0.0
        %835 = vmatpush.msra.mxu0 0.0
        %836 = vmatpush.msra.mxu0 0.0
        %837 = vmatpush.msra.mxu0 0.0
        %838 = vmatpush.msra.mxu0 0.0
        %839 = vmatpush.msra.mxu0 0.0
        %840 = vmatpush.msra.mxu0 0.0
        %841 = vmatpush.msra.mxu0 %v720
        %842 = vmatpush.msra.mxu0 %v719
        %843 = vmatmul.f32.gmra.mxu0 %v822
        %v844 = vpop.f32.mrf.mxu0
        %v845 = vadd.f32 %v816, %v844
        %846 = vmatmul.f32.gmra.mxu0 %v825
        %v847 = vpop.f32.mrf.mxu0
        %v848 = vadd.f32 %v819, %v847
        %849 = vdwg.mxu0
        %s850 = scalar_lea.vmem [#allocation2], 32
        %v851 = vld [vmem:[%s850] sm:$0xff]
        %v852 = vld [vmem:[%s850 + $0x8] sm:$0xff]
        %853 = vrot.lane.b32.xlu0 %v622, 96
        %v854 = vpop.permute.xlu0 %853
        %855 = vrot.lane.b32.xlu0 %v625, 96
        %v856 = vpop.permute.xlu0 %855
        %857 = vrot.lane.b32.xlu0 %v622, 32
        %v858 = vpop.permute.xlu0 %857
        %859 = vrot.lane.b32.xlu0 %v625, 32
        %v860 = vpop.permute.xlu0 %859
        %v861 = vsel %vm660, %v854, 0
        %v863 = vsel %vm660, %v856, 0
        %v865 = vsel %vm660, %v858, 0
        %v867 = vsel %vm660, %v860, 0
        %869 = vmatpush.xpose.msra.mxu0 0.0
        %870 = vmatpush.xpose.msra.mxu0 0.0
        %871 = vmatpush.xpose.msra.mxu0 0.0
        %872 = vmatpush.xpose.msra.mxu0 0.0
        %873 = vmatpush.xpose.msra.mxu0 0.0
        %874 = vmatpush.xpose.msra.mxu0 0.0
        %875 = vmatpush.xpose.msra.mxu0 0.0
        %876 = vmatpush.xpose.msra.mxu0 0.0
        %877 = vmatpush.xpose.msra.mxu0 0.0
        %878 = vmatpush.xpose.msra.mxu0 0.0
        %879 = vmatpush.xpose.msra.mxu0 0.0
        %880 = vmatpush.xpose.msra.mxu0 0.0
        %881 = vmatpush.xpose.msra.mxu0 0.0
        %882 = vmatpush.xpose.msra.mxu0 0.0
        %883 = vmatpush.xpose.msra.mxu0 %v867
        %884 = vmatpush.xpose.msra.mxu0 %v865
        %885 = vmatmul.f32.gmra.mxu0 %v861
        %v886 = vpop.f32.mrf.mxu0
        %v887 = vadd.f32 %v851, %v886
        %888 = vmatmul.f32.gmra.mxu0 %v863
        %v889 = vpop.f32.mrf.mxu0
        %v890 = vadd.f32 %v852, %v889
        %891 = vdwg.mxu0
        %v892 = vsel %vm660, %v887, -inf
        %893 = vmax.xlane.f32.xlu0 %v892
        %v894 = vpop.xlane.xlu0 %893
        %v895 = vsel %vm660, %v890, -inf
        %896 = vmax.xlane.f32.xlu0 %v895
        %v897 = vpop.xlane.xlu0 %896
        %v898 = vsub.f32 %v887, %v894
        %v899 = vsub.f32 %v890, %v897
        %v900 = vmul.f32 %v898, 1.442695
        %v901 = vpow.pop %v900
        %v902 = vmul.f32 %v899, 1.442695
        %v903 = vpow.pop %v902
        %v904 = vsel %vm660, %v901, 0.0
        %905 = vadd.xlane.f32.xlu0 %v904
        %v906 = vpop.xlane.xlu0 %905
        %v907 = vsel %vm660, %v903, 0.0
        %908 = vadd.xlane.f32.xlu0 %v907
        %v909 = vpop.xlane.xlu0 %908
        %v910 = vrcp.pop %v906
        %v911 = vrcp.pop %v909
        %v912 = vmul.f32 %v901, %v910
        %v913 = vmul.f32 %v903, %v911
        %vm914 = vcmp.ge.s32.totalorder %v651, 32
        %vm915 = vcmp.lt.s32.totalorder %v651, 48
        %vm916 = vmand %vm914, %vm915
        %v917 = vsel %vm916, 1, 0
        %vm918 = vcmp.eq.s32.totalorder %v917, 1
        %v919 = vsel %vm918, %v645, 0.0
        %v920 = vsel %vm918, %v648, 0.0
        %v922 = vsel %vm660, %v912, 0
        %v925 = vsel %vm660, %v913, 0
        %927 = vmatpush.msra.mxu0 0.0
        %928 = vmatpush.msra.mxu0 0.0
        %929 = vmatpush.msra.mxu0 0.0
        %930 = vmatpush.msra.mxu0 0.0
        %931 = vmatpush.msra.mxu0 0.0
        %932 = vmatpush.msra.mxu0 0.0
        %933 = vmatpush.msra.mxu0 0.0
        %934 = vmatpush.msra.mxu0 0.0
        %935 = vmatpush.msra.mxu0 0.0
        %936 = vmatpush.msra.mxu0 0.0
        %937 = vmatpush.msra.mxu0 0.0
        %938 = vmatpush.msra.mxu0 0.0
        %939 = vmatpush.msra.mxu0 0.0
        %940 = vmatpush.msra.mxu0 0.0
        %941 = vmatpush.msra.mxu0 %v920
        %942 = vmatpush.msra.mxu0 %v919
        %943 = vmatmul.f32.gmra.mxu0 %v922
        %v944 = vpop.f32.mrf.mxu0
        %v945 = vadd.f32 0.0, %v944
        %946 = vmatmul.f32.gmra.mxu0 %v925
        %v947 = vpop.f32.mrf.mxu0
        %v948 = vadd.f32 0.0, %v947
        %949 = vdwg.mxu0
        %v950 = vadd.f32 %v845, %v945
        %v951 = vadd.f32 %v848, %v948
        %s952 = scalar_lea.vmem [#allocation2], 48
        %v953 = vld [vmem:[%s952] sm:$0xff]
        %v954 = vld [vmem:[%s952 + $0x8] sm:$0xff]
        %955 = vrot.lane.b32.xlu0 %v622, 80
        %v956 = vpop.permute.xlu0 %955
        %957 = vrot.lane.b32.xlu0 %v625, 80
        %v958 = vpop.permute.xlu0 %957
        %959 = vrot.lane.b32.xlu0 %v622, 16
        %v960 = vpop.permute.xlu0 %959
        %961 = vrot.lane.b32.xlu0 %v625, 16
        %v962 = vpop.permute.xlu0 %961
        %v963 = vsel %vm660, %v956, 0
        %v965 = vsel %vm660, %v958, 0
        %v967 = vsel %vm660, %v960, 0
        %v969 = vsel %vm660, %v962, 0
        %971 = vmatpush.xpose.msra.mxu0 0.0
        %972 = vmatpush.xpose.msra.mxu0 0.0
        %973 = vmatpush.xpose.msra.mxu0 0.0
        %974 = vmatpush.xpose.msra.mxu0 0.0
        %975 = vmatpush.xpose.msra.mxu0 0.0
        %976 = vmatpush.xpose.msra.mxu0 0.0
        %977 = vmatpush.xpose.msra.mxu0 0.0
        %978 = vmatpush.xpose.msra.mxu0 0.0
        %979 = vmatpush.xpose.msra.mxu0 0.0
        %980 = vmatpush.xpose.msra.mxu0 0.0
        %981 = vmatpush.xpose.msra.mxu0 0.0
        %982 = vmatpush.xpose.msra.mxu0 0.0
        %983 = vmatpush.xpose.msra.mxu0 0.0
        %984 = vmatpush.xpose.msra.mxu0 0.0
        %985 = vmatpush.xpose.msra.mxu0 %v969
        %986 = vmatpush.xpose.msra.mxu0 %v967
        %987 = vmatmul.f32.gmra.mxu0 %v963
        %v988 = vpop.f32.mrf.mxu0
        %v989 = vadd.f32 %v953, %v988
        %990 = vmatmul.f32.gmra.mxu0 %v965
        %v991 = vpop.f32.mrf.mxu0
        %v992 = vadd.f32 %v954, %v991
        %993 = vdwg.mxu0
        %v994 = vsel %vm660, %v989, -inf
        %995 = vmax.xlane.f32.xlu0 %v994
        %v996 = vpop.xlane.xlu0 %995
        %v997 = vsel %vm660, %v992, -inf
        %998 = vmax.xlane.f32.xlu0 %v997
        %v999 = vpop.xlane.xlu0 %998
        %v1000 = vsub.f32 %v989, %v996
        %v1001 = vsub.f32 %v992, %v999
        %v1002 = vmul.f32 %v1000, 1.442695
        %v1003 = vpow.pop %v1002
        %v1004 = vmul.f32 %v1001, 1.442695
        %v1005 = vpow.pop %v1004
        %v1006 = vsel %vm660, %v1003, 0.0
        %1007 = vadd.xlane.f32.xlu0 %v1006
        %v1008 = vpop.xlane.xlu0 %1007
        %v1009 = vsel %vm660, %v1005, 0.0
        %1010 = vadd.xlane.f32.xlu0 %v1009
        %v1011 = vpop.xlane.xlu0 %1010
        %v1012 = vrcp.pop %v1008
        %v1013 = vrcp.pop %v1011
        %v1014 = vmul.f32 %v1003, %v1012
        %v1015 = vmul.f32 %v1005, %v1013
        %vm1016 = vcmp.ge.s32.totalorder %v651, 48
        %vm1017 = vcmp.lt.s32.totalorder %v651, 64
        %vm1018 = vmand %vm1016, %vm1017
        %v1019 = vsel %vm1018, 1, 0
        %vm1020 = vcmp.eq.s32.totalorder %v1019, 1
        %v1021 = vsel %vm1020, %v645, 0.0
        %v1022 = vsel %vm1020, %v648, 0.0
        %v1024 = vsel %vm660, %v1014, 0
        %v1027 = vsel %vm660, %v1015, 0
        %1029 = vmatpush.msra.mxu0 0.0
        %1030 = vmatpush.msra.mxu0 0.0
        %1031 = vmatpush.msra.mxu0 0.0
        %1032 = vmatpush.msra.mxu0 0.0
        %1033 = vmatpush.msra.mxu0 0.0
        %1034 = vmatpush.msra.mxu0 0.0
        %1035 = vmatpush.msra.mxu0 0.0
        %1036 = vmatpush.msra.mxu0 0.0
        %1037 = vmatpush.msra.mxu0 0.0
        %1038 = vmatpush.msra.mxu0 0.0
        %1039 = vmatpush.msra.mxu0 0.0
        %1040 = vmatpush.msra.mxu0 0.0
        %1041 = vmatpush.msra.mxu0 0.0
        %1042 = vmatpush.msra.mxu0 0.0
        %1043 = vmatpush.msra.mxu0 %v1022
        %1044 = vmatpush.msra.mxu0 %v1021
        %1045 = vmatmul.f32.gmra.mxu0 %v1024
        %v1046 = vpop.f32.mrf.mxu0
        %v1047 = vadd.f32 0.0, %v1046
        %1048 = vmatmul.f32.gmra.mxu0 %v1027
        %v1049 = vpop.f32.mrf.mxu0
        %v1050 = vadd.f32 0.0, %v1049
        %1051 = vdwg.mxu0
        %v1052 = vadd.f32 %v950, %v1047
        %v1053 = vadd.f32 %v951, %v1050
        %v1054 = vld [vmem:[#allocation4] sm:$0xff]
        %v1055 = vld [vmem:[#allocation4 + $0x8] sm:$0xff]
        %v1056 = vld [vmem:[#allocation4 + $0x10] sm:$0xff]
        %v1057 = vld [vmem:[#allocation4 + $0x18] sm:$0xff]
        %v1058 = vld [vmem:[#allocation4 + $0x20] sm:$0xff]
        %v1059 = vld [vmem:[#allocation4 + $0x28] sm:$0xff]
        %v1060 = vld [vmem:[#allocation4 + $0x30] sm:$0xff]
        %v1061 = vld [vmem:[#allocation4 + $0x38] sm:$0xff]
        %v1062 = vld [vmem:[%s7] sm:$0x1]
        %v1064 = vperm.slane %v1062, 0
        %v1067 = vsel %vm520, %v1052, 0
        %v1070 = vsel %vm520, %v1053, 0
        %1072 = vmatpush.msra.mxu0 0.0
        %1073 = vmatpush.msra.mxu0 0.0
        %1074 = vmatpush.msra.mxu0 0.0
        %1075 = vmatpush.msra.mxu0 0.0
        %1076 = vmatpush.msra.mxu0 0.0
        %1077 = vmatpush.msra.mxu0 0.0
        %1078 = vmatpush.msra.mxu0 0.0
        %1079 = vmatpush.msra.mxu0 0.0
        %1080 = vmatpush.msra.mxu0 %v1061
        %1081 = vmatpush.msra.mxu0 %v1060
        %1082 = vmatpush.msra.mxu0 %v1059
        %1083 = vmatpush.msra.mxu0 %v1058
        %1084 = vmatpush.msra.mxu0 %v1057
        %1085 = vmatpush.msra.mxu0 %v1056
        %1086 = vmatpush.msra.mxu0 %v1055
        %1087 = vmatpush.msra.mxu0 %v1054
        %1088 = vmatmul.f32.gmra.mxu0 %v1067
        %v1089 = vpop.f32.mrf.mxu0
        %v1090 = vadd.f32 %v1064, %v1089
        %1091 = vmatmul.f32.gmra.mxu0 %v1070
        %v1092 = vpop.f32.mrf.mxu0
        %v1093 = vadd.f32 %v1064, %v1092
        %1094 = vdwg.mxu0
        %v1095 = vadd.f32 %v518, %v1090
        %v1096 = vadd.f32 %v519, %v1093
        %v1097 = vsel %vm520, %v1095, 0.0
        %v1098 = vsel %vm520, %v1096, 0.0
        %v1099 = vadd.f32 %v1097, %v1098
        %v1100 = vrot.slane %v1099, 4
        %v1101 = vadd.f32 %v1099, %v1100
        %v1102 = vrot.slane %v1101, 2
        %v1103 = vadd.f32 %v1101, %v1102
        %v1104 = vrot.slane %v1103, 1
        %v1105 = vadd.f32 %v1103, %v1104
        %v1106 = vmul.f32 %v1105, %v536
        %v1107 = vsub.f32 %v1095, %v1106
        %v1108 = vsub.f32 %v1096, %v1106
        %v1109 = vmul.f32 %v1107, %v1107
        %v1110 = vmul.f32 %v1108, %v1108
        %v1111 = vsel %vm520, %v1109, 0.0
        %v1112 = vsel %vm520, %v1110, 0.0
        %v1113 = vadd.f32 %v1111, %v1112
        %v1114 = vrot.slane %v1113, 4
        %v1115 = vadd.f32 %v1113, %v1114
        %v1116 = vrot.slane %v1115, 2
        %v1117 = vadd.f32 %v1115, %v1116
        %v1118 = vrot.slane %v1117, 1
        %v1119 = vadd.f32 %v1117, %v1118
        %v1120 = vmul.f32 %v1119, %v536
        %v1121 = vld [vmem:[%s8] sm:$0x1]
        %v1122 = vadd.f32 %v1120, 1e-05
        %v1123 = vrsqrt.pop %v1122
        %v1124 = vmul.f32 %v1123, %v1122
        %v1125 = vmul.f32 %v1124, %v1123
        %v1126 = vmul.f32 0.5, %v1125
        %v1127 = vsub.f32 1.5, %v1126
        %v1128 = vmul.f32 %v1123, %v1127
        %vm1129 = vweird.f32 %v1122
        %vm1130 = vweird.f32 %v1123
        %vm1131 = vmor %vm1129, %vm1130
        %v1132 = vsel %vm1131, %v1123, %v1128
        %v1133 = vmul.f32 %v1121, %v1132
        %v1135 = vperm.slane %v1133, 0
        %v1137 = vmul.f32 %v1107, %v1135
        %v1138 = vmul.f32 %v1108, %v1135
        %v1139 = vld [vmem:[%s9] sm:$0x1]
        %v1141 = vperm.slane %v1139, 0
        %v1143 = vadd.f32 %v1137, %v1141
        %v1144 = vadd.f32 %v1138, %v1141
        %v1145 = vld [vmem:[#allocation6] sm:$0xff]
        %v1146 = vld [vmem:[#allocation6 + $0x8] sm:$0xff]
        %v1147 = vld [vmem:[#allocation6 + $0x10] sm:$0xff]
        %v1148 = vld [vmem:[#allocation6 + $0x18] sm:$0xff]
        %v1149 = vld [vmem:[#allocation6 + $0x20] sm:$0xff]
        %v1150 = vld [vmem:[#allocation6 + $0x28] sm:$0xff]
        %v1151 = vld [vmem:[#allocation6 + $0x30] sm:$0xff]
        %v1152 = vld [vmem:[#allocation6 + $0x38] sm:$0xff]
        %v1153 = vld [vmem:[%s11] sm:$0x1]
        %v1155 = vperm.slane %v1153, 0
        %v1158 = vsel %vm520, %v1143, 0
        %v1161 = vsel %vm520, %v1144, 0
        %1163 = vmatpush.msra.mxu0 0.0
        %1164 = vmatpush.msra.mxu0 0.0
        %1165 = vmatpush.msra.mxu0 0.0
        %1166 = vmatpush.msra.mxu0 0.0
        %1167 = vmatpush.msra.mxu0 0.0
        %1168 = vmatpush.msra.mxu0 0.0
        %1169 = vmatpush.msra.mxu0 0.0
        %1170 = vmatpush.msra.mxu0 0.0
        %1171 = vmatpush.msra.mxu0 %v1152
        %1172 = vmatpush.msra.mxu0 %v1151
        %1173 = vmatpush.msra.mxu0 %v1150
        %1174 = vmatpush.msra.mxu0 %v1149
        %1175 = vmatpush.msra.mxu0 %v1148
        %1176 = vmatpush.msra.mxu0 %v1147
        %1177 = vmatpush.msra.mxu0 %v1146
        %1178 = vmatpush.msra.mxu0 %v1145
        %1179 = vmatmul.f32.gmra.mxu0 %v1158
        %v1180 = vpop.f32.mrf.mxu0
        %v1181 = vadd.f32 %v1155, %v1180
        %1182 = vmatmul.f32.gmra.mxu0 %v1161
        %v1183 = vpop.f32.mrf.mxu0
        %v1184 = vadd.f32 %v1155, %v1183
        %1185 = vdwg.mxu0
        %v1186 = vmul.f32 %v1181, %v1181
        %v1187 = vmul.f32 %v1184, %v1184
        %v1188 = vmul.f32 %v1181, %v1186
        %v1189 = vmul.f32 %v1184, %v1187
        %v1190 = vmul.f32 %v1188, 0.044715
        %v1191 = vmul.f32 %v1189, 0.044715
        %v1192 = vadd.f32 %v1181, %v1190
        %v1193 = vadd.f32 %v1184, %v1191
        %v1194 = vmul.f32 %v1192, 0.7978846
        %v1195 = vmul.f32 %v1193, 0.7978846
        %v1196 = vtanh.pop %v1194
        %v1197 = vtanh.pop %v1195
        %v1198 = vadd.f32 %v1196, 1.0
        %v1199 = vadd.f32 %v1197, 1.0
        %v1200 = vmul.f32 %v1198, 0.5
        %v1201 = vmul.f32 %v1199, 0.5
        %v1202 = vmul.f32 %v1181, %v1200
        %v1203 = vmul.f32 %v1184, %v1201
        %v1204 = vld [vmem:[%s12] sm:$0xff]
        %v1205 = vld [vmem:[%s12 + $0x8] sm:$0xff]
        %v1206 = vld [vmem:[%s12 + $0x10] sm:$0xff]
        %v1207 = vld [vmem:[%s12 + $0x18] sm:$0xff]
        %v1208 = vld [vmem:[%s12 + $0x20] sm:$0xff]
        %v1209 = vld [vmem:[%s12 + $0x28] sm:$0xff]
        %v1210 = vld [vmem:[%s12 + $0x30] sm:$0xff]
        %v1211 = vld [vmem:[%s12 + $0x38] sm:$0xff]
        %v1212 = vld [vmem:[%s12 + $0x40] sm:$0xff]
        %v1213 = vld [vmem:[%s12 + $0x48] sm:$0xff]
        %v1214 = vld [vmem:[%s12 + $0x50] sm:$0xff]
        %v1215 = vld [vmem:[%s12 + $0x58] sm:$0xff]
        %v1216 = vld [vmem:[%s12 + $0x60] sm:$0xff]
        %v1217 = vld [vmem:[%s12 + $0x68] sm:$0xff]
        %v1218 = vld [vmem:[%s12 + $0x70] sm:$0xff]
        %v1219 = vld [vmem:[%s12 + $0x78] sm:$0xff]
        %v1220 = vld [vmem:[%s13] sm:$0x1]
        %v1222 = vperm.slane %v1220, 0
        %1224 = vmatpush.msra.mxu0 %v1219
        %1225 = vmatpush.msra.mxu0 %v1218
        %1226 = vmatpush.msra.mxu0 %v1217
        %1227 = vmatpush.msra.mxu0 %v1216
        %1228 = vmatpush.msra.mxu0 %v1215
        %1229 = vmatpush.msra.mxu0 %v1214
        %1230 = vmatpush.msra.mxu0 %v1213
        %1231 = vmatpush.msra.mxu0 %v1212
        %1232 = vmatpush.msra.mxu0 %v1211
        %1233 = vmatpush.msra.mxu0 %v1210
        %1234 = vmatpush.msra.mxu0 %v1209
        %1235 = vmatpush.msra.mxu0 %v1208
        %1236 = vmatpush.msra.mxu0 %v1207
        %1237 = vmatpush.msra.mxu0 %v1206
        %1238 = vmatpush.msra.mxu0 %v1205
        %1239 = vmatpush.msra.mxu0 %v1204
        %1240 = vmatmul.f32.gmra.mxu0 %v1202
        %v1241 = vpop.f32.mrf.mxu0
        %v1242 = vadd.f32 %v1222, %v1241
        %1243 = vmatmul.f32.gmra.mxu0 %v1203
        %v1244 = vpop.f32.mrf.mxu0
        %v1245 = vadd.f32 %v1222, %v1244
        %1246 = vdwg.mxu0
        %v1247 = vadd.f32 %v1095, %v1242
        %v1248 = vadd.f32 %v1096, %v1245
        %1249 = vst.msk [vmem:[%s517] sm:$0xff] %vm520, %v1247
        %1250 = vst.msk [vmem:[%s517 + $0x8] sm:$0xff] %vm520, %v1248
        %p1251 = scmp.lt.s32.totalorder %s27, 1
        %s1252 = scalar_select %p1251, %s27, 1
        %s1253 = smul.addr %s1252, 2
        %s1254 = smul.addr %s1253, 8
        %s1255 = scalar_lea.vmem %s14, %s1254
        // Predicated region
        $region89: #{_lambda_.8} parent=75 // pred_check
          %p1256 = pneg %p344
        $region90: #{_lambda_.8} parent=75 // pred_check_branch
          %1258 = sbr.rel (%p1256) target = $region92
        $region91: #{_lambda_.8} parent=75 // pred_region
          _
        $region92: #{_lambda_.8} parent=75 // pred_fallthru
          _
      $region76: #{_lambda_.8} parent=5 // pred_fallthru
        _
      %p1259 = scmp.le.s32.totalorder 2, %s22
      // Predicated region
      $region93: #{_lambda_.8} parent=5 // pred_check
        %p1260 = pneg %p1259
      $region94: #{_lambda_.8} parent=5 // pred_check_branch
        %1262 = sbr.rel (%p1260) target = $region96
      $region95: #{_lambda_.8} parent=5 // pred_region
        %s1263 = ssub.s32 %s22, 2
        // Predicated region
        $region97: #{_lambda_.8} parent=95 // pred_check
          %p1264 = pneg %p350
        $region98: #{_lambda_.8} parent=95 // pred_check_branch
          %1266 = sbr.rel (%p1264) target = $region100
        $region99: #{_lambda_.8} parent=95 // pred_region
          %p1267 = scmp.lt.s32.totalorder %s28, 1
          %s1268 = scalar_select %p1267, %s28, 1
          %s1269 = smul.addr %s1268, 2
          %s1270 = smul.addr %s1269, 8
          %s1271 = scalar_lea.vmem %s14, %s1270
        $region100: #{_lambda_.8} parent=95 // pred_fallthru
          _
      $region96: #{_lambda_.8} parent=5 // pred_fallthru
        _
    $region6: #{_lambda_.8} parent=1 // loop_footer
      %s26 = sadd.s32 1, %s22
    $region7: #{_lambda_.8} parent=1 // loop_footer_branch
      %21 = sbr.rel target = $region3
    $region8: #{_lambda_.8} parent=1 // loop_exit
      _
    %1272 = vsyncpa [#allocation3], 1
    %s1273 = scalar_lea.sflag [#allocation3], 1
    %1274 = vsyncpa %s1273, 1
    %1275 = vsyncpa [#allocation5], 1

// kernel: _lambda_.9
$region0: #{_lambda_.9}
  #allocation0 [shape = 'u32[]', space=smem, size = 0x4, offset = 0x4, fixed_abs, tag = 'smem constant byte address 0x4 - core index']
  #allocation1 [shape = 'u32[72,128]{1,0:T(1,128)}', space=vmem, size = 0x9000, scoped, tag = 'internal scratch']
  %s0 = inlined_call_operand.vmem [shape: f32[2,16,64], index: 0, kind: input, shape index: {}]
  %s1 = inlined_call_operand.vmem [shape: f32[1,64], index: 1, kind: input, shape index: {}, may-alias: {1,8}]
  %s2 = inlined_call_operand.vmem [shape: f32[1,64], index: 2, kind: input, shape index: {}, may-alias: {2,7,9,13}]
  %s3 = inlined_call_operand.vmem [shape: f32[64,192], index: 3, kind: input, shape index: {}]
  %s4 = inlined_call_operand.vmem [shape: f32[1,192], index: 4, kind: input, shape index: {}]
  %s5 = inlined_call_operand.hbm [shape: f32[4,16,16], index: 5, kind: input, shape index: {}]
  %s6 = inlined_call_operand.hbm [shape: f32[64,64], index: 6, kind: input, shape index: {}]
  %s7 = inlined_call_operand.vmem [shape: f32[1,64], index: 7, kind: input, shape index: {}, may-alias: {2,7,9,13}]
  %s8 = inlined_call_operand.vmem [shape: f32[1,64], index: 8, kind: input, shape index: {}, may-alias: {1,8}]
  %s9 = inlined_call_operand.vmem [shape: f32[1,64], index: 9, kind: input, shape index: {}, may-alias: {2,7,9,13}]
  %s10 = inlined_call_operand.hbm [shape: f32[64,128], index: 10, kind: input, shape index: {}]
  %s11 = inlined_call_operand.vmem [shape: f32[1,128], index: 11, kind: input, shape index: {}]
  %s12 = inlined_call_operand.vmem [shape: f32[128,64], index: 12, kind: input, shape index: {}]
  %s13 = inlined_call_operand.vmem [shape: f32[1,64], index: 13, kind: input, shape index: {}, may-alias: {2,7,9,13}]
  %s14 = inlined_call_operand.hbm [shape: f32[2,16,64], index: 14, kind: output, shape index: {}]
  %s15 = sld [smem:[#allocation0]]
  $region101: #{_lambda_.9} parent=0
    _
  %s17 = ssub.s32 1, %s15
  %s18 = scalar_select 0, %s17, %s15
  $region1: #{_lambda_.9} parent=0
    #allocation2 [shape = 'u8[32768]{0}', space=vmem, size = 0x8000, scoped, tag = 'input window, operand 5, single buffered']
    #allocation3 [shape = 's32[2]{0}', space=sflag, size = 0x8, scoped, tag = 'scoped memory for _lambda_.9']
    #allocation4 [shape = 's32[2]{0}', space=sflag, size = 0x8, scoped, tag = 'scoped memory for _lambda_.9']
    #allocation5 [shape = 'u8[32768]{0}', space=vmem, size = 0x8000, scoped, tag = 'input window, operand 6, single buffered']
    #allocation6 [shape = 's32[1]{0}', space=sflag, size = 0x4, scoped, tag = 'scoped memory for _lambda_.9']
    #allocation7 [shape = 'u8[32768]{0}', space=vmem, size = 0x8000, scoped, tag = 'input window, operand 10, single buffered']
    #allocation8 [shape = 'u8[16384]{0}', space=vmem, size = 0x4000, scoped, tag = 'output window, operand 0']
    %19 = vsyncpa [#allocation3], 0
    %20 = vsyncpa [#allocation6], 0
    %21 = vsyncpa [#allocation4], 0
    %s22 = scalar_lea.sflag [#allocation4], 1
    %23 = vsyncpa %s22, 0
    loop: start=0, step=1, limit=4
    $region2: #{_lambda_.9} parent=1 // loop_pre_header
      _
    $region3: #{_lambda_.9} parent=1 // loop_header
      %s25 = sphi 0, %s29
      %p26 = scmp.ge.s32.totalorder %s25, 4
      %s35 = sphi 0, %s37
      %s38 = sphi 0, %s35
      %s39 = sphi 0, %s38
      %s55 = sphi 0, %s39
      %s59 = sphi 0, %s59
      %s61 = sphi 0, %s59
      %s62 = sphi 0, %s61
      %s76 = sphi 0, %s62
      %s80 = sphi 0, %s80
      %s82 = sphi 0, %s80
      %s83 = sphi 0, %s82
      %s97 = sphi 0, %s83
      %s101 = sphi 0, %s101
      %s103 = sphi 0, %s101
      %s104 = sphi 0, %s103
      %s118 = sphi 0, %s104
      %s122 = sphi 0, %s122
      %s124 = sphi 0, %s122
      %s125 = sphi 0, %s124
      %s139 = sphi 0, %s125
      %s143 = sphi 0, %s143
      %s145 = sphi 0, %s143
      %s146 = sphi 0, %s145
      %s160 = sphi 0, %s146
      %s164 = sphi 0, %s164
      %s166 = sphi 0, %s164
      %s167 = sphi 0, %s166
      %s181 = sphi 0, %s167
      %s185 = sphi 0, %s185
      %s187 = sphi 0, %s185
      %s188 = sphi 0, %s187
      %s202 = sphi 0, %s188
      %s206 = sphi 0, %s206
      %s208 = sphi 0, %s206
      %s209 = sphi 0, %s208
      %s223 = sphi 0, %s209
      %s227 = sphi 0, %s227
      %s229 = sphi 0, %s227
      %s230 = sphi 0, %s229
      %s244 = sphi 0, %s230
      %s248 = sphi 0, %s248
      %s250 = sphi 0, %s248
      %s251 = sphi 0, %s250
      %s265 = sphi 0, %s251
      %s269 = sphi 0, %s269
      %s271 = sphi 0, %s269
      %s272 = sphi 0, %s271
      %s286 = sphi 0, %s272
      %s290 = sphi 0, %s290
      %s292 = sphi 0, %s290
      %s293 = sphi 0, %s292
      %s307 = sphi 0, %s293
      %s311 = sphi 0, %s311
      %s313 = sphi 0, %s311
      %s314 = sphi 0, %s313
      %s328 = sphi 0, %s314
      %s334 = sphi 0, %s336
      %s337 = sphi 0, %s334
      %s338 = sphi 0, %s337
      %s354 = sphi 0, %s338
    $region4: #{_lambda_.9} parent=1 // loop_header_branch
      %28 = sbr.rel (%p26) target = $region8
    $region5: #{_lambda_.9} parent=1 // loop_body
      %s30 = ssub.s32 %s25, 1
      %s31 = ssub.s32 %s25, 2
      %s32 = sadd.s32 %s25, 1
      %s33 = ssub.s32 %s25, %s32
      %p34 = scmp.eq.s32.totalorder %s33, 0
      %s36 = sadd.s32 %s35, 1
      %s37 = scalar_select %p34, %s35, %s36
      %p40 = pneg %p34
      %p41 = scmp.eq.s32.totalorder %s25, 1
      %p42 = por %p40, %p41
      %p43 = scmp.ne.s32.totalorder %s35, %s38
      %p44 = scmp.eq.s32.totalorder %s25, 0
      %p45 = por %p43, %p44
      %p46 = scmp.ne.s32.totalorder %s35, %s38
      %p47 = scmp.eq.s32.totalorder %s30, 1
      %p48 = por %p46, %p47
      %p49 = scmp.ne.s32.totalorder %s38, %s39
      %p50 = scmp.eq.s32.totalorder %s30, 0
      %p51 = por %p49, %p50
      %p52 = scmp.ne.s32.totalorder %s38, %s39
      %p53 = scmp.eq.s32.totalorder %s31, 1
      %p54 = por %p52, %p53
      %p56 = scmp.ne.s32.totalorder %s39, %s55
      %p57 = scmp.eq.s32.totalorder %s31, 0
      %p58 = por %p56, %p57
      %s60 = sadd.s32 %s59, 1
      %p63 = scmp.eq.s32.totalorder %s25, 1
      %p64 = scmp.ne.s32.totalorder %s59, %s61
      %p65 = scmp.eq.s32.totalorder %s25, 0
      %p66 = por %p64, %p65
      %p67 = scmp.ne.s32.totalorder %s59, %s61
      %p68 = scmp.eq.s32.totalorder %s30, 1
      %p69 = por %p67, %p68
      %p70 = scmp.ne.s32.totalorder %s61, %s62
      %p71 = scmp.eq.s32.totalorder %s30, 0
      %p72 = por %p70, %p71
      %p73 = scmp.ne.s32.totalorder %s61, %s62
      %p74 = scmp.eq.s32.totalorder %s31, 1
      %p75 = por %p73, %p74
      %p77 = scmp.ne.s32.totalorder %s62, %s76
      %p78 = scmp.eq.s32.totalorder %s31, 0
      %p79 = por %p77, %p78
      %s81 = sadd.s32 %s80, 1
      %p84 = scmp.eq.s32.totalorder %s25, 1
      %p85 = scmp.ne.s32.totalorder %s80, %s82
      %p86 = scmp.eq.s32.totalorder %s25, 0
      %p87 = por %p85, %p86
      %p88 = scmp.ne.s32.totalorder %s80, %s82
      %p89 = scmp.eq.s32.totalorder %s30, 1
      %p90 = por %p88, %p89
      %p91 = scmp.ne.s32.totalorder %s82, %s83
      %p92 = scmp.eq.s32.totalorder %s30, 0
      %p93 = por %p91, %p92
      %p94 = scmp.ne.s32.totalorder %s82, %s83
      %p95 = scmp.eq.s32.totalorder %s31, 1
      %p96 = por %p94, %p95
      %p98 = scmp.ne.s32.totalorder %s83, %s97
      %p99 = scmp.eq.s32.totalorder %s31, 0
      %p100 = por %p98, %p99
      %s102 = sadd.s32 %s101, 1
      %p105 = scmp.eq.s32.totalorder %s25, 1
      %p106 = scmp.ne.s32.totalorder %s101, %s103
      %p107 = scmp.eq.s32.totalorder %s25, 0
      %p108 = por %p106, %p107
      %p109 = scmp.ne.s32.totalorder %s101, %s103
      %p110 = scmp.eq.s32.totalorder %s30, 1
      %p111 = por %p109, %p110
      %p112 = scmp.ne.s32.totalorder %s103, %s104
      %p113 = scmp.eq.s32.totalorder %s30, 0
      %p114 = por %p112, %p113
      %p115 = scmp.ne.s32.totalorder %s103, %s104
      %p116 = scmp.eq.s32.totalorder %s31, 1
      %p117 = por %p115, %p116
      %p119 = scmp.ne.s32.totalorder %s104, %s118
      %p120 = scmp.eq.s32.totalorder %s31, 0
      %p121 = por %p119, %p120
      %s123 = sadd.s32 %s122, 1
      %p126 = scmp.eq.s32.totalorder %s25, 1
      %p127 = scmp.ne.s32.totalorder %s122, %s124
      %p128 = scmp.eq.s32.totalorder %s25, 0
      %p129 = por %p127, %p128
      %p130 = scmp.ne.s32.totalorder %s122, %s124
      %p131 = scmp.eq.s32.totalorder %s30, 1
      %p132 = por %p130, %p131
      %p133 = scmp.ne.s32.totalorder %s124, %s125
      %p134 = scmp.eq.s32.totalorder %s30, 0
      %p135 = por %p133, %p134
      %p136 = scmp.ne.s32.totalorder %s124, %s125
      %p137 = scmp.eq.s32.totalorder %s31, 1
      %p138 = por %p136, %p137
      %p140 = scmp.ne.s32.totalorder %s125, %s139
      %p141 = scmp.eq.s32.totalorder %s31, 0
      %p142 = por %p140, %p141
      %s144 = sadd.s32 %s143, 1
      %p147 = scmp.eq.s32.totalorder %s25, 1
      %p148 = scmp.ne.s32.totalorder %s143, %s145
      %p149 = scmp.eq.s32.totalorder %s25, 0
      %p150 = por %p148, %p149
      %p151 = scmp.ne.s32.totalorder %s143, %s145
      %p152 = scmp.eq.s32.totalorder %s30, 1
      %p153 = por %p151, %p152
      %p154 = scmp.ne.s32.totalorder %s145, %s146
      %p155 = scmp.eq.s32.totalorder %s30, 0
      %p156 = por %p154, %p155
      %p157 = scmp.ne.s32.totalorder %s145, %s146
      %p158 = scmp.eq.s32.totalorder %s31, 1
      %p159 = por %p157, %p158
      %p161 = scmp.ne.s32.totalorder %s146, %s160
      %p162 = scmp.eq.s32.totalorder %s31, 0
      %p163 = por %p161, %p162
      %s165 = sadd.s32 %s164, 1
      %p168 = scmp.eq.s32.totalorder %s25, 1
      %p169 = scmp.ne.s32.totalorder %s164, %s166
      %p170 = scmp.eq.s32.totalorder %s25, 0
      %p171 = por %p169, %p170
      %p172 = scmp.ne.s32.totalorder %s164, %s166
      %p173 = scmp.eq.s32.totalorder %s30, 1
      %p174 = por %p172, %p173
      %p175 = scmp.ne.s32.totalorder %s166, %s167
      %p176 = scmp.eq.s32.totalorder %s30, 0
      %p177 = por %p175, %p176
      %p178 = scmp.ne.s32.totalorder %s166, %s167
      %p179 = scmp.eq.s32.totalorder %s31, 1
      %p180 = por %p178, %p179
      %p182 = scmp.ne.s32.totalorder %s167, %s181
      %p183 = scmp.eq.s32.totalorder %s31, 0
      %p184 = por %p182, %p183
      %s186 = sadd.s32 %s185, 1
      %p189 = scmp.eq.s32.totalorder %s25, 1
      %p190 = scmp.ne.s32.totalorder %s185, %s187
      %p191 = scmp.eq.s32.totalorder %s25, 0
      %p192 = por %p190, %p191
      %p193 = scmp.ne.s32.totalorder %s185, %s187
      %p194 = scmp.eq.s32.totalorder %s30, 1
      %p195 = por %p193, %p194
      %p196 = scmp.ne.s32.totalorder %s187, %s188
      %p197 = scmp.eq.s32.totalorder %s30, 0
      %p198 = por %p196, %p197
      %p199 = scmp.ne.s32.totalorder %s187, %s188
      %p200 = scmp.eq.s32.totalorder %s31, 1
      %p201 = por %p199, %p200
      %p203 = scmp.ne.s32.totalorder %s188, %s202
      %p204 = scmp.eq.s32.totalorder %s31, 0
      %p205 = por %p203, %p204
      %s207 = sadd.s32 %s206, 1
      %p210 = scmp.eq.s32.totalorder %s25, 1
      %p211 = scmp.ne.s32.totalorder %s206, %s208
      %p212 = scmp.eq.s32.totalorder %s25, 0
      %p213 = por %p211, %p212
      %p214 = scmp.ne.s32.totalorder %s206, %s208
      %p215 = scmp.eq.s32.totalorder %s30, 1
      %p216 = por %p214, %p215
      %p217 = scmp.ne.s32.totalorder %s208, %s209
      %p218 = scmp.eq.s32.totalorder %s30, 0
      %p219 = por %p217, %p218
      %p220 = scmp.ne.s32.totalorder %s208, %s209
      %p221 = scmp.eq.s32.totalorder %s31, 1
      %p222 = por %p220, %p221
      %p224 = scmp.ne.s32.totalorder %s209, %s223
      %p225 = scmp.eq.s32.totalorder %s31, 0
      %p226 = por %p224, %p225
      %s228 = sadd.s32 %s227, 1
      %p231 = scmp.eq.s32.totalorder %s25, 1
      %p232 = scmp.ne.s32.totalorder %s227, %s229
      %p233 = scmp.eq.s32.totalorder %s25, 0
      %p234 = por %p232, %p233
      %p235 = scmp.ne.s32.totalorder %s227, %s229
      %p236 = scmp.eq.s32.totalorder %s30, 1
      %p237 = por %p235, %p236
      %p238 = scmp.ne.s32.totalorder %s229, %s230
      %p239 = scmp.eq.s32.totalorder %s30, 0
      %p240 = por %p238, %p239
      %p241 = scmp.ne.s32.totalorder %s229, %s230
      %p242 = scmp.eq.s32.totalorder %s31, 1
      %p243 = por %p241, %p242
      %p245 = scmp.ne.s32.totalorder %s230, %s244
      %p246 = scmp.eq.s32.totalorder %s31, 0
      %p247 = por %p245, %p246
      %s249 = sadd.s32 %s248, 1
      %p252 = scmp.eq.s32.totalorder %s25, 1
      %p253 = scmp.ne.s32.totalorder %s248, %s250
      %p254 = scmp.eq.s32.totalorder %s25, 0
      %p255 = por %p253, %p254
      %p256 = scmp.ne.s32.totalorder %s248, %s250
      %p257 = scmp.eq.s32.totalorder %s30, 1
      %p258 = por %p256, %p257
      %p259 = scmp.ne.s32.totalorder %s250, %s251
      %p260 = scmp.eq.s32.totalorder %s30, 0
      %p261 = por %p259, %p260
      %p262 = scmp.ne.s32.totalorder %s250, %s251
      %p263 = scmp.eq.s32.totalorder %s31, 1
      %p264 = por %p262, %p263
      %p266 = scmp.ne.s32.totalorder %s251, %s265
      %p267 = scmp.eq.s32.totalorder %s31, 0
      %p268 = por %p266, %p267
      %s270 = sadd.s32 %s269, 1
      %p273 = scmp.eq.s32.totalorder %s25, 1
      %p274 = scmp.ne.s32.totalorder %s269, %s271
      %p275 = scmp.eq.s32.totalorder %s25, 0
      %p276 = por %p274, %p275
      %p277 = scmp.ne.s32.totalorder %s269, %s271
      %p278 = scmp.eq.s32.totalorder %s30, 1
      %p279 = por %p277, %p278
      %p280 = scmp.ne.s32.totalorder %s271, %s272
      %p281 = scmp.eq.s32.totalorder %s30, 0
      %p282 = por %p280, %p281
      %p283 = scmp.ne.s32.totalorder %s271, %s272
      %p284 = scmp.eq.s32.totalorder %s31, 1
      %p285 = por %p283, %p284
      %p287 = scmp.ne.s32.totalorder %s272, %s286
      %p288 = scmp.eq.s32.totalorder %s31, 0
      %p289 = por %p287, %p288
      %s291 = sadd.s32 %s290, 1
      %p294 = scmp.eq.s32.totalorder %s25, 1
      %p295 = scmp.ne.s32.totalorder %s290, %s292
      %p296 = scmp.eq.s32.totalorder %s25, 0
      %p297 = por %p295, %p296
      %p298 = scmp.ne.s32.totalorder %s290, %s292
      %p299 = scmp.eq.s32.totalorder %s30, 1
      %p300 = por %p298, %p299
      %p301 = scmp.ne.s32.totalorder %s292, %s293
      %p302 = scmp.eq.s32.totalorder %s30, 0
      %p303 = por %p301, %p302
      %p304 = scmp.ne.s32.totalorder %s292, %s293
      %p305 = scmp.eq.s32.totalorder %s31, 1
      %p306 = por %p304, %p305
      %p308 = scmp.ne.s32.totalorder %s293, %s307
      %p309 = scmp.eq.s32.totalorder %s31, 0
      %p310 = por %p308, %p309
      %s312 = sadd.s32 %s311, 1
      %p315 = scmp.eq.s32.totalorder %s25, 1
      %p316 = scmp.ne.s32.totalorder %s311, %s313
      %p317 = scmp.eq.s32.totalorder %s25, 0
      %p318 = por %p316, %p317
      %p319 = scmp.ne.s32.totalorder %s311, %s313
      %p320 = scmp.eq.s32.totalorder %s30, 1
      %p321 = por %p319, %p320
      %p322 = scmp.ne.s32.totalorder %s313, %s314
      %p323 = scmp.eq.s32.totalorder %s30, 0
      %p324 = por %p322, %p323
      %p325 = scmp.ne.s32.totalorder %s313, %s314
      %p326 = scmp.eq.s32.totalorder %s31, 1
      %p327 = por %p325, %p326
      %p329 = scmp.ne.s32.totalorder %s314, %s328
      %p330 = scmp.eq.s32.totalorder %s31, 0
      %p331 = por %p329, %p330
      %s332 = ssub.s32 %s25, %s32
      %p333 = scmp.eq.s32.totalorder %s332, 0
      %s335 = sadd.s32 %s334, 1
      %s336 = scalar_select %p333, %s334, %s335
      %p339 = pneg %p333
      %p340 = scmp.eq.s32.totalorder %s25, 1
      %p341 = por %p339, %p340
      %p342 = scmp.ne.s32.totalorder %s334, %s337
      %p343 = scmp.eq.s32.totalorder %s25, 0
      %p344 = por %p342, %p343
      %p345 = scmp.ne.s32.totalorder %s334, %s337
      %p346 = scmp.eq.s32.totalorder %s30, 1
      %p347 = por %p345, %p346
      %p348 = scmp.ne.s32.totalorder %s337, %s338
      %p349 = scmp.eq.s32.totalorder %s30, 0
      %p350 = por %p348, %p349
      %p351 = scmp.ne.s32.totalorder %s337, %s338
      %p352 = scmp.eq.s32.totalorder %s31, 1
      %p353 = por %p351, %p352
      %p355 = scmp.ne.s32.totalorder %s338, %s354
      %p356 = scmp.eq.s32.totalorder %s31, 0
      %p357 = por %p355, %p356
      %p358 = scmp.le.s32.totalorder 1, %s25
      %p359 = scmp.lt.s32.totalorder %s25, 3
      %p360 = pnand %p358, %p359
      %p361 = pneg %p360
      // Predicated region
      $region9: #{_lambda_.9} parent=5 // pred_check
        _
      $region10: #{_lambda_.9} parent=5 // pred_check_branch
        %363 = sbr.rel (%p360) target = $region12
      $region11: #{_lambda_.9} parent=5 // pred_region
        %s364 = ssub.s32 %s25, 1
        // Predicated region
        $region13: #{_lambda_.9} parent=11 // pred_check
          %p365 = pneg %p72
        $region14: #{_lambda_.9} parent=11 // pred_check_branch
          %367 = sbr.rel (%p365) target = $region16
        $region15: #{_lambda_.9} parent=11 // pred_region
          _
        $region16: #{_lambda_.9} parent=11 // pred_fallthru
          _
        // Predicated region
        $region17: #{_lambda_.9} parent=11 // pred_check
          %p368 = pneg %p93
        $region18: #{_lambda_.9} parent=11 // pred_check_branch
          %370 = sbr.rel (%p368) target = $region20
        $region19: #{_lambda_.9} parent=11 // pred_region
          _
        $region20: #{_lambda_.9} parent=11 // pred_fallthru
          _
        // Predicated region
        $region21: #{_lambda_.9} parent=11 // pred_check
          %p371 = pneg %p114
        $region22: #{_lambda_.9} parent=11 // pred_check_branch
          %373 = sbr.rel (%p371) target = $region24
        $region23: #{_lambda_.9} parent=11 // pred_region
          _
        $region24: #{_lambda_.9} parent=11 // pred_fallthru
          _
        // Predicated region
        $region25: #{_lambda_.9} parent=11 // pred_check
          %p374 = pneg %p135
        $region26: #{_lambda_.9} parent=11 // pred_check_branch
          %376 = sbr.rel (%p374) target = $region28
        $region27: #{_lambda_.9} parent=11 // pred_region
          _
        $region28: #{_lambda_.9} parent=11 // pred_fallthru
          _
        // Predicated region
        $region29: #{_lambda_.9} parent=11 // pred_check
          %p377 = pneg %p156
        $region30: #{_lambda_.9} parent=11 // pred_check_branch
          %379 = sbr.rel (%p377) target = $region32
        $region31: #{_lambda_.9} parent=11 // pred_region
          %381 = vsyncadd [#allocation3], 0
          %s382 = sshll.u32 %s5, 4
          %s383 = int_to_ptr.hbm [resolvable:$true] %s382
          %s384 = sshll.u32 [#allocation2], 4
          %s385 = int_to_ptr.vmem [resolvable:$true] %s384
          %390 = dma.hbm_to_vmem [thread:$0]  %s383, 1024, %s385, [#allocation3], 128, 128, 8
        $region32: #{_lambda_.9} parent=11 // pred_fallthru
          _
        // Predicated region
        $region33: #{_lambda_.9} parent=11 // pred_check
          %p391 = pneg %p177
        $region34: #{_lambda_.9} parent=11 // pred_check_branch
          %393 = sbr.rel (%p391) target = $region36
        $region35: #{_lambda_.9} parent=11 // pred_region
          %395 = vsyncadd [#allocation6], 0
          %s396 = sshll.u32 %s6, 4
          %s397 = int_to_ptr.hbm [resolvable:$true] %s396
          %s398 = sshll.u32 [#allocation5], 4
          %s399 = int_to_ptr.vmem [resolvable:$true] %s398
          %404 = dma.hbm_to_vmem [thread:$0]  %s397, 1024, %s399, [#allocation6], 128, 128, 8
        $region36: #{_lambda_.9} parent=11 // pred_fallthru
          _
        // Predicated region
        $region37: #{_lambda_.9} parent=11 // pred_check
          %p405 = pneg %p198
        $region38: #{_lambda_.9} parent=11 // pred_check_branch
          %407 = sbr.rel (%p405) target = $region40
        $region39: #{_lambda_.9} parent=11 // pred_region
          _
        $region40: #{_lambda_.9} parent=11 // pred_fallthru
          _
        // Predicated region
        $region41: #{_lambda_.9} parent=11 // pred_check
          %p408 = pneg %p219
        $region42: #{_lambda_.9} parent=11 // pred_check_branch
          %410 = sbr.rel (%p408) target = $region44
        $region43: #{_lambda_.9} parent=11 // pred_region
          _
        $region44: #{_lambda_.9} parent=11 // pred_fallthru
          _
        // Predicated region
        $region45: #{_lambda_.9} parent=11 // pred_check
          %p411 = pneg %p240
        $region46: #{_lambda_.9} parent=11 // pred_check_branch
          %413 = sbr.rel (%p411) target = $region48
        $region47: #{_lambda_.9} parent=11 // pred_region
          _
        $region48: #{_lambda_.9} parent=11 // pred_fallthru
          _
        // Predicated region
        $region49: #{_lambda_.9} parent=11 // pred_check
          %p414 = pneg %p261
        $region50: #{_lambda_.9} parent=11 // pred_check_branch
          %416 = sbr.rel (%p414) target = $region52
        $region51: #{_lambda_.9} parent=11 // pred_region
          %418 = vsyncadd [#allocation6], 0
          %s419 = sshll.u32 %s10, 4
          %s420 = int_to_ptr.hbm [resolvable:$true] %s419
          %s421 = sshll.u32 [#allocation7], 4
          %s422 = int_to_ptr.vmem [resolvable:$true] %s421
          %427 = dma.hbm_to_vmem [thread:$0]  %s420, 1024, %s422, [#allocation6], 128, 128, 8
        $region52: #{_lambda_.9} parent=11 // pred_fallthru
          _
        // Predicated region
        $region53: #{_lambda_.9} parent=11 // pred_check
          %p428 = pneg %p282
        $region54: #{_lambda_.9} parent=11 // pred_check_branch
          %430 = sbr.rel (%p428) target = $region56
        $region55: #{_lambda_.9} parent=11 // pred_region
          _
        $region56: #{_lambda_.9} parent=11 // pred_fallthru
          _
        // Predicated region
        $region57: #{_lambda_.9} parent=11 // pred_check
          %p431 = pneg %p303
        $region58: #{_lambda_.9} parent=11 // pred_check_branch
          %433 = sbr.rel (%p431) target = $region60
        $region59: #{_lambda_.9} parent=11 // pred_region
          _
        $region60: #{_lambda_.9} parent=11 // pred_fallthru
          _
        // Predicated region
        $region61: #{_lambda_.9} parent=11 // pred_check
          %p434 = pneg %p324
        $region62: #{_lambda_.9} parent=11 // pred_check_branch
          %436 = sbr.rel (%p434) target = $region64
        $region63: #{_lambda_.9} parent=11 // pred_region
          _
        $region64: #{_lambda_.9} parent=11 // pred_fallthru
          _
      $region12: #{_lambda_.9} parent=5 // pred_fallthru
        _
      %p437 = scmp.lt.s32.totalorder %s25, 2
      // Predicated region
      $region65: #{_lambda_.9} parent=5 // pred_check
        %p438 = pneg %p437
      $region66: #{_lambda_.9} parent=5 // pred_check_branch
        %440 = sbr.rel (%p438) target = $region68
      $region67: #{_lambda_.9} parent=5 // pred_region
        // Predicated region
        $region69: #{_lambda_.9} parent=67 // pred_check
          %p441 = pneg %p45
        $region70: #{_lambda_.9} parent=67 // pred_check_branch
          %443 = sbr.rel (%p441) target = $region72
        $region71: #{_lambda_.9} parent=67 // pred_region
          %p444 = scmp.lt.s32.totalorder %s25, 1
          %s445 = scalar_select %p444, %s25, 1
          %s446 = smul.addr %s445, 2
          %s447 = smul.addr %s446, 8
          %s448 = scalar_lea.vmem %s0, %s447
        $region72: #{_lambda_.9} parent=67 // pred_fallthru
          _
      $region68: #{_lambda_.9} parent=5 // pred_fallthru
        _
      %p449 = scmp.le.s32.totalorder 1, %s25
      %p450 = scmp.lt.s32.totalorder %s25, 3
      %p451 = pnand %p449, %p450
      %p452 = pneg %p451
      // Predicated region
      $region73: #{_lambda_.9} parent=5 // pred_check
        _
      $region74: #{_lambda_.9} parent=5 // pred_check_branch
        %454 = sbr.rel (%p451) target = $region76
      $region75: #{_lambda_.9} parent=5 // pred_region
        %s455 = ssub.s32 %s25, 1
        // Predicated region
        $region77: #{_lambda_.9} parent=75 // pred_check
          %p456 = pneg %p156
        $region78: #{_lambda_.9} parent=75 // pred_check_branch
          %458 = sbr.rel (%p456) target = $region80
        $region79: #{_lambda_.9} parent=75 // pred_region
          %460 = dma.done [#allocation3], 1024
        $region80: #{_lambda_.9} parent=75 // pred_fallthru
          _
        // Predicated region
        $region81: #{_lambda_.9} parent=75 // pred_check
          %p461 = pneg %p177
        $region82: #{_lambda_.9} parent=75 // pred_check_branch
          %463 = sbr.rel (%p461) target = $region84
        $region83: #{_lambda_.9} parent=75 // pred_region
          %465 = dma.done [#allocation6], 1024
        $region84: #{_lambda_.9} parent=75 // pred_fallthru
          _
        // Predicated region
        $region85: #{_lambda_.9} parent=75 // pred_check
          %p466 = pneg %p261
        $region86: #{_lambda_.9} parent=75 // pred_check_branch
          %468 = sbr.rel (%p466) target = $region88
        $region87: #{_lambda_.9} parent=75 // pred_region
          %470 = dma.done [#allocation6], 1024
        $region88: #{_lambda_.9} parent=75 // pred_fallthru
          _
        %p471 = scmp.lt.s32.totalorder %s30, 1
        %s472 = scalar_select %p471, %s30, 1
        %s473 = smul.addr %s472, 2
        %s474 = smul.addr %s473, 8
        %s475 = scalar_lea.vmem %s0, %s474
        %p476 = pneg %p51
        %p477 = pneg %p48
        %p478 = pneg %p72
        %p479 = pneg %p69
        %p480 = pneg %p93
        %p481 = pneg %p90
        %p482 = pneg %p114
        %p483 = pneg %p111
        %p484 = pneg %p135
        %p485 = pneg %p132
        %p486 = pneg %p156
        %p487 = pneg %p153
        %p488 = pneg %p177
        %p489 = pneg %p174
        %p490 = pneg %p198
        %p491 = pneg %p195
        %p492 = pneg %p219
        %p493 = pneg %p216
        %p494 = pneg %p240
        %p495 = pneg %p237
        %p496 = pneg %p261
        %p497 = pneg %p258
        %p498 = pneg %p282
        %p499 = pneg %p279
        %p500 = pneg %p303
        %p501 = pneg %p300
        %p502 = pneg %p324
        %p503 = pneg %p321
        %p504 = pneg %p350
        %p505 = pneg %p347
        %s506 = sand.u32 %s337, 1
        %s507 = scalar_lea.sflag [#allocation4], %s506
        %s508 = sand.u32 %s337, 1
        %s509 = smul.addr %s508, 16
        %s510 = scalar_lea.vmem [#allocation8], %s509
        %p511 = scmp.lt.s32.totalorder %s30, 1
        %s512 = scalar_select %p511, %s30, 1
        %s513 = smul.addr %s512, 2
        %s514 = smul.addr %s513, 8
        %s515 = scalar_lea.vmem %s0, %s514
        %v516 = vld [vmem:[%s515] sm:$0xff]
        %v517 = vld [vmem:[%s515 + $0x8] sm:$0xff]
        %vm518 = vcmask 523264
        %v519 = vsel %vm518, %v516, 0.0
        %v520 = vsel %vm518, %v517, 0.0
        %v521 = vadd.f32 %v519, %v520
        %v522 = vrot.slane %v521, 4
        %v523 = vadd.f32 %v521, %v522
        %v524 = vrot.slane %v523, 2
        %v525 = vadd.f32 %v523, %v524
        %v526 = vrot.slane %v525, 1
        %v527 = vadd.f32 %v525, %v526
        %v528 = vrcp.pop 16.0
        %v529 = vmul.f32 16.0, %v528
        %v530 = vsub.f32 1.0, %v529
        %v531 = vmul.f32 %v528, %v530
        %v532 = vadd.f32 %v528, %v531
        %vm533 = vweird.f32 %v528
        %v534 = vsel %vm533, %v528, %v532
        %v535 = vmul.f32 %v527, %v534
        %v536 = vsub.f32 %v516, %v535
        %v537 = vsub.f32 %v517, %v535
        %v538 = vmul.f32 %v536, %v536
        %v539 = vmul.f32 %v537, %v537
        %v540 = vsel %vm518, %v538, 0.0
        %v541 = vsel %vm518, %v539, 0.0
        %v542 = vadd.f32 %v540, %v541
        %v543 = vrot.slane %v542, 4
        %v544 = vadd.f32 %v542, %v543
        %v545 = vrot.slane %v544, 2
        %v546 = vadd.f32 %v544, %v545
        %v547 = vrot.slane %v546, 1
        %v548 = vadd.f32 %v546, %v547
        %v549 = vmul.f32 %v548, %v534
        %v550 = vld [vmem:[%s1] sm:$0x1]
        %v551 = vadd.f32 %v549, 1e-05
        %v552 = vrsqrt.pop %v551
        %v553 = vmul.f32 %v552, %v551
        %v554 = vmul.f32 %v553, %v552
        %v555 = vmul.f32 0.5, %v554
        %v556 = vsub.f32 1.5, %v555
        %v557 = vmul.f32 %v552, %v556
        %vm558 = vweird.f32 %v551
        %vm559 = vweird.f32 %v552
        %vm560 = vmor %vm558, %vm559
        %v561 = vsel %vm560, %v552, %v557
        %v562 = vmul.f32 %v550, %v561
        %v564 = vperm.slane %v562, 0
        %v566 = vmul.f32 %v536, %v564
        %v567 = vmul.f32 %v537, %v564
        %v568 = vld [vmem:[%s2] sm:$0x1]
        %v570 = vperm.slane %v568, 0
        %v572 = vadd.f32 %v566, %v570
        %v573 = vadd.f32 %v567, %v570
        %v574 = vld [vmem:[%s3] sm:$0xff]
        %v575 = vld [vmem:[%s3 + $0x8] sm:$0xff]
        %v576 = vld [vmem:[%s3 + $0x10] sm:$0xff]
        %v577 = vld [vmem:[%s3 + $0x18] sm:$0xff]
        %v578 = vld [vmem:[%s3 + $0x20] sm:$0xff]
        %v579 = vld [vmem:[%s3 + $0x28] sm:$0xff]
        %v580 = vld [vmem:[%s3 + $0x30] sm:$0xff]
        %v581 = vld [vmem:[%s3 + $0x38] sm:$0xff]
        %v582 = vld [vmem:[%s3 + $0x40] sm:$0xff]
        %v583 = vld [vmem:[%s3 + $0x48] sm:$0xff]
        %v584 = vld [vmem:[%s3 + $0x50] sm:$0xff]
        %v585 = vld [vmem:[%s3 + $0x58] sm:$0xff]
        %v586 = vld [vmem:[%s3 + $0x60] sm:$0xff]
        %v587 = vld [vmem:[%s3 + $0x68] sm:$0xff]
        %v588 = vld [vmem:[%s3 + $0x70] sm:$0xff]
        %v589 = vld [vmem:[%s3 + $0x78] sm:$0xff]
        %v590 = vld [vmem:[%s4] sm:$0x3]
        %v592 = vperm.slane %v590, 0
        %v593 = vperm.slane %v590, 1
        %v597 = vsel %vm518, %v572, 0
        %v600 = vsel %vm518, %v573, 0
        %602 = vmatpush.msra.mxu0 0.0
        %603 = vmatpush.msra.mxu0 0.0
        %604 = vmatpush.msra.mxu0 0.0
        %605 = vmatpush.msra.mxu0 0.0
        %606 = vmatpush.msra.mxu0 0.0
        %607 = vmatpush.msra.mxu0 0.0
        %608 = vmatpush.msra.mxu0 0.0
        %609 = vmatpush.msra.mxu0 0.0
        %610 = vmatpush.msra.mxu0 %v588
        %611 = vmatpush.msra.mxu0 %v586
        %612 = vmatpush.msra.mxu0 %v584
        %613 = vmatpush.msra.mxu0 %v582
        %614 = vmatpush.msra.mxu0 %v580
        %615 = vmatpush.msra.mxu0 %v578
        %616 = vmatpush.msra.mxu0 %v576
        %617 = vmatpush.msra.mxu0 %v574
        %618 = vmatmul.f32.gmra.mxu0 %v597
        %v619 = vpop.f32.mrf.mxu0
        %v620 = vadd.f32 %v592, %v619
        %621 = vmatmul.f32.gmra.mxu0 %v600
        %v622 = vpop.f32.mrf.mxu0
        %v623 = vadd.f32 %v592, %v622
        %624 = vdwg.mxu0
        %625 = vmatpush.msra.mxu0 0.0
        %626 = vmatpush.msra.mxu0 0.0
        %627 = vmatpush.msra.mxu0 0.0
        %628 = vmatpush.msra.mxu0 0.0
        %629 = vmatpush.msra.mxu0 0.0
        %630 = vmatpush.msra.mxu0 0.0
        %631 = vmatpush.msra.mxu0 0.0
        %632 = vmatpush.msra.mxu0 0.0
        %633 = vmatpush.msra.mxu0 %v589
        %634 = vmatpush.msra.mxu0 %v587
        %635 = vmatpush.msra.mxu0 %v585
        %636 = vmatpush.msra.mxu0 %v583
        %637 = vmatpush.msra.mxu0 %v581
        %638 = vmatpush.msra.mxu0 %v579
        %639 = vmatpush.msra.mxu0 %v577
        %640 = vmatpush.msra.mxu0 %v575
        %641 = vmatmul.f32.gmra.mxu0 %v597
        %v642 = vpop.f32.mrf.mxu0
        %v643 = vadd.f32 %v593, %v642
        %644 = vmatmul.f32.gmra.mxu0 %v600
        %v645 = vpop.f32.mrf.mxu0
        %v646 = vadd.f32 %v593, %v645
        %647 = vdwg.mxu0
        %v648 = vlaneseq
        %v649 = vand.u32 %v648, 127
        %v650 = vld [vmem:[#allocation2] sm:$0xff]
        %v651 = vld [vmem:[#allocation2 + $0x8] sm:$0xff]
        %654 = vrot.lane.b32.xlu0 %v620, 64
        %v655 = vpop.permute.xlu0 %654
        %656 = vrot.lane.b32.xlu0 %v623, 64
        %v657 = vpop.permute.xlu0 %656
        %vm658 = vcmask 130048
        %v659 = vsel %vm658, %v620, 0
        %v661 = vsel %vm658, %v623, 0
        %v663 = vsel %vm658, %v655, 0
        %v665 = vsel %vm658, %v657, 0
        %667 = vmatpush.xpose.msra.mxu0 0.0
        %668 = vmatpush.xpose.msra.mxu0 0.0
        %669 = vmatpush.xpose.msra.mxu0 0.0
        %670 = vmatpush.xpose.msra.mxu0 0.0
        %671 = vmatpush.xpose.msra.mxu0 0.0
        %672 = vmatpush.xpose.msra.mxu0 0.0
        %673 = vmatpush.xpose.msra.mxu0 0.0
        %674 = vmatpush.xpose.msra.mxu0 0.0
        %675 = vmatpush.xpose.msra.mxu0 0.0
        %676 = vmatpush.xpose.msra.mxu0 0.0
        %677 = vmatpush.xpose.msra.mxu0 0.0
        %678 = vmatpush.xpose.msra.mxu0 0.0
        %679 = vmatpush.xpose.msra.mxu0 0.0
        %680 = vmatpush.xpose.msra.mxu0 0.0
        %681 = vmatpush.xpose.msra.mxu0 %v665
        %682 = vmatpush.xpose.msra.mxu0 %v663
        %683 = vmatmul.f32.gmra.mxu0 %v659
        %v684 = vpop.f32.mrf.mxu0
        %v685 = vadd.f32 %v650, %v684
        %686 = vmatmul.f32.gmra.mxu0 %v661
        %v687 = vpop.f32.mrf.mxu0
        %v688 = vadd.f32 %v651, %v687
        %689 = vdwg.mxu0
        %v690 = vsel %vm658, %v685, -inf
        %691 = vmax.xlane.f32.xlu0 %v690
        %v692 = vpop.xlane.xlu0 %691
        %v693 = vsel %vm658, %v688, -inf
        %694 = vmax.xlane.f32.xlu0 %v693
        %v695 = vpop.xlane.xlu0 %694
        %v696 = vsub.f32 %v685, %v692
        %v697 = vsub.f32 %v688, %v695
        %v698 = vmul.f32 %v696, 1.442695
        %v699 = vpow.pop %v698
        %v700 = vmul.f32 %v697, 1.442695
        %v701 = vpow.pop %v700
        %v702 = vsel %vm658, %v699, 0.0
        %703 = vadd.xlane.f32.xlu0 %v702
        %v704 = vpop.xlane.xlu0 %703
        %v705 = vsel %vm658, %v701, 0.0
        %706 = vadd.xlane.f32.xlu0 %v705
        %v707 = vpop.xlane.xlu0 %706
        %v708 = vrcp.pop %v704
        %v709 = vrcp.pop %v707
        %v710 = vmul.f32 %v699, %v708
        %v711 = vmul.f32 %v701, %v709
        %vm712 = vcmp.ge.s32.totalorder %v649, 0
        %vm713 = vcmp.lt.s32.totalorder %v649, 16
        %vm714 = vmand %vm712, %vm713
        %v715 = vsel %vm714, 1, 0
        %vm716 = vcmp.eq.s32.totalorder %v715, 1
        %v717 = vsel %vm716, %v643, 0.0
        %v718 = vsel %vm716, %v646, 0.0
        %s719 = scalar_lea.vmem [#allocation2], 16
        %v720 = vld [vmem:[%s719] sm:$0xff]
        %v721 = vld [vmem:[%s719 + $0x8] sm:$0xff]
        %722 = vrot.lane.b32.xlu0 %v620, 112
        %v723 = vpop.permute.xlu0 %722
        %724 = vrot.lane.b32.xlu0 %v623, 112
        %v725 = vpop.permute.xlu0 %724
        %726 = vrot.lane.b32.xlu0 %v620, 48
        %v727 = vpop.permute.xlu0 %726
        %728 = vrot.lane.b32.xlu0 %v623, 48
        %v729 = vpop.permute.xlu0 %728
        %v730 = vsel %vm658, %v723, 0
        %v732 = vsel %vm658, %v725, 0
        %v734 = vsel %vm658, %v727, 0
        %v736 = vsel %vm658, %v729, 0
        %738 = vmatpush.xpose.msra.mxu0 0.0
        %739 = vmatpush.xpose.msra.mxu0 0.0
        %740 = vmatpush.xpose.msra.mxu0 0.0
        %741 = vmatpush.xpose.msra.mxu0 0.0
        %742 = vmatpush.xpose.msra.mxu0 0.0
        %743 = vmatpush.xpose.msra.mxu0 0.0
        %744 = vmatpush.xpose.msra.mxu0 0.0
        %745 = vmatpush.xpose.msra.mxu0 0.0
        %746 = vmatpush.xpose.msra.mxu0 0.0
        %747 = vmatpush.xpose.msra.mxu0 0.0
        %748 = vmatpush.xpose.msra.mxu0 0.0
        %749 = vmatpush.xpose.msra.mxu0 0.0
        %750 = vmatpush.xpose.msra.mxu0 0.0
        %751 = vmatpush.xpose.msra.mxu0 0.0
        %752 = vmatpush.xpose.msra.mxu0 %v736
        %753 = vmatpush.xpose.msra.mxu0 %v734
        %754 = vmatmul.f32.gmra.mxu0 %v730
        %v755 = vpop.f32.mrf.mxu0
        %v756 = vadd.f32 %v720, %v755
        %757 = vmatmul.f32.gmra.mxu0 %v732
        %v758 = vpop.f32.mrf.mxu0
        %v759 = vadd.f32 %v721, %v758
        %760 = vdwg.mxu0
        %v761 = vsel %vm658, %v756, -inf
        %762 = vmax.xlane.f32.xlu0 %v761
        %v763 = vpop.xlane.xlu0 %762
        %v764 = vsel %vm658, %v759, -inf
        %765 = vmax.xlane.f32.xlu0 %v764
        %v766 = vpop.xlane.xlu0 %765
        %v767 = vsub.f32 %v756, %v763
        %v768 = vsub.f32 %v759, %v766
        %v769 = vmul.f32 %v767, 1.442695
        %v770 = vpow.pop %v769
        %v771 = vmul.f32 %v768, 1.442695
        %v772 = vpow.pop %v771
        %v773 = vsel %vm658, %v770, 0.0
        %774 = vadd.xlane.f32.xlu0 %v773
        %v775 = vpop.xlane.xlu0 %774
        %v776 = vsel %vm658, %v772, 0.0
        %777 = vadd.xlane.f32.xlu0 %v776
        %v778 = vpop.xlane.xlu0 %777
        %v779 = vrcp.pop %v775
        %v780 = vrcp.pop %v778
        %v781 = vmul.f32 %v770, %v779
        %v782 = vmul.f32 %v772, %v780
        %vm783 = vcmp.ge.s32.totalorder %v649, 16
        %vm784 = vcmp.lt.s32.totalorder %v649, 32
        %vm785 = vmand %vm783, %vm784
        %v786 = vsel %vm785, 1, 0
        %vm787 = vcmp.eq.s32.totalorder %v786, 1
        %v788 = vsel %vm787, %v643, 0.0
        %v789 = vsel %vm787, %v646, 0.0
        %v791 = vsel %vm658, %v781, 0
        %v794 = vsel %vm658, %v782, 0
        %796 = vmatpush.msra.mxu0 0.0
        %797 = vmatpush.msra.mxu0 0.0
        %798 = vmatpush.msra.mxu0 0.0
        %799 = vmatpush.msra.mxu0 0.0
        %800 = vmatpush.msra.mxu0 0.0
        %801 = vmatpush.msra.mxu0 0.0
        %802 = vmatpush.msra.mxu0 0.0
        %803 = vmatpush.msra.mxu0 0.0
        %804 = vmatpush.msra.mxu0 0.0
        %805 = vmatpush.msra.mxu0 0.0
        %806 = vmatpush.msra.mxu0 0.0
        %807 = vmatpush.msra.mxu0 0.0
        %808 = vmatpush.msra.mxu0 0.0
        %809 = vmatpush.msra.mxu0 0.0
        %810 = vmatpush.msra.mxu0 %v789
        %811 = vmatpush.msra.mxu0 %v788
        %812 = vmatmul.f32.gmra.mxu0 %v791
        %v813 = vpop.f32.mrf.mxu0
        %v814 = vadd.f32 0.0, %v813
        %815 = vmatmul.f32.gmra.mxu0 %v794
        %v816 = vpop.f32.mrf.mxu0
        %v817 = vadd.f32 0.0, %v816
        %818 = vdwg.mxu0
        %v820 = vsel %vm658, %v710, 0
        %v823 = vsel %vm658, %v711, 0
        %825 = vmatpush.msra.mxu0 0.0
        %826 = vmatpush.msra.mxu0 0.0
        %827 = vmatpush.msra.mxu0 0.0
        %828 = vmatpush.msra.mxu0 0.0
        %829 = vmatpush.msra.mxu0 0.0
        %830 = vmatpush.msra.mxu0 0.0
        %831 = vmatpush.msra.mxu0 0.0
        %832 = vmatpush.msra.mxu0 0.0
        %833 = vmatpush.msra.mxu0 0.0
        %834 = vmatpush.msra.mxu0 0.0
        %835 = vmatpush.msra.mxu0 0.0
        %836 = vmatpush.msra.mxu0 0.0
        %837 = vmatpush.msra.mxu0 0.0
        %838 = vmatpush.msra.mxu0 0.0
        %839 = vmatpush.msra.mxu0 %v718
        %840 = vmatpush.msra.mxu0 %v717
        %841 = vmatmul.f32.gmra.mxu0 %v820
        %v842 = vpop.f32.mrf.mxu0
        %v843 = vadd.f32 %v814, %v842
        %844 = vmatmul.f32.gmra.mxu0 %v823
        %v845 = vpop.f32.mrf.mxu0
        %v846 = vadd.f32 %v817, %v845
        %847 = vdwg.mxu0
        %s848 = scalar_lea.vmem [#allocation2], 32
        %v849 = vld [vmem:[%s848] sm:$0xff]
        %v850 = vld [vmem:[%s848 + $0x8] sm:$0xff]
        %851 = vrot.lane.b32.xlu0 %v620, 96
        %v852 = vpop.permute.xlu0 %851
        %853 = vrot.lane.b32.xlu0 %v623, 96
        %v854 = vpop.permute.xlu0 %853
        %855 = vrot.lane.b32.xlu0 %v620, 32
        %v856 = vpop.permute.xlu0 %855
        %857 = vrot.lane.b32.xlu0 %v623, 32
        %v858 = vpop.permute.xlu0 %857
        %v859 = vsel %vm658, %v852, 0
        %v861 = vsel %vm658, %v854, 0
        %v863 = vsel %vm658, %v856, 0
        %v865 = vsel %vm658, %v858, 0
        %867 = vmatpush.xpose.msra.mxu0 0.0
        %868 = vmatpush.xpose.msra.mxu0 0.0
        %869 = vmatpush.xpose.msra.mxu0 0.0
        %870 = vmatpush.xpose.msra.mxu0 0.0
        %871 = vmatpush.xpose.msra.mxu0 0.0
        %872 = vmatpush.xpose.msra.mxu0 0.0
        %873 = vmatpush.xpose.msra.mxu0 0.0
        %874 = vmatpush.xpose.msra.mxu0 0.0
        %875 = vmatpush.xpose.msra.mxu0 0.0
        %876 = vmatpush.xpose.msra.mxu0 0.0
        %877 = vmatpush.xpose.msra.mxu0 0.0
        %878 = vmatpush.xpose.msra.mxu0 0.0
        %879 = vmatpush.xpose.msra.mxu0 0.0
        %880 = vmatpush.xpose.msra.mxu0 0.0
        %881 = vmatpush.xpose.msra.mxu0 %v865
        %882 = vmatpush.xpose.msra.mxu0 %v863
        %883 = vmatmul.f32.gmra.mxu0 %v859
        %v884 = vpop.f32.mrf.mxu0
        %v885 = vadd.f32 %v849, %v884
        %886 = vmatmul.f32.gmra.mxu0 %v861
        %v887 = vpop.f32.mrf.mxu0
        %v888 = vadd.f32 %v850, %v887
        %889 = vdwg.mxu0
        %v890 = vsel %vm658, %v885, -inf
        %891 = vmax.xlane.f32.xlu0 %v890
        %v892 = vpop.xlane.xlu0 %891
        %v893 = vsel %vm658, %v888, -inf
        %894 = vmax.xlane.f32.xlu0 %v893
        %v895 = vpop.xlane.xlu0 %894
        %v896 = vsub.f32 %v885, %v892
        %v897 = vsub.f32 %v888, %v895
        %v898 = vmul.f32 %v896, 1.442695
        %v899 = vpow.pop %v898
        %v900 = vmul.f32 %v897, 1.442695
        %v901 = vpow.pop %v900
        %v902 = vsel %vm658, %v899, 0.0
        %903 = vadd.xlane.f32.xlu0 %v902
        %v904 = vpop.xlane.xlu0 %903
        %v905 = vsel %vm658, %v901, 0.0
        %906 = vadd.xlane.f32.xlu0 %v905
        %v907 = vpop.xlane.xlu0 %906
        %v908 = vrcp.pop %v904
        %v909 = vrcp.pop %v907
        %v910 = vmul.f32 %v899, %v908
        %v911 = vmul.f32 %v901, %v909
        %vm912 = vcmp.ge.s32.totalorder %v649, 32
        %vm913 = vcmp.lt.s32.totalorder %v649, 48
        %vm914 = vmand %vm912, %vm913
        %v915 = vsel %vm914, 1, 0
        %vm916 = vcmp.eq.s32.totalorder %v915, 1
        %v917 = vsel %vm916, %v643, 0.0
        %v918 = vsel %vm916, %v646, 0.0
        %v920 = vsel %vm658, %v910, 0
        %v923 = vsel %vm658, %v911, 0
        %925 = vmatpush.msra.mxu0 0.0
        %926 = vmatpush.msra.mxu0 0.0
        %927 = vmatpush.msra.mxu0 0.0
        %928 = vmatpush.msra.mxu0 0.0
        %929 = vmatpush.msra.mxu0 0.0
        %930 = vmatpush.msra.mxu0 0.0
        %931 = vmatpush.msra.mxu0 0.0
        %932 = vmatpush.msra.mxu0 0.0
        %933 = vmatpush.msra.mxu0 0.0
        %934 = vmatpush.msra.mxu0 0.0
        %935 = vmatpush.msra.mxu0 0.0
        %936 = vmatpush.msra.mxu0 0.0
        %937 = vmatpush.msra.mxu0 0.0
        %938 = vmatpush.msra.mxu0 0.0
        %939 = vmatpush.msra.mxu0 %v918
        %940 = vmatpush.msra.mxu0 %v917
        %941 = vmatmul.f32.gmra.mxu0 %v920
        %v942 = vpop.f32.mrf.mxu0
        %v943 = vadd.f32 0.0, %v942
        %944 = vmatmul.f32.gmra.mxu0 %v923
        %v945 = vpop.f32.mrf.mxu0
        %v946 = vadd.f32 0.0, %v945
        %947 = vdwg.mxu0
        %v948 = vadd.f32 %v843, %v943
        %v949 = vadd.f32 %v846, %v946
        %s950 = scalar_lea.vmem [#allocation2], 48
        %v951 = vld [vmem:[%s950] sm:$0xff]
        %v952 = vld [vmem:[%s950 + $0x8] sm:$0xff]
        %953 = vrot.lane.b32.xlu0 %v620, 80
        %v954 = vpop.permute.xlu0 %953
        %955 = vrot.lane.b32.xlu0 %v623, 80
        %v956 = vpop.permute.xlu0 %955
        %957 = vrot.lane.b32.xlu0 %v620, 16
        %v958 = vpop.permute.xlu0 %957
        %959 = vrot.lane.b32.xlu0 %v623, 16
        %v960 = vpop.permute.xlu0 %959
        %v961 = vsel %vm658, %v954, 0
        %v963 = vsel %vm658, %v956, 0
        %v965 = vsel %vm658, %v958, 0
        %v967 = vsel %vm658, %v960, 0
        %969 = vmatpush.xpose.msra.mxu0 0.0
        %970 = vmatpush.xpose.msra.mxu0 0.0
        %971 = vmatpush.xpose.msra.mxu0 0.0
        %972 = vmatpush.xpose.msra.mxu0 0.0
        %973 = vmatpush.xpose.msra.mxu0 0.0
        %974 = vmatpush.xpose.msra.mxu0 0.0
        %975 = vmatpush.xpose.msra.mxu0 0.0
        %976 = vmatpush.xpose.msra.mxu0 0.0
        %977 = vmatpush.xpose.msra.mxu0 0.0
        %978 = vmatpush.xpose.msra.mxu0 0.0
        %979 = vmatpush.xpose.msra.mxu0 0.0
        %980 = vmatpush.xpose.msra.mxu0 0.0
        %981 = vmatpush.xpose.msra.mxu0 0.0
        %982 = vmatpush.xpose.msra.mxu0 0.0
        %983 = vmatpush.xpose.msra.mxu0 %v967
        %984 = vmatpush.xpose.msra.mxu0 %v965
        %985 = vmatmul.f32.gmra.mxu0 %v961
        %v986 = vpop.f32.mrf.mxu0
        %v987 = vadd.f32 %v951, %v986
        %988 = vmatmul.f32.gmra.mxu0 %v963
        %v989 = vpop.f32.mrf.mxu0
        %v990 = vadd.f32 %v952, %v989
        %991 = vdwg.mxu0
        %v992 = vsel %vm658, %v987, -inf
        %993 = vmax.xlane.f32.xlu0 %v992
        %v994 = vpop.xlane.xlu0 %993
        %v995 = vsel %vm658, %v990, -inf
        %996 = vmax.xlane.f32.xlu0 %v995
        %v997 = vpop.xlane.xlu0 %996
        %v998 = vsub.f32 %v987, %v994
        %v999 = vsub.f32 %v990, %v997
        %v1000 = vmul.f32 %v998, 1.442695
        %v1001 = vpow.pop %v1000
        %v1002 = vmul.f32 %v999, 1.442695
        %v1003 = vpow.pop %v1002
        %v1004 = vsel %vm658, %v1001, 0.0
        %1005 = vadd.xlane.f32.xlu0 %v1004
        %v1006 = vpop.xlane.xlu0 %1005
        %v1007 = vsel %vm658, %v1003, 0.0
        %1008 = vadd.xlane.f32.xlu0 %v1007
        %v1009 = vpop.xlane.xlu0 %1008
        %v1010 = vrcp.pop %v1006
        %v1011 = vrcp.pop %v1009
        %v1012 = vmul.f32 %v1001, %v1010
        %v1013 = vmul.f32 %v1003, %v1011
        %vm1014 = vcmp.ge.s32.totalorder %v649, 48
        %vm1015 = vcmp.lt.s32.totalorder %v649, 64
        %vm1016 = vmand %vm1014, %vm1015
        %v1017 = vsel %vm1016, 1, 0
        %vm1018 = vcmp.eq.s32.totalorder %v1017, 1
        %v1019 = vsel %vm1018, %v643, 0.0
        %v1020 = vsel %vm1018, %v646, 0.0
        %v1022 = vsel %vm658, %v1012, 0
        %v1025 = vsel %vm658, %v1013, 0
        %1027 = vmatpush.msra.mxu0 0.0
        %1028 = vmatpush.msra.mxu0 0.0
        %1029 = vmatpush.msra.mxu0 0.0
        %1030 = vmatpush.msra.mxu0 0.0
        %1031 = vmatpush.msra.mxu0 0.0
        %1032 = vmatpush.msra.mxu0 0.0
        %1033 = vmatpush.msra.mxu0 0.0
        %1034 = vmatpush.msra.mxu0 0.0
        %1035 = vmatpush.msra.mxu0 0.0
        %1036 = vmatpush.msra.mxu0 0.0
        %1037 = vmatpush.msra.mxu0 0.0
        %1038 = vmatpush.msra.mxu0 0.0
        %1039 = vmatpush.msra.mxu0 0.0
        %1040 = vmatpush.msra.mxu0 0.0
        %1041 = vmatpush.msra.mxu0 %v1020
        %1042 = vmatpush.msra.mxu0 %v1019
        %1043 = vmatmul.f32.gmra.mxu0 %v1022
        %v1044 = vpop.f32.mrf.mxu0
        %v1045 = vadd.f32 0.0, %v1044
        %1046 = vmatmul.f32.gmra.mxu0 %v1025
        %v1047 = vpop.f32.mrf.mxu0
        %v1048 = vadd.f32 0.0, %v1047
        %1049 = vdwg.mxu0
        %v1050 = vadd.f32 %v948, %v1045
        %v1051 = vadd.f32 %v949, %v1048
        %v1052 = vld [vmem:[#allocation5] sm:$0xff]
        %v1053 = vld [vmem:[#allocation5 + $0x8] sm:$0xff]
        %v1054 = vld [vmem:[#allocation5 + $0x10] sm:$0xff]
        %v1055 = vld [vmem:[#allocation5 + $0x18] sm:$0xff]
        %v1056 = vld [vmem:[#allocation5 + $0x20] sm:$0xff]
        %v1057 = vld [vmem:[#allocation5 + $0x28] sm:$0xff]
        %v1058 = vld [vmem:[#allocation5 + $0x30] sm:$0xff]
        %v1059 = vld [vmem:[#allocation5 + $0x38] sm:$0xff]
        %v1060 = vld [vmem:[%s7] sm:$0x1]
        %v1062 = vperm.slane %v1060, 0
        %v1065 = vsel %vm518, %v1050, 0
        %v1068 = vsel %vm518, %v1051, 0
        %1070 = vmatpush.msra.mxu0 0.0
        %1071 = vmatpush.msra.mxu0 0.0
        %1072 = vmatpush.msra.mxu0 0.0
        %1073 = vmatpush.msra.mxu0 0.0
        %1074 = vmatpush.msra.mxu0 0.0
        %1075 = vmatpush.msra.mxu0 0.0
        %1076 = vmatpush.msra.mxu0 0.0
        %1077 = vmatpush.msra.mxu0 0.0
        %1078 = vmatpush.msra.mxu0 %v1059
        %1079 = vmatpush.msra.mxu0 %v1058
        %1080 = vmatpush.msra.mxu0 %v1057
        %1081 = vmatpush.msra.mxu0 %v1056
        %1082 = vmatpush.msra.mxu0 %v1055
        %1083 = vmatpush.msra.mxu0 %v1054
        %1084 = vmatpush.msra.mxu0 %v1053
        %1085 = vmatpush.msra.mxu0 %v1052
        %1086 = vmatmul.f32.gmra.mxu0 %v1065
        %v1087 = vpop.f32.mrf.mxu0
        %v1088 = vadd.f32 %v1062, %v1087
        %1089 = vmatmul.f32.gmra.mxu0 %v1068
        %v1090 = vpop.f32.mrf.mxu0
        %v1091 = vadd.f32 %v1062, %v1090
        %1092 = vdwg.mxu0
        %v1093 = vadd.f32 %v516, %v1088
        %v1094 = vadd.f32 %v517, %v1091
        %v1095 = vsel %vm518, %v1093, 0.0
        %v1096 = vsel %vm518, %v1094, 0.0
        %v1097 = vadd.f32 %v1095, %v1096
        %v1098 = vrot.slane %v1097, 4
        %v1099 = vadd.f32 %v1097, %v1098
        %v1100 = vrot.slane %v1099, 2
        %v1101 = vadd.f32 %v1099, %v1100
        %v1102 = vrot.slane %v1101, 1
        %v1103 = vadd.f32 %v1101, %v1102
        %v1104 = vmul.f32 %v1103, %v534
        %v1105 = vsub.f32 %v1093, %v1104
        %v1106 = vsub.f32 %v1094, %v1104
        %v1107 = vmul.f32 %v1105, %v1105
        %v1108 = vmul.f32 %v1106, %v1106
        %v1109 = vsel %vm518, %v1107, 0.0
        %v1110 = vsel %vm518, %v1108, 0.0
        %v1111 = vadd.f32 %v1109, %v1110
        %v1112 = vrot.slane %v1111, 4
        %v1113 = vadd.f32 %v1111, %v1112
        %v1114 = vrot.slane %v1113, 2
        %v1115 = vadd.f32 %v1113, %v1114
        %v1116 = vrot.slane %v1115, 1
        %v1117 = vadd.f32 %v1115, %v1116
        %v1118 = vmul.f32 %v1117, %v534
        %v1119 = vld [vmem:[%s8] sm:$0x1]
        %v1120 = vadd.f32 %v1118, 1e-05
        %v1121 = vrsqrt.pop %v1120
        %v1122 = vmul.f32 %v1121, %v1120
        %v1123 = vmul.f32 %v1122, %v1121
        %v1124 = vmul.f32 0.5, %v1123
        %v1125 = vsub.f32 1.5, %v1124
        %v1126 = vmul.f32 %v1121, %v1125
        %vm1127 = vweird.f32 %v1120
        %vm1128 = vweird.f32 %v1121
        %vm1129 = vmor %vm1127, %vm1128
        %v1130 = vsel %vm1129, %v1121, %v1126
        %v1131 = vmul.f32 %v1119, %v1130
        %v1133 = vperm.slane %v1131, 0
        %v1135 = vmul.f32 %v1105, %v1133
        %v1136 = vmul.f32 %v1106, %v1133
        %v1137 = vld [vmem:[%s9] sm:$0x1]
        %v1139 = vperm.slane %v1137, 0
        %v1141 = vadd.f32 %v1135, %v1139
        %v1142 = vadd.f32 %v1136, %v1139
        %v1143 = vld [vmem:[#allocation7] sm:$0xff]
        %v1144 = vld [vmem:[#allocation7 + $0x8] sm:$0xff]
        %v1145 = vld [vmem:[#allocation7 + $0x10] sm:$0xff]
        %v1146 = vld [vmem:[#allocation7 + $0x18] sm:$0xff]
        %v1147 = vld [vmem:[#allocation7 + $0x20] sm:$0xff]
        %v1148 = vld [vmem:[#allocation7 + $0x28] sm:$0xff]
        %v1149 = vld [vmem:[#allocation7 + $0x30] sm:$0xff]
        %v1150 = vld [vmem:[#allocation7 + $0x38] sm:$0xff]
        %v1151 = vld [vmem:[%s11] sm:$0x1]
        %v1153 = vperm.slane %v1151, 0
        %v1156 = vsel %vm518, %v1141, 0
        %v1159 = vsel %vm518, %v1142, 0
        %1161 = vmatpush.msra.mxu0 0.0
        %1162 = vmatpush.msra.mxu0 0.0
        %1163 = vmatpush.msra.mxu0 0.0
        %1164 = vmatpush.msra.mxu0 0.0
        %1165 = vmatpush.msra.mxu0 0.0
        %1166 = vmatpush.msra.mxu0 0.0
        %1167 = vmatpush.msra.mxu0 0.0
        %1168 = vmatpush.msra.mxu0 0.0
        %1169 = vmatpush.msra.mxu0 %v1150
        %1170 = vmatpush.msra.mxu0 %v1149
        %1171 = vmatpush.msra.mxu0 %v1148
        %1172 = vmatpush.msra.mxu0 %v1147
        %1173 = vmatpush.msra.mxu0 %v1146
        %1174 = vmatpush.msra.mxu0 %v1145
        %1175 = vmatpush.msra.mxu0 %v1144
        %1176 = vmatpush.msra.mxu0 %v1143
        %1177 = vmatmul.f32.gmra.mxu0 %v1156
        %v1178 = vpop.f32.mrf.mxu0
        %v1179 = vadd.f32 %v1153, %v1178
        %1180 = vmatmul.f32.gmra.mxu0 %v1159
        %v1181 = vpop.f32.mrf.mxu0
        %v1182 = vadd.f32 %v1153, %v1181
        %1183 = vdwg.mxu0
        %v1184 = vmul.f32 %v1179, %v1179
        %v1185 = vmul.f32 %v1182, %v1182
        %v1186 = vmul.f32 %v1179, %v1184
        %v1187 = vmul.f32 %v1182, %v1185
        %v1188 = vmul.f32 %v1186, 0.044715
        %v1189 = vmul.f32 %v1187, 0.044715
        %v1190 = vadd.f32 %v1179, %v1188
        %v1191 = vadd.f32 %v1182, %v1189
        %v1192 = vmul.f32 %v1190, 0.7978846
        %v1193 = vmul.f32 %v1191, 0.7978846
        %v1194 = vtanh.pop %v1192
        %v1195 = vtanh.pop %v1193
        %v1196 = vadd.f32 %v1194, 1.0
        %v1197 = vadd.f32 %v1195, 1.0
        %v1198 = vmul.f32 %v1196, 0.5
        %v1199 = vmul.f32 %v1197, 0.5
        %v1200 = vmul.f32 %v1179, %v1198
        %v1201 = vmul.f32 %v1182, %v1199
        %v1202 = vld [vmem:[%s12] sm:$0xff]
        %v1203 = vld [vmem:[%s12 + $0x8] sm:$0xff]
        %v1204 = vld [vmem:[%s12 + $0x10] sm:$0xff]
        %v1205 = vld [vmem:[%s12 + $0x18] sm:$0xff]
        %v1206 = vld [vmem:[%s12 + $0x20] sm:$0xff]
        %v1207 = vld [vmem:[%s12 + $0x28] sm:$0xff]
        %v1208 = vld [vmem:[%s12 + $0x30] sm:$0xff]
        %v1209 = vld [vmem:[%s12 + $0x38] sm:$0xff]
        %v1210 = vld [vmem:[%s12 + $0x40] sm:$0xff]
        %v1211 = vld [vmem:[%s12 + $0x48] sm:$0xff]
        %v1212 = vld [vmem:[%s12 + $0x50] sm:$0xff]
        %v1213 = vld [vmem:[%s12 + $0x58] sm:$0xff]
        %v1214 = vld [vmem:[%s12 + $0x60] sm:$0xff]
        %v1215 = vld [vmem:[%s12 + $0x68] sm:$0xff]
        %v1216 = vld [vmem:[%s12 + $0x70] sm:$0xff]
        %v1217 = vld [vmem:[%s12 + $0x78] sm:$0xff]
        %v1218 = vld [vmem:[%s13] sm:$0x1]
        %v1220 = vperm.slane %v1218, 0
        %1222 = vmatpush.msra.mxu0 %v1217
        %1223 = vmatpush.msra.mxu0 %v1216
        %1224 = vmatpush.msra.mxu0 %v1215
        %1225 = vmatpush.msra.mxu0 %v1214
        %1226 = vmatpush.msra.mxu0 %v1213
        %1227 = vmatpush.msra.mxu0 %v1212
        %1228 = vmatpush.msra.mxu0 %v1211
        %1229 = vmatpush.msra.mxu0 %v1210
        %1230 = vmatpush.msra.mxu0 %v1209
        %1231 = vmatpush.msra.mxu0 %v1208
        %1232 = vmatpush.msra.mxu0 %v1207
        %1233 = vmatpush.msra.mxu0 %v1206
        %1234 = vmatpush.msra.mxu0 %v1205
        %1235 = vmatpush.msra.mxu0 %v1204
        %1236 = vmatpush.msra.mxu0 %v1203
        %1237 = vmatpush.msra.mxu0 %v1202
        %1238 = vmatmul.f32.gmra.mxu0 %v1200
        %v1239 = vpop.f32.mrf.mxu0
        %v1240 = vadd.f32 %v1220, %v1239
        %1241 = vmatmul.f32.gmra.mxu0 %v1201
        %v1242 = vpop.f32.mrf.mxu0
        %v1243 = vadd.f32 %v1220, %v1242
        %1244 = vdwg.mxu0
        %v1245 = vadd.f32 %v1093, %v1240
        %v1246 = vadd.f32 %v1094, %v1243
        %1247 = vst.msk [vmem:[%s510] sm:$0xff] %vm518, %v1245
        %1248 = vst.msk [vmem:[%s510 + $0x8] sm:$0xff] %vm518, %v1246
        %s1249 = sand.u32 %s337, 1
        %s1250 = scalar_lea.sflag [#allocation4], %s1249
        %s1251 = sand.u32 %s337, 1
        %s1252 = smul.addr %s1251, 16
        %s1253 = scalar_lea.vmem [#allocation8], %s1252
        // Predicated region
        $region89: #{_lambda_.9} parent=75 // pred_check
          %p1254 = pneg %p347
        $region90: #{_lambda_.9} parent=75 // pred_check_branch
          %1256 = sbr.rel (%p1254) target = $region92
        $region91: #{_lambda_.9} parent=75 // pred_region
          %1258 = vsyncadd %s1250, 0
          %s1259 = smul.addr %s30, 2
          %s1260 = smul.addr %s1259, 8
          %s1261 = scalar_lea.hbm %s14, %s1260
          %s1262 = sshll.u32 %s1253, 4
          %s1263 = int_to_ptr.vmem [resolvable:$true] %s1262
          %s1264 = sshll.u32 %s1261, 4
          %s1265 = int_to_ptr.hbm [resolvable:$true] %s1264
          %1270 = dma.vmem_to_hbm [thread:$0]  %s1263, 256, %s1265, %s1250, 128, 128, 8
        $region92: #{_lambda_.9} parent=75 // pred_fallthru
          _
      $region76: #{_lambda_.9} parent=5 // pred_fallthru
        _
      %p1271 = scmp.le.s32.totalorder 2, %s25
      // Predicated region
      $region93: #{_lambda_.9} parent=5 // pred_check
        %p1272 = pneg %p1271
      $region94: #{_lambda_.9} parent=5 // pred_check_branch
        %1274 = sbr.rel (%p1272) target = $region96
      $region95: #{_lambda_.9} parent=5 // pred_region
        %s1275 = ssub.s32 %s25, 2
        // Predicated region
        $region97: #{_lambda_.9} parent=95 // pred_check
          %p1276 = pneg %p353
        $region98: #{_lambda_.9} parent=95 // pred_check_branch
          %1278 = sbr.rel (%p1276) target = $region100
        $region99: #{_lambda_.9} parent=95 // pred_region
          %s1279 = sand.u32 %s338, 1
          %s1280 = scalar_lea.sflag [#allocation4], %s1279
          %s1281 = sand.u32 %s338, 1
          %s1282 = smul.addr %s1281, 16
          %s1283 = scalar_lea.vmem [#allocation8], %s1282
          %1285 = dma.done %s1280, 256
        $region100: #{_lambda_.9} parent=95 // pred_fallthru
          _
      $region96: #{_lambda_.9} parent=5 // pred_fallthru
        _
    $region6: #{_lambda_.9} parent=1 // loop_footer
      %s29 = sadd.s32 1, %s25
    $region7: #{_lambda_.9} parent=1 // loop_footer_branch
      %24 = sbr.rel target = $region3
    $region8: #{_lambda_.9} parent=1 // loop_exit
      _
    %1286 = vsyncpa [#allocation3], 1
    %s1287 = scalar_lea.sflag [#allocation3], 1
    %1288 = vsyncpa %s1287, 1
    %1289 = vsyncpa [#allocation6], 1
    %1290 = vsyncpa [#allocation4], 1
    %s1291 = scalar_lea.sflag [#allocation4], 1
    %1292 = vsyncpa %s1291, 1

</llo_original>
